<compile_context>
chip_gen: v7x
topology: tpu7x:2x2x1
jax: 0.10.0
libtpu: 0.0.40
codegen_flags: <defaults>
</compile_context>

<pallas_src>
import jax
import jax.numpy as jnp
from jax.experimental import pallas as pl
from jax.experimental.pallas import tpu as pltpu


ENC_DIMS = [2800, 512, 256, 128, 28]
DEC_DIMS = [28, 128, 256, 512, 2800]
LAYER_DIMS = list(zip(ENC_DIMS[:-1], ENC_DIMS[1:])) + list(
    zip(DEC_DIMS[:-1], DEC_DIMS[1:])
)
NUM_LAYERS = len(LAYER_DIMS)          # 8
PRELU_LAYERS = (0, 1, 2, 4, 5, 6)     # no PReLU after encoder out (3) / decoder out (7)
D_IN = 2800
D_OUT = 2800
D_OUT_PAD = 2816                      # 22 * 128 -> lane-dense output stores


def _round_up(x, m):
    return ((x + m - 1) // m) * m


def _cae_fused_kernel(*refs):
    """refs = (x_tile, w0..w7, b0..b7, alpha, out_tile)."""
    x_ref = refs[0]
    w_refs = refs[1 : 1 + NUM_LAYERS]
    b_refs = refs[1 + NUM_LAYERS : 1 + 2 * NUM_LAYERS]
    alpha_ref = refs[1 + 2 * NUM_LAYERS]
    o_ref = refs[2 + 2 * NUM_LAYERS]

    # bf16 activation handoff between layers; accumulate / bias / PReLU in f32.
    h = x_ref[...].astype(jnp.bfloat16)               # [TILE_B, 2800]
    y = None
    alpha_idx = 0
    for i in range(NUM_LAYERS):
        y = jnp.dot(h, w_refs[i][...], preferred_element_type=jnp.float32)
        y = y + b_refs[i][...]                        # [1, Dout] broadcast, f32
        if i in PRELU_LAYERS:
            a = alpha_ref[alpha_idx]                  # scalar from SMEM
            alpha_idx += 1
            y = jnp.where(y > 0.0, y, a * y)
        if i < NUM_LAYERS - 1:
            h = y.astype(jnp.bfloat16)
    o_ref[...] = y.astype(o_ref.dtype)                # lane-dense [TILE_B, 2816]


def cae_forward(x, weights_padded, biases_padded, alphas, *, tile_b=128):
    """Fused encoder+decoder forward.

    weights_padded / biases_padded are the kernel-form params from
    prep_kernel_params(): bf16 [in, out] weights, last layer padded to 2816.
    """
    assert tile_b % 8 == 0, "tile_b must be a multiple of the 8-sublane tile"
    B = x.shape[0]
    # Keep the tile no bigger than the (sublane-rounded) batch for tiny inputs.
    tile_b = min(tile_b, _round_up(B, 8))
    Bp = pl.cdiv(B, tile_b) * tile_b
    if Bp != B:
        x = jnp.pad(x, ((0, Bp - B), (0, 0)))

    grid = (Bp // tile_b,)
    x_spec = pl.BlockSpec((tile_b, D_IN), lambda i: (i, 0))
    # Whole-array weight/bias specs with constant index_map: DMA'd once,
    # re-fetch skipped on subsequent grid steps (weights stay VMEM-resident).
    w_specs = [pl.BlockSpec(w.shape, lambda i: (0, 0)) for w in weights_padded]
    b_specs = [pl.BlockSpec(b.shape, lambda i: (0, 0)) for b in biases_padded]
    alpha_spec = pl.BlockSpec(memory_space=pltpu.SMEM)
    out_spec = pl.BlockSpec((tile_b, D_OUT_PAD), lambda i: (i, 0))

    out = pl.pallas_call(
        _cae_fused_kernel,
        out_shape=jax.ShapeDtypeStruct((Bp, D_OUT_PAD), jnp.float32),
        grid=grid,
        in_specs=[x_spec] + w_specs + b_specs + [alpha_spec],
        out_specs=out_spec,
        compiler_params=pltpu.CompilerParams(
            # Batch tiles are independent -> shard across v7x's 2 TensorCores.
            dimension_semantics=("parallel",),
            # ~12.8 MiB double-buffered bf16 weights + ~5 MiB activation tiles
            # (+ scratch) at TILE_B=128; 48 MiB leaves headroom and stays under
            # v7x's 64 MiB physical VMEM per TC.
            vmem_limit_bytes=48 * 1024 * 1024,
        ),
    )(x, *weights_padded, *biases_padded, alphas)
    return out[:B, :D_OUT]


# ------------------------------ references --------------------------------- #

def cae_forward_ref_f32(x, weights_f32, biases, alphas):
    """Pure f32 reference (PyTorch-equivalent numerics)."""
    h = x
    alpha_idx = 0
    for i in range(NUM_LAYERS):
        y = jnp.dot(h, weights_f32[i]) + biases[i]
        if i in PRELU_LAYERS:
            a = alphas[alpha_idx]
            alpha_idx += 1
            y = jnp.where(y > 0.0, y, a * y)
        h = y
    return h


def cae_forward_ref_bf16(x, weights_f32, biases, alphas):
    """Reference with the kernel's bf16-weight / bf16-handoff / f32-accumulate semantics."""
    h = x.astype(jnp.bfloat16)
    y = None
    alpha_idx = 0
    for i in range(NUM_LAYERS):
        w = weights_f32[i].astype(jnp.bfloat16)
        y = jnp.dot(h, w, preferred_element_type=jnp.float32) + biases[i]
        if i in PRELU_LAYERS:
            a = alphas[alpha_idx]
            alpha_idx += 1
            y = jnp.where(y > 0.0, y, a * y)
        if i < NUM_LAYERS - 1:
            h = y.astype(jnp.bfloat16)
    return y


# ------------------------------ params -------------------------------------- #

def init_params(key):
    """Deterministic f32 params mirroring nn.Linear init shapes ([in, out] layout)."""
    weights, biases = [], []
    for din, dout in LAYER_DIMS:
        kw, kb, key = jax.random.split(key, 3)
        bound = 1.0 / float(din) ** 0.5
        w = jax.random.uniform(kw, (din, dout), jnp.float32, -bound, bound)
        b = jax.random.uniform(kb, (1, dout), jnp.float32, -bound, bound)
        weights.append(w)
        biases.append(b)
    # nn.PReLU() default: one shared parameter per PReLU, init 0.25.
    alphas = jnp.full((len(PRELU_LAYERS),), 0.25, dtype=jnp.float32)
    return weights, biases, alphas, key


def prep_kernel_params(weights_f32, biases_f32):
    """Kernel-form params: bf16 weights; last layer zero-padded 2800 -> 2816."""
    weights = [w.astype(jnp.bfloat16) for w in weights_f32]
    biases = list(biases_f32)
    pad = D_OUT_PAD - D_OUT
    weights[-1] = jnp.pad(weights[-1], ((0, 0), (0, pad)))
    biases[-1] = jnp.pad(biases[-1], ((0, 0), (0, pad)))
    return weights, biases


# TODO(synk): get_loss (MSE + contractive penalty on encoder.6.weight) is a
# training-time loss, not part of forward(); not implemented as a Pallas kernel.


if __name__ == "__main__":
    key = jax.random.PRNGKey(0)
    weights_f32, biases, alphas, key = init_params(key)
    weights_k, biases_k = prep_kernel_params(weights_f32, biases)

    # Small driver: batch=20 with tile_b=8 -> grid=(3,), exercises batch padding,
    # multi-step grid, and weight residency across steps. Production default is
    # tile_b=128 (or 256 on v6e/v7x) to fill the MXU.
    batch = 20
    kx, key = jax.random.split(key)
    x = jax.random.normal(kx, (batch, D_IN), dtype=jnp.float32)

    out = cae_forward(x, weights_k, biases_k, alphas, tile_b=8)
    out = jax.block_until_ready(out)
    assert out.shape == (batch, D_OUT)

    # Structural check: identical bf16/f32 semantics -> tight tolerance.
    ref_bf16 = jax.block_until_ready(cae_forward_ref_bf16(x, weights_f32, biases, alphas))
    assert jnp.allclose(out, ref_bf16, atol=1e-2, rtol=1e-2), "mismatch vs bf16 reference"

    # Numerics check vs PyTorch-equivalent f32 baseline -> loose tolerance.
    ref_f32 = jax.block_until_ready(cae_forward_ref_f32(x, weights_f32, biases, alphas))
    assert jnp.allclose(out, ref_f32, atol=5e-2, rtol=5e-2), "mismatch vs f32 reference"

    print("KERNEL_OK")
</pallas_src>

<mosaic_0001>
module attributes {stable_mosaic.version = 11 : i64} {
  func.func @_cae_fused_kernel(%arg0: i32, %arg1: memref<8x2800xf32, #tpu.memory_space<vmem>>, %arg2: memref<2800x512xbf16, #tpu.memory_space<vmem>>, %arg3: memref<512x256xbf16, #tpu.memory_space<vmem>>, %arg4: memref<256x128xbf16, #tpu.memory_space<vmem>>, %arg5: memref<128x28xbf16, #tpu.memory_space<vmem>>, %arg6: memref<28x128xbf16, #tpu.memory_space<vmem>>, %arg7: memref<128x256xbf16, #tpu.memory_space<vmem>>, %arg8: memref<256x512xbf16, #tpu.memory_space<vmem>>, %arg9: memref<512x2816xbf16, #tpu.memory_space<vmem>>, %arg10: memref<1x512xf32, #tpu.memory_space<vmem>>, %arg11: memref<1x256xf32, #tpu.memory_space<vmem>>, %arg12: memref<1x128xf32, #tpu.memory_space<vmem>>, %arg13: memref<1x28xf32, #tpu.memory_space<vmem>>, %arg14: memref<1x128xf32, #tpu.memory_space<vmem>>, %arg15: memref<1x256xf32, #tpu.memory_space<vmem>>, %arg16: memref<1x512xf32, #tpu.memory_space<vmem>>, %arg17: memref<1x2816xf32, #tpu.memory_space<vmem>>, %arg18: memref<6xf32, #tpu.memory_space<smem>>, %arg19: memref<8x2816xf32, #tpu.memory_space<vmem>>) attributes {dimension_semantics = [#tpu.dimension_semantics<parallel>], iteration_bounds = array<i64: 3>, scalar_prefetch = 0 : i64, scratch_operands = 0 : i64, tpu.core_type = #tpu.core_type<tc>, window_params = [{transform_indices = @transform_0, window_bounds = array<i64: 8, 2800>}, {pipeline_mode = #tpu.pipeline_mode<synchronous>, transform_indices = @transform_1, window_bounds = array<i64: 2800, 512>}, {pipeline_mode = #tpu.pipeline_mode<synchronous>, transform_indices = @transform_2, window_bounds = array<i64: 512, 256>}, {pipeline_mode = #tpu.pipeline_mode<synchronous>, transform_indices = @transform_3, window_bounds = array<i64: 256, 128>}, {pipeline_mode = #tpu.pipeline_mode<synchronous>, transform_indices = @transform_4, window_bounds = array<i64: 128, 28>}, {pipeline_mode = #tpu.pipeline_mode<synchronous>, transform_indices = @transform_5, window_bounds = array<i64: 28, 128>}, {pipeline_mode = #tpu.pipeline_mode<synchronous>, transform_indices = @transform_6, window_bounds = array<i64: 128, 256>}, {pipeline_mode = #tpu.pipeline_mode<synchronous>, transform_indices = @transform_7, window_bounds = array<i64: 256, 512>}, {pipeline_mode = #tpu.pipeline_mode<synchronous>, transform_indices = @transform_8, window_bounds = array<i64: 512, 2816>}, {pipeline_mode = #tpu.pipeline_mode<synchronous>, transform_indices = @transform_9, window_bounds = array<i64: 1, 512>}, {pipeline_mode = #tpu.pipeline_mode<synchronous>, transform_indices = @transform_10, window_bounds = array<i64: 1, 256>}, {pipeline_mode = #tpu.pipeline_mode<synchronous>, transform_indices = @transform_11, window_bounds = array<i64: 1, 128>}, {pipeline_mode = #tpu.pipeline_mode<synchronous>, transform_indices = @transform_12, window_bounds = array<i64: 1, 28>}, {pipeline_mode = #tpu.pipeline_mode<synchronous>, transform_indices = @transform_13, window_bounds = array<i64: 1, 128>}, {pipeline_mode = #tpu.pipeline_mode<synchronous>, transform_indices = @transform_14, window_bounds = array<i64: 1, 256>}, {pipeline_mode = #tpu.pipeline_mode<synchronous>, transform_indices = @transform_15, window_bounds = array<i64: 1, 512>}, {pipeline_mode = #tpu.pipeline_mode<synchronous>, transform_indices = @transform_16, window_bounds = array<i64: 1, 2816>}, {transform_indices = @transform_17, window_bounds = array<i64: 6>}, {transform_indices = @transform_18, window_bounds = array<i64: 8, 2816>}]} {
    %c0 = arith.constant 0 : index
    %c0_0 = arith.constant 0 : index
    %0 = vector.load %arg1[%c0, %c0_0] : memref<8x2800xf32, #tpu.memory_space<vmem>>, vector<8x2800xf32>
    %1 = arith.truncf %0 : vector<8x2800xf32> to vector<8x2800xbf16>
    %c0_1 = arith.constant 0 : index
    %c0_2 = arith.constant 0 : index
    %2 = vector.load %arg2[%c0_1, %c0_2] : memref<2800x512xbf16, #tpu.memory_space<vmem>>, vector<2800x512xbf16>
    %cst = arith.constant dense<0.000000e+00> : vector<8x512xf32>
    %3 = tpu.matmul %1, %2, %cst {dimension_numbers = #tpu.dot_dimension_numbers<[1], [0], [0], [1], [0, 0, 1, 1], [], []>} : vector<8x2800xbf16>, vector<2800x512xbf16>, vector<8x512xf32> -> vector<8x512xf32>
    %c0_3 = arith.constant 0 : index
    %c0_4 = arith.constant 0 : index
    %4 = vector.load %arg10[%c0_3, %c0_4] : memref<1x512xf32, #tpu.memory_space<vmem>>, vector<1x512xf32>
    %5 = vector.broadcast %4 : vector<1x512xf32> to vector<8x512xf32>
    %6 = arith.addf %3, %5 : vector<8x512xf32>
    %c0_5 = arith.constant 0 : index
    %7 = memref.load %arg18[%c0_5] : memref<6xf32, #tpu.memory_space<smem>>
    %cst_6 = arith.constant 0.000000e+00 : f32
    %8 = vector.broadcast %cst_6 : f32 to vector<8x512xf32>
    %9 = arith.cmpf ogt, %6, %8 : vector<8x512xf32>
    %10 = vector.broadcast %7 : f32 to vector<8x512xf32>
    %11 = arith.mulf %10, %6 : vector<8x512xf32>
    %12 = arith.select %9, %6, %11 : vector<8x512xi1>, vector<8x512xf32>
    %13 = arith.truncf %12 : vector<8x512xf32> to vector<8x512xbf16>
    %c0_7 = arith.constant 0 : index
    %c0_8 = arith.constant 0 : index
    %14 = vector.load %arg3[%c0_7, %c0_8] : memref<512x256xbf16, #tpu.memory_space<vmem>>, vector<512x256xbf16>
    %cst_9 = arith.constant dense<0.000000e+00> : vector<8x256xf32>
    %15 = tpu.matmul %13, %14, %cst_9 {dimension_numbers = #tpu.dot_dimension_numbers<[1], [0], [0], [1], [0, 0, 1, 1], [], []>} : vector<8x512xbf16>, vector<512x256xbf16>, vector<8x256xf32> -> vector<8x256xf32>
    %c0_10 = arith.constant 0 : index
    %c0_11 = arith.constant 0 : index
    %16 = vector.load %arg11[%c0_10, %c0_11] : memref<1x256xf32, #tpu.memory_space<vmem>>, vector<1x256xf32>
    %17 = vector.broadcast %16 : vector<1x256xf32> to vector<8x256xf32>
    %18 = arith.addf %15, %17 : vector<8x256xf32>
    %c1 = arith.constant 1 : index
    %19 = memref.load %arg18[%c1] : memref<6xf32, #tpu.memory_space<smem>>
    %cst_12 = arith.constant 0.000000e+00 : f32
    %20 = vector.broadcast %cst_12 : f32 to vector<8x256xf32>
    %21 = arith.cmpf ogt, %18, %20 : vector<8x256xf32>
    %22 = vector.broadcast %19 : f32 to vector<8x256xf32>
    %23 = arith.mulf %22, %18 : vector<8x256xf32>
    %24 = arith.select %21, %18, %23 : vector<8x256xi1>, vector<8x256xf32>
    %25 = arith.truncf %24 : vector<8x256xf32> to vector<8x256xbf16>
    %c0_13 = arith.constant 0 : index
    %c0_14 = arith.constant 0 : index
    %26 = vector.load %arg4[%c0_13, %c0_14] : memref<256x128xbf16, #tpu.memory_space<vmem>>, vector<256x128xbf16>
    %cst_15 = arith.constant dense<0.000000e+00> : vector<8x128xf32>
    %27 = tpu.matmul %25, %26, %cst_15 {dimension_numbers = #tpu.dot_dimension_numbers<[1], [0], [0], [1], [0, 0, 1, 1], [], []>} : vector<8x256xbf16>, vector<256x128xbf16>, vector<8x128xf32> -> vector<8x128xf32>
    %c0_16 = arith.constant 0 : index
    %c0_17 = arith.constant 0 : index
    %28 = vector.load %arg12[%c0_16, %c0_17] : memref<1x128xf32, #tpu.memory_space<vmem>>, vector<1x128xf32>
    %29 = vector.broadcast %28 : vector<1x128xf32> to vector<8x128xf32>
    %30 = arith.addf %27, %29 : vector<8x128xf32>
    %c2 = arith.constant 2 : index
    %31 = memref.load %arg18[%c2] : memref<6xf32, #tpu.memory_space<smem>>
    %cst_18 = arith.constant 0.000000e+00 : f32
    %32 = vector.broadcast %cst_18 : f32 to vector<8x128xf32>
    %33 = arith.cmpf ogt, %30, %32 : vector<8x128xf32>
    %34 = vector.broadcast %31 : f32 to vector<8x128xf32>
    %35 = arith.mulf %34, %30 : vector<8x128xf32>
    %36 = arith.select %33, %30, %35 : vector<8x128xi1>, vector<8x128xf32>
    %37 = arith.truncf %36 : vector<8x128xf32> to vector<8x128xbf16>
    %c0_19 = arith.constant 0 : index
    %c0_20 = arith.constant 0 : index
    %38 = vector.load %arg5[%c0_19, %c0_20] : memref<128x28xbf16, #tpu.memory_space<vmem>>, vector<128x28xbf16>
    %cst_21 = arith.constant dense<0.000000e+00> : vector<8x28xf32>
    %39 = tpu.matmul %37, %38, %cst_21 {dimension_numbers = #tpu.dot_dimension_numbers<[1], [0], [0], [1], [0, 0, 1, 1], [], []>} : vector<8x128xbf16>, vector<128x28xbf16>, vector<8x28xf32> -> vector<8x28xf32>
    %c0_22 = arith.constant 0 : index
    %c0_23 = arith.constant 0 : index
    %40 = vector.load %arg13[%c0_22, %c0_23] : memref<1x28xf32, #tpu.memory_space<vmem>>, vector<1x28xf32>
    %41 = vector.broadcast %40 : vector<1x28xf32> to vector<8x28xf32>
    %42 = arith.addf %39, %41 : vector<8x28xf32>
    %43 = arith.truncf %42 : vector<8x28xf32> to vector<8x28xbf16>
    %c0_24 = arith.constant 0 : index
    %c0_25 = arith.constant 0 : index
    %44 = vector.load %arg6[%c0_24, %c0_25] : memref<28x128xbf16, #tpu.memory_space<vmem>>, vector<28x128xbf16>
    %cst_26 = arith.constant dense<0.000000e+00> : vector<8x128xf32>
    %45 = tpu.matmul %43, %44, %cst_26 {dimension_numbers = #tpu.dot_dimension_numbers<[1], [0], [0], [1], [0, 0, 1, 1], [], []>} : vector<8x28xbf16>, vector<28x128xbf16>, vector<8x128xf32> -> vector<8x128xf32>
    %c0_27 = arith.constant 0 : index
    %c0_28 = arith.constant 0 : index
    %46 = vector.load %arg14[%c0_27, %c0_28] : memref<1x128xf32, #tpu.memory_space<vmem>>, vector<1x128xf32>
    %47 = vector.broadcast %46 : vector<1x128xf32> to vector<8x128xf32>
    %48 = arith.addf %45, %47 : vector<8x128xf32>
    %c3 = arith.constant 3 : index
    %49 = memref.load %arg18[%c3] : memref<6xf32, #tpu.memory_space<smem>>
    %cst_29 = arith.constant 0.000000e+00 : f32
    %50 = vector.broadcast %cst_29 : f32 to vector<8x128xf32>
    %51 = arith.cmpf ogt, %48, %50 : vector<8x128xf32>
    %52 = vector.broadcast %49 : f32 to vector<8x128xf32>
    %53 = arith.mulf %52, %48 : vector<8x128xf32>
    %54 = arith.select %51, %48, %53 : vector<8x128xi1>, vector<8x128xf32>
    %55 = arith.truncf %54 : vector<8x128xf32> to vector<8x128xbf16>
    %c0_30 = arith.constant 0 : index
    %c0_31 = arith.constant 0 : index
    %56 = vector.load %arg7[%c0_30, %c0_31] : memref<128x256xbf16, #tpu.memory_space<vmem>>, vector<128x256xbf16>
    %cst_32 = arith.constant dense<0.000000e+00> : vector<8x256xf32>
    %57 = tpu.matmul %55, %56, %cst_32 {dimension_numbers = #tpu.dot_dimension_numbers<[1], [0], [0], [1], [0, 0, 1, 1], [], []>} : vector<8x128xbf16>, vector<128x256xbf16>, vector<8x256xf32> -> vector<8x256xf32>
    %c0_33 = arith.constant 0 : index
    %c0_34 = arith.constant 0 : index
    %58 = vector.load %arg15[%c0_33, %c0_34] : memref<1x256xf32, #tpu.memory_space<vmem>>, vector<1x256xf32>
    %59 = vector.broadcast %58 : vector<1x256xf32> to vector<8x256xf32>
    %60 = arith.addf %57, %59 : vector<8x256xf32>
    %c4 = arith.constant 4 : index
    %61 = memref.load %arg18[%c4] : memref<6xf32, #tpu.memory_space<smem>>
    %cst_35 = arith.constant 0.000000e+00 : f32
    %62 = vector.broadcast %cst_35 : f32 to vector<8x256xf32>
    %63 = arith.cmpf ogt, %60, %62 : vector<8x256xf32>
    %64 = vector.broadcast %61 : f32 to vector<8x256xf32>
    %65 = arith.mulf %64, %60 : vector<8x256xf32>
    %66 = arith.select %63, %60, %65 : vector<8x256xi1>, vector<8x256xf32>
    %67 = arith.truncf %66 : vector<8x256xf32> to vector<8x256xbf16>
    %c0_36 = arith.constant 0 : index
    %c0_37 = arith.constant 0 : index
    %68 = vector.load %arg8[%c0_36, %c0_37] : memref<256x512xbf16, #tpu.memory_space<vmem>>, vector<256x512xbf16>
    %cst_38 = arith.constant dense<0.000000e+00> : vector<8x512xf32>
    %69 = tpu.matmul %67, %68, %cst_38 {dimension_numbers = #tpu.dot_dimension_numbers<[1], [0], [0], [1], [0, 0, 1, 1], [], []>} : vector<8x256xbf16>, vector<256x512xbf16>, vector<8x512xf32> -> vector<8x512xf32>
    %c0_39 = arith.constant 0 : index
    %c0_40 = arith.constant 0 : index
    %70 = vector.load %arg16[%c0_39, %c0_40] : memref<1x512xf32, #tpu.memory_space<vmem>>, vector<1x512xf32>
    %71 = vector.broadcast %70 : vector<1x512xf32> to vector<8x512xf32>
    %72 = arith.addf %69, %71 : vector<8x512xf32>
    %c5 = arith.constant 5 : index
    %73 = memref.load %arg18[%c5] : memref<6xf32, #tpu.memory_space<smem>>
    %cst_41 = arith.constant 0.000000e+00 : f32
    %74 = vector.broadcast %cst_41 : f32 to vector<8x512xf32>
    %75 = arith.cmpf ogt, %72, %74 : vector<8x512xf32>
    %76 = vector.broadcast %73 : f32 to vector<8x512xf32>
    %77 = arith.mulf %76, %72 : vector<8x512xf32>
    %78 = arith.select %75, %72, %77 : vector<8x512xi1>, vector<8x512xf32>
    %79 = arith.truncf %78 : vector<8x512xf32> to vector<8x512xbf16>
    %c0_42 = arith.constant 0 : index
    %c0_43 = arith.constant 0 : index
    %80 = vector.load %arg9[%c0_42, %c0_43] : memref<512x2816xbf16, #tpu.memory_space<vmem>>, vector<512x2816xbf16>
    %cst_44 = arith.constant dense<0.000000e+00> : vector<8x2816xf32>
    %81 = tpu.matmul %79, %80, %cst_44 {dimension_numbers = #tpu.dot_dimension_numbers<[1], [0], [0], [1], [0, 0, 1, 1], [], []>} : vector<8x512xbf16>, vector<512x2816xbf16>, vector<8x2816xf32> -> vector<8x2816xf32>
    %c0_45 = arith.constant 0 : index
    %c0_46 = arith.constant 0 : index
    %82 = vector.load %arg17[%c0_45, %c0_46] : memref<1x2816xf32, #tpu.memory_space<vmem>>, vector<1x2816xf32>
    %83 = vector.broadcast %82 : vector<1x2816xf32> to vector<8x2816xf32>
    %84 = arith.addf %81, %83 : vector<8x2816xf32>
    %c0_47 = arith.constant 0 : index
    %c0_48 = arith.constant 0 : index
    %85 = vector.load %arg19[%c0_47, %c0_48] : memref<8x2816xf32, #tpu.memory_space<vmem>>, vector<8x2816xf32>
    tpu.vector_store %arg19[%c0_47, %c0_48], %84 {strides = array<i32>} : memref<8x2816xf32, #tpu.memory_space<vmem>>, vector<8x2816xf32>,
    return
  }
  func.func @transform_0(%arg0: i32) -> (i32, i32) {
    %c0_i32 = arith.constant 0 : i32
    %c0_i32_0 = arith.constant 0 : i32
    return %arg0, %c0_i32 : i32, i32
  }
  func.func @transform_1(%arg0: i32) -> (i32, i32) {
    %c0_i32 = arith.constant 0 : i32
    %c0_i32_0 = arith.constant 0 : i32
    %c0_i32_1 = arith.constant 0 : i32
    return %c0_i32, %c0_i32_0 : i32, i32
  }
  func.func @transform_2(%arg0: i32) -> (i32, i32) {
    %c0_i32 = arith.constant 0 : i32
    %c0_i32_0 = arith.constant 0 : i32
    %c0_i32_1 = arith.constant 0 : i32
    return %c0_i32, %c0_i32_0 : i32, i32
  }
  func.func @transform_3(%arg0: i32) -> (i32, i32) {
    %c0_i32 = arith.constant 0 : i32
    %c0_i32_0 = arith.constant 0 : i32
    %c0_i32_1 = arith.constant 0 : i32
    return %c0_i32, %c0_i32_0 : i32, i32
  }
  func.func @transform_4(%arg0: i32) -> (i32, i32) {
    %c0_i32 = arith.constant 0 : i32
    %c0_i32_0 = arith.constant 0 : i32
    %c0_i32_1 = arith.constant 0 : i32
    return %c0_i32, %c0_i32_0 : i32, i32
  }
  func.func @transform_5(%arg0: i32) -> (i32, i32) {
    %c0_i32 = arith.constant 0 : i32
    %c0_i32_0 = arith.constant 0 : i32
    %c0_i32_1 = arith.constant 0 : i32
    return %c0_i32, %c0_i32_0 : i32, i32
  }
  func.func @transform_6(%arg0: i32) -> (i32, i32) {
    %c0_i32 = arith.constant 0 : i32
    %c0_i32_0 = arith.constant 0 : i32
    %c0_i32_1 = arith.constant 0 : i32
    return %c0_i32, %c0_i32_0 : i32, i32
  }
  func.func @transform_7(%arg0: i32) -> (i32, i32) {
    %c0_i32 = arith.constant 0 : i32
    %c0_i32_0 = arith.constant 0 : i32
    %c0_i32_1 = arith.constant 0 : i32
    return %c0_i32, %c0_i32_0 : i32, i32
  }
  func.func @transform_8(%arg0: i32) -> (i32, i32) {
    %c0_i32 = arith.constant 0 : i32
    %c0_i32_0 = arith.constant 0 : i32
    %c0_i32_1 = arith.constant 0 : i32
    return %c0_i32, %c0_i32_0 : i32, i32
  }
  func.func @transform_9(%arg0: i32) -> (i32, i32) {
    %c0_i32 = arith.constant 0 : i32
    %c0_i32_0 = arith.constant 0 : i32
    %c0_i32_1 = arith.constant 0 : i32
    return %c0_i32, %c0_i32_0 : i32, i32
  }
  func.func @transform_10(%arg0: i32) -> (i32, i32) {
    %c0_i32 = arith.constant 0 : i32
    %c0_i32_0 = arith.constant 0 : i32
    %c0_i32_1 = arith.constant 0 : i32
    return %c0_i32, %c0_i32_0 : i32, i32
  }
  func.func @transform_11(%arg0: i32) -> (i32, i32) {
    %c0_i32 = arith.constant 0 : i32
    %c0_i32_0 = arith.constant 0 : i32
    %c0_i32_1 = arith.constant 0 : i32
    return %c0_i32, %c0_i32_0 : i32, i32
  }
  func.func @transform_12(%arg0: i32) -> (i32, i32) {
    %c0_i32 = arith.constant 0 : i32
    %c0_i32_0 = arith.constant 0 : i32
    %c0_i32_1 = arith.constant 0 : i32
    return %c0_i32, %c0_i32_0 : i32, i32
  }
  func.func @transform_13(%arg0: i32) -> (i32, i32) {
    %c0_i32 = arith.constant 0 : i32
    %c0_i32_0 = arith.constant 0 : i32
    %c0_i32_1 = arith.constant 0 : i32
    return %c0_i32, %c0_i32_0 : i32, i32
  }
  func.func @transform_14(%arg0: i32) -> (i32, i32) {
    %c0_i32 = arith.constant 0 : i32
    %c0_i32_0 = arith.constant 0 : i32
    %c0_i32_1 = arith.constant 0 : i32
    return %c0_i32, %c0_i32_0 : i32, i32
  }
  func.func @transform_15(%arg0: i32) -> (i32, i32) {
    %c0_i32 = arith.constant 0 : i32
    %c0_i32_0 = arith.constant 0 : i32
    %c0_i32_1 = arith.constant 0 : i32
    return %c0_i32, %c0_i32_0 : i32, i32
  }
  func.func @transform_16(%arg0: i32) -> (i32, i32) {
    %c0_i32 = arith.constant 0 : i32
    %c0_i32_0 = arith.constant 0 : i32
    %c0_i32_1 = arith.constant 0 : i32
    return %c0_i32, %c0_i32_0 : i32, i32
  }
  func.func @transform_17(%arg0: i32) -> i32 {
    %c0_i32 = arith.constant 0 : i32
    %c0_i32_0 = arith.constant 0 : i32
    return %c0_i32 : i32
  }
  func.func @transform_18(%arg0: i32) -> (i32, i32) {
    %c0_i32 = arith.constant 0 : i32
    %c0_i32_0 = arith.constant 0 : i32
    return %arg0, %c0_i32 : i32, i32
  }
}

</mosaic_0001>

<llo_original>
// kernel: tpu_custom_call.1
$region0: #{tpu_custom_call.1}
  #allocation0 [shape = 'u32[]', space=smem, size = 0x4, offset = 0x4, fixed_abs, tag = 'smem constant byte address 0x4 - core index']
  #allocation1 [shape = 'u32[144,128]{1,0:T(1,128)}', space=vmem, size = 0x12000, scoped, tag = 'internal scratch']
  %s0 = inlined_call_operand.hbm [shape: f32[24,2800], index: 0, kind: input, shape index: {}]
  %s1 = inlined_call_operand.hbm [shape: bf16[2800,512], index: 1, kind: input, shape index: {}]
  %s2 = inlined_call_operand.hbm [shape: bf16[512,256], index: 2, kind: input, shape index: {}]
  %s3 = inlined_call_operand.hbm [shape: bf16[256,128], index: 3, kind: input, shape index: {}]
  %s4 = inlined_call_operand.vmem [shape: bf16[128,28], index: 4, kind: input, shape index: {}]
  %s5 = inlined_call_operand.hbm [shape: bf16[28,128], index: 5, kind: input, shape index: {}]
  %s6 = inlined_call_operand.hbm [shape: bf16[128,256], index: 6, kind: input, shape index: {}]
  %s7 = inlined_call_operand.hbm [shape: bf16[256,512], index: 7, kind: input, shape index: {}]
  %s8 = inlined_call_operand.hbm [shape: bf16[512,2816], index: 8, kind: input, shape index: {}]
  %s9 = inlined_call_operand.hbm [shape: f32[1,512], index: 9, kind: input, shape index: {}]
  %s10 = inlined_call_operand.hbm [shape: f32[1,256], index: 10, kind: input, shape index: {}]
  %s11 = inlined_call_operand.hbm [shape: f32[1,128], index: 11, kind: input, shape index: {}]
  %s12 = inlined_call_operand.hbm [shape: f32[1,28], index: 12, kind: input, shape index: {}]
  %s13 = inlined_call_operand.hbm [shape: f32[1,128], index: 13, kind: input, shape index: {}]
  %s14 = inlined_call_operand.hbm [shape: f32[1,256], index: 14, kind: input, shape index: {}]
  %s15 = inlined_call_operand.hbm [shape: f32[1,512], index: 15, kind: input, shape index: {}]
  %s16 = inlined_call_operand.hbm [shape: f32[1,2816], index: 16, kind: input, shape index: {}]
  %s17 = inlined_call_operand.hbm [shape: f32[6], index: 17, kind: input, shape index: {}]
  %s18 = inlined_call_operand.hbm [shape: f32[24,2816], index: 18, kind: output, shape index: {}]
  %s19 = sld [smem:[#allocation0]]
  $region173: #{tpu_custom_call.1} parent=0
    _
  %s21 = ssub.s32 1, %s19
  %s22 = scalar_select 0, %s21, %s19
  $region1: #{tpu_custom_call.1} parent=0
    #allocation2 [shape = 'u8[180224]{0}', space=vmem, size = 0x2c000, scoped, tag = 'input window, operand 0']
    #allocation3 [shape = 's32[2]{0}', space=sflag, size = 0x8, scoped, tag = 'scoped memory for tpu_custom_call.1']
    #allocation4 [shape = 's32[2]{0}', space=sflag, size = 0x8, scoped, tag = 'scoped memory for tpu_custom_call.1']
    #allocation5 [shape = 's32[2]{0}', space=sflag, size = 0x8, scoped, tag = 'scoped memory for tpu_custom_call.1']
    #allocation6 [shape = 'u8[2867200]{0}', space=vmem, size = 0x2bc000, scoped, tag = 'input window, operand 1, single buffered']
    #allocation7 [shape = 's32[1]{0}', space=sflag, size = 0x4, scoped, tag = 'scoped memory for tpu_custom_call.1']
    #allocation8 [shape = 'u8[262144]{0}', space=vmem, size = 0x40000, scoped, tag = 'input window, operand 2, single buffered']
    #allocation9 [shape = 'u8[65536]{0}', space=vmem, size = 0x10000, scoped, tag = 'input window, operand 3, single buffered']
    #allocation10 [shape = 's32[1]{0}', space=sflag, size = 0x4, scoped, tag = 'scoped memory for tpu_custom_call.1']
    #allocation11 [shape = 'u8[8192]{0}', space=vmem, size = 0x2000, scoped, tag = 'input window, operand 5, single buffered']
    #allocation12 [shape = 'u8[65536]{0}', space=vmem, size = 0x10000, scoped, tag = 'input window, operand 6, single buffered']
    #allocation13 [shape = 's32[1]{0}', space=sflag, size = 0x4, scoped, tag = 'scoped memory for tpu_custom_call.1']
    #allocation14 [shape = 'u8[262144]{0}', space=vmem, size = 0x40000, scoped, tag = 'input window, operand 7, single buffered']
    #allocation15 [shape = 'u8[2883584]{0}', space=vmem, size = 0x2c0000, scoped, tag = 'input window, operand 8, single buffered']
    #allocation16 [shape = 's32[1]{0}', space=sflag, size = 0x4, scoped, tag = 'scoped memory for tpu_custom_call.1']
    #allocation17 [shape = 'u8[2048]{0}', space=vmem, size = 0x800, scoped, tag = 'input window, operand 9, single buffered']
    #allocation18 [shape = 'u8[1024]{0}', space=vmem, size = 0x400, scoped, tag = 'input window, operand 10, single buffered']
    #allocation19 [shape = 's32[1]{0}', space=sflag, size = 0x4, scoped, tag = 'scoped memory for tpu_custom_call.1']
    #allocation20 [shape = 'u8[512]{0}', space=vmem, size = 0x400, scoped, tag = 'input window, operand 11, single buffered']
    #allocation21 [shape = 'u8[512]{0}', space=vmem, size = 0x400, scoped, tag = 'input window, operand 12, single buffered']
    #allocation22 [shape = 's32[1]{0}', space=sflag, size = 0x4, scoped, tag = 'scoped memory for tpu_custom_call.1']
    #allocation23 [shape = 'u8[512]{0}', space=vmem, size = 0x400, scoped, tag = 'input window, operand 13, single buffered']
    #allocation24 [shape = 'u8[1024]{0}', space=vmem, size = 0x400, scoped, tag = 'input window, operand 14, single buffered']
    #allocation25 [shape = 's32[1]{0}', space=sflag, size = 0x4, scoped, tag = 'scoped memory for tpu_custom_call.1']
    #allocation26 [shape = 'u8[2048]{0}', space=vmem, size = 0x800, scoped, tag = 'input window, operand 15, single buffered']
    #allocation27 [shape = 'u8[11264]{0}', space=vmem, size = 0x2c00, scoped, tag = 'input window, operand 16, single buffered']
    #allocation28 [shape = 's32[1]{0}', space=sflag, size = 0x4, scoped, tag = 'scoped memory for tpu_custom_call.1']
    #allocation29 [shape = 'u8[512]{0}', space=smem, size = 0x200, scoped, tag = 'input window, operand 17, single buffered']
    #allocation30 [shape = 'u8[180224]{0}', space=vmem, size = 0x2c000, scoped, tag = 'output window, operand 0']
    %23 = vsyncpa [#allocation3], 0
    %s24 = scalar_lea.sflag [#allocation3], 1
    %25 = vsyncpa %s24, 0
    %26 = vsyncpa [#allocation7], 0
    %27 = vsyncpa [#allocation10], 0
    %28 = vsyncpa [#allocation13], 0
    %29 = vsyncpa [#allocation16], 0
    %30 = vsyncpa [#allocation19], 0
    %31 = vsyncpa [#allocation22], 0
    %32 = vsyncpa [#allocation25], 0
    %33 = vsyncpa [#allocation28], 0
    %34 = vsyncpa [#allocation5], 0
    %35 = vsyncpa [#allocation4], 0
    %s36 = scalar_lea.sflag [#allocation4], 1
    %37 = vsyncpa %s36, 0
    loop: start=0, step=1, limit=5
    $region2: #{tpu_custom_call.1} parent=1 // loop_pre_header
      _
    $region3: #{tpu_custom_call.1} parent=1 // loop_header
      %s39 = sphi 0, %s43
      %p40 = scmp.ge.s32.totalorder %s39, 5
      %s49 = sphi 0, %s51
      %s52 = sphi 0, %s49
      %s53 = sphi 0, %s52
      %s69 = sphi 0, %s53
      %s73 = sphi 0, %s73
      %s75 = sphi 0, %s73
      %s76 = sphi 0, %s75
      %s90 = sphi 0, %s76
      %s94 = sphi 0, %s94
      %s96 = sphi 0, %s94
      %s97 = sphi 0, %s96
      %s111 = sphi 0, %s97
      %s115 = sphi 0, %s115
      %s117 = sphi 0, %s115
      %s118 = sphi 0, %s117
      %s132 = sphi 0, %s118
      %s136 = sphi 0, %s136
      %s138 = sphi 0, %s136
      %s139 = sphi 0, %s138
      %s153 = sphi 0, %s139
      %s157 = sphi 0, %s157
      %s159 = sphi 0, %s157
      %s160 = sphi 0, %s159
      %s174 = sphi 0, %s160
      %s178 = sphi 0, %s178
      %s180 = sphi 0, %s178
      %s181 = sphi 0, %s180
      %s195 = sphi 0, %s181
      %s199 = sphi 0, %s199
      %s201 = sphi 0, %s199
      %s202 = sphi 0, %s201
      %s216 = sphi 0, %s202
      %s220 = sphi 0, %s220
      %s222 = sphi 0, %s220
      %s223 = sphi 0, %s222
      %s237 = sphi 0, %s223
      %s241 = sphi 0, %s241
      %s243 = sphi 0, %s241
      %s244 = sphi 0, %s243
      %s258 = sphi 0, %s244
      %s262 = sphi 0, %s262
      %s264 = sphi 0, %s262
      %s265 = sphi 0, %s264
      %s279 = sphi 0, %s265
      %s283 = sphi 0, %s283
      %s285 = sphi 0, %s283
      %s286 = sphi 0, %s285
      %s300 = sphi 0, %s286
      %s304 = sphi 0, %s304
      %s306 = sphi 0, %s304
      %s307 = sphi 0, %s306
      %s321 = sphi 0, %s307
      %s325 = sphi 0, %s325
      %s327 = sphi 0, %s325
      %s328 = sphi 0, %s327
      %s342 = sphi 0, %s328
      %s346 = sphi 0, %s346
      %s348 = sphi 0, %s346
      %s349 = sphi 0, %s348
      %s363 = sphi 0, %s349
      %s367 = sphi 0, %s367
      %s369 = sphi 0, %s367
      %s370 = sphi 0, %s369
      %s384 = sphi 0, %s370
      %s388 = sphi 0, %s388
      %s390 = sphi 0, %s388
      %s391 = sphi 0, %s390
      %s405 = sphi 0, %s391
      %s409 = sphi 0, %s409
      %s411 = sphi 0, %s409
      %s412 = sphi 0, %s411
      %s426 = sphi 0, %s412
      %s432 = sphi 0, %s434
      %s435 = sphi 0, %s432
      %s436 = sphi 0, %s435
      %s452 = sphi 0, %s436
    $region4: #{tpu_custom_call.1} parent=1 // loop_header_branch
      %42 = sbr.rel (%p40) target = $region8
    $region5: #{tpu_custom_call.1} parent=1 // loop_body
      %s44 = ssub.s32 %s39, 1
      %s45 = ssub.s32 %s39, 2
      %s46 = sadd.s32 %s39, 1
      %s47 = ssub.s32 %s39, %s46
      %p48 = scmp.eq.s32.totalorder %s47, 0
      %s50 = sadd.s32 %s49, 1
      %s51 = scalar_select %p48, %s49, %s50
      %p54 = pneg %p48
      %p55 = scmp.eq.s32.totalorder %s39, 2
      %p56 = por %p54, %p55
      %p57 = scmp.ne.s32.totalorder %s49, %s52
      %p58 = scmp.eq.s32.totalorder %s39, 0
      %p59 = por %p57, %p58
      %p60 = scmp.ne.s32.totalorder %s49, %s52
      %p61 = scmp.eq.s32.totalorder %s44, 2
      %p62 = por %p60, %p61
      %p63 = scmp.ne.s32.totalorder %s52, %s53
      %p64 = scmp.eq.s32.totalorder %s44, 0
      %p65 = por %p63, %p64
      %p66 = scmp.ne.s32.totalorder %s52, %s53
      %p67 = scmp.eq.s32.totalorder %s45, 2
      %p68 = por %p66, %p67
      %p70 = scmp.ne.s32.totalorder %s53, %s69
      %p71 = scmp.eq.s32.totalorder %s45, 0
      %p72 = por %p70, %p71
      %s74 = sadd.s32 %s73, 1
      %p77 = scmp.eq.s32.totalorder %s39, 2
      %p78 = scmp.ne.s32.totalorder %s73, %s75
      %p79 = scmp.eq.s32.totalorder %s39, 0
      %p80 = por %p78, %p79
      %p81 = scmp.ne.s32.totalorder %s73, %s75
      %p82 = scmp.eq.s32.totalorder %s44, 2
      %p83 = por %p81, %p82
      %p84 = scmp.ne.s32.totalorder %s75, %s76
      %p85 = scmp.eq.s32.totalorder %s44, 0
      %p86 = por %p84, %p85
      %p87 = scmp.ne.s32.totalorder %s75, %s76
      %p88 = scmp.eq.s32.totalorder %s45, 2
      %p89 = por %p87, %p88
      %p91 = scmp.ne.s32.totalorder %s76, %s90
      %p92 = scmp.eq.s32.totalorder %s45, 0
      %p93 = por %p91, %p92
      %s95 = sadd.s32 %s94, 1
      %p98 = scmp.eq.s32.totalorder %s39, 2
      %p99 = scmp.ne.s32.totalorder %s94, %s96
      %p100 = scmp.eq.s32.totalorder %s39, 0
      %p101 = por %p99, %p100
      %p102 = scmp.ne.s32.totalorder %s94, %s96
      %p103 = scmp.eq.s32.totalorder %s44, 2
      %p104 = por %p102, %p103
      %p105 = scmp.ne.s32.totalorder %s96, %s97
      %p106 = scmp.eq.s32.totalorder %s44, 0
      %p107 = por %p105, %p106
      %p108 = scmp.ne.s32.totalorder %s96, %s97
      %p109 = scmp.eq.s32.totalorder %s45, 2
      %p110 = por %p108, %p109
      %p112 = scmp.ne.s32.totalorder %s97, %s111
      %p113 = scmp.eq.s32.totalorder %s45, 0
      %p114 = por %p112, %p113
      %s116 = sadd.s32 %s115, 1
      %p119 = scmp.eq.s32.totalorder %s39, 2
      %p120 = scmp.ne.s32.totalorder %s115, %s117
      %p121 = scmp.eq.s32.totalorder %s39, 0
      %p122 = por %p120, %p121
      %p123 = scmp.ne.s32.totalorder %s115, %s117
      %p124 = scmp.eq.s32.totalorder %s44, 2
      %p125 = por %p123, %p124
      %p126 = scmp.ne.s32.totalorder %s117, %s118
      %p127 = scmp.eq.s32.totalorder %s44, 0
      %p128 = por %p126, %p127
      %p129 = scmp.ne.s32.totalorder %s117, %s118
      %p130 = scmp.eq.s32.totalorder %s45, 2
      %p131 = por %p129, %p130
      %p133 = scmp.ne.s32.totalorder %s118, %s132
      %p134 = scmp.eq.s32.totalorder %s45, 0
      %p135 = por %p133, %p134
      %s137 = sadd.s32 %s136, 1
      %p140 = scmp.eq.s32.totalorder %s39, 2
      %p141 = scmp.ne.s32.totalorder %s136, %s138
      %p142 = scmp.eq.s32.totalorder %s39, 0
      %p143 = por %p141, %p142
      %p144 = scmp.ne.s32.totalorder %s136, %s138
      %p145 = scmp.eq.s32.totalorder %s44, 2
      %p146 = por %p144, %p145
      %p147 = scmp.ne.s32.totalorder %s138, %s139
      %p148 = scmp.eq.s32.totalorder %s44, 0
      %p149 = por %p147, %p148
      %p150 = scmp.ne.s32.totalorder %s138, %s139
      %p151 = scmp.eq.s32.totalorder %s45, 2
      %p152 = por %p150, %p151
      %p154 = scmp.ne.s32.totalorder %s139, %s153
      %p155 = scmp.eq.s32.totalorder %s45, 0
      %p156 = por %p154, %p155
      %s158 = sadd.s32 %s157, 1
      %p161 = scmp.eq.s32.totalorder %s39, 2
      %p162 = scmp.ne.s32.totalorder %s157, %s159
      %p163 = scmp.eq.s32.totalorder %s39, 0
      %p164 = por %p162, %p163
      %p165 = scmp.ne.s32.totalorder %s157, %s159
      %p166 = scmp.eq.s32.totalorder %s44, 2
      %p167 = por %p165, %p166
      %p168 = scmp.ne.s32.totalorder %s159, %s160
      %p169 = scmp.eq.s32.totalorder %s44, 0
      %p170 = por %p168, %p169
      %p171 = scmp.ne.s32.totalorder %s159, %s160
      %p172 = scmp.eq.s32.totalorder %s45, 2
      %p173 = por %p171, %p172
      %p175 = scmp.ne.s32.totalorder %s160, %s174
      %p176 = scmp.eq.s32.totalorder %s45, 0
      %p177 = por %p175, %p176
      %s179 = sadd.s32 %s178, 1
      %p182 = scmp.eq.s32.totalorder %s39, 2
      %p183 = scmp.ne.s32.totalorder %s178, %s180
      %p184 = scmp.eq.s32.totalorder %s39, 0
      %p185 = por %p183, %p184
      %p186 = scmp.ne.s32.totalorder %s178, %s180
      %p187 = scmp.eq.s32.totalorder %s44, 2
      %p188 = por %p186, %p187
      %p189 = scmp.ne.s32.totalorder %s180, %s181
      %p190 = scmp.eq.s32.totalorder %s44, 0
      %p191 = por %p189, %p190
      %p192 = scmp.ne.s32.totalorder %s180, %s181
      %p193 = scmp.eq.s32.totalorder %s45, 2
      %p194 = por %p192, %p193
      %p196 = scmp.ne.s32.totalorder %s181, %s195
      %p197 = scmp.eq.s32.totalorder %s45, 0
      %p198 = por %p196, %p197
      %s200 = sadd.s32 %s199, 1
      %p203 = scmp.eq.s32.totalorder %s39, 2
      %p204 = scmp.ne.s32.totalorder %s199, %s201
      %p205 = scmp.eq.s32.totalorder %s39, 0
      %p206 = por %p204, %p205
      %p207 = scmp.ne.s32.totalorder %s199, %s201
      %p208 = scmp.eq.s32.totalorder %s44, 2
      %p209 = por %p207, %p208
      %p210 = scmp.ne.s32.totalorder %s201, %s202
      %p211 = scmp.eq.s32.totalorder %s44, 0
      %p212 = por %p210, %p211
      %p213 = scmp.ne.s32.totalorder %s201, %s202
      %p214 = scmp.eq.s32.totalorder %s45, 2
      %p215 = por %p213, %p214
      %p217 = scmp.ne.s32.totalorder %s202, %s216
      %p218 = scmp.eq.s32.totalorder %s45, 0
      %p219 = por %p217, %p218
      %s221 = sadd.s32 %s220, 1
      %p224 = scmp.eq.s32.totalorder %s39, 2
      %p225 = scmp.ne.s32.totalorder %s220, %s222
      %p226 = scmp.eq.s32.totalorder %s39, 0
      %p227 = por %p225, %p226
      %p228 = scmp.ne.s32.totalorder %s220, %s222
      %p229 = scmp.eq.s32.totalorder %s44, 2
      %p230 = por %p228, %p229
      %p231 = scmp.ne.s32.totalorder %s222, %s223
      %p232 = scmp.eq.s32.totalorder %s44, 0
      %p233 = por %p231, %p232
      %p234 = scmp.ne.s32.totalorder %s222, %s223
      %p235 = scmp.eq.s32.totalorder %s45, 2
      %p236 = por %p234, %p235
      %p238 = scmp.ne.s32.totalorder %s223, %s237
      %p239 = scmp.eq.s32.totalorder %s45, 0
      %p240 = por %p238, %p239
      %s242 = sadd.s32 %s241, 1
      %p245 = scmp.eq.s32.totalorder %s39, 2
      %p246 = scmp.ne.s32.totalorder %s241, %s243
      %p247 = scmp.eq.s32.totalorder %s39, 0
      %p248 = por %p246, %p247
      %p249 = scmp.ne.s32.totalorder %s241, %s243
      %p250 = scmp.eq.s32.totalorder %s44, 2
      %p251 = por %p249, %p250
      %p252 = scmp.ne.s32.totalorder %s243, %s244
      %p253 = scmp.eq.s32.totalorder %s44, 0
      %p254 = por %p252, %p253
      %p255 = scmp.ne.s32.totalorder %s243, %s244
      %p256 = scmp.eq.s32.totalorder %s45, 2
      %p257 = por %p255, %p256
      %p259 = scmp.ne.s32.totalorder %s244, %s258
      %p260 = scmp.eq.s32.totalorder %s45, 0
      %p261 = por %p259, %p260
      %s263 = sadd.s32 %s262, 1
      %p266 = scmp.eq.s32.totalorder %s39, 2
      %p267 = scmp.ne.s32.totalorder %s262, %s264
      %p268 = scmp.eq.s32.totalorder %s39, 0
      %p269 = por %p267, %p268
      %p270 = scmp.ne.s32.totalorder %s262, %s264
      %p271 = scmp.eq.s32.totalorder %s44, 2
      %p272 = por %p270, %p271
      %p273 = scmp.ne.s32.totalorder %s264, %s265
      %p274 = scmp.eq.s32.totalorder %s44, 0
      %p275 = por %p273, %p274
      %p276 = scmp.ne.s32.totalorder %s264, %s265
      %p277 = scmp.eq.s32.totalorder %s45, 2
      %p278 = por %p276, %p277
      %p280 = scmp.ne.s32.totalorder %s265, %s279
      %p281 = scmp.eq.s32.totalorder %s45, 0
      %p282 = por %p280, %p281
      %s284 = sadd.s32 %s283, 1
      %p287 = scmp.eq.s32.totalorder %s39, 2
      %p288 = scmp.ne.s32.totalorder %s283, %s285
      %p289 = scmp.eq.s32.totalorder %s39, 0
      %p290 = por %p288, %p289
      %p291 = scmp.ne.s32.totalorder %s283, %s285
      %p292 = scmp.eq.s32.totalorder %s44, 2
      %p293 = por %p291, %p292
      %p294 = scmp.ne.s32.totalorder %s285, %s286
      %p295 = scmp.eq.s32.totalorder %s44, 0
      %p296 = por %p294, %p295
      %p297 = scmp.ne.s32.totalorder %s285, %s286
      %p298 = scmp.eq.s32.totalorder %s45, 2
      %p299 = por %p297, %p298
      %p301 = scmp.ne.s32.totalorder %s286, %s300
      %p302 = scmp.eq.s32.totalorder %s45, 0
      %p303 = por %p301, %p302
      %s305 = sadd.s32 %s304, 1
      %p308 = scmp.eq.s32.totalorder %s39, 2
      %p309 = scmp.ne.s32.totalorder %s304, %s306
      %p310 = scmp.eq.s32.totalorder %s39, 0
      %p311 = por %p309, %p310
      %p312 = scmp.ne.s32.totalorder %s304, %s306
      %p313 = scmp.eq.s32.totalorder %s44, 2
      %p314 = por %p312, %p313
      %p315 = scmp.ne.s32.totalorder %s306, %s307
      %p316 = scmp.eq.s32.totalorder %s44, 0
      %p317 = por %p315, %p316
      %p318 = scmp.ne.s32.totalorder %s306, %s307
      %p319 = scmp.eq.s32.totalorder %s45, 2
      %p320 = por %p318, %p319
      %p322 = scmp.ne.s32.totalorder %s307, %s321
      %p323 = scmp.eq.s32.totalorder %s45, 0
      %p324 = por %p322, %p323
      %s326 = sadd.s32 %s325, 1
      %p329 = scmp.eq.s32.totalorder %s39, 2
      %p330 = scmp.ne.s32.totalorder %s325, %s327
      %p331 = scmp.eq.s32.totalorder %s39, 0
      %p332 = por %p330, %p331
      %p333 = scmp.ne.s32.totalorder %s325, %s327
      %p334 = scmp.eq.s32.totalorder %s44, 2
      %p335 = por %p333, %p334
      %p336 = scmp.ne.s32.totalorder %s327, %s328
      %p337 = scmp.eq.s32.totalorder %s44, 0
      %p338 = por %p336, %p337
      %p339 = scmp.ne.s32.totalorder %s327, %s328
      %p340 = scmp.eq.s32.totalorder %s45, 2
      %p341 = por %p339, %p340
      %p343 = scmp.ne.s32.totalorder %s328, %s342
      %p344 = scmp.eq.s32.totalorder %s45, 0
      %p345 = por %p343, %p344
      %s347 = sadd.s32 %s346, 1
      %p350 = scmp.eq.s32.totalorder %s39, 2
      %p351 = scmp.ne.s32.totalorder %s346, %s348
      %p352 = scmp.eq.s32.totalorder %s39, 0
      %p353 = por %p351, %p352
      %p354 = scmp.ne.s32.totalorder %s346, %s348
      %p355 = scmp.eq.s32.totalorder %s44, 2
      %p356 = por %p354, %p355
      %p357 = scmp.ne.s32.totalorder %s348, %s349
      %p358 = scmp.eq.s32.totalorder %s44, 0
      %p359 = por %p357, %p358
      %p360 = scmp.ne.s32.totalorder %s348, %s349
      %p361 = scmp.eq.s32.totalorder %s45, 2
      %p362 = por %p360, %p361
      %p364 = scmp.ne.s32.totalorder %s349, %s363
      %p365 = scmp.eq.s32.totalorder %s45, 0
      %p366 = por %p364, %p365
      %s368 = sadd.s32 %s367, 1
      %p371 = scmp.eq.s32.totalorder %s39, 2
      %p372 = scmp.ne.s32.totalorder %s367, %s369
      %p373 = scmp.eq.s32.totalorder %s39, 0
      %p374 = por %p372, %p373
      %p375 = scmp.ne.s32.totalorder %s367, %s369
      %p376 = scmp.eq.s32.totalorder %s44, 2
      %p377 = por %p375, %p376
      %p378 = scmp.ne.s32.totalorder %s369, %s370
      %p379 = scmp.eq.s32.totalorder %s44, 0
      %p380 = por %p378, %p379
      %p381 = scmp.ne.s32.totalorder %s369, %s370
      %p382 = scmp.eq.s32.totalorder %s45, 2
      %p383 = por %p381, %p382
      %p385 = scmp.ne.s32.totalorder %s370, %s384
      %p386 = scmp.eq.s32.totalorder %s45, 0
      %p387 = por %p385, %p386
      %s389 = sadd.s32 %s388, 1
      %p392 = scmp.eq.s32.totalorder %s39, 2
      %p393 = scmp.ne.s32.totalorder %s388, %s390
      %p394 = scmp.eq.s32.totalorder %s39, 0
      %p395 = por %p393, %p394
      %p396 = scmp.ne.s32.totalorder %s388, %s390
      %p397 = scmp.eq.s32.totalorder %s44, 2
      %p398 = por %p396, %p397
      %p399 = scmp.ne.s32.totalorder %s390, %s391
      %p400 = scmp.eq.s32.totalorder %s44, 0
      %p401 = por %p399, %p400
      %p402 = scmp.ne.s32.totalorder %s390, %s391
      %p403 = scmp.eq.s32.totalorder %s45, 2
      %p404 = por %p402, %p403
      %p406 = scmp.ne.s32.totalorder %s391, %s405
      %p407 = scmp.eq.s32.totalorder %s45, 0
      %p408 = por %p406, %p407
      %s410 = sadd.s32 %s409, 1
      %p413 = scmp.eq.s32.totalorder %s39, 2
      %p414 = scmp.ne.s32.totalorder %s409, %s411
      %p415 = scmp.eq.s32.totalorder %s39, 0
      %p416 = por %p414, %p415
      %p417 = scmp.ne.s32.totalorder %s409, %s411
      %p418 = scmp.eq.s32.totalorder %s44, 2
      %p419 = por %p417, %p418
      %p420 = scmp.ne.s32.totalorder %s411, %s412
      %p421 = scmp.eq.s32.totalorder %s44, 0
      %p422 = por %p420, %p421
      %p423 = scmp.ne.s32.totalorder %s411, %s412
      %p424 = scmp.eq.s32.totalorder %s45, 2
      %p425 = por %p423, %p424
      %p427 = scmp.ne.s32.totalorder %s412, %s426
      %p428 = scmp.eq.s32.totalorder %s45, 0
      %p429 = por %p427, %p428
      %s430 = ssub.s32 %s39, %s46
      %p431 = scmp.eq.s32.totalorder %s430, 0
      %s433 = sadd.s32 %s432, 1
      %s434 = scalar_select %p431, %s432, %s433
      %p437 = pneg %p431
      %p438 = scmp.eq.s32.totalorder %s39, 2
      %p439 = por %p437, %p438
      %p440 = scmp.ne.s32.totalorder %s432, %s435
      %p441 = scmp.eq.s32.totalorder %s39, 0
      %p442 = por %p440, %p441
      %p443 = scmp.ne.s32.totalorder %s432, %s435
      %p444 = scmp.eq.s32.totalorder %s44, 2
      %p445 = por %p443, %p444
      %p446 = scmp.ne.s32.totalorder %s435, %s436
      %p447 = scmp.eq.s32.totalorder %s44, 0
      %p448 = por %p446, %p447
      %p449 = scmp.ne.s32.totalorder %s435, %s436
      %p450 = scmp.eq.s32.totalorder %s45, 2
      %p451 = por %p449, %p450
      %p453 = scmp.ne.s32.totalorder %s436, %s452
      %p454 = scmp.eq.s32.totalorder %s45, 0
      %p455 = por %p453, %p454
      %p456 = scmp.le.s32.totalorder 1, %s39
      %p457 = scmp.lt.s32.totalorder %s39, 4
      %p458 = pnand %p456, %p457
      %p459 = pneg %p458
      // Predicated region
      $region9: #{tpu_custom_call.1} parent=5 // pred_check
        _
      $region10: #{tpu_custom_call.1} parent=5 // pred_check_branch
        %461 = sbr.rel (%p458) target = $region12
      $region11: #{tpu_custom_call.1} parent=5 // pred_region
        %s462 = ssub.s32 %s39, 1
        // Predicated region
        $region13: #{tpu_custom_call.1} parent=11 // pred_check
          %p463 = pneg %p86
        $region14: #{tpu_custom_call.1} parent=11 // pred_check_branch
          %465 = sbr.rel (%p463) target = $region16
        $region15: #{tpu_custom_call.1} parent=11 // pred_region
          %s467 = ssub.s32 89600, 89600
          %468 = vsyncadd [#allocation7], %s467
          %s469 = sshll.u32 [#allocation6], 4
          %s470 = int_to_ptr.vmem [resolvable:$true] %s469
          %475 = dma.hbm_to_vmem [thread:$0]  %s1, 89600, %s470, [#allocation7], 256, 256, 16
        $region16: #{tpu_custom_call.1} parent=11 // pred_fallthru
          _
        // Predicated region
        $region17: #{tpu_custom_call.1} parent=11 // pred_check
          %p476 = pneg %p107
        $region18: #{tpu_custom_call.1} parent=11 // pred_check_branch
          %478 = sbr.rel (%p476) target = $region20
        $region19: #{tpu_custom_call.1} parent=11 // pred_region
          %s480 = ssub.s32 8192, 8192
          %481 = vsyncadd [#allocation7], %s480
          %s482 = sshll.u32 [#allocation8], 4
          %s483 = int_to_ptr.vmem [resolvable:$true] %s482
          %488 = dma.hbm_to_vmem [thread:$0]  %s2, 8192, %s483, [#allocation7], 128, 128, 8
        $region20: #{tpu_custom_call.1} parent=11 // pred_fallthru
          _
        // Predicated region
        $region21: #{tpu_custom_call.1} parent=11 // pred_check
          %p489 = pneg %p128
        $region22: #{tpu_custom_call.1} parent=11 // pred_check_branch
          %491 = sbr.rel (%p489) target = $region24
        $region23: #{tpu_custom_call.1} parent=11 // pred_region
          %s493 = ssub.s32 2048, 2048
          %494 = vsyncadd [#allocation10], %s493
          %s495 = sshll.u32 [#allocation9], 4
          %s496 = int_to_ptr.vmem [resolvable:$true] %s495
          %501 = dma.hbm_to_vmem [thread:$0]  %s3, 2048, %s496, [#allocation10], 64, 64, 4
        $region24: #{tpu_custom_call.1} parent=11 // pred_fallthru
          _
        // Predicated region
        $region25: #{tpu_custom_call.1} parent=11 // pred_check
          %p502 = pneg %p149
        $region26: #{tpu_custom_call.1} parent=11 // pred_check_branch
          %504 = sbr.rel (%p502) target = $region28
        $region27: #{tpu_custom_call.1} parent=11 // pred_region
          _
        $region28: #{tpu_custom_call.1} parent=11 // pred_fallthru
          _
        // Predicated region
        $region29: #{tpu_custom_call.1} parent=11 // pred_check
          %p505 = pneg %p170
        $region30: #{tpu_custom_call.1} parent=11 // pred_check_branch
          %507 = sbr.rel (%p505) target = $region32
        $region31: #{tpu_custom_call.1} parent=11 // pred_region
          %s509 = ssub.s32 256, 256
          %510 = vsyncadd [#allocation10], %s509
          %s511 = sshll.u32 [#allocation11], 4
          %s512 = int_to_ptr.vmem [resolvable:$true] %s511
          %517 = dma.hbm_to_vmem [thread:$0]  %s5, 256, %s512, [#allocation10], 64, 64, 4
        $region32: #{tpu_custom_call.1} parent=11 // pred_fallthru
          _
        // Predicated region
        $region33: #{tpu_custom_call.1} parent=11 // pred_check
          %p518 = pneg %p191
        $region34: #{tpu_custom_call.1} parent=11 // pred_check_branch
          %520 = sbr.rel (%p518) target = $region36
        $region35: #{tpu_custom_call.1} parent=11 // pred_region
          %s522 = ssub.s32 2048, 2048
          %523 = vsyncadd [#allocation13], %s522
          %s524 = sshll.u32 [#allocation12], 4
          %s525 = int_to_ptr.vmem [resolvable:$true] %s524
          %530 = dma.hbm_to_vmem [thread:$0]  %s6, 2048, %s525, [#allocation13], 128, 128, 8
        $region36: #{tpu_custom_call.1} parent=11 // pred_fallthru
          _
        // Predicated region
        $region37: #{tpu_custom_call.1} parent=11 // pred_check
          %p531 = pneg %p212
        $region38: #{tpu_custom_call.1} parent=11 // pred_check_branch
          %533 = sbr.rel (%p531) target = $region40
        $region39: #{tpu_custom_call.1} parent=11 // pred_region
          %s535 = ssub.s32 8192, 8192
          %536 = vsyncadd [#allocation13], %s535
          %s537 = sshll.u32 [#allocation14], 4
          %s538 = int_to_ptr.vmem [resolvable:$true] %s537
          %543 = dma.hbm_to_vmem [thread:$0]  %s7, 8192, %s538, [#allocation13], 256, 256, 16
        $region40: #{tpu_custom_call.1} parent=11 // pred_fallthru
          _
        // Predicated region
        $region41: #{tpu_custom_call.1} parent=11 // pred_check
          %p544 = pneg %p233
        $region42: #{tpu_custom_call.1} parent=11 // pred_check_branch
          %546 = sbr.rel (%p544) target = $region44
        $region43: #{tpu_custom_call.1} parent=11 // pred_region
          %s548 = ssub.s32 90112, 90112
          %549 = vsyncadd [#allocation16], %s548
          %s550 = sshll.u32 [#allocation15], 4
          %s551 = int_to_ptr.vmem [resolvable:$true] %s550
          %556 = dma.hbm_to_vmem [thread:$0]  %s8, 90112, %s551, [#allocation16], 1408, 1408, 88
        $region44: #{tpu_custom_call.1} parent=11 // pred_fallthru
          _
        // Predicated region
        $region45: #{tpu_custom_call.1} parent=11 // pred_check
          %p557 = pneg %p254
        $region46: #{tpu_custom_call.1} parent=11 // pred_check_branch
          %559 = sbr.rel (%p557) target = $region48
        $region47: #{tpu_custom_call.1} parent=11 // pred_region
          %s561 = ssub.s32 64, 64
          %562 = vsyncadd [#allocation16], %s561
          %s564 = sshll.u32 [#allocation17], 4
          %s565 = int_to_ptr.vmem [resolvable:$true] %s564
          %567 = dma.hbm_to_vmem [thread:$0]  %s9, 64, %s565, [#allocation16]
        $region48: #{tpu_custom_call.1} parent=11 // pred_fallthru
          _
        // Predicated region
        $region49: #{tpu_custom_call.1} parent=11 // pred_check
          %p568 = pneg %p275
        $region50: #{tpu_custom_call.1} parent=11 // pred_check_branch
          %570 = sbr.rel (%p568) target = $region52
        $region51: #{tpu_custom_call.1} parent=11 // pred_region
          %s572 = ssub.s32 32, 32
          %573 = vsyncadd [#allocation19], %s572
          %s575 = sshll.u32 [#allocation18], 4
          %s576 = int_to_ptr.vmem [resolvable:$true] %s575
          %578 = dma.hbm_to_vmem [thread:$0]  %s10, 32, %s576, [#allocation19]
        $region52: #{tpu_custom_call.1} parent=11 // pred_fallthru
          _
        // Predicated region
        $region53: #{tpu_custom_call.1} parent=11 // pred_check
          %p579 = pneg %p296
        $region54: #{tpu_custom_call.1} parent=11 // pred_check_branch
          %581 = sbr.rel (%p579) target = $region56
        $region55: #{tpu_custom_call.1} parent=11 // pred_region
          %s583 = ssub.s32 16, 16
          %584 = vsyncadd [#allocation19], %s583
          %s586 = sshll.u32 [#allocation20], 4
          %s587 = int_to_ptr.vmem [resolvable:$true] %s586
          %589 = dma.hbm_to_vmem [thread:$0]  %s11, 16, %s587, [#allocation19]
        $region56: #{tpu_custom_call.1} parent=11 // pred_fallthru
          _
        // Predicated region
        $region57: #{tpu_custom_call.1} parent=11 // pred_check
          %p590 = pneg %p317
        $region58: #{tpu_custom_call.1} parent=11 // pred_check_branch
          %592 = sbr.rel (%p590) target = $region60
        $region59: #{tpu_custom_call.1} parent=11 // pred_region
          %s594 = ssub.s32 16, 16
          %595 = vsyncadd [#allocation22], %s594
          %s597 = sshll.u32 [#allocation21], 4
          %s598 = int_to_ptr.vmem [resolvable:$true] %s597
          %600 = dma.hbm_to_vmem [thread:$0]  %s12, 16, %s598, [#allocation22]
        $region60: #{tpu_custom_call.1} parent=11 // pred_fallthru
          _
        // Predicated region
        $region61: #{tpu_custom_call.1} parent=11 // pred_check
          %p601 = pneg %p338
        $region62: #{tpu_custom_call.1} parent=11 // pred_check_branch
          %603 = sbr.rel (%p601) target = $region64
        $region63: #{tpu_custom_call.1} parent=11 // pred_region
          %s605 = ssub.s32 16, 16
          %606 = vsyncadd [#allocation22], %s605
          %s608 = sshll.u32 [#allocation23], 4
          %s609 = int_to_ptr.vmem [resolvable:$true] %s608
          %611 = dma.hbm_to_vmem [thread:$0]  %s13, 16, %s609, [#allocation22]
        $region64: #{tpu_custom_call.1} parent=11 // pred_fallthru
          _
        // Predicated region
        $region65: #{tpu_custom_call.1} parent=11 // pred_check
          %p612 = pneg %p359
        $region66: #{tpu_custom_call.1} parent=11 // pred_check_branch
          %614 = sbr.rel (%p612) target = $region68
        $region67: #{tpu_custom_call.1} parent=11 // pred_region
          %s616 = ssub.s32 32, 32
          %617 = vsyncadd [#allocation25], %s616
          %s619 = sshll.u32 [#allocation24], 4
          %s620 = int_to_ptr.vmem [resolvable:$true] %s619
          %622 = dma.hbm_to_vmem [thread:$0]  %s14, 32, %s620, [#allocation25]
        $region68: #{tpu_custom_call.1} parent=11 // pred_fallthru
          _
        // Predicated region
        $region69: #{tpu_custom_call.1} parent=11 // pred_check
          %p623 = pneg %p380
        $region70: #{tpu_custom_call.1} parent=11 // pred_check_branch
          %625 = sbr.rel (%p623) target = $region72
        $region71: #{tpu_custom_call.1} parent=11 // pred_region
          %s627 = ssub.s32 64, 64
          %628 = vsyncadd [#allocation25], %s627
          %s630 = sshll.u32 [#allocation26], 4
          %s631 = int_to_ptr.vmem [resolvable:$true] %s630
          %633 = dma.hbm_to_vmem [thread:$0]  %s15, 64, %s631, [#allocation25]
        $region72: #{tpu_custom_call.1} parent=11 // pred_fallthru
          _
        // Predicated region
        $region73: #{tpu_custom_call.1} parent=11 // pred_check
          %p634 = pneg %p401
        $region74: #{tpu_custom_call.1} parent=11 // pred_check_branch
          %636 = sbr.rel (%p634) target = $region76
        $region75: #{tpu_custom_call.1} parent=11 // pred_region
          %s638 = ssub.s32 352, 352
          %639 = vsyncadd [#allocation28], %s638
          %s641 = sshll.u32 [#allocation27], 4
          %s642 = int_to_ptr.vmem [resolvable:$true] %s641
          %644 = dma.hbm_to_vmem [thread:$0]  %s16, 352, %s642, [#allocation28]
        $region76: #{tpu_custom_call.1} parent=11 // pred_fallthru
          _
        // Predicated region
        $region77: #{tpu_custom_call.1} parent=11 // pred_check
          %p645 = pneg %p422
        $region78: #{tpu_custom_call.1} parent=11 // pred_check_branch
          %647 = sbr.rel (%p645) target = $region80
        $region79: #{tpu_custom_call.1} parent=11 // pred_region
          %s649 = ssub.s32 16, 16
          %650 = vsyncadd [#allocation5], %s649
          %653 = dma.hbm_to_smem %s17, 16, [#allocation29], [#allocation5]
        $region80: #{tpu_custom_call.1} parent=11 // pred_fallthru
          _
      $region12: #{tpu_custom_call.1} parent=5 // pred_fallthru
        _
      %p654 = scmp.lt.s32.totalorder %s39, 3
      // Predicated region
      $region81: #{tpu_custom_call.1} parent=5 // pred_check
        %p655 = pneg %p654
      $region82: #{tpu_custom_call.1} parent=5 // pred_check_branch
        %657 = sbr.rel (%p655) target = $region84
      $region83: #{tpu_custom_call.1} parent=5 // pred_region
        // Predicated region
        $region85: #{tpu_custom_call.1} parent=83 // pred_check
          %p658 = pneg %p59
        $region86: #{tpu_custom_call.1} parent=83 // pred_check_branch
          %660 = sbr.rel (%p658) target = $region88
        $region87: #{tpu_custom_call.1} parent=83 // pred_region
          %s661 = sand.u32 %s49, 1
          %s662 = scalar_lea.sflag [#allocation3], %s661
          %s663 = sand.u32 %s49, 1
          %s664 = smul.addr %s663, 176
          %s665 = scalar_lea.vmem [#allocation2], %s664
          %s667 = ssub.s32 2816, 2816
          %668 = vsyncadd %s662, %s667
          %s669 = smul.addr %s39, 22
          %s670 = smul.addr %s669, 128
          %s671 = scalar_lea.hbm %s0, %s670
          %s673 = sshll.u32 %s665, 4
          %s674 = int_to_ptr.vmem [resolvable:$true] %s673
          %676 = dma.hbm_to_vmem [thread:$0]  %s671, 2816, %s674, %s662
        $region88: #{tpu_custom_call.1} parent=83 // pred_fallthru
          _
      $region84: #{tpu_custom_call.1} parent=5 // pred_fallthru
        _
      %p677 = scmp.le.s32.totalorder 1, %s39
      %p678 = scmp.lt.s32.totalorder %s39, 4
      %p679 = pnand %p677, %p678
      %p680 = pneg %p679
      // Predicated region
      $region89: #{tpu_custom_call.1} parent=5 // pred_check
        _
      $region90: #{tpu_custom_call.1} parent=5 // pred_check_branch
        %682 = sbr.rel (%p679) target = $region92
      $region91: #{tpu_custom_call.1} parent=5 // pred_region
        %s683 = ssub.s32 %s39, 1
        %s684 = sand.u32 %s52, 1
        %s685 = scalar_lea.sflag [#allocation3], %s684
        %s686 = sand.u32 %s52, 1
        %s687 = smul.addr %s686, 176
        %s688 = scalar_lea.vmem [#allocation2], %s687
        // Predicated region
        $region93: #{tpu_custom_call.1} parent=91 // pred_check
          %p689 = pneg %p65
        $region94: #{tpu_custom_call.1} parent=91 // pred_check_branch
          %691 = sbr.rel (%p689) target = $region96
        $region95: #{tpu_custom_call.1} parent=91 // pred_region
          %692 = dma.done %s685, 2816
        $region96: #{tpu_custom_call.1} parent=91 // pred_fallthru
          _
        // Predicated region
        $region97: #{tpu_custom_call.1} parent=91 // pred_check
          %p693 = pneg %p86
        $region98: #{tpu_custom_call.1} parent=91 // pred_check_branch
          %695 = sbr.rel (%p693) target = $region100
        $region99: #{tpu_custom_call.1} parent=91 // pred_region
          %696 = dma.done [#allocation7], 89600
        $region100: #{tpu_custom_call.1} parent=91 // pred_fallthru
          _
        // Predicated region
        $region101: #{tpu_custom_call.1} parent=91 // pred_check
          %p697 = pneg %p107
        $region102: #{tpu_custom_call.1} parent=91 // pred_check_branch
          %699 = sbr.rel (%p697) target = $region104
        $region103: #{tpu_custom_call.1} parent=91 // pred_region
          %700 = dma.done [#allocation7], 8192
        $region104: #{tpu_custom_call.1} parent=91 // pred_fallthru
          _
        // Predicated region
        $region105: #{tpu_custom_call.1} parent=91 // pred_check
          %p701 = pneg %p128
        $region106: #{tpu_custom_call.1} parent=91 // pred_check_branch
          %703 = sbr.rel (%p701) target = $region108
        $region107: #{tpu_custom_call.1} parent=91 // pred_region
          %704 = dma.done [#allocation10], 2048
        $region108: #{tpu_custom_call.1} parent=91 // pred_fallthru
          _
        // Predicated region
        $region109: #{tpu_custom_call.1} parent=91 // pred_check
          %p705 = pneg %p170
        $region110: #{tpu_custom_call.1} parent=91 // pred_check_branch
          %707 = sbr.rel (%p705) target = $region112
        $region111: #{tpu_custom_call.1} parent=91 // pred_region
          %708 = dma.done [#allocation10], 256
        $region112: #{tpu_custom_call.1} parent=91 // pred_fallthru
          _
        // Predicated region
        $region113: #{tpu_custom_call.1} parent=91 // pred_check
          %p709 = pneg %p191
        $region114: #{tpu_custom_call.1} parent=91 // pred_check_branch
          %711 = sbr.rel (%p709) target = $region116
        $region115: #{tpu_custom_call.1} parent=91 // pred_region
          %712 = dma.done [#allocation13], 2048
        $region116: #{tpu_custom_call.1} parent=91 // pred_fallthru
          _
        // Predicated region
        $region117: #{tpu_custom_call.1} parent=91 // pred_check
          %p713 = pneg %p212
        $region118: #{tpu_custom_call.1} parent=91 // pred_check_branch
          %715 = sbr.rel (%p713) target = $region120
        $region119: #{tpu_custom_call.1} parent=91 // pred_region
          %716 = dma.done [#allocation13], 8192
        $region120: #{tpu_custom_call.1} parent=91 // pred_fallthru
          _
        // Predicated region
        $region121: #{tpu_custom_call.1} parent=91 // pred_check
          %p717 = pneg %p233
        $region122: #{tpu_custom_call.1} parent=91 // pred_check_branch
          %719 = sbr.rel (%p717) target = $region124
        $region123: #{tpu_custom_call.1} parent=91 // pred_region
          %720 = dma.done [#allocation16], 90112
        $region124: #{tpu_custom_call.1} parent=91 // pred_fallthru
          _
        // Predicated region
        $region125: #{tpu_custom_call.1} parent=91 // pred_check
          %p721 = pneg %p254
        $region126: #{tpu_custom_call.1} parent=91 // pred_check_branch
          %723 = sbr.rel (%p721) target = $region128
        $region127: #{tpu_custom_call.1} parent=91 // pred_region
          %724 = dma.done [#allocation16], 64
        $region128: #{tpu_custom_call.1} parent=91 // pred_fallthru
          _
        // Predicated region
        $region129: #{tpu_custom_call.1} parent=91 // pred_check
          %p725 = pneg %p275
        $region130: #{tpu_custom_call.1} parent=91 // pred_check_branch
          %727 = sbr.rel (%p725) target = $region132
        $region131: #{tpu_custom_call.1} parent=91 // pred_region
          %728 = dma.done [#allocation19], 32
        $region132: #{tpu_custom_call.1} parent=91 // pred_fallthru
          _
        // Predicated region
        $region133: #{tpu_custom_call.1} parent=91 // pred_check
          %p729 = pneg %p296
        $region134: #{tpu_custom_call.1} parent=91 // pred_check_branch
          %731 = sbr.rel (%p729) target = $region136
        $region135: #{tpu_custom_call.1} parent=91 // pred_region
          %732 = dma.done [#allocation19], 16
        $region136: #{tpu_custom_call.1} parent=91 // pred_fallthru
          _
        // Predicated region
        $region137: #{tpu_custom_call.1} parent=91 // pred_check
          %p733 = pneg %p317
        $region138: #{tpu_custom_call.1} parent=91 // pred_check_branch
          %735 = sbr.rel (%p733) target = $region140
        $region139: #{tpu_custom_call.1} parent=91 // pred_region
          %736 = dma.done [#allocation22], 16
        $region140: #{tpu_custom_call.1} parent=91 // pred_fallthru
          _
        // Predicated region
        $region141: #{tpu_custom_call.1} parent=91 // pred_check
          %p737 = pneg %p338
        $region142: #{tpu_custom_call.1} parent=91 // pred_check_branch
          %739 = sbr.rel (%p737) target = $region144
        $region143: #{tpu_custom_call.1} parent=91 // pred_region
          %740 = dma.done [#allocation22], 16
        $region144: #{tpu_custom_call.1} parent=91 // pred_fallthru
          _
        // Predicated region
        $region145: #{tpu_custom_call.1} parent=91 // pred_check
          %p741 = pneg %p359
        $region146: #{tpu_custom_call.1} parent=91 // pred_check_branch
          %743 = sbr.rel (%p741) target = $region148
        $region147: #{tpu_custom_call.1} parent=91 // pred_region
          %744 = dma.done [#allocation25], 32
        $region148: #{tpu_custom_call.1} parent=91 // pred_fallthru
          _
        // Predicated region
        $region149: #{tpu_custom_call.1} parent=91 // pred_check
          %p745 = pneg %p380
        $region150: #{tpu_custom_call.1} parent=91 // pred_check_branch
          %747 = sbr.rel (%p745) target = $region152
        $region151: #{tpu_custom_call.1} parent=91 // pred_region
          %748 = dma.done [#allocation25], 64
        $region152: #{tpu_custom_call.1} parent=91 // pred_fallthru
          _
        // Predicated region
        $region153: #{tpu_custom_call.1} parent=91 // pred_check
          %p749 = pneg %p401
        $region154: #{tpu_custom_call.1} parent=91 // pred_check_branch
          %751 = sbr.rel (%p749) target = $region156
        $region155: #{tpu_custom_call.1} parent=91 // pred_region
          %752 = dma.done [#allocation28], 352
        $region156: #{tpu_custom_call.1} parent=91 // pred_fallthru
          _
        // Predicated region
        $region157: #{tpu_custom_call.1} parent=91 // pred_check
          %p753 = pneg %p422
        $region158: #{tpu_custom_call.1} parent=91 // pred_check_branch
          %755 = sbr.rel (%p753) target = $region160
        $region159: #{tpu_custom_call.1} parent=91 // pred_region
          %756 = dma.done [#allocation5], 16
        $region160: #{tpu_custom_call.1} parent=91 // pred_fallthru
          _
        %757 = sfence
        %s758 = sand.u32 %s52, 1
        %s759 = scalar_lea.sflag [#allocation3], %s758
        %s760 = sand.u32 %s52, 1
        %s761 = smul.addr %s760, 176
        %s762 = scalar_lea.vmem [#allocation2], %s761
        %p763 = pneg %p65
        %p764 = pneg %p62
        %p765 = pneg %p86
        %p766 = pneg %p83
        %p767 = pneg %p107
        %p768 = pneg %p104
        %p769 = pneg %p128
        %p770 = pneg %p125
        %p771 = pneg %p149
        %p772 = pneg %p146
        %p773 = pneg %p170
        %p774 = pneg %p167
        %p775 = pneg %p191
        %p776 = pneg %p188
        %p777 = pneg %p212
        %p778 = pneg %p209
        %p779 = pneg %p233
        %p780 = pneg %p230
        %p781 = pneg %p254
        %p782 = pneg %p251
        %p783 = pneg %p275
        %p784 = pneg %p272
        %p785 = pneg %p296
        %p786 = pneg %p293
        %p787 = pneg %p317
        %p788 = pneg %p314
        %p789 = pneg %p338
        %p790 = pneg %p335
        %p791 = pneg %p359
        %p792 = pneg %p356
        %p793 = pneg %p380
        %p794 = pneg %p377
        %p795 = pneg %p401
        %p796 = pneg %p398
        %p797 = pneg %p422
        %p798 = pneg %p419
        %p799 = pneg %p448
        %p800 = pneg %p445
        %s801 = sand.u32 %s435, 1
        %s802 = scalar_lea.sflag [#allocation4], %s801
        %s803 = sand.u32 %s435, 1
        %s804 = smul.addr %s803, 176
        %s805 = scalar_lea.vmem [#allocation30], %s804
        %v807 = vld [vmem:[%s688] sm:$0xff]
        %v808 = vld [vmem:[%s688 + $0x8] sm:$0xff]
        %v809 = vld [vmem:[%s688 + $0x10] sm:$0xff]
        %v810 = vld [vmem:[%s688 + $0x18] sm:$0xff]
        %v811 = vld [vmem:[%s688 + $0x20] sm:$0xff]
        %v812 = vld [vmem:[%s688 + $0x28] sm:$0xff]
        %v813 = vld [vmem:[%s688 + $0x30] sm:$0xff]
        %v814 = vld [vmem:[%s688 + $0x38] sm:$0xff]
        %v815 = vld [vmem:[%s688 + $0x40] sm:$0xff]
        %v816 = vld [vmem:[%s688 + $0x48] sm:$0xff]
        %v817 = vld [vmem:[%s688 + $0x50] sm:$0xff]
        %v818 = vld [vmem:[%s688 + $0x58] sm:$0xff]
        %v819 = vld [vmem:[%s688 + $0x60] sm:$0xff]
        %v820 = vld [vmem:[%s688 + $0x68] sm:$0xff]
        %v821 = vld [vmem:[%s688 + $0x70] sm:$0xff]
        %v822 = vld [vmem:[%s688 + $0x78] sm:$0xff]
        %v823 = vld [vmem:[%s688 + $0x80] sm:$0xff]
        %v824 = vld [vmem:[%s688 + $0x88] sm:$0xff]
        %v825 = vld [vmem:[%s688 + $0x90] sm:$0xff]
        %v826 = vld [vmem:[%s688 + $0x98] sm:$0xff]
        %v827 = vld [vmem:[%s688 + $0xa0] sm:$0xff]
        %v828 = vld [vmem:[%s688 + $0xa8] sm:$0xff]
        %v829 = vpack.c.bf16 %v807, %v807
        %v830 = vpack.c.bf16 %v808, %v808
        %v831 = vpack.c.bf16 %v809, %v809
        %v832 = vpack.c.bf16 %v810, %v810
        %v833 = vpack.c.bf16 %v811, %v811
        %v834 = vpack.c.bf16 %v812, %v812
        %v835 = vpack.c.bf16 %v813, %v813
        %v836 = vpack.c.bf16 %v814, %v814
        %v837 = vpack.c.bf16 %v815, %v815
        %v838 = vpack.c.bf16 %v816, %v816
        %v839 = vpack.c.bf16 %v817, %v817
        %v840 = vpack.c.bf16 %v818, %v818
        %v841 = vpack.c.bf16 %v819, %v819
        %v842 = vpack.c.bf16 %v820, %v820
        %v843 = vpack.c.bf16 %v821, %v821
        %v844 = vpack.c.bf16 %v822, %v822
        %v845 = vpack.c.bf16 %v823, %v823
        %v846 = vpack.c.bf16 %v824, %v824
        %v847 = vpack.c.bf16 %v825, %v825
        %v848 = vpack.c.bf16 %v826, %v826
        %v849 = vpack.c.bf16 %v827, %v827
        %v850 = vpack.c.bf16 %v828, %v828
        %v851 = vld [vmem:[#allocation6] sm:$0xff]
        %v852 = vld [vmem:[#allocation6 + $0x8] sm:$0xff]
        %v853 = vld [vmem:[#allocation6 + $0x10] sm:$0xff]
        %v854 = vld [vmem:[#allocation6 + $0x18] sm:$0xff]
        %v855 = vld [vmem:[#allocation6 + $0x20] sm:$0xff]
        %v856 = vld [vmem:[#allocation6 + $0x28] sm:$0xff]
        %v857 = vld [vmem:[#allocation6 + $0x30] sm:$0xff]
        %v858 = vld [vmem:[#allocation6 + $0x38] sm:$0xff]
        %v859 = vld [vmem:[#allocation6 + $0x40] sm:$0xff]
        %v860 = vld [vmem:[#allocation6 + $0x48] sm:$0xff]
        %v861 = vld [vmem:[#allocation6 + $0x50] sm:$0xff]
        %v862 = vld [vmem:[#allocation6 + $0x58] sm:$0xff]
        %v863 = vld [vmem:[#allocation6 + $0x60] sm:$0xff]
        %v864 = vld [vmem:[#allocation6 + $0x68] sm:$0xff]
        %v865 = vld [vmem:[#allocation6 + $0x70] sm:$0xff]
        %v866 = vld [vmem:[#allocation6 + $0x78] sm:$0xff]
        %v867 = vld [vmem:[#allocation6 + $0x80] sm:$0xff]
        %v868 = vld [vmem:[#allocation6 + $0x88] sm:$0xff]
        %v869 = vld [vmem:[#allocation6 + $0x90] sm:$0xff]
        %v870 = vld [vmem:[#allocation6 + $0x98] sm:$0xff]
        %v871 = vld [vmem:[#allocation6 + $0xa0] sm:$0xff]
        %v872 = vld [vmem:[#allocation6 + $0xa8] sm:$0xff]
        %v873 = vld [vmem:[#allocation6 + $0xb0] sm:$0xff]
        %v874 = vld [vmem:[#allocation6 + $0xb8] sm:$0xff]
        %v875 = vld [vmem:[#allocation6 + $0xc0] sm:$0xff]
        %v876 = vld [vmem:[#allocation6 + $0xc8] sm:$0xff]
        %v877 = vld [vmem:[#allocation6 + $0xd0] sm:$0xff]
        %v878 = vld [vmem:[#allocation6 + $0xd8] sm:$0xff]
        %v879 = vld [vmem:[#allocation6 + $0xe0] sm:$0xff]
        %v880 = vld [vmem:[#allocation6 + $0xe8] sm:$0xff]
        %v881 = vld [vmem:[#allocation6 + $0xf0] sm:$0xff]
        %v882 = vld [vmem:[#allocation6 + $0xf8] sm:$0xff]
        %v883 = vld [vmem:[#allocation6 + $0x100] sm:$0xff]
        %v884 = vld [vmem:[#allocation6 + $0x108] sm:$0xff]
        %v885 = vld [vmem:[#allocation6 + $0x110] sm:$0xff]
        %v886 = vld [vmem:[#allocation6 + $0x118] sm:$0xff]
        %v887 = vld [vmem:[#allocation6 + $0x120] sm:$0xff]
        %v888 = vld [vmem:[#allocation6 + $0x128] sm:$0xff]
        %v889 = vld [vmem:[#allocation6 + $0x130] sm:$0xff]
        %v890 = vld [vmem:[#allocation6 + $0x138] sm:$0xff]
        %v891 = vld [vmem:[#allocation6 + $0x140] sm:$0xff]
        %v892 = vld [vmem:[#allocation6 + $0x148] sm:$0xff]
        %v893 = vld [vmem:[#allocation6 + $0x150] sm:$0xff]
        %v894 = vld [vmem:[#allocation6 + $0x158] sm:$0xff]
        %v895 = vld [vmem:[#allocation6 + $0x160] sm:$0xff]
        %v896 = vld [vmem:[#allocation6 + $0x168] sm:$0xff]
        %v897 = vld [vmem:[#allocation6 + $0x170] sm:$0xff]
        %v898 = vld [vmem:[#allocation6 + $0x178] sm:$0xff]
        %v899 = vld [vmem:[#allocation6 + $0x180] sm:$0xff]
        %v900 = vld [vmem:[#allocation6 + $0x188] sm:$0xff]
        %v901 = vld [vmem:[#allocation6 + $0x190] sm:$0xff]
        %v902 = vld [vmem:[#allocation6 + $0x198] sm:$0xff]
        %v903 = vld [vmem:[#allocation6 + $0x1a0] sm:$0xff]
        %v904 = vld [vmem:[#allocation6 + $0x1a8] sm:$0xff]
        %v905 = vld [vmem:[#allocation6 + $0x1b0] sm:$0xff]
        %v906 = vld [vmem:[#allocation6 + $0x1b8] sm:$0xff]
        %v907 = vld [vmem:[#allocation6 + $0x1c0] sm:$0xff]
        %v908 = vld [vmem:[#allocation6 + $0x1c8] sm:$0xff]
        %v909 = vld [vmem:[#allocation6 + $0x1d0] sm:$0xff]
        %v910 = vld [vmem:[#allocation6 + $0x1d8] sm:$0xff]
        %v911 = vld [vmem:[#allocation6 + $0x1e0] sm:$0xff]
        %v912 = vld [vmem:[#allocation6 + $0x1e8] sm:$0xff]
        %v913 = vld [vmem:[#allocation6 + $0x1f0] sm:$0xff]
        %v914 = vld [vmem:[#allocation6 + $0x1f8] sm:$0xff]
        %v915 = vld [vmem:[#allocation6 + $0x200] sm:$0xff]
        %v916 = vld [vmem:[#allocation6 + $0x208] sm:$0xff]
        %v917 = vld [vmem:[#allocation6 + $0x210] sm:$0xff]
        %v918 = vld [vmem:[#allocation6 + $0x218] sm:$0xff]
        %v919 = vld [vmem:[#allocation6 + $0x220] sm:$0xff]
        %v920 = vld [vmem:[#allocation6 + $0x228] sm:$0xff]
        %v921 = vld [vmem:[#allocation6 + $0x230] sm:$0xff]
        %v922 = vld [vmem:[#allocation6 + $0x238] sm:$0xff]
        %v923 = vld [vmem:[#allocation6 + $0x240] sm:$0xff]
        %v924 = vld [vmem:[#allocation6 + $0x248] sm:$0xff]
        %v925 = vld [vmem:[#allocation6 + $0x250] sm:$0xff]
        %v926 = vld [vmem:[#allocation6 + $0x258] sm:$0xff]
        %v927 = vld [vmem:[#allocation6 + $0x260] sm:$0xff]
        %v928 = vld [vmem:[#allocation6 + $0x268] sm:$0xff]
        %v929 = vld [vmem:[#allocation6 + $0x270] sm:$0xff]
        %v930 = vld [vmem:[#allocation6 + $0x278] sm:$0xff]
        %v931 = vld [vmem:[#allocation6 + $0x280] sm:$0xff]
        %v932 = vld [vmem:[#allocation6 + $0x288] sm:$0xff]
        %v933 = vld [vmem:[#allocation6 + $0x290] sm:$0xff]
        %v934 = vld [vmem:[#allocation6 + $0x298] sm:$0xff]
        %v935 = vld [vmem:[#allocation6 + $0x2a0] sm:$0xff]
        %v936 = vld [vmem:[#allocation6 + $0x2a8] sm:$0xff]
        %v937 = vld [vmem:[#allocation6 + $0x2b0] sm:$0xff]
        %v938 = vld [vmem:[#allocation6 + $0x2b8] sm:$0xff]
        %v939 = vld [vmem:[#allocation6 + $0x2c0] sm:$0xff]
        %v940 = vld [vmem:[#allocation6 + $0x2c8] sm:$0xff]
        %v941 = vld [vmem:[#allocation6 + $0x2d0] sm:$0xff]
        %v942 = vld [vmem:[#allocation6 + $0x2d8] sm:$0xff]
        %v943 = vld [vmem:[#allocation6 + $0x2e0] sm:$0xff]
        %v944 = vld [vmem:[#allocation6 + $0x2e8] sm:$0xff]
        %v945 = vld [vmem:[#allocation6 + $0x2f0] sm:$0xff]
        %v946 = vld [vmem:[#allocation6 + $0x2f8] sm:$0xff]
        %v947 = vld [vmem:[#allocation6 + $0x300] sm:$0xff]
        %v948 = vld [vmem:[#allocation6 + $0x308] sm:$0xff]
        %v949 = vld [vmem:[#allocation6 + $0x310] sm:$0xff]
        %v950 = vld [vmem:[#allocation6 + $0x318] sm:$0xff]
        %v951 = vld [vmem:[#allocation6 + $0x320] sm:$0xff]
        %v952 = vld [vmem:[#allocation6 + $0x328] sm:$0xff]
        %v953 = vld [vmem:[#allocation6 + $0x330] sm:$0xff]
        %v954 = vld [vmem:[#allocation6 + $0x338] sm:$0xff]
        %v955 = vld [vmem:[#allocation6 + $0x340] sm:$0xff]
        %v956 = vld [vmem:[#allocation6 + $0x348] sm:$0xff]
        %v957 = vld [vmem:[#allocation6 + $0x350] sm:$0xff]
        %v958 = vld [vmem:[#allocation6 + $0x358] sm:$0xff]
        %v959 = vld [vmem:[#allocation6 + $0x360] sm:$0xff]
        %v960 = vld [vmem:[#allocation6 + $0x368] sm:$0xff]
        %v961 = vld [vmem:[#allocation6 + $0x370] sm:$0xff]
        %v962 = vld [vmem:[#allocation6 + $0x378] sm:$0xff]
        %v963 = vld [vmem:[#allocation6 + $0x380] sm:$0xff]
        %v964 = vld [vmem:[#allocation6 + $0x388] sm:$0xff]
        %v965 = vld [vmem:[#allocation6 + $0x390] sm:$0xff]
        %v966 = vld [vmem:[#allocation6 + $0x398] sm:$0xff]
        %v967 = vld [vmem:[#allocation6 + $0x3a0] sm:$0xff]
        %v968 = vld [vmem:[#allocation6 + $0x3a8] sm:$0xff]
        %v969 = vld [vmem:[#allocation6 + $0x3b0] sm:$0xff]
        %v970 = vld [vmem:[#allocation6 + $0x3b8] sm:$0xff]
        %v971 = vld [vmem:[#allocation6 + $0x3c0] sm:$0xff]
        %v972 = vld [vmem:[#allocation6 + $0x3c8] sm:$0xff]
        %v973 = vld [vmem:[#allocation6 + $0x3d0] sm:$0xff]
        %v974 = vld [vmem:[#allocation6 + $0x3d8] sm:$0xff]
        %v975 = vld [vmem:[#allocation6 + $0x3e0] sm:$0xff]
        %v976 = vld [vmem:[#allocation6 + $0x3e8] sm:$0xff]
        %v977 = vld [vmem:[#allocation6 + $0x3f0] sm:$0xff]
        %v978 = vld [vmem:[#allocation6 + $0x3f8] sm:$0xff]
        %v979 = vld [vmem:[#allocation6 + $0x400] sm:$0xff]
        %v980 = vld [vmem:[#allocation6 + $0x408] sm:$0xff]
        %v981 = vld [vmem:[#allocation6 + $0x410] sm:$0xff]
        %v982 = vld [vmem:[#allocation6 + $0x418] sm:$0xff]
        %v983 = vld [vmem:[#allocation6 + $0x420] sm:$0xff]
        %v984 = vld [vmem:[#allocation6 + $0x428] sm:$0xff]
        %v985 = vld [vmem:[#allocation6 + $0x430] sm:$0xff]
        %v986 = vld [vmem:[#allocation6 + $0x438] sm:$0xff]
        %v987 = vld [vmem:[#allocation6 + $0x440] sm:$0xff]
        %v988 = vld [vmem:[#allocation6 + $0x448] sm:$0xff]
        %v989 = vld [vmem:[#allocation6 + $0x450] sm:$0xff]
        %v990 = vld [vmem:[#allocation6 + $0x458] sm:$0xff]
        %v991 = vld [vmem:[#allocation6 + $0x460] sm:$0xff]
        %v992 = vld [vmem:[#allocation6 + $0x468] sm:$0xff]
        %v993 = vld [vmem:[#allocation6 + $0x470] sm:$0xff]
        %v994 = vld [vmem:[#allocation6 + $0x478] sm:$0xff]
        %v995 = vld [vmem:[#allocation6 + $0x480] sm:$0xff]
        %v996 = vld [vmem:[#allocation6 + $0x488] sm:$0xff]
        %v997 = vld [vmem:[#allocation6 + $0x490] sm:$0xff]
        %v998 = vld [vmem:[#allocation6 + $0x498] sm:$0xff]
        %v999 = vld [vmem:[#allocation6 + $0x4a0] sm:$0xff]
        %v1000 = vld [vmem:[#allocation6 + $0x4a8] sm:$0xff]
        %v1001 = vld [vmem:[#allocation6 + $0x4b0] sm:$0xff]
        %v1002 = vld [vmem:[#allocation6 + $0x4b8] sm:$0xff]
        %v1003 = vld [vmem:[#allocation6 + $0x4c0] sm:$0xff]
        %v1004 = vld [vmem:[#allocation6 + $0x4c8] sm:$0xff]
        %v1005 = vld [vmem:[#allocation6 + $0x4d0] sm:$0xff]
        %v1006 = vld [vmem:[#allocation6 + $0x4d8] sm:$0xff]
        %v1007 = vld [vmem:[#allocation6 + $0x4e0] sm:$0xff]
        %v1008 = vld [vmem:[#allocation6 + $0x4e8] sm:$0xff]
        %v1009 = vld [vmem:[#allocation6 + $0x4f0] sm:$0xff]
        %v1010 = vld [vmem:[#allocation6 + $0x4f8] sm:$0xff]
        %v1011 = vld [vmem:[#allocation6 + $0x500] sm:$0xff]
        %v1012 = vld [vmem:[#allocation6 + $0x508] sm:$0xff]
        %v1013 = vld [vmem:[#allocation6 + $0x510] sm:$0xff]
        %v1014 = vld [vmem:[#allocation6 + $0x518] sm:$0xff]
        %v1015 = vld [vmem:[#allocation6 + $0x520] sm:$0xff]
        %v1016 = vld [vmem:[#allocation6 + $0x528] sm:$0xff]
        %v1017 = vld [vmem:[#allocation6 + $0x530] sm:$0xff]
        %v1018 = vld [vmem:[#allocation6 + $0x538] sm:$0xff]
        %v1019 = vld [vmem:[#allocation6 + $0x540] sm:$0xff]
        %v1020 = vld [vmem:[#allocation6 + $0x548] sm:$0xff]
        %v1021 = vld [vmem:[#allocation6 + $0x550] sm:$0xff]
        %v1022 = vld [vmem:[#allocation6 + $0x558] sm:$0xff]
        %v1023 = vld [vmem:[#allocation6 + $0x560] sm:$0xff]
        %v1024 = vld [vmem:[#allocation6 + $0x568] sm:$0xff]
        %v1025 = vld [vmem:[#allocation6 + $0x570] sm:$0xff]
        %v1026 = vld [vmem:[#allocation6 + $0x578] sm:$0xff]
        %v1027 = vld [vmem:[#allocation6 + $0x580] sm:$0xff]
        %v1028 = vld [vmem:[#allocation6 + $0x588] sm:$0xff]
        %v1029 = vld [vmem:[#allocation6 + $0x590] sm:$0xff]
        %v1030 = vld [vmem:[#allocation6 + $0x598] sm:$0xff]
        %v1031 = vld [vmem:[#allocation6 + $0x5a0] sm:$0xff]
        %v1032 = vld [vmem:[#allocation6 + $0x5a8] sm:$0xff]
        %v1033 = vld [vmem:[#allocation6 + $0x5b0] sm:$0xff]
        %v1034 = vld [vmem:[#allocation6 + $0x5b8] sm:$0xff]
        %v1035 = vld [vmem:[#allocation6 + $0x5c0] sm:$0xff]
        %v1036 = vld [vmem:[#allocation6 + $0x5c8] sm:$0xff]
        %v1037 = vld [vmem:[#allocation6 + $0x5d0] sm:$0xff]
        %v1038 = vld [vmem:[#allocation6 + $0x5d8] sm:$0xff]
        %v1039 = vld [vmem:[#allocation6 + $0x5e0] sm:$0xff]
        %v1040 = vld [vmem:[#allocation6 + $0x5e8] sm:$0xff]
        %v1041 = vld [vmem:[#allocation6 + $0x5f0] sm:$0xff]
        %v1042 = vld [vmem:[#allocation6 + $0x5f8] sm:$0xff]
        %v1043 = vld [vmem:[#allocation6 + $0x600] sm:$0xff]
        %v1044 = vld [vmem:[#allocation6 + $0x608] sm:$0xff]
        %v1045 = vld [vmem:[#allocation6 + $0x610] sm:$0xff]
        %v1046 = vld [vmem:[#allocation6 + $0x618] sm:$0xff]
        %v1047 = vld [vmem:[#allocation6 + $0x620] sm:$0xff]
        %v1048 = vld [vmem:[#allocation6 + $0x628] sm:$0xff]
        %v1049 = vld [vmem:[#allocation6 + $0x630] sm:$0xff]
        %v1050 = vld [vmem:[#allocation6 + $0x638] sm:$0xff]
        %v1051 = vld [vmem:[#allocation6 + $0x640] sm:$0xff]
        %v1052 = vld [vmem:[#allocation6 + $0x648] sm:$0xff]
        %v1053 = vld [vmem:[#allocation6 + $0x650] sm:$0xff]
        %v1054 = vld [vmem:[#allocation6 + $0x658] sm:$0xff]
        %v1055 = vld [vmem:[#allocation6 + $0x660] sm:$0xff]
        %v1056 = vld [vmem:[#allocation6 + $0x668] sm:$0xff]
        %v1057 = vld [vmem:[#allocation6 + $0x670] sm:$0xff]
        %v1058 = vld [vmem:[#allocation6 + $0x678] sm:$0xff]
        %v1059 = vld [vmem:[#allocation6 + $0x680] sm:$0xff]
        %v1060 = vld [vmem:[#allocation6 + $0x688] sm:$0xff]
        %v1061 = vld [vmem:[#allocation6 + $0x690] sm:$0xff]
        %v1062 = vld [vmem:[#allocation6 + $0x698] sm:$0xff]
        %v1063 = vld [vmem:[#allocation6 + $0x6a0] sm:$0xff]
        %v1064 = vld [vmem:[#allocation6 + $0x6a8] sm:$0xff]
        %v1065 = vld [vmem:[#allocation6 + $0x6b0] sm:$0xff]
        %v1066 = vld [vmem:[#allocation6 + $0x6b8] sm:$0xff]
        %v1067 = vld [vmem:[#allocation6 + $0x6c0] sm:$0xff]
        %v1068 = vld [vmem:[#allocation6 + $0x6c8] sm:$0xff]
        %v1069 = vld [vmem:[#allocation6 + $0x6d0] sm:$0xff]
        %v1070 = vld [vmem:[#allocation6 + $0x6d8] sm:$0xff]
        %v1071 = vld [vmem:[#allocation6 + $0x6e0] sm:$0xff]
        %v1072 = vld [vmem:[#allocation6 + $0x6e8] sm:$0xff]
        %v1073 = vld [vmem:[#allocation6 + $0x6f0] sm:$0xff]
        %v1074 = vld [vmem:[#allocation6 + $0x6f8] sm:$0xff]
        %v1075 = vld [vmem:[#allocation6 + $0x700] sm:$0xff]
        %v1076 = vld [vmem:[#allocation6 + $0x708] sm:$0xff]
        %v1077 = vld [vmem:[#allocation6 + $0x710] sm:$0xff]
        %v1078 = vld [vmem:[#allocation6 + $0x718] sm:$0xff]
        %v1079 = vld [vmem:[#allocation6 + $0x720] sm:$0xff]
        %v1080 = vld [vmem:[#allocation6 + $0x728] sm:$0xff]
        %v1081 = vld [vmem:[#allocation6 + $0x730] sm:$0xff]
        %v1082 = vld [vmem:[#allocation6 + $0x738] sm:$0xff]
        %v1083 = vld [vmem:[#allocation6 + $0x740] sm:$0xff]
        %v1084 = vld [vmem:[#allocation6 + $0x748] sm:$0xff]
        %v1085 = vld [vmem:[#allocation6 + $0x750] sm:$0xff]
        %v1086 = vld [vmem:[#allocation6 + $0x758] sm:$0xff]
        %v1087 = vld [vmem:[#allocation6 + $0x760] sm:$0xff]
        %v1088 = vld [vmem:[#allocation6 + $0x768] sm:$0xff]
        %v1089 = vld [vmem:[#allocation6 + $0x770] sm:$0xff]
        %v1090 = vld [vmem:[#allocation6 + $0x778] sm:$0xff]
        %v1091 = vld [vmem:[#allocation6 + $0x780] sm:$0xff]
        %v1092 = vld [vmem:[#allocation6 + $0x788] sm:$0xff]
        %v1093 = vld [vmem:[#allocation6 + $0x790] sm:$0xff]
        %v1094 = vld [vmem:[#allocation6 + $0x798] sm:$0xff]
        %v1095 = vld [vmem:[#allocation6 + $0x7a0] sm:$0xff]
        %v1096 = vld [vmem:[#allocation6 + $0x7a8] sm:$0xff]
        %v1097 = vld [vmem:[#allocation6 + $0x7b0] sm:$0xff]
        %v1098 = vld [vmem:[#allocation6 + $0x7b8] sm:$0xff]
        %v1099 = vld [vmem:[#allocation6 + $0x7c0] sm:$0xff]
        %v1100 = vld [vmem:[#allocation6 + $0x7c8] sm:$0xff]
        %v1101 = vld [vmem:[#allocation6 + $0x7d0] sm:$0xff]
        %v1102 = vld [vmem:[#allocation6 + $0x7d8] sm:$0xff]
        %v1103 = vld [vmem:[#allocation6 + $0x7e0] sm:$0xff]
        %v1104 = vld [vmem:[#allocation6 + $0x7e8] sm:$0xff]
        %v1105 = vld [vmem:[#allocation6 + $0x7f0] sm:$0xff]
        %v1106 = vld [vmem:[#allocation6 + $0x7f8] sm:$0xff]
        %v1107 = vld [vmem:[#allocation6 + $0x800] sm:$0xff]
        %v1108 = vld [vmem:[#allocation6 + $0x808] sm:$0xff]
        %v1109 = vld [vmem:[#allocation6 + $0x810] sm:$0xff]
        %v1110 = vld [vmem:[#allocation6 + $0x818] sm:$0xff]
        %v1111 = vld [vmem:[#allocation6 + $0x820] sm:$0xff]
        %v1112 = vld [vmem:[#allocation6 + $0x828] sm:$0xff]
        %v1113 = vld [vmem:[#allocation6 + $0x830] sm:$0xff]
        %v1114 = vld [vmem:[#allocation6 + $0x838] sm:$0xff]
        %v1115 = vld [vmem:[#allocation6 + $0x840] sm:$0xff]
        %v1116 = vld [vmem:[#allocation6 + $0x848] sm:$0xff]
        %v1117 = vld [vmem:[#allocation6 + $0x850] sm:$0xff]
        %v1118 = vld [vmem:[#allocation6 + $0x858] sm:$0xff]
        %v1119 = vld [vmem:[#allocation6 + $0x860] sm:$0xff]
        %v1120 = vld [vmem:[#allocation6 + $0x868] sm:$0xff]
        %v1121 = vld [vmem:[#allocation6 + $0x870] sm:$0xff]
        %v1122 = vld [vmem:[#allocation6 + $0x878] sm:$0xff]
        %v1123 = vld [vmem:[#allocation6 + $0x880] sm:$0xff]
        %v1124 = vld [vmem:[#allocation6 + $0x888] sm:$0xff]
        %v1125 = vld [vmem:[#allocation6 + $0x890] sm:$0xff]
        %v1126 = vld [vmem:[#allocation6 + $0x898] sm:$0xff]
        %v1127 = vld [vmem:[#allocation6 + $0x8a0] sm:$0xff]
        %v1128 = vld [vmem:[#allocation6 + $0x8a8] sm:$0xff]
        %v1129 = vld [vmem:[#allocation6 + $0x8b0] sm:$0xff]
        %v1130 = vld [vmem:[#allocation6 + $0x8b8] sm:$0xff]
        %v1131 = vld [vmem:[#allocation6 + $0x8c0] sm:$0xff]
        %v1132 = vld [vmem:[#allocation6 + $0x8c8] sm:$0xff]
        %v1133 = vld [vmem:[#allocation6 + $0x8d0] sm:$0xff]
        %v1134 = vld [vmem:[#allocation6 + $0x8d8] sm:$0xff]
        %v1135 = vld [vmem:[#allocation6 + $0x8e0] sm:$0xff]
        %v1136 = vld [vmem:[#allocation6 + $0x8e8] sm:$0xff]
        %v1137 = vld [vmem:[#allocation6 + $0x8f0] sm:$0xff]
        %v1138 = vld [vmem:[#allocation6 + $0x8f8] sm:$0xff]
        %v1139 = vld [vmem:[#allocation6 + $0x900] sm:$0xff]
        %v1140 = vld [vmem:[#allocation6 + $0x908] sm:$0xff]
        %v1141 = vld [vmem:[#allocation6 + $0x910] sm:$0xff]
        %v1142 = vld [vmem:[#allocation6 + $0x918] sm:$0xff]
        %v1143 = vld [vmem:[#allocation6 + $0x920] sm:$0xff]
        %v1144 = vld [vmem:[#allocation6 + $0x928] sm:$0xff]
        %v1145 = vld [vmem:[#allocation6 + $0x930] sm:$0xff]
        %v1146 = vld [vmem:[#allocation6 + $0x938] sm:$0xff]
        %v1147 = vld [vmem:[#allocation6 + $0x940] sm:$0xff]
        %v1148 = vld [vmem:[#allocation6 + $0x948] sm:$0xff]
        %v1149 = vld [vmem:[#allocation6 + $0x950] sm:$0xff]
        %v1150 = vld [vmem:[#allocation6 + $0x958] sm:$0xff]
        %v1151 = vld [vmem:[#allocation6 + $0x960] sm:$0xff]
        %v1152 = vld [vmem:[#allocation6 + $0x968] sm:$0xff]
        %v1153 = vld [vmem:[#allocation6 + $0x970] sm:$0xff]
        %v1154 = vld [vmem:[#allocation6 + $0x978] sm:$0xff]
        %v1155 = vld [vmem:[#allocation6 + $0x980] sm:$0xff]
        %v1156 = vld [vmem:[#allocation6 + $0x988] sm:$0xff]
        %v1157 = vld [vmem:[#allocation6 + $0x990] sm:$0xff]
        %v1158 = vld [vmem:[#allocation6 + $0x998] sm:$0xff]
        %v1159 = vld [vmem:[#allocation6 + $0x9a0] sm:$0xff]
        %v1160 = vld [vmem:[#allocation6 + $0x9a8] sm:$0xff]
        %v1161 = vld [vmem:[#allocation6 + $0x9b0] sm:$0xff]
        %v1162 = vld [vmem:[#allocation6 + $0x9b8] sm:$0xff]
        %v1163 = vld [vmem:[#allocation6 + $0x9c0] sm:$0xff]
        %v1164 = vld [vmem:[#allocation6 + $0x9c8] sm:$0xff]
        %v1165 = vld [vmem:[#allocation6 + $0x9d0] sm:$0xff]
        %v1166 = vld [vmem:[#allocation6 + $0x9d8] sm:$0xff]
        %v1167 = vld [vmem:[#allocation6 + $0x9e0] sm:$0xff]
        %v1168 = vld [vmem:[#allocation6 + $0x9e8] sm:$0xff]
        %v1169 = vld [vmem:[#allocation6 + $0x9f0] sm:$0xff]
        %v1170 = vld [vmem:[#allocation6 + $0x9f8] sm:$0xff]
        %v1171 = vld [vmem:[#allocation6 + $0xa00] sm:$0xff]
        %v1172 = vld [vmem:[#allocation6 + $0xa08] sm:$0xff]
        %v1173 = vld [vmem:[#allocation6 + $0xa10] sm:$0xff]
        %v1174 = vld [vmem:[#allocation6 + $0xa18] sm:$0xff]
        %v1175 = vld [vmem:[#allocation6 + $0xa20] sm:$0xff]
        %v1176 = vld [vmem:[#allocation6 + $0xa28] sm:$0xff]
        %v1177 = vld [vmem:[#allocation6 + $0xa30] sm:$0xff]
        %v1178 = vld [vmem:[#allocation6 + $0xa38] sm:$0xff]
        %v1179 = vld [vmem:[#allocation6 + $0xa40] sm:$0xff]
        %v1180 = vld [vmem:[#allocation6 + $0xa48] sm:$0xff]
        %v1181 = vld [vmem:[#allocation6 + $0xa50] sm:$0xff]
        %v1182 = vld [vmem:[#allocation6 + $0xa58] sm:$0xff]
        %v1183 = vld [vmem:[#allocation6 + $0xa60] sm:$0xff]
        %v1184 = vld [vmem:[#allocation6 + $0xa68] sm:$0xff]
        %v1185 = vld [vmem:[#allocation6 + $0xa70] sm:$0xff]
        %v1186 = vld [vmem:[#allocation6 + $0xa78] sm:$0xff]
        %v1187 = vld [vmem:[#allocation6 + $0xa80] sm:$0xff]
        %v1188 = vld [vmem:[#allocation6 + $0xa88] sm:$0xff]
        %v1189 = vld [vmem:[#allocation6 + $0xa90] sm:$0xff]
        %v1190 = vld [vmem:[#allocation6 + $0xa98] sm:$0xff]
        %v1191 = vld [vmem:[#allocation6 + $0xaa0] sm:$0xff]
        %v1192 = vld [vmem:[#allocation6 + $0xaa8] sm:$0xff]
        %v1193 = vld [vmem:[#allocation6 + $0xab0] sm:$0xff]
        %v1194 = vld [vmem:[#allocation6 + $0xab8] sm:$0xff]
        %v1195 = vld [vmem:[#allocation6 + $0xac0] sm:$0xff]
        %v1196 = vld [vmem:[#allocation6 + $0xac8] sm:$0xff]
        %v1197 = vld [vmem:[#allocation6 + $0xad0] sm:$0xff]
        %v1198 = vld [vmem:[#allocation6 + $0xad8] sm:$0xff]
        %v1199 = vld [vmem:[#allocation6 + $0xae0] sm:$0xff]
        %v1200 = vld [vmem:[#allocation6 + $0xae8] sm:$0xff]
        %v1201 = vld [vmem:[#allocation6 + $0xaf0] sm:$0xff]
        %v1202 = vld [vmem:[#allocation6 + $0xaf8] sm:$0xff]
        %v1203 = vld [vmem:[#allocation6 + $0xb00] sm:$0xff]
        %v1204 = vld [vmem:[#allocation6 + $0xb08] sm:$0xff]
        %v1205 = vld [vmem:[#allocation6 + $0xb10] sm:$0xff]
        %v1206 = vld [vmem:[#allocation6 + $0xb18] sm:$0xff]
        %v1207 = vld [vmem:[#allocation6 + $0xb20] sm:$0xff]
        %v1208 = vld [vmem:[#allocation6 + $0xb28] sm:$0xff]
        %v1209 = vld [vmem:[#allocation6 + $0xb30] sm:$0xff]
        %v1210 = vld [vmem:[#allocation6 + $0xb38] sm:$0xff]
        %v1211 = vld [vmem:[#allocation6 + $0xb40] sm:$0xff]
        %v1212 = vld [vmem:[#allocation6 + $0xb48] sm:$0xff]
        %v1213 = vld [vmem:[#allocation6 + $0xb50] sm:$0xff]
        %v1214 = vld [vmem:[#allocation6 + $0xb58] sm:$0xff]
        %v1215 = vld [vmem:[#allocation6 + $0xb60] sm:$0xff]
        %v1216 = vld [vmem:[#allocation6 + $0xb68] sm:$0xff]
        %v1217 = vld [vmem:[#allocation6 + $0xb70] sm:$0xff]
        %v1218 = vld [vmem:[#allocation6 + $0xb78] sm:$0xff]
        %v1219 = vld [vmem:[#allocation6 + $0xb80] sm:$0xff]
        %v1220 = vld [vmem:[#allocation6 + $0xb88] sm:$0xff]
        %v1221 = vld [vmem:[#allocation6 + $0xb90] sm:$0xff]
        %v1222 = vld [vmem:[#allocation6 + $0xb98] sm:$0xff]
        %v1223 = vld [vmem:[#allocation6 + $0xba0] sm:$0xff]
        %v1224 = vld [vmem:[#allocation6 + $0xba8] sm:$0xff]
        %v1225 = vld [vmem:[#allocation6 + $0xbb0] sm:$0xff]
        %v1226 = vld [vmem:[#allocation6 + $0xbb8] sm:$0xff]
        %v1227 = vld [vmem:[#allocation6 + $0xbc0] sm:$0xff]
        %v1228 = vld [vmem:[#allocation6 + $0xbc8] sm:$0xff]
        %v1229 = vld [vmem:[#allocation6 + $0xbd0] sm:$0xff]
        %v1230 = vld [vmem:[#allocation6 + $0xbd8] sm:$0xff]
        %v1231 = vld [vmem:[#allocation6 + $0xbe0] sm:$0xff]
        %v1232 = vld [vmem:[#allocation6 + $0xbe8] sm:$0xff]
        %v1233 = vld [vmem:[#allocation6 + $0xbf0] sm:$0xff]
        %v1234 = vld [vmem:[#allocation6 + $0xbf8] sm:$0xff]
        %v1235 = vld [vmem:[#allocation6 + $0xc00] sm:$0xff]
        %v1236 = vld [vmem:[#allocation6 + $0xc08] sm:$0xff]
        %v1237 = vld [vmem:[#allocation6 + $0xc10] sm:$0xff]
        %v1238 = vld [vmem:[#allocation6 + $0xc18] sm:$0xff]
        %v1239 = vld [vmem:[#allocation6 + $0xc20] sm:$0xff]
        %v1240 = vld [vmem:[#allocation6 + $0xc28] sm:$0xff]
        %v1241 = vld [vmem:[#allocation6 + $0xc30] sm:$0xff]
        %v1242 = vld [vmem:[#allocation6 + $0xc38] sm:$0xff]
        %v1243 = vld [vmem:[#allocation6 + $0xc40] sm:$0xff]
        %v1244 = vld [vmem:[#allocation6 + $0xc48] sm:$0xff]
        %v1245 = vld [vmem:[#allocation6 + $0xc50] sm:$0xff]
        %v1246 = vld [vmem:[#allocation6 + $0xc58] sm:$0xff]
        %v1247 = vld [vmem:[#allocation6 + $0xc60] sm:$0xff]
        %v1248 = vld [vmem:[#allocation6 + $0xc68] sm:$0xff]
        %v1249 = vld [vmem:[#allocation6 + $0xc70] sm:$0xff]
        %v1250 = vld [vmem:[#allocation6 + $0xc78] sm:$0xff]
        %v1251 = vld [vmem:[#allocation6 + $0xc80] sm:$0xff]
        %v1252 = vld [vmem:[#allocation6 + $0xc88] sm:$0xff]
        %v1253 = vld [vmem:[#allocation6 + $0xc90] sm:$0xff]
        %v1254 = vld [vmem:[#allocation6 + $0xc98] sm:$0xff]
        %v1255 = vld [vmem:[#allocation6 + $0xca0] sm:$0xff]
        %v1256 = vld [vmem:[#allocation6 + $0xca8] sm:$0xff]
        %v1257 = vld [vmem:[#allocation6 + $0xcb0] sm:$0xff]
        %v1258 = vld [vmem:[#allocation6 + $0xcb8] sm:$0xff]
        %v1259 = vld [vmem:[#allocation6 + $0xcc0] sm:$0xff]
        %v1260 = vld [vmem:[#allocation6 + $0xcc8] sm:$0xff]
        %v1261 = vld [vmem:[#allocation6 + $0xcd0] sm:$0xff]
        %v1262 = vld [vmem:[#allocation6 + $0xcd8] sm:$0xff]
        %v1263 = vld [vmem:[#allocation6 + $0xce0] sm:$0xff]
        %v1264 = vld [vmem:[#allocation6 + $0xce8] sm:$0xff]
        %v1265 = vld [vmem:[#allocation6 + $0xcf0] sm:$0xff]
        %v1266 = vld [vmem:[#allocation6 + $0xcf8] sm:$0xff]
        %v1267 = vld [vmem:[#allocation6 + $0xd00] sm:$0xff]
        %v1268 = vld [vmem:[#allocation6 + $0xd08] sm:$0xff]
        %v1269 = vld [vmem:[#allocation6 + $0xd10] sm:$0xff]
        %v1270 = vld [vmem:[#allocation6 + $0xd18] sm:$0xff]
        %v1271 = vld [vmem:[#allocation6 + $0xd20] sm:$0xff]
        %v1272 = vld [vmem:[#allocation6 + $0xd28] sm:$0xff]
        %v1273 = vld [vmem:[#allocation6 + $0xd30] sm:$0xff]
        %v1274 = vld [vmem:[#allocation6 + $0xd38] sm:$0xff]
        %v1275 = vld [vmem:[#allocation6 + $0xd40] sm:$0xff]
        %v1276 = vld [vmem:[#allocation6 + $0xd48] sm:$0xff]
        %v1277 = vld [vmem:[#allocation6 + $0xd50] sm:$0xff]
        %v1278 = vld [vmem:[#allocation6 + $0xd58] sm:$0xff]
        %v1279 = vld [vmem:[#allocation6 + $0xd60] sm:$0xff]
        %v1280 = vld [vmem:[#allocation6 + $0xd68] sm:$0xff]
        %v1281 = vld [vmem:[#allocation6 + $0xd70] sm:$0xff]
        %v1282 = vld [vmem:[#allocation6 + $0xd78] sm:$0xff]
        %v1283 = vld [vmem:[#allocation6 + $0xd80] sm:$0xff]
        %v1284 = vld [vmem:[#allocation6 + $0xd88] sm:$0xff]
        %v1285 = vld [vmem:[#allocation6 + $0xd90] sm:$0xff]
        %v1286 = vld [vmem:[#allocation6 + $0xd98] sm:$0xff]
        %v1287 = vld [vmem:[#allocation6 + $0xda0] sm:$0xff]
        %v1288 = vld [vmem:[#allocation6 + $0xda8] sm:$0xff]
        %v1289 = vld [vmem:[#allocation6 + $0xdb0] sm:$0xff]
        %v1290 = vld [vmem:[#allocation6 + $0xdb8] sm:$0xff]
        %v1291 = vld [vmem:[#allocation6 + $0xdc0] sm:$0xff]
        %v1292 = vld [vmem:[#allocation6 + $0xdc8] sm:$0xff]
        %v1293 = vld [vmem:[#allocation6 + $0xdd0] sm:$0xff]
        %v1294 = vld [vmem:[#allocation6 + $0xdd8] sm:$0xff]
        %v1295 = vld [vmem:[#allocation6 + $0xde0] sm:$0xff]
        %v1296 = vld [vmem:[#allocation6 + $0xde8] sm:$0xff]
        %v1297 = vld [vmem:[#allocation6 + $0xdf0] sm:$0xff]
        %v1298 = vld [vmem:[#allocation6 + $0xdf8] sm:$0xff]
        %v1299 = vld [vmem:[#allocation6 + $0xe00] sm:$0xff]
        %v1300 = vld [vmem:[#allocation6 + $0xe08] sm:$0xff]
        %v1301 = vld [vmem:[#allocation6 + $0xe10] sm:$0xff]
        %v1302 = vld [vmem:[#allocation6 + $0xe18] sm:$0xff]
        %v1303 = vld [vmem:[#allocation6 + $0xe20] sm:$0xff]
        %v1304 = vld [vmem:[#allocation6 + $0xe28] sm:$0xff]
        %v1305 = vld [vmem:[#allocation6 + $0xe30] sm:$0xff]
        %v1306 = vld [vmem:[#allocation6 + $0xe38] sm:$0xff]
        %v1307 = vld [vmem:[#allocation6 + $0xe40] sm:$0xff]
        %v1308 = vld [vmem:[#allocation6 + $0xe48] sm:$0xff]
        %v1309 = vld [vmem:[#allocation6 + $0xe50] sm:$0xff]
        %v1310 = vld [vmem:[#allocation6 + $0xe58] sm:$0xff]
        %v1311 = vld [vmem:[#allocation6 + $0xe60] sm:$0xff]
        %v1312 = vld [vmem:[#allocation6 + $0xe68] sm:$0xff]
        %v1313 = vld [vmem:[#allocation6 + $0xe70] sm:$0xff]
        %v1314 = vld [vmem:[#allocation6 + $0xe78] sm:$0xff]
        %v1315 = vld [vmem:[#allocation6 + $0xe80] sm:$0xff]
        %v1316 = vld [vmem:[#allocation6 + $0xe88] sm:$0xff]
        %v1317 = vld [vmem:[#allocation6 + $0xe90] sm:$0xff]
        %v1318 = vld [vmem:[#allocation6 + $0xe98] sm:$0xff]
        %v1319 = vld [vmem:[#allocation6 + $0xea0] sm:$0xff]
        %v1320 = vld [vmem:[#allocation6 + $0xea8] sm:$0xff]
        %v1321 = vld [vmem:[#allocation6 + $0xeb0] sm:$0xff]
        %v1322 = vld [vmem:[#allocation6 + $0xeb8] sm:$0xff]
        %v1323 = vld [vmem:[#allocation6 + $0xec0] sm:$0xff]
        %v1324 = vld [vmem:[#allocation6 + $0xec8] sm:$0xff]
        %v1325 = vld [vmem:[#allocation6 + $0xed0] sm:$0xff]
        %v1326 = vld [vmem:[#allocation6 + $0xed8] sm:$0xff]
        %v1327 = vld [vmem:[#allocation6 + $0xee0] sm:$0xff]
        %v1328 = vld [vmem:[#allocation6 + $0xee8] sm:$0xff]
        %v1329 = vld [vmem:[#allocation6 + $0xef0] sm:$0xff]
        %v1330 = vld [vmem:[#allocation6 + $0xef8] sm:$0xff]
        %v1331 = vld [vmem:[#allocation6 + $0xf00] sm:$0xff]
        %v1332 = vld [vmem:[#allocation6 + $0xf08] sm:$0xff]
        %v1333 = vld [vmem:[#allocation6 + $0xf10] sm:$0xff]
        %v1334 = vld [vmem:[#allocation6 + $0xf18] sm:$0xff]
        %v1335 = vld [vmem:[#allocation6 + $0xf20] sm:$0xff]
        %v1336 = vld [vmem:[#allocation6 + $0xf28] sm:$0xff]
        %v1337 = vld [vmem:[#allocation6 + $0xf30] sm:$0xff]
        %v1338 = vld [vmem:[#allocation6 + $0xf38] sm:$0xff]
        %v1339 = vld [vmem:[#allocation6 + $0xf40] sm:$0xff]
        %v1340 = vld [vmem:[#allocation6 + $0xf48] sm:$0xff]
        %v1341 = vld [vmem:[#allocation6 + $0xf50] sm:$0xff]
        %v1342 = vld [vmem:[#allocation6 + $0xf58] sm:$0xff]
        %v1343 = vld [vmem:[#allocation6 + $0xf60] sm:$0xff]
        %v1344 = vld [vmem:[#allocation6 + $0xf68] sm:$0xff]
        %v1345 = vld [vmem:[#allocation6 + $0xf70] sm:$0xff]
        %v1346 = vld [vmem:[#allocation6 + $0xf78] sm:$0xff]
        %v1347 = vld [vmem:[#allocation6 + $0xf80] sm:$0xff]
        %v1348 = vld [vmem:[#allocation6 + $0xf88] sm:$0xff]
        %v1349 = vld [vmem:[#allocation6 + $0xf90] sm:$0xff]
        %v1350 = vld [vmem:[#allocation6 + $0xf98] sm:$0xff]
        %v1351 = vld [vmem:[#allocation6 + $0xfa0] sm:$0xff]
        %v1352 = vld [vmem:[#allocation6 + $0xfa8] sm:$0xff]
        %v1353 = vld [vmem:[#allocation6 + $0xfb0] sm:$0xff]
        %v1354 = vld [vmem:[#allocation6 + $0xfb8] sm:$0xff]
        %v1355 = vld [vmem:[#allocation6 + $0xfc0] sm:$0xff]
        %v1356 = vld [vmem:[#allocation6 + $0xfc8] sm:$0xff]
        %v1357 = vld [vmem:[#allocation6 + $0xfd0] sm:$0xff]
        %v1358 = vld [vmem:[#allocation6 + $0xfd8] sm:$0xff]
        %v1359 = vld [vmem:[#allocation6 + $0xfe0] sm:$0xff]
        %v1360 = vld [vmem:[#allocation6 + $0xfe8] sm:$0xff]
        %v1361 = vld [vmem:[#allocation6 + $0xff0] sm:$0xff]
        %v1362 = vld [vmem:[#allocation6 + $0xff8] sm:$0xff]
        %v1363 = vld [vmem:[#allocation6 + $0x1000] sm:$0xff]
        %v1364 = vld [vmem:[#allocation6 + $0x1008] sm:$0xff]
        %v1365 = vld [vmem:[#allocation6 + $0x1010] sm:$0xff]
        %v1366 = vld [vmem:[#allocation6 + $0x1018] sm:$0xff]
        %v1367 = vld [vmem:[#allocation6 + $0x1020] sm:$0xff]
        %v1368 = vld [vmem:[#allocation6 + $0x1028] sm:$0xff]
        %v1369 = vld [vmem:[#allocation6 + $0x1030] sm:$0xff]
        %v1370 = vld [vmem:[#allocation6 + $0x1038] sm:$0xff]
        %v1371 = vld [vmem:[#allocation6 + $0x1040] sm:$0xff]
        %v1372 = vld [vmem:[#allocation6 + $0x1048] sm:$0xff]
        %v1373 = vld [vmem:[#allocation6 + $0x1050] sm:$0xff]
        %v1374 = vld [vmem:[#allocation6 + $0x1058] sm:$0xff]
        %v1375 = vld [vmem:[#allocation6 + $0x1060] sm:$0xff]
        %v1376 = vld [vmem:[#allocation6 + $0x1068] sm:$0xff]
        %v1377 = vld [vmem:[#allocation6 + $0x1070] sm:$0xff]
        %v1378 = vld [vmem:[#allocation6 + $0x1078] sm:$0xff]
        %v1379 = vld [vmem:[#allocation6 + $0x1080] sm:$0xff]
        %v1380 = vld [vmem:[#allocation6 + $0x1088] sm:$0xff]
        %v1381 = vld [vmem:[#allocation6 + $0x1090] sm:$0xff]
        %v1382 = vld [vmem:[#allocation6 + $0x1098] sm:$0xff]
        %v1383 = vld [vmem:[#allocation6 + $0x10a0] sm:$0xff]
        %v1384 = vld [vmem:[#allocation6 + $0x10a8] sm:$0xff]
        %v1385 = vld [vmem:[#allocation6 + $0x10b0] sm:$0xff]
        %v1386 = vld [vmem:[#allocation6 + $0x10b8] sm:$0xff]
        %v1387 = vld [vmem:[#allocation6 + $0x10c0] sm:$0xff]
        %v1388 = vld [vmem:[#allocation6 + $0x10c8] sm:$0xff]
        %v1389 = vld [vmem:[#allocation6 + $0x10d0] sm:$0xff]
        %v1390 = vld [vmem:[#allocation6 + $0x10d8] sm:$0xff]
        %v1391 = vld [vmem:[#allocation6 + $0x10e0] sm:$0xff]
        %v1392 = vld [vmem:[#allocation6 + $0x10e8] sm:$0xff]
        %v1393 = vld [vmem:[#allocation6 + $0x10f0] sm:$0xff]
        %v1394 = vld [vmem:[#allocation6 + $0x10f8] sm:$0xff]
        %v1395 = vld [vmem:[#allocation6 + $0x1100] sm:$0xff]
        %v1396 = vld [vmem:[#allocation6 + $0x1108] sm:$0xff]
        %v1397 = vld [vmem:[#allocation6 + $0x1110] sm:$0xff]
        %v1398 = vld [vmem:[#allocation6 + $0x1118] sm:$0xff]
        %v1399 = vld [vmem:[#allocation6 + $0x1120] sm:$0xff]
        %v1400 = vld [vmem:[#allocation6 + $0x1128] sm:$0xff]
        %v1401 = vld [vmem:[#allocation6 + $0x1130] sm:$0xff]
        %v1402 = vld [vmem:[#allocation6 + $0x1138] sm:$0xff]
        %v1403 = vld [vmem:[#allocation6 + $0x1140] sm:$0xff]
        %v1404 = vld [vmem:[#allocation6 + $0x1148] sm:$0xff]
        %v1405 = vld [vmem:[#allocation6 + $0x1150] sm:$0xff]
        %v1406 = vld [vmem:[#allocation6 + $0x1158] sm:$0xff]
        %v1407 = vld [vmem:[#allocation6 + $0x1160] sm:$0xff]
        %v1408 = vld [vmem:[#allocation6 + $0x1168] sm:$0xff]
        %v1409 = vld [vmem:[#allocation6 + $0x1170] sm:$0xff]
        %v1410 = vld [vmem:[#allocation6 + $0x1178] sm:$0xff]
        %v1411 = vld [vmem:[#allocation6 + $0x1180] sm:$0xff]
        %v1412 = vld [vmem:[#allocation6 + $0x1188] sm:$0xff]
        %v1413 = vld [vmem:[#allocation6 + $0x1190] sm:$0xff]
        %v1414 = vld [vmem:[#allocation6 + $0x1198] sm:$0xff]
        %v1415 = vld [vmem:[#allocation6 + $0x11a0] sm:$0xff]
        %v1416 = vld [vmem:[#allocation6 + $0x11a8] sm:$0xff]
        %v1417 = vld [vmem:[#allocation6 + $0x11b0] sm:$0xff]
        %v1418 = vld [vmem:[#allocation6 + $0x11b8] sm:$0xff]
        %v1419 = vld [vmem:[#allocation6 + $0x11c0] sm:$0xff]
        %v1420 = vld [vmem:[#allocation6 + $0x11c8] sm:$0xff]
        %v1421 = vld [vmem:[#allocation6 + $0x11d0] sm:$0xff]
        %v1422 = vld [vmem:[#allocation6 + $0x11d8] sm:$0xff]
        %v1423 = vld [vmem:[#allocation6 + $0x11e0] sm:$0xff]
        %v1424 = vld [vmem:[#allocation6 + $0x11e8] sm:$0xff]
        %v1425 = vld [vmem:[#allocation6 + $0x11f0] sm:$0xff]
        %v1426 = vld [vmem:[#allocation6 + $0x11f8] sm:$0xff]
        %v1427 = vld [vmem:[#allocation6 + $0x1200] sm:$0xff]
        %v1428 = vld [vmem:[#allocation6 + $0x1208] sm:$0xff]
        %v1429 = vld [vmem:[#allocation6 + $0x1210] sm:$0xff]
        %v1430 = vld [vmem:[#allocation6 + $0x1218] sm:$0xff]
        %v1431 = vld [vmem:[#allocation6 + $0x1220] sm:$0xff]
        %v1432 = vld [vmem:[#allocation6 + $0x1228] sm:$0xff]
        %v1433 = vld [vmem:[#allocation6 + $0x1230] sm:$0xff]
        %v1434 = vld [vmem:[#allocation6 + $0x1238] sm:$0xff]
        %v1435 = vld [vmem:[#allocation6 + $0x1240] sm:$0xff]
        %v1436 = vld [vmem:[#allocation6 + $0x1248] sm:$0xff]
        %v1437 = vld [vmem:[#allocation6 + $0x1250] sm:$0xff]
        %v1438 = vld [vmem:[#allocation6 + $0x1258] sm:$0xff]
        %v1439 = vld [vmem:[#allocation6 + $0x1260] sm:$0xff]
        %v1440 = vld [vmem:[#allocation6 + $0x1268] sm:$0xff]
        %v1441 = vld [vmem:[#allocation6 + $0x1270] sm:$0xff]
        %v1442 = vld [vmem:[#allocation6 + $0x1278] sm:$0xff]
        %v1443 = vld [vmem:[#allocation6 + $0x1280] sm:$0xff]
        %v1444 = vld [vmem:[#allocation6 + $0x1288] sm:$0xff]
        %v1445 = vld [vmem:[#allocation6 + $0x1290] sm:$0xff]
        %v1446 = vld [vmem:[#allocation6 + $0x1298] sm:$0xff]
        %v1447 = vld [vmem:[#allocation6 + $0x12a0] sm:$0xff]
        %v1448 = vld [vmem:[#allocation6 + $0x12a8] sm:$0xff]
        %v1449 = vld [vmem:[#allocation6 + $0x12b0] sm:$0xff]
        %v1450 = vld [vmem:[#allocation6 + $0x12b8] sm:$0xff]
        %v1451 = vld [vmem:[#allocation6 + $0x12c0] sm:$0xff]
        %v1452 = vld [vmem:[#allocation6 + $0x12c8] sm:$0xff]
        %v1453 = vld [vmem:[#allocation6 + $0x12d0] sm:$0xff]
        %v1454 = vld [vmem:[#allocation6 + $0x12d8] sm:$0xff]
        %v1455 = vld [vmem:[#allocation6 + $0x12e0] sm:$0xff]
        %v1456 = vld [vmem:[#allocation6 + $0x12e8] sm:$0xff]
        %v1457 = vld [vmem:[#allocation6 + $0x12f0] sm:$0xff]
        %v1458 = vld [vmem:[#allocation6 + $0x12f8] sm:$0xff]
        %v1459 = vld [vmem:[#allocation6 + $0x1300] sm:$0xff]
        %v1460 = vld [vmem:[#allocation6 + $0x1308] sm:$0xff]
        %v1461 = vld [vmem:[#allocation6 + $0x1310] sm:$0xff]
        %v1462 = vld [vmem:[#allocation6 + $0x1318] sm:$0xff]
        %v1463 = vld [vmem:[#allocation6 + $0x1320] sm:$0xff]
        %v1464 = vld [vmem:[#allocation6 + $0x1328] sm:$0xff]
        %v1465 = vld [vmem:[#allocation6 + $0x1330] sm:$0xff]
        %v1466 = vld [vmem:[#allocation6 + $0x1338] sm:$0xff]
        %v1467 = vld [vmem:[#allocation6 + $0x1340] sm:$0xff]
        %v1468 = vld [vmem:[#allocation6 + $0x1348] sm:$0xff]
        %v1469 = vld [vmem:[#allocation6 + $0x1350] sm:$0xff]
        %v1470 = vld [vmem:[#allocation6 + $0x1358] sm:$0xff]
        %v1471 = vld [vmem:[#allocation6 + $0x1360] sm:$0xff]
        %v1472 = vld [vmem:[#allocation6 + $0x1368] sm:$0xff]
        %v1473 = vld [vmem:[#allocation6 + $0x1370] sm:$0xff]
        %v1474 = vld [vmem:[#allocation6 + $0x1378] sm:$0xff]
        %v1475 = vld [vmem:[#allocation6 + $0x1380] sm:$0xff]
        %v1476 = vld [vmem:[#allocation6 + $0x1388] sm:$0xff]
        %v1477 = vld [vmem:[#allocation6 + $0x1390] sm:$0xff]
        %v1478 = vld [vmem:[#allocation6 + $0x1398] sm:$0xff]
        %v1479 = vld [vmem:[#allocation6 + $0x13a0] sm:$0xff]
        %v1480 = vld [vmem:[#allocation6 + $0x13a8] sm:$0xff]
        %v1481 = vld [vmem:[#allocation6 + $0x13b0] sm:$0xff]
        %v1482 = vld [vmem:[#allocation6 + $0x13b8] sm:$0xff]
        %v1483 = vld [vmem:[#allocation6 + $0x13c0] sm:$0xff]
        %v1484 = vld [vmem:[#allocation6 + $0x13c8] sm:$0xff]
        %v1485 = vld [vmem:[#allocation6 + $0x13d0] sm:$0xff]
        %v1486 = vld [vmem:[#allocation6 + $0x13d8] sm:$0xff]
        %v1487 = vld [vmem:[#allocation6 + $0x13e0] sm:$0xff]
        %v1488 = vld [vmem:[#allocation6 + $0x13e8] sm:$0xff]
        %v1489 = vld [vmem:[#allocation6 + $0x13f0] sm:$0xff]
        %v1490 = vld [vmem:[#allocation6 + $0x13f8] sm:$0xff]
        %v1491 = vld [vmem:[#allocation6 + $0x1400] sm:$0xff]
        %v1492 = vld [vmem:[#allocation6 + $0x1408] sm:$0xff]
        %v1493 = vld [vmem:[#allocation6 + $0x1410] sm:$0xff]
        %v1494 = vld [vmem:[#allocation6 + $0x1418] sm:$0xff]
        %v1495 = vld [vmem:[#allocation6 + $0x1420] sm:$0xff]
        %v1496 = vld [vmem:[#allocation6 + $0x1428] sm:$0xff]
        %v1497 = vld [vmem:[#allocation6 + $0x1430] sm:$0xff]
        %v1498 = vld [vmem:[#allocation6 + $0x1438] sm:$0xff]
        %v1499 = vld [vmem:[#allocation6 + $0x1440] sm:$0xff]
        %v1500 = vld [vmem:[#allocation6 + $0x1448] sm:$0xff]
        %v1501 = vld [vmem:[#allocation6 + $0x1450] sm:$0xff]
        %v1502 = vld [vmem:[#allocation6 + $0x1458] sm:$0xff]
        %v1503 = vld [vmem:[#allocation6 + $0x1460] sm:$0xff]
        %v1504 = vld [vmem:[#allocation6 + $0x1468] sm:$0xff]
        %v1505 = vld [vmem:[#allocation6 + $0x1470] sm:$0xff]
        %v1506 = vld [vmem:[#allocation6 + $0x1478] sm:$0xff]
        %v1507 = vld [vmem:[#allocation6 + $0x1480] sm:$0xff]
        %v1508 = vld [vmem:[#allocation6 + $0x1488] sm:$0xff]
        %v1509 = vld [vmem:[#allocation6 + $0x1490] sm:$0xff]
        %v1510 = vld [vmem:[#allocation6 + $0x1498] sm:$0xff]
        %v1511 = vld [vmem:[#allocation6 + $0x14a0] sm:$0xff]
        %v1512 = vld [vmem:[#allocation6 + $0x14a8] sm:$0xff]
        %v1513 = vld [vmem:[#allocation6 + $0x14b0] sm:$0xff]
        %v1514 = vld [vmem:[#allocation6 + $0x14b8] sm:$0xff]
        %v1515 = vld [vmem:[#allocation6 + $0x14c0] sm:$0xff]
        %v1516 = vld [vmem:[#allocation6 + $0x14c8] sm:$0xff]
        %v1517 = vld [vmem:[#allocation6 + $0x14d0] sm:$0xff]
        %v1518 = vld [vmem:[#allocation6 + $0x14d8] sm:$0xff]
        %v1519 = vld [vmem:[#allocation6 + $0x14e0] sm:$0xff]
        %v1520 = vld [vmem:[#allocation6 + $0x14e8] sm:$0xff]
        %v1521 = vld [vmem:[#allocation6 + $0x14f0] sm:$0xff]
        %v1522 = vld [vmem:[#allocation6 + $0x14f8] sm:$0xff]
        %v1523 = vld [vmem:[#allocation6 + $0x1500] sm:$0xff]
        %v1524 = vld [vmem:[#allocation6 + $0x1508] sm:$0xff]
        %v1525 = vld [vmem:[#allocation6 + $0x1510] sm:$0xff]
        %v1526 = vld [vmem:[#allocation6 + $0x1518] sm:$0xff]
        %v1527 = vld [vmem:[#allocation6 + $0x1520] sm:$0xff]
        %v1528 = vld [vmem:[#allocation6 + $0x1528] sm:$0xff]
        %v1529 = vld [vmem:[#allocation6 + $0x1530] sm:$0xff]
        %v1530 = vld [vmem:[#allocation6 + $0x1538] sm:$0xff]
        %v1531 = vld [vmem:[#allocation6 + $0x1540] sm:$0xff]
        %v1532 = vld [vmem:[#allocation6 + $0x1548] sm:$0xff]
        %v1533 = vld [vmem:[#allocation6 + $0x1550] sm:$0xff]
        %v1534 = vld [vmem:[#allocation6 + $0x1558] sm:$0xff]
        %v1535 = vld [vmem:[#allocation6 + $0x1560] sm:$0xff]
        %v1536 = vld [vmem:[#allocation6 + $0x1568] sm:$0xff]
        %v1537 = vld [vmem:[#allocation6 + $0x1570] sm:$0xff]
        %v1538 = vld [vmem:[#allocation6 + $0x1578] sm:$0xff]
        %v1539 = vld [vmem:[#allocation6 + $0x1580] sm:$0xff]
        %v1540 = vld [vmem:[#allocation6 + $0x1588] sm:$0xff]
        %v1541 = vld [vmem:[#allocation6 + $0x1590] sm:$0xff]
        %v1542 = vld [vmem:[#allocation6 + $0x1598] sm:$0xff]
        %v1543 = vld [vmem:[#allocation6 + $0x15a0] sm:$0xff]
        %v1544 = vld [vmem:[#allocation6 + $0x15a8] sm:$0xff]
        %v1545 = vld [vmem:[#allocation6 + $0x15b0] sm:$0xff]
        %v1546 = vld [vmem:[#allocation6 + $0x15b8] sm:$0xff]
        %v1547 = vld [vmem:[#allocation6 + $0x15c0] sm:$0xff]
        %v1548 = vld [vmem:[#allocation6 + $0x15c8] sm:$0xff]
        %v1549 = vld [vmem:[#allocation6 + $0x15d0] sm:$0xff]
        %v1550 = vld [vmem:[#allocation6 + $0x15d8] sm:$0xff]
        %v1551 = vld [vmem:[#allocation17] sm:$0xf]
        %v1553 = vlaneseq
        %v1554 = vshrl.u32 %v1553, 7
        %v1555 = vsub.s32 0, %v1554
        %v1556 = vrot.slane %v1551, %v1555
        %v1557 = vlaneseq
        %v1558 = vshrl.u32 %v1557, 7
        %v1559 = vsub.s32 1, %v1558
        %v1560 = vrot.slane %v1551, %v1559
        %v1561 = vlaneseq
        %v1562 = vshrl.u32 %v1561, 7
        %v1563 = vsub.s32 2, %v1562
        %v1564 = vrot.slane %v1551, %v1563
        %v1565 = vlaneseq
        %v1566 = vshrl.u32 %v1565, 7
        %v1567 = vsub.s32 3, %v1566
        %v1568 = vrot.slane %v1551, %v1567
        %v2273 = vunpack.c.l.b16 %v851
        %v2274 = vunpack.c.h.b16 %v851
        %v2275 = vunpack.c.l.b16 %v852
        %v2276 = vunpack.c.h.b16 %v852
        %v2277 = vunpack.c.l.b16 %v853
        %v2278 = vunpack.c.h.b16 %v853
        %v2279 = vunpack.c.l.b16 %v854
        %v2280 = vunpack.c.h.b16 %v854
        %v2281 = vunpack.c.l.b16 %v855
        %v2282 = vunpack.c.h.b16 %v855
        %v2283 = vunpack.c.l.b16 %v856
        %v2284 = vunpack.c.h.b16 %v856
        %v2285 = vunpack.c.l.b16 %v857
        %v2286 = vunpack.c.h.b16 %v857
        %v2287 = vunpack.c.l.b16 %v858
        %v2288 = vunpack.c.h.b16 %v858
        %v2289 = vunpack.c.l.b16 %v859
        %v2290 = vunpack.c.h.b16 %v859
        %v2291 = vunpack.c.l.b16 %v860
        %v2292 = vunpack.c.h.b16 %v860
        %v2293 = vunpack.c.l.b16 %v861
        %v2294 = vunpack.c.h.b16 %v861
        %v2295 = vunpack.c.l.b16 %v862
        %v2296 = vunpack.c.h.b16 %v862
        %v2297 = vunpack.c.l.b16 %v863
        %v2298 = vunpack.c.h.b16 %v863
        %v2299 = vunpack.c.l.b16 %v864
        %v2300 = vunpack.c.h.b16 %v864
        %v2301 = vunpack.c.l.b16 %v865
        %v2302 = vunpack.c.h.b16 %v865
        %v2303 = vunpack.c.l.b16 %v866
        %v2304 = vunpack.c.h.b16 %v866
        %v2305 = vunpack.c.l.b16 %v867
        %v2306 = vunpack.c.h.b16 %v867
        %v2307 = vunpack.c.l.b16 %v868
        %v2308 = vunpack.c.h.b16 %v868
        %v2309 = vunpack.c.l.b16 %v869
        %v2310 = vunpack.c.h.b16 %v869
        %v2311 = vunpack.c.l.b16 %v870
        %v2312 = vunpack.c.h.b16 %v870
        %v2313 = vunpack.c.l.b16 %v871
        %v2314 = vunpack.c.h.b16 %v871
        %v2315 = vunpack.c.l.b16 %v872
        %v2316 = vunpack.c.h.b16 %v872
        %v2317 = vunpack.c.l.b16 %v873
        %v2318 = vunpack.c.h.b16 %v873
        %v2319 = vunpack.c.l.b16 %v874
        %v2320 = vunpack.c.h.b16 %v874
        %v2321 = vunpack.c.l.b16 %v875
        %v2322 = vunpack.c.h.b16 %v875
        %v2323 = vunpack.c.l.b16 %v876
        %v2324 = vunpack.c.h.b16 %v876
        %v2325 = vunpack.c.l.b16 %v877
        %v2326 = vunpack.c.h.b16 %v877
        %v2327 = vunpack.c.l.b16 %v878
        %v2328 = vunpack.c.h.b16 %v878
        %v2329 = vunpack.c.l.b16 %v879
        %v2330 = vunpack.c.h.b16 %v879
        %v2331 = vunpack.c.l.b16 %v880
        %v2332 = vunpack.c.h.b16 %v880
        %v2333 = vunpack.c.l.b16 %v881
        %v2334 = vunpack.c.h.b16 %v881
        %v2335 = vunpack.c.l.b16 %v882
        %v2336 = vunpack.c.h.b16 %v882
        %v2337 = vunpack.c.l.b16 %v883
        %v2338 = vunpack.c.h.b16 %v883
        %v2339 = vunpack.c.l.b16 %v884
        %v2340 = vunpack.c.h.b16 %v884
        %v2341 = vunpack.c.l.b16 %v885
        %v2342 = vunpack.c.h.b16 %v885
        %v2343 = vunpack.c.l.b16 %v886
        %v2344 = vunpack.c.h.b16 %v886
        %v2345 = vunpack.c.l.b16 %v887
        %v2346 = vunpack.c.h.b16 %v887
        %v2347 = vunpack.c.l.b16 %v888
        %v2348 = vunpack.c.h.b16 %v888
        %v2349 = vunpack.c.l.b16 %v889
        %v2350 = vunpack.c.h.b16 %v889
        %v2351 = vunpack.c.l.b16 %v890
        %v2352 = vunpack.c.h.b16 %v890
        %v2353 = vunpack.c.l.b16 %v891
        %v2354 = vunpack.c.h.b16 %v891
        %v2355 = vunpack.c.l.b16 %v892
        %v2356 = vunpack.c.h.b16 %v892
        %v2357 = vunpack.c.l.b16 %v893
        %v2358 = vunpack.c.h.b16 %v893
        %v2359 = vunpack.c.l.b16 %v894
        %v2360 = vunpack.c.h.b16 %v894
        %v2361 = vunpack.c.l.b16 %v895
        %v2362 = vunpack.c.h.b16 %v895
        %v2363 = vunpack.c.l.b16 %v896
        %v2364 = vunpack.c.h.b16 %v896
        %v2365 = vunpack.c.l.b16 %v897
        %v2366 = vunpack.c.h.b16 %v897
        %v2367 = vunpack.c.l.b16 %v898
        %v2368 = vunpack.c.h.b16 %v898
        %v2369 = vunpack.c.l.b16 %v899
        %v2370 = vunpack.c.h.b16 %v899
        %v2371 = vunpack.c.l.b16 %v900
        %v2372 = vunpack.c.h.b16 %v900
        %v2373 = vunpack.c.l.b16 %v901
        %v2374 = vunpack.c.h.b16 %v901
        %v2375 = vunpack.c.l.b16 %v902
        %v2376 = vunpack.c.h.b16 %v902
        %v2377 = vunpack.c.l.b16 %v903
        %v2378 = vunpack.c.h.b16 %v903
        %v2379 = vunpack.c.l.b16 %v904
        %v2380 = vunpack.c.h.b16 %v904
        %v2381 = vunpack.c.l.b16 %v905
        %v2382 = vunpack.c.h.b16 %v905
        %v2383 = vunpack.c.l.b16 %v906
        %v2384 = vunpack.c.h.b16 %v906
        %v2385 = vunpack.c.l.b16 %v907
        %v2386 = vunpack.c.h.b16 %v907
        %v2387 = vunpack.c.l.b16 %v908
        %v2388 = vunpack.c.h.b16 %v908
        %v2389 = vunpack.c.l.b16 %v909
        %v2390 = vunpack.c.h.b16 %v909
        %v2391 = vunpack.c.l.b16 %v910
        %v2392 = vunpack.c.h.b16 %v910
        %v2393 = vunpack.c.l.b16 %v911
        %v2394 = vunpack.c.h.b16 %v911
        %v2395 = vunpack.c.l.b16 %v912
        %v2396 = vunpack.c.h.b16 %v912
        %v2397 = vunpack.c.l.b16 %v913
        %v2398 = vunpack.c.h.b16 %v913
        %v2399 = vunpack.c.l.b16 %v914
        %v2400 = vunpack.c.h.b16 %v914
        %v2401 = vunpack.c.l.b16 %v915
        %v2402 = vunpack.c.h.b16 %v915
        %v2403 = vunpack.c.l.b16 %v916
        %v2404 = vunpack.c.h.b16 %v916
        %v2405 = vunpack.c.l.b16 %v917
        %v2406 = vunpack.c.h.b16 %v917
        %v2407 = vunpack.c.l.b16 %v918
        %v2408 = vunpack.c.h.b16 %v918
        %v2409 = vunpack.c.l.b16 %v919
        %v2410 = vunpack.c.h.b16 %v919
        %v2411 = vunpack.c.l.b16 %v920
        %v2412 = vunpack.c.h.b16 %v920
        %v2413 = vunpack.c.l.b16 %v921
        %v2414 = vunpack.c.h.b16 %v921
        %v2415 = vunpack.c.l.b16 %v922
        %v2416 = vunpack.c.h.b16 %v922
        %v2417 = vunpack.c.l.b16 %v923
        %v2418 = vunpack.c.h.b16 %v923
        %v2419 = vunpack.c.l.b16 %v924
        %v2420 = vunpack.c.h.b16 %v924
        %v2421 = vunpack.c.l.b16 %v925
        %v2422 = vunpack.c.h.b16 %v925
        %v2423 = vunpack.c.l.b16 %v926
        %v2424 = vunpack.c.h.b16 %v926
        %v2425 = vunpack.c.l.b16 %v927
        %v2426 = vunpack.c.h.b16 %v927
        %v2427 = vunpack.c.l.b16 %v928
        %v2428 = vunpack.c.h.b16 %v928
        %v2429 = vunpack.c.l.b16 %v929
        %v2430 = vunpack.c.h.b16 %v929
        %v2431 = vunpack.c.l.b16 %v930
        %v2432 = vunpack.c.h.b16 %v930
        %v2433 = vunpack.c.l.b16 %v931
        %v2434 = vunpack.c.h.b16 %v931
        %v2435 = vunpack.c.l.b16 %v932
        %v2436 = vunpack.c.h.b16 %v932
        %v2437 = vunpack.c.l.b16 %v933
        %v2438 = vunpack.c.h.b16 %v933
        %v2439 = vunpack.c.l.b16 %v934
        %v2440 = vunpack.c.h.b16 %v934
        %v2441 = vunpack.c.l.b16 %v935
        %v2442 = vunpack.c.h.b16 %v935
        %v2443 = vunpack.c.l.b16 %v936
        %v2444 = vunpack.c.h.b16 %v936
        %v2445 = vunpack.c.l.b16 %v937
        %v2446 = vunpack.c.h.b16 %v937
        %v2447 = vunpack.c.l.b16 %v938
        %v2448 = vunpack.c.h.b16 %v938
        %v2449 = vunpack.c.l.b16 %v939
        %v2450 = vunpack.c.h.b16 %v939
        %v2451 = vunpack.c.l.b16 %v940
        %v2452 = vunpack.c.h.b16 %v940
        %v2453 = vunpack.c.l.b16 %v941
        %v2454 = vunpack.c.h.b16 %v941
        %v2455 = vunpack.c.l.b16 %v942
        %v2456 = vunpack.c.h.b16 %v942
        %v2457 = vunpack.c.l.b16 %v943
        %v2458 = vunpack.c.h.b16 %v943
        %v2459 = vunpack.c.l.b16 %v944
        %v2460 = vunpack.c.h.b16 %v944
        %v2461 = vunpack.c.l.b16 %v945
        %v2462 = vunpack.c.h.b16 %v945
        %v2463 = vunpack.c.l.b16 %v946
        %v2464 = vunpack.c.h.b16 %v946
        %v2465 = vunpack.c.l.b16 %v947
        %v2466 = vunpack.c.h.b16 %v947
        %v2467 = vunpack.c.l.b16 %v948
        %v2468 = vunpack.c.h.b16 %v948
        %v2469 = vunpack.c.l.b16 %v949
        %v2470 = vunpack.c.h.b16 %v949
        %v2471 = vunpack.c.l.b16 %v950
        %v2472 = vunpack.c.h.b16 %v950
        %v2473 = vunpack.c.l.b16 %v951
        %v2474 = vunpack.c.h.b16 %v951
        %v2475 = vunpack.c.l.b16 %v952
        %v2476 = vunpack.c.h.b16 %v952
        %v2477 = vunpack.c.l.b16 %v953
        %v2478 = vunpack.c.h.b16 %v953
        %v2479 = vunpack.c.l.b16 %v954
        %v2480 = vunpack.c.h.b16 %v954
        %v2481 = vunpack.c.l.b16 %v955
        %v2482 = vunpack.c.h.b16 %v955
        %v2483 = vunpack.c.l.b16 %v956
        %v2484 = vunpack.c.h.b16 %v956
        %v2485 = vunpack.c.l.b16 %v957
        %v2486 = vunpack.c.h.b16 %v957
        %v2487 = vunpack.c.l.b16 %v958
        %v2488 = vunpack.c.h.b16 %v958
        %v2489 = vunpack.c.l.b16 %v959
        %v2490 = vunpack.c.h.b16 %v959
        %v2491 = vunpack.c.l.b16 %v960
        %v2492 = vunpack.c.h.b16 %v960
        %v2493 = vunpack.c.l.b16 %v961
        %v2494 = vunpack.c.h.b16 %v961
        %v2495 = vunpack.c.l.b16 %v962
        %v2496 = vunpack.c.h.b16 %v962
        %v2497 = vunpack.c.l.b16 %v963
        %v2498 = vunpack.c.h.b16 %v963
        %v2499 = vunpack.c.l.b16 %v964
        %v2500 = vunpack.c.h.b16 %v964
        %v2501 = vunpack.c.l.b16 %v965
        %v2502 = vunpack.c.h.b16 %v965
        %v2503 = vunpack.c.l.b16 %v966
        %v2504 = vunpack.c.h.b16 %v966
        %v2505 = vunpack.c.l.b16 %v967
        %v2506 = vunpack.c.h.b16 %v967
        %v2507 = vunpack.c.l.b16 %v968
        %v2508 = vunpack.c.h.b16 %v968
        %v2509 = vunpack.c.l.b16 %v969
        %v2510 = vunpack.c.h.b16 %v969
        %v2511 = vunpack.c.l.b16 %v970
        %v2512 = vunpack.c.h.b16 %v970
        %v2513 = vunpack.c.l.b16 %v971
        %v2514 = vunpack.c.h.b16 %v971
        %v2515 = vunpack.c.l.b16 %v972
        %v2516 = vunpack.c.h.b16 %v972
        %v2517 = vunpack.c.l.b16 %v973
        %v2518 = vunpack.c.h.b16 %v973
        %v2519 = vunpack.c.l.b16 %v974
        %v2520 = vunpack.c.h.b16 %v974
        %v2521 = vunpack.c.l.b16 %v975
        %v2522 = vunpack.c.h.b16 %v975
        %v2523 = vunpack.c.l.b16 %v976
        %v2524 = vunpack.c.h.b16 %v976
        %v2525 = vunpack.c.l.b16 %v977
        %v2526 = vunpack.c.h.b16 %v977
        %v2527 = vunpack.c.l.b16 %v978
        %v2528 = vunpack.c.h.b16 %v978
        %v2529 = vunpack.c.l.b16 %v979
        %v2530 = vunpack.c.h.b16 %v979
        %v2531 = vunpack.c.l.b16 %v980
        %v2532 = vunpack.c.h.b16 %v980
        %v2533 = vunpack.c.l.b16 %v981
        %v2534 = vunpack.c.h.b16 %v981
        %v2535 = vunpack.c.l.b16 %v982
        %v2536 = vunpack.c.h.b16 %v982
        %v2537 = vunpack.c.l.b16 %v983
        %v2538 = vunpack.c.h.b16 %v983
        %v2539 = vunpack.c.l.b16 %v984
        %v2540 = vunpack.c.h.b16 %v984
        %v2541 = vunpack.c.l.b16 %v985
        %v2542 = vunpack.c.h.b16 %v985
        %v2543 = vunpack.c.l.b16 %v986
        %v2544 = vunpack.c.h.b16 %v986
        %v2545 = vunpack.c.l.b16 %v987
        %v2546 = vunpack.c.h.b16 %v987
        %v2547 = vunpack.c.l.b16 %v988
        %v2548 = vunpack.c.h.b16 %v988
        %v2549 = vunpack.c.l.b16 %v989
        %v2550 = vunpack.c.h.b16 %v989
        %v2551 = vunpack.c.l.b16 %v990
        %v2552 = vunpack.c.h.b16 %v990
        %v2553 = vunpack.c.l.b16 %v991
        %v2554 = vunpack.c.h.b16 %v991
        %v2555 = vunpack.c.l.b16 %v992
        %v2556 = vunpack.c.h.b16 %v992
        %v2557 = vunpack.c.l.b16 %v993
        %v2558 = vunpack.c.h.b16 %v993
        %v2559 = vunpack.c.l.b16 %v994
        %v2560 = vunpack.c.h.b16 %v994
        %v2561 = vunpack.c.l.b16 %v995
        %v2562 = vunpack.c.h.b16 %v995
        %v2563 = vunpack.c.l.b16 %v996
        %v2564 = vunpack.c.h.b16 %v996
        %v2565 = vunpack.c.l.b16 %v997
        %v2566 = vunpack.c.h.b16 %v997
        %v2567 = vunpack.c.l.b16 %v998
        %v2568 = vunpack.c.h.b16 %v998
        %v2569 = vunpack.c.l.b16 %v999
        %v2570 = vunpack.c.h.b16 %v999
        %v2571 = vunpack.c.l.b16 %v1000
        %v2572 = vunpack.c.h.b16 %v1000
        %v2573 = vunpack.c.l.b16 %v1001
        %v2574 = vunpack.c.h.b16 %v1001
        %v2575 = vunpack.c.l.b16 %v1002
        %v2576 = vunpack.c.h.b16 %v1002
        %v2577 = vunpack.c.l.b16 %v1003
        %v2578 = vunpack.c.h.b16 %v1003
        %v2579 = vunpack.c.l.b16 %v1004
        %v2580 = vunpack.c.h.b16 %v1004
        %v2581 = vunpack.c.l.b16 %v1005
        %v2582 = vunpack.c.h.b16 %v1005
        %v2583 = vunpack.c.l.b16 %v1006
        %v2584 = vunpack.c.h.b16 %v1006
        %v2585 = vunpack.c.l.b16 %v1007
        %v2586 = vunpack.c.h.b16 %v1007
        %v2587 = vunpack.c.l.b16 %v1008
        %v2588 = vunpack.c.h.b16 %v1008
        %v2589 = vunpack.c.l.b16 %v1009
        %v2590 = vunpack.c.h.b16 %v1009
        %v2591 = vunpack.c.l.b16 %v1010
        %v2592 = vunpack.c.h.b16 %v1010
        %v2593 = vunpack.c.l.b16 %v1011
        %v2594 = vunpack.c.h.b16 %v1011
        %v2595 = vunpack.c.l.b16 %v1012
        %v2596 = vunpack.c.h.b16 %v1012
        %v2597 = vunpack.c.l.b16 %v1013
        %v2598 = vunpack.c.h.b16 %v1013
        %v2599 = vunpack.c.l.b16 %v1014
        %v2600 = vunpack.c.h.b16 %v1014
        %v2601 = vunpack.c.l.b16 %v1015
        %v2602 = vunpack.c.h.b16 %v1015
        %v2603 = vunpack.c.l.b16 %v1016
        %v2604 = vunpack.c.h.b16 %v1016
        %v2605 = vunpack.c.l.b16 %v1017
        %v2606 = vunpack.c.h.b16 %v1017
        %v2607 = vunpack.c.l.b16 %v1018
        %v2608 = vunpack.c.h.b16 %v1018
        %v2609 = vunpack.c.l.b16 %v1019
        %v2610 = vunpack.c.h.b16 %v1019
        %v2611 = vunpack.c.l.b16 %v1020
        %v2612 = vunpack.c.h.b16 %v1020
        %v2613 = vunpack.c.l.b16 %v1021
        %v2614 = vunpack.c.h.b16 %v1021
        %v2615 = vunpack.c.l.b16 %v1022
        %v2616 = vunpack.c.h.b16 %v1022
        %v2617 = vunpack.c.l.b16 %v1023
        %v2618 = vunpack.c.h.b16 %v1023
        %v2619 = vunpack.c.l.b16 %v1024
        %v2620 = vunpack.c.h.b16 %v1024
        %v2621 = vunpack.c.l.b16 %v1025
        %v2622 = vunpack.c.h.b16 %v1025
        %v2623 = vunpack.c.l.b16 %v1026
        %v2624 = vunpack.c.h.b16 %v1026
        %v2625 = vunpack.c.l.b16 %v1027
        %v2626 = vunpack.c.h.b16 %v1027
        %v2627 = vunpack.c.l.b16 %v1028
        %v2628 = vunpack.c.h.b16 %v1028
        %v2629 = vunpack.c.l.b16 %v1029
        %v2630 = vunpack.c.h.b16 %v1029
        %v2631 = vunpack.c.l.b16 %v1030
        %v2632 = vunpack.c.h.b16 %v1030
        %v2633 = vunpack.c.l.b16 %v1031
        %v2634 = vunpack.c.h.b16 %v1031
        %v2635 = vunpack.c.l.b16 %v1032
        %v2636 = vunpack.c.h.b16 %v1032
        %v2637 = vunpack.c.l.b16 %v1033
        %v2638 = vunpack.c.h.b16 %v1033
        %v2639 = vunpack.c.l.b16 %v1034
        %v2640 = vunpack.c.h.b16 %v1034
        %v2641 = vunpack.c.l.b16 %v1035
        %v2642 = vunpack.c.h.b16 %v1035
        %v2643 = vunpack.c.l.b16 %v1036
        %v2644 = vunpack.c.h.b16 %v1036
        %v2645 = vunpack.c.l.b16 %v1037
        %v2646 = vunpack.c.h.b16 %v1037
        %v2647 = vunpack.c.l.b16 %v1038
        %v2648 = vunpack.c.h.b16 %v1038
        %v2649 = vunpack.c.l.b16 %v1039
        %v2650 = vunpack.c.h.b16 %v1039
        %v2651 = vunpack.c.l.b16 %v1040
        %v2652 = vunpack.c.h.b16 %v1040
        %v2653 = vunpack.c.l.b16 %v1041
        %v2654 = vunpack.c.h.b16 %v1041
        %v2655 = vunpack.c.l.b16 %v1042
        %v2656 = vunpack.c.h.b16 %v1042
        %v2657 = vunpack.c.l.b16 %v1043
        %v2658 = vunpack.c.h.b16 %v1043
        %v2659 = vunpack.c.l.b16 %v1044
        %v2660 = vunpack.c.h.b16 %v1044
        %v2661 = vunpack.c.l.b16 %v1045
        %v2662 = vunpack.c.h.b16 %v1045
        %v2663 = vunpack.c.l.b16 %v1046
        %v2664 = vunpack.c.h.b16 %v1046
        %v2665 = vunpack.c.l.b16 %v1047
        %v2666 = vunpack.c.h.b16 %v1047
        %v2667 = vunpack.c.l.b16 %v1048
        %v2668 = vunpack.c.h.b16 %v1048
        %v2669 = vunpack.c.l.b16 %v1049
        %v2670 = vunpack.c.h.b16 %v1049
        %v2671 = vunpack.c.l.b16 %v1050
        %v2672 = vunpack.c.h.b16 %v1050
        %v2673 = vunpack.c.l.b16 %v1051
        %v2674 = vunpack.c.h.b16 %v1051
        %v2675 = vunpack.c.l.b16 %v1052
        %v2676 = vunpack.c.h.b16 %v1052
        %v2677 = vunpack.c.l.b16 %v1053
        %v2678 = vunpack.c.h.b16 %v1053
        %v2679 = vunpack.c.l.b16 %v1054
        %v2680 = vunpack.c.h.b16 %v1054
        %v2681 = vunpack.c.l.b16 %v1055
        %v2682 = vunpack.c.h.b16 %v1055
        %v2683 = vunpack.c.l.b16 %v1056
        %v2684 = vunpack.c.h.b16 %v1056
        %v2685 = vunpack.c.l.b16 %v1057
        %v2686 = vunpack.c.h.b16 %v1057
        %v2687 = vunpack.c.l.b16 %v1058
        %v2688 = vunpack.c.h.b16 %v1058
        %v2689 = vunpack.c.l.b16 %v1059
        %v2690 = vunpack.c.h.b16 %v1059
        %v2691 = vunpack.c.l.b16 %v1060
        %v2692 = vunpack.c.h.b16 %v1060
        %v2693 = vunpack.c.l.b16 %v1061
        %v2694 = vunpack.c.h.b16 %v1061
        %v2695 = vunpack.c.l.b16 %v1062
        %v2696 = vunpack.c.h.b16 %v1062
        %v2697 = vunpack.c.l.b16 %v1063
        %v2698 = vunpack.c.h.b16 %v1063
        %v2699 = vunpack.c.l.b16 %v1064
        %v2700 = vunpack.c.h.b16 %v1064
        %v2701 = vunpack.c.l.b16 %v1065
        %v2702 = vunpack.c.h.b16 %v1065
        %v2703 = vunpack.c.l.b16 %v1066
        %v2704 = vunpack.c.h.b16 %v1066
        %v2705 = vunpack.c.l.b16 %v1067
        %v2706 = vunpack.c.h.b16 %v1067
        %v2707 = vunpack.c.l.b16 %v1068
        %v2708 = vunpack.c.h.b16 %v1068
        %v2709 = vunpack.c.l.b16 %v1069
        %v2710 = vunpack.c.h.b16 %v1069
        %v2711 = vunpack.c.l.b16 %v1070
        %v2712 = vunpack.c.h.b16 %v1070
        %v2713 = vunpack.c.l.b16 %v1071
        %v2714 = vunpack.c.h.b16 %v1071
        %v2715 = vunpack.c.l.b16 %v1072
        %v2716 = vunpack.c.h.b16 %v1072
        %v2717 = vunpack.c.l.b16 %v1073
        %v2718 = vunpack.c.h.b16 %v1073
        %v2719 = vunpack.c.l.b16 %v1074
        %v2720 = vunpack.c.h.b16 %v1074
        %v2721 = vunpack.c.l.b16 %v1075
        %v2722 = vunpack.c.h.b16 %v1075
        %v2723 = vunpack.c.l.b16 %v1076
        %v2724 = vunpack.c.h.b16 %v1076
        %v2725 = vunpack.c.l.b16 %v1077
        %v2726 = vunpack.c.h.b16 %v1077
        %v2727 = vunpack.c.l.b16 %v1078
        %v2728 = vunpack.c.h.b16 %v1078
        %v2729 = vunpack.c.l.b16 %v1079
        %v2730 = vunpack.c.h.b16 %v1079
        %v2731 = vunpack.c.l.b16 %v1080
        %v2732 = vunpack.c.h.b16 %v1080
        %v2733 = vunpack.c.l.b16 %v1081
        %v2734 = vunpack.c.h.b16 %v1081
        %v2735 = vunpack.c.l.b16 %v1082
        %v2736 = vunpack.c.h.b16 %v1082
        %v2737 = vunpack.c.l.b16 %v1083
        %v2738 = vunpack.c.h.b16 %v1083
        %v2739 = vunpack.c.l.b16 %v1084
        %v2740 = vunpack.c.h.b16 %v1084
        %v2741 = vunpack.c.l.b16 %v1085
        %v2742 = vunpack.c.h.b16 %v1085
        %v2743 = vunpack.c.l.b16 %v1086
        %v2744 = vunpack.c.h.b16 %v1086
        %v2745 = vunpack.c.l.b16 %v1087
        %v2746 = vunpack.c.h.b16 %v1087
        %v2747 = vunpack.c.l.b16 %v1088
        %v2748 = vunpack.c.h.b16 %v1088
        %v2749 = vunpack.c.l.b16 %v1089
        %v2750 = vunpack.c.h.b16 %v1089
        %v2751 = vunpack.c.l.b16 %v1090
        %v2752 = vunpack.c.h.b16 %v1090
        %v2753 = vunpack.c.l.b16 %v1091
        %v2754 = vunpack.c.h.b16 %v1091
        %v2755 = vunpack.c.l.b16 %v1092
        %v2756 = vunpack.c.h.b16 %v1092
        %v2757 = vunpack.c.l.b16 %v1093
        %v2758 = vunpack.c.h.b16 %v1093
        %v2759 = vunpack.c.l.b16 %v1094
        %v2760 = vunpack.c.h.b16 %v1094
        %v2761 = vunpack.c.l.b16 %v1095
        %v2762 = vunpack.c.h.b16 %v1095
        %v2763 = vunpack.c.l.b16 %v1096
        %v2764 = vunpack.c.h.b16 %v1096
        %v2765 = vunpack.c.l.b16 %v1097
        %v2766 = vunpack.c.h.b16 %v1097
        %v2767 = vunpack.c.l.b16 %v1098
        %v2768 = vunpack.c.h.b16 %v1098
        %v2769 = vunpack.c.l.b16 %v1099
        %v2770 = vunpack.c.h.b16 %v1099
        %v2771 = vunpack.c.l.b16 %v1100
        %v2772 = vunpack.c.h.b16 %v1100
        %v2773 = vunpack.c.l.b16 %v1101
        %v2774 = vunpack.c.h.b16 %v1101
        %v2775 = vunpack.c.l.b16 %v1102
        %v2776 = vunpack.c.h.b16 %v1102
        %v2777 = vunpack.c.l.b16 %v1103
        %v2778 = vunpack.c.h.b16 %v1103
        %v2779 = vunpack.c.l.b16 %v1104
        %v2780 = vunpack.c.h.b16 %v1104
        %v2781 = vunpack.c.l.b16 %v1105
        %v2782 = vunpack.c.h.b16 %v1105
        %v2783 = vunpack.c.l.b16 %v1106
        %v2784 = vunpack.c.h.b16 %v1106
        %v2785 = vunpack.c.l.b16 %v1107
        %v2786 = vunpack.c.h.b16 %v1107
        %v2787 = vunpack.c.l.b16 %v1108
        %v2788 = vunpack.c.h.b16 %v1108
        %v2789 = vunpack.c.l.b16 %v1109
        %v2790 = vunpack.c.h.b16 %v1109
        %v2791 = vunpack.c.l.b16 %v1110
        %v2792 = vunpack.c.h.b16 %v1110
        %v2793 = vunpack.c.l.b16 %v1111
        %v2794 = vunpack.c.h.b16 %v1111
        %v2795 = vunpack.c.l.b16 %v1112
        %v2796 = vunpack.c.h.b16 %v1112
        %v2797 = vunpack.c.l.b16 %v1113
        %v2798 = vunpack.c.h.b16 %v1113
        %v2799 = vunpack.c.l.b16 %v1114
        %v2800 = vunpack.c.h.b16 %v1114
        %v2801 = vunpack.c.l.b16 %v1115
        %v2802 = vunpack.c.h.b16 %v1115
        %v2803 = vunpack.c.l.b16 %v1116
        %v2804 = vunpack.c.h.b16 %v1116
        %v2805 = vunpack.c.l.b16 %v1117
        %v2806 = vunpack.c.h.b16 %v1117
        %v2807 = vunpack.c.l.b16 %v1118
        %v2808 = vunpack.c.h.b16 %v1118
        %v2809 = vunpack.c.l.b16 %v1119
        %v2810 = vunpack.c.h.b16 %v1119
        %v2811 = vunpack.c.l.b16 %v1120
        %v2812 = vunpack.c.h.b16 %v1120
        %v2813 = vunpack.c.l.b16 %v1121
        %v2814 = vunpack.c.h.b16 %v1121
        %v2815 = vunpack.c.l.b16 %v1122
        %v2816 = vunpack.c.h.b16 %v1122
        %v2817 = vunpack.c.l.b16 %v1123
        %v2818 = vunpack.c.h.b16 %v1123
        %v2819 = vunpack.c.l.b16 %v1124
        %v2820 = vunpack.c.h.b16 %v1124
        %v2821 = vunpack.c.l.b16 %v1125
        %v2822 = vunpack.c.h.b16 %v1125
        %v2823 = vunpack.c.l.b16 %v1126
        %v2824 = vunpack.c.h.b16 %v1126
        %v2825 = vunpack.c.l.b16 %v1127
        %v2826 = vunpack.c.h.b16 %v1127
        %v2827 = vunpack.c.l.b16 %v1128
        %v2828 = vunpack.c.h.b16 %v1128
        %v2829 = vunpack.c.l.b16 %v1129
        %v2830 = vunpack.c.h.b16 %v1129
        %v2831 = vunpack.c.l.b16 %v1130
        %v2832 = vunpack.c.h.b16 %v1130
        %v2833 = vunpack.c.l.b16 %v1131
        %v2834 = vunpack.c.h.b16 %v1131
        %v2835 = vunpack.c.l.b16 %v1132
        %v2836 = vunpack.c.h.b16 %v1132
        %v2837 = vunpack.c.l.b16 %v1133
        %v2838 = vunpack.c.h.b16 %v1133
        %v2839 = vunpack.c.l.b16 %v1134
        %v2840 = vunpack.c.h.b16 %v1134
        %v2841 = vunpack.c.l.b16 %v1135
        %v2842 = vunpack.c.h.b16 %v1135
        %v2843 = vunpack.c.l.b16 %v1136
        %v2844 = vunpack.c.h.b16 %v1136
        %v2845 = vunpack.c.l.b16 %v1137
        %v2846 = vunpack.c.h.b16 %v1137
        %v2847 = vunpack.c.l.b16 %v1138
        %v2848 = vunpack.c.h.b16 %v1138
        %v2849 = vunpack.c.l.b16 %v1139
        %v2850 = vunpack.c.h.b16 %v1139
        %v2851 = vunpack.c.l.b16 %v1140
        %v2852 = vunpack.c.h.b16 %v1140
        %v2853 = vunpack.c.l.b16 %v1141
        %v2854 = vunpack.c.h.b16 %v1141
        %v2855 = vunpack.c.l.b16 %v1142
        %v2856 = vunpack.c.h.b16 %v1142
        %v2857 = vunpack.c.l.b16 %v1143
        %v2858 = vunpack.c.h.b16 %v1143
        %v2859 = vunpack.c.l.b16 %v1144
        %v2860 = vunpack.c.h.b16 %v1144
        %v2861 = vunpack.c.l.b16 %v1145
        %v2862 = vunpack.c.h.b16 %v1145
        %v2863 = vunpack.c.l.b16 %v1146
        %v2864 = vunpack.c.h.b16 %v1146
        %v2865 = vunpack.c.l.b16 %v1147
        %v2866 = vunpack.c.h.b16 %v1147
        %v2867 = vunpack.c.l.b16 %v1148
        %v2868 = vunpack.c.h.b16 %v1148
        %v2869 = vunpack.c.l.b16 %v1149
        %v2870 = vunpack.c.h.b16 %v1149
        %v2871 = vunpack.c.l.b16 %v1150
        %v2872 = vunpack.c.h.b16 %v1150
        %v2873 = vunpack.c.l.b16 %v1151
        %v2874 = vunpack.c.h.b16 %v1151
        %v2875 = vunpack.c.l.b16 %v1152
        %v2876 = vunpack.c.h.b16 %v1152
        %v2877 = vunpack.c.l.b16 %v1153
        %v2878 = vunpack.c.h.b16 %v1153
        %v2879 = vunpack.c.l.b16 %v1154
        %v2880 = vunpack.c.h.b16 %v1154
        %v2881 = vunpack.c.l.b16 %v1155
        %v2882 = vunpack.c.h.b16 %v1155
        %v2883 = vunpack.c.l.b16 %v1156
        %v2884 = vunpack.c.h.b16 %v1156
        %v2885 = vunpack.c.l.b16 %v1157
        %v2886 = vunpack.c.h.b16 %v1157
        %v2887 = vunpack.c.l.b16 %v1158
        %v2888 = vunpack.c.h.b16 %v1158
        %v2889 = vunpack.c.l.b16 %v1159
        %v2890 = vunpack.c.h.b16 %v1159
        %v2891 = vunpack.c.l.b16 %v1160
        %v2892 = vunpack.c.h.b16 %v1160
        %v2893 = vunpack.c.l.b16 %v1161
        %v2894 = vunpack.c.h.b16 %v1161
        %v2895 = vunpack.c.l.b16 %v1162
        %v2896 = vunpack.c.h.b16 %v1162
        %v2897 = vunpack.c.l.b16 %v1163
        %v2898 = vunpack.c.h.b16 %v1163
        %v2899 = vunpack.c.l.b16 %v1164
        %v2900 = vunpack.c.h.b16 %v1164
        %v2901 = vunpack.c.l.b16 %v1165
        %v2902 = vunpack.c.h.b16 %v1165
        %v2903 = vunpack.c.l.b16 %v1166
        %v2904 = vunpack.c.h.b16 %v1166
        %v2905 = vunpack.c.l.b16 %v1167
        %v2906 = vunpack.c.h.b16 %v1167
        %v2907 = vunpack.c.l.b16 %v1168
        %v2908 = vunpack.c.h.b16 %v1168
        %v2909 = vunpack.c.l.b16 %v1169
        %v2910 = vunpack.c.h.b16 %v1169
        %v2911 = vunpack.c.l.b16 %v1170
        %v2912 = vunpack.c.h.b16 %v1170
        %v2913 = vunpack.c.l.b16 %v1171
        %v2914 = vunpack.c.h.b16 %v1171
        %v2915 = vunpack.c.l.b16 %v1172
        %v2916 = vunpack.c.h.b16 %v1172
        %v2917 = vunpack.c.l.b16 %v1173
        %v2918 = vunpack.c.h.b16 %v1173
        %v2919 = vunpack.c.l.b16 %v1174
        %v2920 = vunpack.c.h.b16 %v1174
        %v2921 = vunpack.c.l.b16 %v1175
        %v2922 = vunpack.c.h.b16 %v1175
        %v2923 = vunpack.c.l.b16 %v1176
        %v2924 = vunpack.c.h.b16 %v1176
        %v2925 = vunpack.c.l.b16 %v1177
        %v2926 = vunpack.c.h.b16 %v1177
        %v2927 = vunpack.c.l.b16 %v1178
        %v2928 = vunpack.c.h.b16 %v1178
        %v2929 = vunpack.c.l.b16 %v1179
        %v2930 = vunpack.c.h.b16 %v1179
        %v2931 = vunpack.c.l.b16 %v1180
        %v2932 = vunpack.c.h.b16 %v1180
        %v2933 = vunpack.c.l.b16 %v1181
        %v2934 = vunpack.c.h.b16 %v1181
        %v2935 = vunpack.c.l.b16 %v1182
        %v2936 = vunpack.c.h.b16 %v1182
        %v2937 = vunpack.c.l.b16 %v1183
        %v2938 = vunpack.c.h.b16 %v1183
        %v2939 = vunpack.c.l.b16 %v1184
        %v2940 = vunpack.c.h.b16 %v1184
        %v2941 = vunpack.c.l.b16 %v1185
        %v2942 = vunpack.c.h.b16 %v1185
        %v2943 = vunpack.c.l.b16 %v1186
        %v2944 = vunpack.c.h.b16 %v1186
        %v2945 = vunpack.c.l.b16 %v1187
        %v2946 = vunpack.c.h.b16 %v1187
        %v2947 = vunpack.c.l.b16 %v1188
        %v2948 = vunpack.c.h.b16 %v1188
        %v2949 = vunpack.c.l.b16 %v1189
        %v2950 = vunpack.c.h.b16 %v1189
        %v2951 = vunpack.c.l.b16 %v1190
        %v2952 = vunpack.c.h.b16 %v1190
        %v2953 = vunpack.c.l.b16 %v1191
        %v2954 = vunpack.c.h.b16 %v1191
        %v2955 = vunpack.c.l.b16 %v1192
        %v2956 = vunpack.c.h.b16 %v1192
        %v2957 = vunpack.c.l.b16 %v1193
        %v2958 = vunpack.c.h.b16 %v1193
        %v2959 = vunpack.c.l.b16 %v1194
        %v2960 = vunpack.c.h.b16 %v1194
        %v2961 = vunpack.c.l.b16 %v1195
        %v2962 = vunpack.c.h.b16 %v1195
        %v2963 = vunpack.c.l.b16 %v1196
        %v2964 = vunpack.c.h.b16 %v1196
        %v2965 = vunpack.c.l.b16 %v1197
        %v2966 = vunpack.c.h.b16 %v1197
        %v2967 = vunpack.c.l.b16 %v1198
        %v2968 = vunpack.c.h.b16 %v1198
        %v2969 = vunpack.c.l.b16 %v1199
        %v2970 = vunpack.c.h.b16 %v1199
        %v2971 = vunpack.c.l.b16 %v1200
        %v2972 = vunpack.c.h.b16 %v1200
        %v2973 = vunpack.c.l.b16 %v1201
        %v2974 = vunpack.c.h.b16 %v1201
        %v2975 = vunpack.c.l.b16 %v1202
        %v2976 = vunpack.c.h.b16 %v1202
        %v2977 = vunpack.c.l.b16 %v1203
        %v2978 = vunpack.c.h.b16 %v1203
        %v2979 = vunpack.c.l.b16 %v1204
        %v2980 = vunpack.c.h.b16 %v1204
        %v2981 = vunpack.c.l.b16 %v1205
        %v2982 = vunpack.c.h.b16 %v1205
        %v2983 = vunpack.c.l.b16 %v1206
        %v2984 = vunpack.c.h.b16 %v1206
        %v2985 = vunpack.c.l.b16 %v1207
        %v2986 = vunpack.c.h.b16 %v1207
        %v2987 = vunpack.c.l.b16 %v1208
        %v2988 = vunpack.c.h.b16 %v1208
        %v2989 = vunpack.c.l.b16 %v1209
        %v2990 = vunpack.c.h.b16 %v1209
        %v2991 = vunpack.c.l.b16 %v1210
        %v2992 = vunpack.c.h.b16 %v1210
        %v2993 = vunpack.c.l.b16 %v1211
        %v2994 = vunpack.c.h.b16 %v1211
        %v2995 = vunpack.c.l.b16 %v1212
        %v2996 = vunpack.c.h.b16 %v1212
        %v2997 = vunpack.c.l.b16 %v1213
        %v2998 = vunpack.c.h.b16 %v1213
        %v2999 = vunpack.c.l.b16 %v1214
        %v3000 = vunpack.c.h.b16 %v1214
        %v3001 = vunpack.c.l.b16 %v1215
        %v3002 = vunpack.c.h.b16 %v1215
        %v3003 = vunpack.c.l.b16 %v1216
        %v3004 = vunpack.c.h.b16 %v1216
        %v3005 = vunpack.c.l.b16 %v1217
        %v3006 = vunpack.c.h.b16 %v1217
        %v3007 = vunpack.c.l.b16 %v1218
        %v3008 = vunpack.c.h.b16 %v1218
        %v3009 = vunpack.c.l.b16 %v1219
        %v3010 = vunpack.c.h.b16 %v1219
        %v3011 = vunpack.c.l.b16 %v1220
        %v3012 = vunpack.c.h.b16 %v1220
        %v3013 = vunpack.c.l.b16 %v1221
        %v3014 = vunpack.c.h.b16 %v1221
        %v3015 = vunpack.c.l.b16 %v1222
        %v3016 = vunpack.c.h.b16 %v1222
        %v3017 = vunpack.c.l.b16 %v1223
        %v3018 = vunpack.c.h.b16 %v1223
        %v3019 = vunpack.c.l.b16 %v1224
        %v3020 = vunpack.c.h.b16 %v1224
        %v3021 = vunpack.c.l.b16 %v1225
        %v3022 = vunpack.c.h.b16 %v1225
        %v3023 = vunpack.c.l.b16 %v1226
        %v3024 = vunpack.c.h.b16 %v1226
        %v3025 = vunpack.c.l.b16 %v1227
        %v3026 = vunpack.c.h.b16 %v1227
        %v3027 = vunpack.c.l.b16 %v1228
        %v3028 = vunpack.c.h.b16 %v1228
        %v3029 = vunpack.c.l.b16 %v1229
        %v3030 = vunpack.c.h.b16 %v1229
        %v3031 = vunpack.c.l.b16 %v1230
        %v3032 = vunpack.c.h.b16 %v1230
        %v3033 = vunpack.c.l.b16 %v1231
        %v3034 = vunpack.c.h.b16 %v1231
        %v3035 = vunpack.c.l.b16 %v1232
        %v3036 = vunpack.c.h.b16 %v1232
        %v3037 = vunpack.c.l.b16 %v1233
        %v3038 = vunpack.c.h.b16 %v1233
        %v3039 = vunpack.c.l.b16 %v1234
        %v3040 = vunpack.c.h.b16 %v1234
        %v3041 = vunpack.c.l.b16 %v1235
        %v3042 = vunpack.c.h.b16 %v1235
        %v3043 = vunpack.c.l.b16 %v1236
        %v3044 = vunpack.c.h.b16 %v1236
        %v3045 = vunpack.c.l.b16 %v1237
        %v3046 = vunpack.c.h.b16 %v1237
        %v3047 = vunpack.c.l.b16 %v1238
        %v3048 = vunpack.c.h.b16 %v1238
        %v3049 = vunpack.c.l.b16 %v1239
        %v3050 = vunpack.c.h.b16 %v1239
        %v3051 = vunpack.c.l.b16 %v1240
        %v3052 = vunpack.c.h.b16 %v1240
        %v3053 = vunpack.c.l.b16 %v1241
        %v3054 = vunpack.c.h.b16 %v1241
        %v3055 = vunpack.c.l.b16 %v1242
        %v3056 = vunpack.c.h.b16 %v1242
        %v3057 = vunpack.c.l.b16 %v1243
        %v3058 = vunpack.c.h.b16 %v1243
        %v3059 = vunpack.c.l.b16 %v1244
        %v3060 = vunpack.c.h.b16 %v1244
        %v3061 = vunpack.c.l.b16 %v1245
        %v3062 = vunpack.c.h.b16 %v1245
        %v3063 = vunpack.c.l.b16 %v1246
        %v3064 = vunpack.c.h.b16 %v1246
        %v3065 = vunpack.c.l.b16 %v1247
        %v3066 = vunpack.c.h.b16 %v1247
        %v3067 = vunpack.c.l.b16 %v1248
        %v3068 = vunpack.c.h.b16 %v1248
        %v3069 = vunpack.c.l.b16 %v1249
        %v3070 = vunpack.c.h.b16 %v1249
        %v3071 = vunpack.c.l.b16 %v1250
        %v3072 = vunpack.c.h.b16 %v1250
        %v3073 = vunpack.c.l.b16 %v1251
        %v3074 = vunpack.c.h.b16 %v1251
        %v3075 = vunpack.c.l.b16 %v1252
        %v3076 = vunpack.c.h.b16 %v1252
        %v3077 = vunpack.c.l.b16 %v1253
        %v3078 = vunpack.c.h.b16 %v1253
        %v3079 = vunpack.c.l.b16 %v1254
        %v3080 = vunpack.c.h.b16 %v1254
        %v3081 = vunpack.c.l.b16 %v1255
        %v3082 = vunpack.c.h.b16 %v1255
        %v3083 = vunpack.c.l.b16 %v1256
        %v3084 = vunpack.c.h.b16 %v1256
        %v3085 = vunpack.c.l.b16 %v1257
        %v3086 = vunpack.c.h.b16 %v1257
        %v3087 = vunpack.c.l.b16 %v1258
        %v3088 = vunpack.c.h.b16 %v1258
        %v3089 = vunpack.c.l.b16 %v1259
        %v3090 = vunpack.c.h.b16 %v1259
        %v3091 = vunpack.c.l.b16 %v1260
        %v3092 = vunpack.c.h.b16 %v1260
        %v3093 = vunpack.c.l.b16 %v1261
        %v3094 = vunpack.c.h.b16 %v1261
        %v3095 = vunpack.c.l.b16 %v1262
        %v3096 = vunpack.c.h.b16 %v1262
        %v3097 = vunpack.c.l.b16 %v1263
        %v3098 = vunpack.c.h.b16 %v1263
        %v3099 = vunpack.c.l.b16 %v1264
        %v3100 = vunpack.c.h.b16 %v1264
        %v3101 = vunpack.c.l.b16 %v1265
        %v3102 = vunpack.c.h.b16 %v1265
        %v3103 = vunpack.c.l.b16 %v1266
        %v3104 = vunpack.c.h.b16 %v1266
        %v3105 = vunpack.c.l.b16 %v1267
        %v3106 = vunpack.c.h.b16 %v1267
        %v3107 = vunpack.c.l.b16 %v1268
        %v3108 = vunpack.c.h.b16 %v1268
        %v3109 = vunpack.c.l.b16 %v1269
        %v3110 = vunpack.c.h.b16 %v1269
        %v3111 = vunpack.c.l.b16 %v1270
        %v3112 = vunpack.c.h.b16 %v1270
        %v3113 = vunpack.c.l.b16 %v1271
        %v3114 = vunpack.c.h.b16 %v1271
        %v3115 = vunpack.c.l.b16 %v1272
        %v3116 = vunpack.c.h.b16 %v1272
        %v3117 = vunpack.c.l.b16 %v1273
        %v3118 = vunpack.c.h.b16 %v1273
        %v3119 = vunpack.c.l.b16 %v1274
        %v3120 = vunpack.c.h.b16 %v1274
        %v3121 = vunpack.c.l.b16 %v1275
        %v3122 = vunpack.c.h.b16 %v1275
        %v3123 = vunpack.c.l.b16 %v1276
        %v3124 = vunpack.c.h.b16 %v1276
        %v3125 = vunpack.c.l.b16 %v1277
        %v3126 = vunpack.c.h.b16 %v1277
        %v3127 = vunpack.c.l.b16 %v1278
        %v3128 = vunpack.c.h.b16 %v1278
        %v3129 = vunpack.c.l.b16 %v1279
        %v3130 = vunpack.c.h.b16 %v1279
        %v3131 = vunpack.c.l.b16 %v1280
        %v3132 = vunpack.c.h.b16 %v1280
        %v3133 = vunpack.c.l.b16 %v1281
        %v3134 = vunpack.c.h.b16 %v1281
        %v3135 = vunpack.c.l.b16 %v1282
        %v3136 = vunpack.c.h.b16 %v1282
        %v3137 = vunpack.c.l.b16 %v1283
        %v3138 = vunpack.c.h.b16 %v1283
        %v3139 = vunpack.c.l.b16 %v1284
        %v3140 = vunpack.c.h.b16 %v1284
        %v3141 = vunpack.c.l.b16 %v1285
        %v3142 = vunpack.c.h.b16 %v1285
        %v3143 = vunpack.c.l.b16 %v1286
        %v3144 = vunpack.c.h.b16 %v1286
        %v3145 = vunpack.c.l.b16 %v1287
        %v3146 = vunpack.c.h.b16 %v1287
        %v3147 = vunpack.c.l.b16 %v1288
        %v3148 = vunpack.c.h.b16 %v1288
        %v3149 = vunpack.c.l.b16 %v1289
        %v3150 = vunpack.c.h.b16 %v1289
        %v3151 = vunpack.c.l.b16 %v1290
        %v3152 = vunpack.c.h.b16 %v1290
        %v3153 = vunpack.c.l.b16 %v1291
        %v3154 = vunpack.c.h.b16 %v1291
        %v3155 = vunpack.c.l.b16 %v1292
        %v3156 = vunpack.c.h.b16 %v1292
        %v3157 = vunpack.c.l.b16 %v1293
        %v3158 = vunpack.c.h.b16 %v1293
        %v3159 = vunpack.c.l.b16 %v1294
        %v3160 = vunpack.c.h.b16 %v1294
        %v3161 = vunpack.c.l.b16 %v1295
        %v3162 = vunpack.c.h.b16 %v1295
        %v3163 = vunpack.c.l.b16 %v1296
        %v3164 = vunpack.c.h.b16 %v1296
        %v3165 = vunpack.c.l.b16 %v1297
        %v3166 = vunpack.c.h.b16 %v1297
        %v3167 = vunpack.c.l.b16 %v1298
        %v3168 = vunpack.c.h.b16 %v1298
        %v3169 = vunpack.c.l.b16 %v1299
        %v3170 = vunpack.c.h.b16 %v1299
        %v3171 = vunpack.c.l.b16 %v1300
        %v3172 = vunpack.c.h.b16 %v1300
        %v3173 = vunpack.c.l.b16 %v1301
        %v3174 = vunpack.c.h.b16 %v1301
        %v3175 = vunpack.c.l.b16 %v1302
        %v3176 = vunpack.c.h.b16 %v1302
        %v3177 = vunpack.c.l.b16 %v1303
        %v3178 = vunpack.c.h.b16 %v1303
        %v3179 = vunpack.c.l.b16 %v1304
        %v3180 = vunpack.c.h.b16 %v1304
        %v3181 = vunpack.c.l.b16 %v1305
        %v3182 = vunpack.c.h.b16 %v1305
        %v3183 = vunpack.c.l.b16 %v1306
        %v3184 = vunpack.c.h.b16 %v1306
        %v3185 = vunpack.c.l.b16 %v1307
        %v3186 = vunpack.c.h.b16 %v1307
        %v3187 = vunpack.c.l.b16 %v1308
        %v3188 = vunpack.c.h.b16 %v1308
        %v3189 = vunpack.c.l.b16 %v1309
        %v3190 = vunpack.c.h.b16 %v1309
        %v3191 = vunpack.c.l.b16 %v1310
        %v3192 = vunpack.c.h.b16 %v1310
        %v3193 = vunpack.c.l.b16 %v1311
        %v3194 = vunpack.c.h.b16 %v1311
        %v3195 = vunpack.c.l.b16 %v1312
        %v3196 = vunpack.c.h.b16 %v1312
        %v3197 = vunpack.c.l.b16 %v1313
        %v3198 = vunpack.c.h.b16 %v1313
        %v3199 = vunpack.c.l.b16 %v1314
        %v3200 = vunpack.c.h.b16 %v1314
        %v3201 = vunpack.c.l.b16 %v1315
        %v3202 = vunpack.c.h.b16 %v1315
        %v3203 = vunpack.c.l.b16 %v1316
        %v3204 = vunpack.c.h.b16 %v1316
        %v3205 = vunpack.c.l.b16 %v1317
        %v3206 = vunpack.c.h.b16 %v1317
        %v3207 = vunpack.c.l.b16 %v1318
        %v3208 = vunpack.c.h.b16 %v1318
        %v3209 = vunpack.c.l.b16 %v1319
        %v3210 = vunpack.c.h.b16 %v1319
        %v3211 = vunpack.c.l.b16 %v1320
        %v3212 = vunpack.c.h.b16 %v1320
        %v3213 = vunpack.c.l.b16 %v1321
        %v3214 = vunpack.c.h.b16 %v1321
        %v3215 = vunpack.c.l.b16 %v1322
        %v3216 = vunpack.c.h.b16 %v1322
        %v3217 = vunpack.c.l.b16 %v1323
        %v3218 = vunpack.c.h.b16 %v1323
        %v3219 = vunpack.c.l.b16 %v1324
        %v3220 = vunpack.c.h.b16 %v1324
        %v3221 = vunpack.c.l.b16 %v1325
        %v3222 = vunpack.c.h.b16 %v1325
        %v3223 = vunpack.c.l.b16 %v1326
        %v3224 = vunpack.c.h.b16 %v1326
        %v3225 = vunpack.c.l.b16 %v1327
        %v3226 = vunpack.c.h.b16 %v1327
        %v3227 = vunpack.c.l.b16 %v1328
        %v3228 = vunpack.c.h.b16 %v1328
        %v3229 = vunpack.c.l.b16 %v1329
        %v3230 = vunpack.c.h.b16 %v1329
        %v3231 = vunpack.c.l.b16 %v1330
        %v3232 = vunpack.c.h.b16 %v1330
        %v3233 = vunpack.c.l.b16 %v1331
        %v3234 = vunpack.c.h.b16 %v1331
        %v3235 = vunpack.c.l.b16 %v1332
        %v3236 = vunpack.c.h.b16 %v1332
        %v3237 = vunpack.c.l.b16 %v1333
        %v3238 = vunpack.c.h.b16 %v1333
        %v3239 = vunpack.c.l.b16 %v1334
        %v3240 = vunpack.c.h.b16 %v1334
        %v3241 = vunpack.c.l.b16 %v1335
        %v3242 = vunpack.c.h.b16 %v1335
        %v3243 = vunpack.c.l.b16 %v1336
        %v3244 = vunpack.c.h.b16 %v1336
        %v3245 = vunpack.c.l.b16 %v1337
        %v3246 = vunpack.c.h.b16 %v1337
        %v3247 = vunpack.c.l.b16 %v1338
        %v3248 = vunpack.c.h.b16 %v1338
        %v3249 = vunpack.c.l.b16 %v1339
        %v3250 = vunpack.c.h.b16 %v1339
        %v3251 = vunpack.c.l.b16 %v1340
        %v3252 = vunpack.c.h.b16 %v1340
        %v3253 = vunpack.c.l.b16 %v1341
        %v3254 = vunpack.c.h.b16 %v1341
        %v3255 = vunpack.c.l.b16 %v1342
        %v3256 = vunpack.c.h.b16 %v1342
        %v3257 = vunpack.c.l.b16 %v1343
        %v3258 = vunpack.c.h.b16 %v1343
        %v3259 = vunpack.c.l.b16 %v1344
        %v3260 = vunpack.c.h.b16 %v1344
        %v3261 = vunpack.c.l.b16 %v1345
        %v3262 = vunpack.c.h.b16 %v1345
        %v3263 = vunpack.c.l.b16 %v1346
        %v3264 = vunpack.c.h.b16 %v1346
        %v3265 = vunpack.c.l.b16 %v1347
        %v3266 = vunpack.c.h.b16 %v1347
        %v3267 = vunpack.c.l.b16 %v1348
        %v3268 = vunpack.c.h.b16 %v1348
        %v3269 = vunpack.c.l.b16 %v1349
        %v3270 = vunpack.c.h.b16 %v1349
        %v3271 = vunpack.c.l.b16 %v1350
        %v3272 = vunpack.c.h.b16 %v1350
        %v3273 = vunpack.c.l.b16 %v1351
        %v3274 = vunpack.c.h.b16 %v1351
        %v3275 = vunpack.c.l.b16 %v1352
        %v3276 = vunpack.c.h.b16 %v1352
        %v3277 = vunpack.c.l.b16 %v1353
        %v3278 = vunpack.c.h.b16 %v1353
        %v3279 = vunpack.c.l.b16 %v1354
        %v3280 = vunpack.c.h.b16 %v1354
        %v3281 = vunpack.c.l.b16 %v1355
        %v3282 = vunpack.c.h.b16 %v1355
        %v3283 = vunpack.c.l.b16 %v1356
        %v3284 = vunpack.c.h.b16 %v1356
        %v3285 = vunpack.c.l.b16 %v1357
        %v3286 = vunpack.c.h.b16 %v1357
        %v3287 = vunpack.c.l.b16 %v1358
        %v3288 = vunpack.c.h.b16 %v1358
        %v3289 = vunpack.c.l.b16 %v1359
        %v3290 = vunpack.c.h.b16 %v1359
        %v3291 = vunpack.c.l.b16 %v1360
        %v3292 = vunpack.c.h.b16 %v1360
        %v3293 = vunpack.c.l.b16 %v1361
        %v3294 = vunpack.c.h.b16 %v1361
        %v3295 = vunpack.c.l.b16 %v1362
        %v3296 = vunpack.c.h.b16 %v1362
        %v3297 = vunpack.c.l.b16 %v1363
        %v3298 = vunpack.c.h.b16 %v1363
        %v3299 = vunpack.c.l.b16 %v1364
        %v3300 = vunpack.c.h.b16 %v1364
        %v3301 = vunpack.c.l.b16 %v1365
        %v3302 = vunpack.c.h.b16 %v1365
        %v3303 = vunpack.c.l.b16 %v1366
        %v3304 = vunpack.c.h.b16 %v1366
        %v3305 = vunpack.c.l.b16 %v1367
        %v3306 = vunpack.c.h.b16 %v1367
        %v3307 = vunpack.c.l.b16 %v1368
        %v3308 = vunpack.c.h.b16 %v1368
        %v3309 = vunpack.c.l.b16 %v1369
        %v3310 = vunpack.c.h.b16 %v1369
        %v3311 = vunpack.c.l.b16 %v1370
        %v3312 = vunpack.c.h.b16 %v1370
        %v3313 = vunpack.c.l.b16 %v1371
        %v3314 = vunpack.c.h.b16 %v1371
        %v3315 = vunpack.c.l.b16 %v1372
        %v3316 = vunpack.c.h.b16 %v1372
        %v3317 = vunpack.c.l.b16 %v1373
        %v3318 = vunpack.c.h.b16 %v1373
        %v3319 = vunpack.c.l.b16 %v1374
        %v3320 = vunpack.c.h.b16 %v1374
        %v3321 = vunpack.c.l.b16 %v1375
        %v3322 = vunpack.c.h.b16 %v1375
        %v3323 = vunpack.c.l.b16 %v1376
        %v3324 = vunpack.c.h.b16 %v1376
        %v3325 = vunpack.c.l.b16 %v1377
        %v3326 = vunpack.c.h.b16 %v1377
        %v3327 = vunpack.c.l.b16 %v1378
        %v3328 = vunpack.c.h.b16 %v1378
        %v3329 = vunpack.c.l.b16 %v1379
        %v3330 = vunpack.c.h.b16 %v1379
        %v3331 = vunpack.c.l.b16 %v1380
        %v3332 = vunpack.c.h.b16 %v1380
        %v3333 = vunpack.c.l.b16 %v1381
        %v3334 = vunpack.c.h.b16 %v1381
        %v3335 = vunpack.c.l.b16 %v1382
        %v3336 = vunpack.c.h.b16 %v1382
        %v3337 = vunpack.c.l.b16 %v1383
        %v3338 = vunpack.c.h.b16 %v1383
        %v3339 = vunpack.c.l.b16 %v1384
        %v3340 = vunpack.c.h.b16 %v1384
        %v3341 = vunpack.c.l.b16 %v1385
        %v3342 = vunpack.c.h.b16 %v1385
        %v3343 = vunpack.c.l.b16 %v1386
        %v3344 = vunpack.c.h.b16 %v1386
        %v3345 = vunpack.c.l.b16 %v1387
        %v3346 = vunpack.c.h.b16 %v1387
        %v3347 = vunpack.c.l.b16 %v1388
        %v3348 = vunpack.c.h.b16 %v1388
        %v3349 = vunpack.c.l.b16 %v1389
        %v3350 = vunpack.c.h.b16 %v1389
        %v3351 = vunpack.c.l.b16 %v1390
        %v3352 = vunpack.c.h.b16 %v1390
        %v3353 = vunpack.c.l.b16 %v1391
        %v3354 = vunpack.c.h.b16 %v1391
        %v3355 = vunpack.c.l.b16 %v1392
        %v3356 = vunpack.c.h.b16 %v1392
        %v3357 = vunpack.c.l.b16 %v1393
        %v3358 = vunpack.c.h.b16 %v1393
        %v3359 = vunpack.c.l.b16 %v1394
        %v3360 = vunpack.c.h.b16 %v1394
        %v3361 = vunpack.c.l.b16 %v1395
        %v3362 = vunpack.c.h.b16 %v1395
        %v3363 = vunpack.c.l.b16 %v1396
        %v3364 = vunpack.c.h.b16 %v1396
        %v3365 = vunpack.c.l.b16 %v1397
        %v3366 = vunpack.c.h.b16 %v1397
        %v3367 = vunpack.c.l.b16 %v1398
        %v3368 = vunpack.c.h.b16 %v1398
        %v3369 = vunpack.c.l.b16 %v1399
        %v3370 = vunpack.c.h.b16 %v1399
        %v3371 = vunpack.c.l.b16 %v1400
        %v3372 = vunpack.c.h.b16 %v1400
        %v3373 = vunpack.c.l.b16 %v1401
        %v3374 = vunpack.c.h.b16 %v1401
        %v3375 = vunpack.c.l.b16 %v1402
        %v3376 = vunpack.c.h.b16 %v1402
        %v3377 = vunpack.c.l.b16 %v1403
        %v3378 = vunpack.c.h.b16 %v1403
        %v3379 = vunpack.c.l.b16 %v1404
        %v3380 = vunpack.c.h.b16 %v1404
        %v3381 = vunpack.c.l.b16 %v1405
        %v3382 = vunpack.c.h.b16 %v1405
        %v3383 = vunpack.c.l.b16 %v1406
        %v3384 = vunpack.c.h.b16 %v1406
        %v3385 = vunpack.c.l.b16 %v1407
        %v3386 = vunpack.c.h.b16 %v1407
        %v3387 = vunpack.c.l.b16 %v1408
        %v3388 = vunpack.c.h.b16 %v1408
        %v3389 = vunpack.c.l.b16 %v1409
        %v3390 = vunpack.c.h.b16 %v1409
        %v3391 = vunpack.c.l.b16 %v1410
        %v3392 = vunpack.c.h.b16 %v1410
        %v3393 = vunpack.c.l.b16 %v1411
        %v3394 = vunpack.c.h.b16 %v1411
        %v3395 = vunpack.c.l.b16 %v1412
        %v3396 = vunpack.c.h.b16 %v1412
        %v3397 = vunpack.c.l.b16 %v1413
        %v3398 = vunpack.c.h.b16 %v1413
        %v3399 = vunpack.c.l.b16 %v1414
        %v3400 = vunpack.c.h.b16 %v1414
        %v3401 = vunpack.c.l.b16 %v1415
        %v3402 = vunpack.c.h.b16 %v1415
        %v3403 = vunpack.c.l.b16 %v1416
        %v3404 = vunpack.c.h.b16 %v1416
        %v3405 = vunpack.c.l.b16 %v1417
        %v3406 = vunpack.c.h.b16 %v1417
        %v3407 = vunpack.c.l.b16 %v1418
        %v3408 = vunpack.c.h.b16 %v1418
        %v3409 = vunpack.c.l.b16 %v1419
        %v3410 = vunpack.c.h.b16 %v1419
        %v3411 = vunpack.c.l.b16 %v1420
        %v3412 = vunpack.c.h.b16 %v1420
        %v3413 = vunpack.c.l.b16 %v1421
        %v3414 = vunpack.c.h.b16 %v1421
        %v3415 = vunpack.c.l.b16 %v1422
        %v3416 = vunpack.c.h.b16 %v1422
        %v3417 = vunpack.c.l.b16 %v1423
        %v3418 = vunpack.c.h.b16 %v1423
        %v3419 = vunpack.c.l.b16 %v1424
        %v3420 = vunpack.c.h.b16 %v1424
        %v3421 = vunpack.c.l.b16 %v1425
        %v3422 = vunpack.c.h.b16 %v1425
        %v3423 = vunpack.c.l.b16 %v1426
        %v3424 = vunpack.c.h.b16 %v1426
        %v3425 = vunpack.c.l.b16 %v1427
        %v3426 = vunpack.c.h.b16 %v1427
        %v3427 = vunpack.c.l.b16 %v1428
        %v3428 = vunpack.c.h.b16 %v1428
        %v3429 = vunpack.c.l.b16 %v1429
        %v3430 = vunpack.c.h.b16 %v1429
        %v3431 = vunpack.c.l.b16 %v1430
        %v3432 = vunpack.c.h.b16 %v1430
        %v3433 = vunpack.c.l.b16 %v1431
        %v3434 = vunpack.c.h.b16 %v1431
        %v3435 = vunpack.c.l.b16 %v1432
        %v3436 = vunpack.c.h.b16 %v1432
        %v3437 = vunpack.c.l.b16 %v1433
        %v3438 = vunpack.c.h.b16 %v1433
        %v3439 = vunpack.c.l.b16 %v1434
        %v3440 = vunpack.c.h.b16 %v1434
        %v3441 = vunpack.c.l.b16 %v1435
        %v3442 = vunpack.c.h.b16 %v1435
        %v3443 = vunpack.c.l.b16 %v1436
        %v3444 = vunpack.c.h.b16 %v1436
        %v3445 = vunpack.c.l.b16 %v1437
        %v3446 = vunpack.c.h.b16 %v1437
        %v3447 = vunpack.c.l.b16 %v1438
        %v3448 = vunpack.c.h.b16 %v1438
        %v3449 = vunpack.c.l.b16 %v1439
        %v3450 = vunpack.c.h.b16 %v1439
        %v3451 = vunpack.c.l.b16 %v1440
        %v3452 = vunpack.c.h.b16 %v1440
        %v3453 = vunpack.c.l.b16 %v1441
        %v3454 = vunpack.c.h.b16 %v1441
        %v3455 = vunpack.c.l.b16 %v1442
        %v3456 = vunpack.c.h.b16 %v1442
        %v3457 = vunpack.c.l.b16 %v1443
        %v3458 = vunpack.c.h.b16 %v1443
        %v3459 = vunpack.c.l.b16 %v1444
        %v3460 = vunpack.c.h.b16 %v1444
        %v3461 = vunpack.c.l.b16 %v1445
        %v3462 = vunpack.c.h.b16 %v1445
        %v3463 = vunpack.c.l.b16 %v1446
        %v3464 = vunpack.c.h.b16 %v1446
        %v3465 = vunpack.c.l.b16 %v1447
        %v3466 = vunpack.c.h.b16 %v1447
        %v3467 = vunpack.c.l.b16 %v1448
        %v3468 = vunpack.c.h.b16 %v1448
        %v3469 = vunpack.c.l.b16 %v1449
        %v3470 = vunpack.c.h.b16 %v1449
        %v3471 = vunpack.c.l.b16 %v1450
        %v3472 = vunpack.c.h.b16 %v1450
        %v3473 = vunpack.c.l.b16 %v1451
        %v3474 = vunpack.c.h.b16 %v1451
        %v3475 = vunpack.c.l.b16 %v1452
        %v3476 = vunpack.c.h.b16 %v1452
        %v3477 = vunpack.c.l.b16 %v1453
        %v3478 = vunpack.c.h.b16 %v1453
        %v3479 = vunpack.c.l.b16 %v1454
        %v3480 = vunpack.c.h.b16 %v1454
        %v3481 = vunpack.c.l.b16 %v1455
        %v3482 = vunpack.c.h.b16 %v1455
        %v3483 = vunpack.c.l.b16 %v1456
        %v3484 = vunpack.c.h.b16 %v1456
        %v3485 = vunpack.c.l.b16 %v1457
        %v3486 = vunpack.c.h.b16 %v1457
        %v3487 = vunpack.c.l.b16 %v1458
        %v3488 = vunpack.c.h.b16 %v1458
        %v3489 = vunpack.c.l.b16 %v1459
        %v3490 = vunpack.c.h.b16 %v1459
        %v3491 = vunpack.c.l.b16 %v1460
        %v3492 = vunpack.c.h.b16 %v1460
        %v3493 = vunpack.c.l.b16 %v1461
        %v3494 = vunpack.c.h.b16 %v1461
        %v3495 = vunpack.c.l.b16 %v1462
        %v3496 = vunpack.c.h.b16 %v1462
        %v3497 = vunpack.c.l.b16 %v1463
        %v3498 = vunpack.c.h.b16 %v1463
        %v3499 = vunpack.c.l.b16 %v1464
        %v3500 = vunpack.c.h.b16 %v1464
        %v3501 = vunpack.c.l.b16 %v1465
        %v3502 = vunpack.c.h.b16 %v1465
        %v3503 = vunpack.c.l.b16 %v1466
        %v3504 = vunpack.c.h.b16 %v1466
        %v3505 = vunpack.c.l.b16 %v1467
        %v3506 = vunpack.c.h.b16 %v1467
        %v3507 = vunpack.c.l.b16 %v1468
        %v3508 = vunpack.c.h.b16 %v1468
        %v3509 = vunpack.c.l.b16 %v1469
        %v3510 = vunpack.c.h.b16 %v1469
        %v3511 = vunpack.c.l.b16 %v1470
        %v3512 = vunpack.c.h.b16 %v1470
        %v3513 = vunpack.c.l.b16 %v1471
        %v3514 = vunpack.c.h.b16 %v1471
        %v3515 = vunpack.c.l.b16 %v1472
        %v3516 = vunpack.c.h.b16 %v1472
        %v3517 = vunpack.c.l.b16 %v1473
        %v3518 = vunpack.c.h.b16 %v1473
        %v3519 = vunpack.c.l.b16 %v1474
        %v3520 = vunpack.c.h.b16 %v1474
        %v3521 = vunpack.c.l.b16 %v1475
        %v3522 = vunpack.c.h.b16 %v1475
        %v3523 = vunpack.c.l.b16 %v1476
        %v3524 = vunpack.c.h.b16 %v1476
        %v3525 = vunpack.c.l.b16 %v1477
        %v3526 = vunpack.c.h.b16 %v1477
        %v3527 = vunpack.c.l.b16 %v1478
        %v3528 = vunpack.c.h.b16 %v1478
        %v3529 = vunpack.c.l.b16 %v1479
        %v3530 = vunpack.c.h.b16 %v1479
        %v3531 = vunpack.c.l.b16 %v1480
        %v3532 = vunpack.c.h.b16 %v1480
        %v3533 = vunpack.c.l.b16 %v1481
        %v3534 = vunpack.c.h.b16 %v1481
        %v3535 = vunpack.c.l.b16 %v1482
        %v3536 = vunpack.c.h.b16 %v1482
        %v3537 = vunpack.c.l.b16 %v1483
        %v3538 = vunpack.c.h.b16 %v1483
        %v3539 = vunpack.c.l.b16 %v1484
        %v3540 = vunpack.c.h.b16 %v1484
        %v3541 = vunpack.c.l.b16 %v1485
        %v3542 = vunpack.c.h.b16 %v1485
        %v3543 = vunpack.c.l.b16 %v1486
        %v3544 = vunpack.c.h.b16 %v1486
        %v3545 = vunpack.c.l.b16 %v1487
        %v3546 = vunpack.c.h.b16 %v1487
        %v3547 = vunpack.c.l.b16 %v1488
        %v3548 = vunpack.c.h.b16 %v1488
        %v3549 = vunpack.c.l.b16 %v1489
        %v3550 = vunpack.c.h.b16 %v1489
        %v3551 = vunpack.c.l.b16 %v1490
        %v3552 = vunpack.c.h.b16 %v1490
        %v3553 = vunpack.c.l.b16 %v1491
        %v3554 = vunpack.c.h.b16 %v1491
        %v3555 = vunpack.c.l.b16 %v1492
        %v3556 = vunpack.c.h.b16 %v1492
        %v3557 = vunpack.c.l.b16 %v1493
        %v3558 = vunpack.c.h.b16 %v1493
        %v3559 = vunpack.c.l.b16 %v1494
        %v3560 = vunpack.c.h.b16 %v1494
        %v3561 = vunpack.c.l.b16 %v1495
        %v3562 = vunpack.c.h.b16 %v1495
        %v3563 = vunpack.c.l.b16 %v1496
        %v3564 = vunpack.c.h.b16 %v1496
        %v3565 = vunpack.c.l.b16 %v1497
        %v3566 = vunpack.c.h.b16 %v1497
        %v3567 = vunpack.c.l.b16 %v1498
        %v3568 = vunpack.c.h.b16 %v1498
        %v3569 = vunpack.c.l.b16 %v1499
        %v3570 = vunpack.c.h.b16 %v1499
        %v3571 = vunpack.c.l.b16 %v1500
        %v3572 = vunpack.c.h.b16 %v1500
        %v3573 = vunpack.c.l.b16 %v1501
        %v3574 = vunpack.c.h.b16 %v1501
        %v3575 = vunpack.c.l.b16 %v1502
        %v3576 = vunpack.c.h.b16 %v1502
        %v3577 = vunpack.c.l.b16 %v1503
        %v3578 = vunpack.c.h.b16 %v1503
        %v3579 = vunpack.c.l.b16 %v1504
        %v3580 = vunpack.c.h.b16 %v1504
        %v3581 = vunpack.c.l.b16 %v1505
        %v3582 = vunpack.c.h.b16 %v1505
        %v3583 = vunpack.c.l.b16 %v1506
        %v3584 = vunpack.c.h.b16 %v1506
        %v3585 = vunpack.c.l.b16 %v1507
        %v3586 = vunpack.c.h.b16 %v1507
        %v3587 = vunpack.c.l.b16 %v1508
        %v3588 = vunpack.c.h.b16 %v1508
        %v3589 = vunpack.c.l.b16 %v1509
        %v3590 = vunpack.c.h.b16 %v1509
        %v3591 = vunpack.c.l.b16 %v1510
        %v3592 = vunpack.c.h.b16 %v1510
        %v3593 = vunpack.c.l.b16 %v1511
        %v3594 = vunpack.c.h.b16 %v1511
        %v3595 = vunpack.c.l.b16 %v1512
        %v3596 = vunpack.c.h.b16 %v1512
        %v3597 = vunpack.c.l.b16 %v1513
        %v3598 = vunpack.c.h.b16 %v1513
        %v3599 = vunpack.c.l.b16 %v1514
        %v3600 = vunpack.c.h.b16 %v1514
        %v3601 = vunpack.c.l.b16 %v1515
        %v3602 = vunpack.c.h.b16 %v1515
        %v3603 = vunpack.c.l.b16 %v1516
        %v3604 = vunpack.c.h.b16 %v1516
        %v3605 = vunpack.c.l.b16 %v1517
        %v3606 = vunpack.c.h.b16 %v1517
        %v3607 = vunpack.c.l.b16 %v1518
        %v3608 = vunpack.c.h.b16 %v1518
        %v3609 = vunpack.c.l.b16 %v1519
        %v3610 = vunpack.c.h.b16 %v1519
        %v3611 = vunpack.c.l.b16 %v1520
        %v3612 = vunpack.c.h.b16 %v1520
        %v3613 = vunpack.c.l.b16 %v1521
        %v3614 = vunpack.c.h.b16 %v1521
        %v3615 = vunpack.c.l.b16 %v1522
        %v3616 = vunpack.c.h.b16 %v1522
        %v3617 = vunpack.c.l.b16 %v1523
        %v3618 = vunpack.c.h.b16 %v1523
        %v3619 = vunpack.c.l.b16 %v1524
        %v3620 = vunpack.c.h.b16 %v1524
        %v3621 = vunpack.c.l.b16 %v1525
        %v3622 = vunpack.c.h.b16 %v1525
        %v3623 = vunpack.c.l.b16 %v1526
        %v3624 = vunpack.c.h.b16 %v1526
        %v3625 = vunpack.c.l.b16 %v1527
        %v3626 = vunpack.c.h.b16 %v1527
        %v3627 = vunpack.c.l.b16 %v1528
        %v3628 = vunpack.c.h.b16 %v1528
        %v3629 = vunpack.c.l.b16 %v1529
        %v3630 = vunpack.c.h.b16 %v1529
        %v3631 = vunpack.c.l.b16 %v1530
        %v3632 = vunpack.c.h.b16 %v1530
        %v3633 = vunpack.c.l.b16 %v1531
        %v3634 = vunpack.c.h.b16 %v1531
        %v3635 = vunpack.c.l.b16 %v1532
        %v3636 = vunpack.c.h.b16 %v1532
        %v3637 = vunpack.c.l.b16 %v1533
        %v3638 = vunpack.c.h.b16 %v1533
        %v3639 = vunpack.c.l.b16 %v1534
        %v3640 = vunpack.c.h.b16 %v1534
        %v3641 = vunpack.c.l.b16 %v1535
        %v3642 = vunpack.c.h.b16 %v1535
        %v3643 = vunpack.c.l.b16 %v1536
        %v3644 = vunpack.c.h.b16 %v1536
        %v3645 = vunpack.c.l.b16 %v1537
        %v3646 = vunpack.c.h.b16 %v1537
        %v3647 = vunpack.c.l.b16 %v1538
        %v3648 = vunpack.c.h.b16 %v1538
        %v3649 = vunpack.c.l.b16 %v1539
        %v3650 = vunpack.c.h.b16 %v1539
        %v3651 = vunpack.c.l.b16 %v1540
        %v3652 = vunpack.c.h.b16 %v1540
        %v3653 = vunpack.c.l.b16 %v1541
        %v3654 = vunpack.c.h.b16 %v1541
        %v3655 = vunpack.c.l.b16 %v1542
        %v3656 = vunpack.c.h.b16 %v1542
        %v3657 = vunpack.c.l.b16 %v1543
        %v3658 = vunpack.c.h.b16 %v1543
        %v3659 = vunpack.c.l.b16 %v1544
        %v3660 = vunpack.c.h.b16 %v1544
        %v3661 = vunpack.c.l.b16 %v1545
        %v3662 = vunpack.c.h.b16 %v1545
        %v3663 = vunpack.c.l.b16 %v1546
        %v3664 = vunpack.c.h.b16 %v1546
        %v3665 = vunpack.c.l.b16 %v1547
        %v3666 = vunpack.c.h.b16 %v1547
        %v3667 = vunpack.c.l.b16 %v1548
        %v3668 = vunpack.c.h.b16 %v1548
        %v3669 = vunpack.c.l.b16 %v1549
        %v3670 = vunpack.c.h.b16 %v1549
        %v3671 = vunpack.c.l.b16 %v1550
        %v3672 = vunpack.c.h.b16 %v1550
        %v3673 = vpack.c.b16 %v2277, %v2273
        %v3674 = vpack.c.b16 %v2278, %v2274
        %v3675 = vpack.c.b16 %v2279, %v2275
        %v3676 = vpack.c.b16 %v2280, %v2276
        %v3677 = vpack.c.b16 %v2285, %v2281
        %v3678 = vpack.c.b16 %v2286, %v2282
        %v3679 = vpack.c.b16 %v2287, %v2283
        %v3680 = vpack.c.b16 %v2288, %v2284
        %v3681 = vpack.c.b16 %v2293, %v2289
        %v3682 = vpack.c.b16 %v2294, %v2290
        %v3683 = vpack.c.b16 %v2295, %v2291
        %v3684 = vpack.c.b16 %v2296, %v2292
        %v3685 = vpack.c.b16 %v2301, %v2297
        %v3686 = vpack.c.b16 %v2302, %v2298
        %v3687 = vpack.c.b16 %v2303, %v2299
        %v3688 = vpack.c.b16 %v2304, %v2300
        %v3689 = vpack.c.b16 %v2309, %v2305
        %v3690 = vpack.c.b16 %v2310, %v2306
        %v3691 = vpack.c.b16 %v2311, %v2307
        %v3692 = vpack.c.b16 %v2312, %v2308
        %v3693 = vpack.c.b16 %v2317, %v2313
        %v3694 = vpack.c.b16 %v2318, %v2314
        %v3695 = vpack.c.b16 %v2319, %v2315
        %v3696 = vpack.c.b16 %v2320, %v2316
        %v3697 = vpack.c.b16 %v2325, %v2321
        %v3698 = vpack.c.b16 %v2326, %v2322
        %v3699 = vpack.c.b16 %v2327, %v2323
        %v3700 = vpack.c.b16 %v2328, %v2324
        %v3701 = vpack.c.b16 %v2333, %v2329
        %v3702 = vpack.c.b16 %v2334, %v2330
        %v3703 = vpack.c.b16 %v2335, %v2331
        %v3704 = vpack.c.b16 %v2336, %v2332
        %v3705 = vpack.c.b16 %v2341, %v2337
        %v3706 = vpack.c.b16 %v2342, %v2338
        %v3707 = vpack.c.b16 %v2343, %v2339
        %v3708 = vpack.c.b16 %v2344, %v2340
        %v3709 = vpack.c.b16 %v2349, %v2345
        %v3710 = vpack.c.b16 %v2350, %v2346
        %v3711 = vpack.c.b16 %v2351, %v2347
        %v3712 = vpack.c.b16 %v2352, %v2348
        %v3713 = vpack.c.b16 %v2357, %v2353
        %v3714 = vpack.c.b16 %v2358, %v2354
        %v3715 = vpack.c.b16 %v2359, %v2355
        %v3716 = vpack.c.b16 %v2360, %v2356
        %v3717 = vpack.c.b16 %v2365, %v2361
        %v3718 = vpack.c.b16 %v2366, %v2362
        %v3719 = vpack.c.b16 %v2367, %v2363
        %v3720 = vpack.c.b16 %v2368, %v2364
        %v3721 = vpack.c.b16 %v2373, %v2369
        %v3722 = vpack.c.b16 %v2374, %v2370
        %v3723 = vpack.c.b16 %v2375, %v2371
        %v3724 = vpack.c.b16 %v2376, %v2372
        %v3725 = vpack.c.b16 %v2381, %v2377
        %v3726 = vpack.c.b16 %v2382, %v2378
        %v3727 = vpack.c.b16 %v2383, %v2379
        %v3728 = vpack.c.b16 %v2384, %v2380
        %v3729 = vpack.c.b16 %v2389, %v2385
        %v3730 = vpack.c.b16 %v2390, %v2386
        %v3731 = vpack.c.b16 %v2391, %v2387
        %v3732 = vpack.c.b16 %v2392, %v2388
        %v3733 = vpack.c.b16 %v2397, %v2393
        %v3734 = vpack.c.b16 %v2398, %v2394
        %v3735 = vpack.c.b16 %v2399, %v2395
        %v3736 = vpack.c.b16 %v2400, %v2396
        %v3737 = vpack.c.b16 %v2405, %v2401
        %v3738 = vpack.c.b16 %v2406, %v2402
        %v3739 = vpack.c.b16 %v2407, %v2403
        %v3740 = vpack.c.b16 %v2408, %v2404
        %v3741 = vpack.c.b16 %v2413, %v2409
        %v3742 = vpack.c.b16 %v2414, %v2410
        %v3743 = vpack.c.b16 %v2415, %v2411
        %v3744 = vpack.c.b16 %v2416, %v2412
        %v3745 = vpack.c.b16 %v2421, %v2417
        %v3746 = vpack.c.b16 %v2422, %v2418
        %v3747 = vpack.c.b16 %v2423, %v2419
        %v3748 = vpack.c.b16 %v2424, %v2420
        %v3749 = vpack.c.b16 %v2429, %v2425
        %v3750 = vpack.c.b16 %v2430, %v2426
        %v3751 = vpack.c.b16 %v2431, %v2427
        %v3752 = vpack.c.b16 %v2432, %v2428
        %v3753 = vpack.c.b16 %v2437, %v2433
        %v3754 = vpack.c.b16 %v2438, %v2434
        %v3755 = vpack.c.b16 %v2439, %v2435
        %v3756 = vpack.c.b16 %v2440, %v2436
        %v3757 = vpack.c.b16 %v2445, %v2441
        %v3758 = vpack.c.b16 %v2446, %v2442
        %v3759 = vpack.c.b16 %v2447, %v2443
        %v3760 = vpack.c.b16 %v2448, %v2444
        %v3761 = vpack.c.b16 %v2453, %v2449
        %v3762 = vpack.c.b16 %v2454, %v2450
        %v3763 = vpack.c.b16 %v2455, %v2451
        %v3764 = vpack.c.b16 %v2456, %v2452
        %v3765 = vpack.c.b16 %v2461, %v2457
        %v3766 = vpack.c.b16 %v2462, %v2458
        %v3767 = vpack.c.b16 %v2463, %v2459
        %v3768 = vpack.c.b16 %v2464, %v2460
        %v3769 = vpack.c.b16 %v2469, %v2465
        %v3770 = vpack.c.b16 %v2470, %v2466
        %v3771 = vpack.c.b16 %v2471, %v2467
        %v3772 = vpack.c.b16 %v2472, %v2468
        %v3773 = vpack.c.b16 %v2477, %v2473
        %v3774 = vpack.c.b16 %v2478, %v2474
        %v3775 = vpack.c.b16 %v2479, %v2475
        %v3776 = vpack.c.b16 %v2480, %v2476
        %v3777 = vpack.c.b16 %v2485, %v2481
        %v3778 = vpack.c.b16 %v2486, %v2482
        %v3779 = vpack.c.b16 %v2487, %v2483
        %v3780 = vpack.c.b16 %v2488, %v2484
        %v3781 = vpack.c.b16 %v2493, %v2489
        %v3782 = vpack.c.b16 %v2494, %v2490
        %v3783 = vpack.c.b16 %v2495, %v2491
        %v3784 = vpack.c.b16 %v2496, %v2492
        %v3785 = vpack.c.b16 %v2501, %v2497
        %v3786 = vpack.c.b16 %v2502, %v2498
        %v3787 = vpack.c.b16 %v2503, %v2499
        %v3788 = vpack.c.b16 %v2504, %v2500
        %v3789 = vpack.c.b16 %v2509, %v2505
        %v3790 = vpack.c.b16 %v2510, %v2506
        %v3791 = vpack.c.b16 %v2511, %v2507
        %v3792 = vpack.c.b16 %v2512, %v2508
        %v3793 = vpack.c.b16 %v2517, %v2513
        %v3794 = vpack.c.b16 %v2518, %v2514
        %v3795 = vpack.c.b16 %v2519, %v2515
        %v3796 = vpack.c.b16 %v2520, %v2516
        %v3797 = vpack.c.b16 %v2525, %v2521
        %v3798 = vpack.c.b16 %v2526, %v2522
        %v3799 = vpack.c.b16 %v2527, %v2523
        %v3800 = vpack.c.b16 %v2528, %v2524
        %v3801 = vpack.c.b16 %v2533, %v2529
        %v3802 = vpack.c.b16 %v2534, %v2530
        %v3803 = vpack.c.b16 %v2535, %v2531
        %v3804 = vpack.c.b16 %v2536, %v2532
        %v3805 = vpack.c.b16 %v2541, %v2537
        %v3806 = vpack.c.b16 %v2542, %v2538
        %v3807 = vpack.c.b16 %v2543, %v2539
        %v3808 = vpack.c.b16 %v2544, %v2540
        %v3809 = vpack.c.b16 %v2549, %v2545
        %v3810 = vpack.c.b16 %v2550, %v2546
        %v3811 = vpack.c.b16 %v2551, %v2547
        %v3812 = vpack.c.b16 %v2552, %v2548
        %v3813 = vpack.c.b16 %v2557, %v2553
        %v3814 = vpack.c.b16 %v2558, %v2554
        %v3815 = vpack.c.b16 %v2559, %v2555
        %v3816 = vpack.c.b16 %v2560, %v2556
        %v3817 = vpack.c.b16 %v2565, %v2561
        %v3818 = vpack.c.b16 %v2566, %v2562
        %v3819 = vpack.c.b16 %v2567, %v2563
        %v3820 = vpack.c.b16 %v2568, %v2564
        %v3821 = vpack.c.b16 %v2573, %v2569
        %v3822 = vpack.c.b16 %v2574, %v2570
        %v3823 = vpack.c.b16 %v2575, %v2571
        %v3824 = vpack.c.b16 %v2576, %v2572
        %v3825 = vpack.c.b16 %v2581, %v2577
        %v3826 = vpack.c.b16 %v2582, %v2578
        %v3827 = vpack.c.b16 %v2583, %v2579
        %v3828 = vpack.c.b16 %v2584, %v2580
        %v3829 = vpack.c.b16 %v2589, %v2585
        %v3830 = vpack.c.b16 %v2590, %v2586
        %v3831 = vpack.c.b16 %v2591, %v2587
        %v3832 = vpack.c.b16 %v2592, %v2588
        %v3833 = vpack.c.b16 %v2597, %v2593
        %v3834 = vpack.c.b16 %v2598, %v2594
        %v3835 = vpack.c.b16 %v2599, %v2595
        %v3836 = vpack.c.b16 %v2600, %v2596
        %v3837 = vpack.c.b16 %v2605, %v2601
        %v3838 = vpack.c.b16 %v2606, %v2602
        %v3839 = vpack.c.b16 %v2607, %v2603
        %v3840 = vpack.c.b16 %v2608, %v2604
        %v3841 = vpack.c.b16 %v2613, %v2609
        %v3842 = vpack.c.b16 %v2614, %v2610
        %v3843 = vpack.c.b16 %v2615, %v2611
        %v3844 = vpack.c.b16 %v2616, %v2612
        %v3845 = vpack.c.b16 %v2621, %v2617
        %v3846 = vpack.c.b16 %v2622, %v2618
        %v3847 = vpack.c.b16 %v2623, %v2619
        %v3848 = vpack.c.b16 %v2624, %v2620
        %v3849 = vpack.c.b16 %v2629, %v2625
        %v3850 = vpack.c.b16 %v2630, %v2626
        %v3851 = vpack.c.b16 %v2631, %v2627
        %v3852 = vpack.c.b16 %v2632, %v2628
        %v3853 = vpack.c.b16 %v2637, %v2633
        %v3854 = vpack.c.b16 %v2638, %v2634
        %v3855 = vpack.c.b16 %v2639, %v2635
        %v3856 = vpack.c.b16 %v2640, %v2636
        %v3857 = vpack.c.b16 %v2645, %v2641
        %v3858 = vpack.c.b16 %v2646, %v2642
        %v3859 = vpack.c.b16 %v2647, %v2643
        %v3860 = vpack.c.b16 %v2648, %v2644
        %v3861 = vpack.c.b16 %v2653, %v2649
        %v3862 = vpack.c.b16 %v2654, %v2650
        %v3863 = vpack.c.b16 %v2655, %v2651
        %v3864 = vpack.c.b16 %v2656, %v2652
        %v3865 = vpack.c.b16 %v2661, %v2657
        %v3866 = vpack.c.b16 %v2662, %v2658
        %v3867 = vpack.c.b16 %v2663, %v2659
        %v3868 = vpack.c.b16 %v2664, %v2660
        %v3869 = vpack.c.b16 %v2669, %v2665
        %v3870 = vpack.c.b16 %v2670, %v2666
        %v3871 = vpack.c.b16 %v2671, %v2667
        %v3872 = vpack.c.b16 %v2672, %v2668
        %v3873 = vpack.c.b16 %v2677, %v2673
        %v3874 = vpack.c.b16 %v2678, %v2674
        %v3875 = vpack.c.b16 %v2679, %v2675
        %v3876 = vpack.c.b16 %v2680, %v2676
        %v3877 = vpack.c.b16 %v2685, %v2681
        %v3878 = vpack.c.b16 %v2686, %v2682
        %v3879 = vpack.c.b16 %v2687, %v2683
        %v3880 = vpack.c.b16 %v2688, %v2684
        %v3881 = vpack.c.b16 %v2693, %v2689
        %v3882 = vpack.c.b16 %v2694, %v2690
        %v3883 = vpack.c.b16 %v2695, %v2691
        %v3884 = vpack.c.b16 %v2696, %v2692
        %v3885 = vpack.c.b16 %v2701, %v2697
        %v3886 = vpack.c.b16 %v2702, %v2698
        %v3887 = vpack.c.b16 %v2703, %v2699
        %v3888 = vpack.c.b16 %v2704, %v2700
        %v3889 = vpack.c.b16 %v2709, %v2705
        %v3890 = vpack.c.b16 %v2710, %v2706
        %v3891 = vpack.c.b16 %v2711, %v2707
        %v3892 = vpack.c.b16 %v2712, %v2708
        %v3893 = vpack.c.b16 %v2717, %v2713
        %v3894 = vpack.c.b16 %v2718, %v2714
        %v3895 = vpack.c.b16 %v2719, %v2715
        %v3896 = vpack.c.b16 %v2720, %v2716
        %v3897 = vpack.c.b16 %v2725, %v2721
        %v3898 = vpack.c.b16 %v2726, %v2722
        %v3899 = vpack.c.b16 %v2727, %v2723
        %v3900 = vpack.c.b16 %v2728, %v2724
        %v3901 = vpack.c.b16 %v2733, %v2729
        %v3902 = vpack.c.b16 %v2734, %v2730
        %v3903 = vpack.c.b16 %v2735, %v2731
        %v3904 = vpack.c.b16 %v2736, %v2732
        %v3905 = vpack.c.b16 %v2741, %v2737
        %v3906 = vpack.c.b16 %v2742, %v2738
        %v3907 = vpack.c.b16 %v2743, %v2739
        %v3908 = vpack.c.b16 %v2744, %v2740
        %v3909 = vpack.c.b16 %v2749, %v2745
        %v3910 = vpack.c.b16 %v2750, %v2746
        %v3911 = vpack.c.b16 %v2751, %v2747
        %v3912 = vpack.c.b16 %v2752, %v2748
        %v3913 = vpack.c.b16 %v2757, %v2753
        %v3914 = vpack.c.b16 %v2758, %v2754
        %v3915 = vpack.c.b16 %v2759, %v2755
        %v3916 = vpack.c.b16 %v2760, %v2756
        %v3917 = vpack.c.b16 %v2765, %v2761
        %v3918 = vpack.c.b16 %v2766, %v2762
        %v3919 = vpack.c.b16 %v2767, %v2763
        %v3920 = vpack.c.b16 %v2768, %v2764
        %v3921 = vpack.c.b16 %v2773, %v2769
        %v3922 = vpack.c.b16 %v2774, %v2770
        %v3923 = vpack.c.b16 %v2775, %v2771
        %v3924 = vpack.c.b16 %v2776, %v2772
        %v3925 = vpack.c.b16 %v2781, %v2777
        %v3926 = vpack.c.b16 %v2782, %v2778
        %v3927 = vpack.c.b16 %v2783, %v2779
        %v3928 = vpack.c.b16 %v2784, %v2780
        %v3929 = vpack.c.b16 %v2789, %v2785
        %v3930 = vpack.c.b16 %v2790, %v2786
        %v3931 = vpack.c.b16 %v2791, %v2787
        %v3932 = vpack.c.b16 %v2792, %v2788
        %v3933 = vpack.c.b16 %v2797, %v2793
        %v3934 = vpack.c.b16 %v2798, %v2794
        %v3935 = vpack.c.b16 %v2799, %v2795
        %v3936 = vpack.c.b16 %v2800, %v2796
        %v3937 = vpack.c.b16 %v2805, %v2801
        %v3938 = vpack.c.b16 %v2806, %v2802
        %v3939 = vpack.c.b16 %v2807, %v2803
        %v3940 = vpack.c.b16 %v2808, %v2804
        %v3941 = vpack.c.b16 %v2813, %v2809
        %v3942 = vpack.c.b16 %v2814, %v2810
        %v3943 = vpack.c.b16 %v2815, %v2811
        %v3944 = vpack.c.b16 %v2816, %v2812
        %v3945 = vpack.c.b16 %v2821, %v2817
        %v3946 = vpack.c.b16 %v2822, %v2818
        %v3947 = vpack.c.b16 %v2823, %v2819
        %v3948 = vpack.c.b16 %v2824, %v2820
        %v3949 = vpack.c.b16 %v2829, %v2825
        %v3950 = vpack.c.b16 %v2830, %v2826
        %v3951 = vpack.c.b16 %v2831, %v2827
        %v3952 = vpack.c.b16 %v2832, %v2828
        %v3953 = vpack.c.b16 %v2837, %v2833
        %v3954 = vpack.c.b16 %v2838, %v2834
        %v3955 = vpack.c.b16 %v2839, %v2835
        %v3956 = vpack.c.b16 %v2840, %v2836
        %v3957 = vpack.c.b16 %v2845, %v2841
        %v3958 = vpack.c.b16 %v2846, %v2842
        %v3959 = vpack.c.b16 %v2847, %v2843
        %v3960 = vpack.c.b16 %v2848, %v2844
        %v3961 = vpack.c.b16 %v2853, %v2849
        %v3962 = vpack.c.b16 %v2854, %v2850
        %v3963 = vpack.c.b16 %v2855, %v2851
        %v3964 = vpack.c.b16 %v2856, %v2852
        %v3965 = vpack.c.b16 %v2861, %v2857
        %v3966 = vpack.c.b16 %v2862, %v2858
        %v3967 = vpack.c.b16 %v2863, %v2859
        %v3968 = vpack.c.b16 %v2864, %v2860
        %v3969 = vpack.c.b16 %v2869, %v2865
        %v3970 = vpack.c.b16 %v2870, %v2866
        %v3971 = vpack.c.b16 %v2871, %v2867
        %v3972 = vpack.c.b16 %v2872, %v2868
        %v3973 = vpack.c.b16 %v2877, %v2873
        %v3974 = vpack.c.b16 %v2878, %v2874
        %v3975 = vpack.c.b16 %v2879, %v2875
        %v3976 = vpack.c.b16 %v2880, %v2876
        %v3977 = vpack.c.b16 %v2885, %v2881
        %v3978 = vpack.c.b16 %v2886, %v2882
        %v3979 = vpack.c.b16 %v2887, %v2883
        %v3980 = vpack.c.b16 %v2888, %v2884
        %v3981 = vpack.c.b16 %v2893, %v2889
        %v3982 = vpack.c.b16 %v2894, %v2890
        %v3983 = vpack.c.b16 %v2895, %v2891
        %v3984 = vpack.c.b16 %v2896, %v2892
        %v3985 = vpack.c.b16 %v2901, %v2897
        %v3986 = vpack.c.b16 %v2902, %v2898
        %v3987 = vpack.c.b16 %v2903, %v2899
        %v3988 = vpack.c.b16 %v2904, %v2900
        %v3989 = vpack.c.b16 %v2909, %v2905
        %v3990 = vpack.c.b16 %v2910, %v2906
        %v3991 = vpack.c.b16 %v2911, %v2907
        %v3992 = vpack.c.b16 %v2912, %v2908
        %v3993 = vpack.c.b16 %v2917, %v2913
        %v3994 = vpack.c.b16 %v2918, %v2914
        %v3995 = vpack.c.b16 %v2919, %v2915
        %v3996 = vpack.c.b16 %v2920, %v2916
        %v3997 = vpack.c.b16 %v2925, %v2921
        %v3998 = vpack.c.b16 %v2926, %v2922
        %v3999 = vpack.c.b16 %v2927, %v2923
        %v4000 = vpack.c.b16 %v2928, %v2924
        %v4001 = vpack.c.b16 %v2933, %v2929
        %v4002 = vpack.c.b16 %v2934, %v2930
        %v4003 = vpack.c.b16 %v2935, %v2931
        %v4004 = vpack.c.b16 %v2936, %v2932
        %v4005 = vpack.c.b16 %v2941, %v2937
        %v4006 = vpack.c.b16 %v2942, %v2938
        %v4007 = vpack.c.b16 %v2943, %v2939
        %v4008 = vpack.c.b16 %v2944, %v2940
        %v4009 = vpack.c.b16 %v2949, %v2945
        %v4010 = vpack.c.b16 %v2950, %v2946
        %v4011 = vpack.c.b16 %v2951, %v2947
        %v4012 = vpack.c.b16 %v2952, %v2948
        %v4013 = vpack.c.b16 %v2957, %v2953
        %v4014 = vpack.c.b16 %v2958, %v2954
        %v4015 = vpack.c.b16 %v2959, %v2955
        %v4016 = vpack.c.b16 %v2960, %v2956
        %v4017 = vpack.c.b16 %v2965, %v2961
        %v4018 = vpack.c.b16 %v2966, %v2962
        %v4019 = vpack.c.b16 %v2967, %v2963
        %v4020 = vpack.c.b16 %v2968, %v2964
        %v4021 = vpack.c.b16 %v2973, %v2969
        %v4022 = vpack.c.b16 %v2974, %v2970
        %v4023 = vpack.c.b16 %v2975, %v2971
        %v4024 = vpack.c.b16 %v2976, %v2972
        %v4025 = vpack.c.b16 %v2981, %v2977
        %v4026 = vpack.c.b16 %v2982, %v2978
        %v4027 = vpack.c.b16 %v2983, %v2979
        %v4028 = vpack.c.b16 %v2984, %v2980
        %v4029 = vpack.c.b16 %v2989, %v2985
        %v4030 = vpack.c.b16 %v2990, %v2986
        %v4031 = vpack.c.b16 %v2991, %v2987
        %v4032 = vpack.c.b16 %v2992, %v2988
        %v4033 = vpack.c.b16 %v2997, %v2993
        %v4034 = vpack.c.b16 %v2998, %v2994
        %v4035 = vpack.c.b16 %v2999, %v2995
        %v4036 = vpack.c.b16 %v3000, %v2996
        %v4037 = vpack.c.b16 %v3005, %v3001
        %v4038 = vpack.c.b16 %v3006, %v3002
        %v4039 = vpack.c.b16 %v3007, %v3003
        %v4040 = vpack.c.b16 %v3008, %v3004
        %v4041 = vpack.c.b16 %v3013, %v3009
        %v4042 = vpack.c.b16 %v3014, %v3010
        %v4043 = vpack.c.b16 %v3015, %v3011
        %v4044 = vpack.c.b16 %v3016, %v3012
        %v4045 = vpack.c.b16 %v3021, %v3017
        %v4046 = vpack.c.b16 %v3022, %v3018
        %v4047 = vpack.c.b16 %v3023, %v3019
        %v4048 = vpack.c.b16 %v3024, %v3020
        %v4049 = vpack.c.b16 %v3029, %v3025
        %v4050 = vpack.c.b16 %v3030, %v3026
        %v4051 = vpack.c.b16 %v3031, %v3027
        %v4052 = vpack.c.b16 %v3032, %v3028
        %v4053 = vpack.c.b16 %v3037, %v3033
        %v4054 = vpack.c.b16 %v3038, %v3034
        %v4055 = vpack.c.b16 %v3039, %v3035
        %v4056 = vpack.c.b16 %v3040, %v3036
        %v4057 = vpack.c.b16 %v3045, %v3041
        %v4058 = vpack.c.b16 %v3046, %v3042
        %v4059 = vpack.c.b16 %v3047, %v3043
        %v4060 = vpack.c.b16 %v3048, %v3044
        %v4061 = vpack.c.b16 %v3053, %v3049
        %v4062 = vpack.c.b16 %v3054, %v3050
        %v4063 = vpack.c.b16 %v3055, %v3051
        %v4064 = vpack.c.b16 %v3056, %v3052
        %v4065 = vpack.c.b16 %v3061, %v3057
        %v4066 = vpack.c.b16 %v3062, %v3058
        %v4067 = vpack.c.b16 %v3063, %v3059
        %v4068 = vpack.c.b16 %v3064, %v3060
        %v4069 = vpack.c.b16 %v3069, %v3065
        %v4070 = vpack.c.b16 %v3070, %v3066
        %v4071 = vpack.c.b16 %v3071, %v3067
        %v4072 = vpack.c.b16 %v3072, %v3068
        %v4073 = vpack.c.b16 %v3077, %v3073
        %v4074 = vpack.c.b16 %v3078, %v3074
        %v4075 = vpack.c.b16 %v3079, %v3075
        %v4076 = vpack.c.b16 %v3080, %v3076
        %v4077 = vpack.c.b16 %v3085, %v3081
        %v4078 = vpack.c.b16 %v3086, %v3082
        %v4079 = vpack.c.b16 %v3087, %v3083
        %v4080 = vpack.c.b16 %v3088, %v3084
        %v4081 = vpack.c.b16 %v3093, %v3089
        %v4082 = vpack.c.b16 %v3094, %v3090
        %v4083 = vpack.c.b16 %v3095, %v3091
        %v4084 = vpack.c.b16 %v3096, %v3092
        %v4085 = vpack.c.b16 %v3101, %v3097
        %v4086 = vpack.c.b16 %v3102, %v3098
        %v4087 = vpack.c.b16 %v3103, %v3099
        %v4088 = vpack.c.b16 %v3104, %v3100
        %v4089 = vpack.c.b16 %v3109, %v3105
        %v4090 = vpack.c.b16 %v3110, %v3106
        %v4091 = vpack.c.b16 %v3111, %v3107
        %v4092 = vpack.c.b16 %v3112, %v3108
        %v4093 = vpack.c.b16 %v3117, %v3113
        %v4094 = vpack.c.b16 %v3118, %v3114
        %v4095 = vpack.c.b16 %v3119, %v3115
        %v4096 = vpack.c.b16 %v3120, %v3116
        %v4097 = vpack.c.b16 %v3125, %v3121
        %v4098 = vpack.c.b16 %v3126, %v3122
        %v4099 = vpack.c.b16 %v3127, %v3123
        %v4100 = vpack.c.b16 %v3128, %v3124
        %v4101 = vpack.c.b16 %v3133, %v3129
        %v4102 = vpack.c.b16 %v3134, %v3130
        %v4103 = vpack.c.b16 %v3135, %v3131
        %v4104 = vpack.c.b16 %v3136, %v3132
        %v4105 = vpack.c.b16 %v3141, %v3137
        %v4106 = vpack.c.b16 %v3142, %v3138
        %v4107 = vpack.c.b16 %v3143, %v3139
        %v4108 = vpack.c.b16 %v3144, %v3140
        %v4109 = vpack.c.b16 %v3149, %v3145
        %v4110 = vpack.c.b16 %v3150, %v3146
        %v4111 = vpack.c.b16 %v3151, %v3147
        %v4112 = vpack.c.b16 %v3152, %v3148
        %v4113 = vpack.c.b16 %v3157, %v3153
        %v4114 = vpack.c.b16 %v3158, %v3154
        %v4115 = vpack.c.b16 %v3159, %v3155
        %v4116 = vpack.c.b16 %v3160, %v3156
        %v4117 = vpack.c.b16 %v3165, %v3161
        %v4118 = vpack.c.b16 %v3166, %v3162
        %v4119 = vpack.c.b16 %v3167, %v3163
        %v4120 = vpack.c.b16 %v3168, %v3164
        %v4121 = vpack.c.b16 %v3173, %v3169
        %v4122 = vpack.c.b16 %v3174, %v3170
        %v4123 = vpack.c.b16 %v3175, %v3171
        %v4124 = vpack.c.b16 %v3176, %v3172
        %v4125 = vpack.c.b16 %v3181, %v3177
        %v4126 = vpack.c.b16 %v3182, %v3178
        %v4127 = vpack.c.b16 %v3183, %v3179
        %v4128 = vpack.c.b16 %v3184, %v3180
        %v4129 = vpack.c.b16 %v3189, %v3185
        %v4130 = vpack.c.b16 %v3190, %v3186
        %v4131 = vpack.c.b16 %v3191, %v3187
        %v4132 = vpack.c.b16 %v3192, %v3188
        %v4133 = vpack.c.b16 %v3197, %v3193
        %v4134 = vpack.c.b16 %v3198, %v3194
        %v4135 = vpack.c.b16 %v3199, %v3195
        %v4136 = vpack.c.b16 %v3200, %v3196
        %v4137 = vpack.c.b16 %v3205, %v3201
        %v4138 = vpack.c.b16 %v3206, %v3202
        %v4139 = vpack.c.b16 %v3207, %v3203
        %v4140 = vpack.c.b16 %v3208, %v3204
        %v4141 = vpack.c.b16 %v3213, %v3209
        %v4142 = vpack.c.b16 %v3214, %v3210
        %v4143 = vpack.c.b16 %v3215, %v3211
        %v4144 = vpack.c.b16 %v3216, %v3212
        %v4145 = vpack.c.b16 %v3221, %v3217
        %v4146 = vpack.c.b16 %v3222, %v3218
        %v4147 = vpack.c.b16 %v3223, %v3219
        %v4148 = vpack.c.b16 %v3224, %v3220
        %v4149 = vpack.c.b16 %v3229, %v3225
        %v4150 = vpack.c.b16 %v3230, %v3226
        %v4151 = vpack.c.b16 %v3231, %v3227
        %v4152 = vpack.c.b16 %v3232, %v3228
        %v4153 = vpack.c.b16 %v3237, %v3233
        %v4154 = vpack.c.b16 %v3238, %v3234
        %v4155 = vpack.c.b16 %v3239, %v3235
        %v4156 = vpack.c.b16 %v3240, %v3236
        %v4157 = vpack.c.b16 %v3245, %v3241
        %v4158 = vpack.c.b16 %v3246, %v3242
        %v4159 = vpack.c.b16 %v3247, %v3243
        %v4160 = vpack.c.b16 %v3248, %v3244
        %v4161 = vpack.c.b16 %v3253, %v3249
        %v4162 = vpack.c.b16 %v3254, %v3250
        %v4163 = vpack.c.b16 %v3255, %v3251
        %v4164 = vpack.c.b16 %v3256, %v3252
        %v4165 = vpack.c.b16 %v3261, %v3257
        %v4166 = vpack.c.b16 %v3262, %v3258
        %v4167 = vpack.c.b16 %v3263, %v3259
        %v4168 = vpack.c.b16 %v3264, %v3260
        %v4169 = vpack.c.b16 %v3269, %v3265
        %v4170 = vpack.c.b16 %v3270, %v3266
        %v4171 = vpack.c.b16 %v3271, %v3267
        %v4172 = vpack.c.b16 %v3272, %v3268
        %v4173 = vpack.c.b16 %v3277, %v3273
        %v4174 = vpack.c.b16 %v3278, %v3274
        %v4175 = vpack.c.b16 %v3279, %v3275
        %v4176 = vpack.c.b16 %v3280, %v3276
        %v4177 = vpack.c.b16 %v3285, %v3281
        %v4178 = vpack.c.b16 %v3286, %v3282
        %v4179 = vpack.c.b16 %v3287, %v3283
        %v4180 = vpack.c.b16 %v3288, %v3284
        %v4181 = vpack.c.b16 %v3293, %v3289
        %v4182 = vpack.c.b16 %v3294, %v3290
        %v4183 = vpack.c.b16 %v3295, %v3291
        %v4184 = vpack.c.b16 %v3296, %v3292
        %v4185 = vpack.c.b16 %v3301, %v3297
        %v4186 = vpack.c.b16 %v3302, %v3298
        %v4187 = vpack.c.b16 %v3303, %v3299
        %v4188 = vpack.c.b16 %v3304, %v3300
        %v4189 = vpack.c.b16 %v3309, %v3305
        %v4190 = vpack.c.b16 %v3310, %v3306
        %v4191 = vpack.c.b16 %v3311, %v3307
        %v4192 = vpack.c.b16 %v3312, %v3308
        %v4193 = vpack.c.b16 %v3317, %v3313
        %v4194 = vpack.c.b16 %v3318, %v3314
        %v4195 = vpack.c.b16 %v3319, %v3315
        %v4196 = vpack.c.b16 %v3320, %v3316
        %v4197 = vpack.c.b16 %v3325, %v3321
        %v4198 = vpack.c.b16 %v3326, %v3322
        %v4199 = vpack.c.b16 %v3327, %v3323
        %v4200 = vpack.c.b16 %v3328, %v3324
        %v4201 = vpack.c.b16 %v3333, %v3329
        %v4202 = vpack.c.b16 %v3334, %v3330
        %v4203 = vpack.c.b16 %v3335, %v3331
        %v4204 = vpack.c.b16 %v3336, %v3332
        %v4205 = vpack.c.b16 %v3341, %v3337
        %v4206 = vpack.c.b16 %v3342, %v3338
        %v4207 = vpack.c.b16 %v3343, %v3339
        %v4208 = vpack.c.b16 %v3344, %v3340
        %v4209 = vpack.c.b16 %v3349, %v3345
        %v4210 = vpack.c.b16 %v3350, %v3346
        %v4211 = vpack.c.b16 %v3351, %v3347
        %v4212 = vpack.c.b16 %v3352, %v3348
        %v4213 = vpack.c.b16 %v3357, %v3353
        %v4214 = vpack.c.b16 %v3358, %v3354
        %v4215 = vpack.c.b16 %v3359, %v3355
        %v4216 = vpack.c.b16 %v3360, %v3356
        %v4217 = vpack.c.b16 %v3365, %v3361
        %v4218 = vpack.c.b16 %v3366, %v3362
        %v4219 = vpack.c.b16 %v3367, %v3363
        %v4220 = vpack.c.b16 %v3368, %v3364
        %v4221 = vpack.c.b16 %v3373, %v3369
        %v4222 = vpack.c.b16 %v3374, %v3370
        %v4223 = vpack.c.b16 %v3375, %v3371
        %v4224 = vpack.c.b16 %v3376, %v3372
        %v4225 = vpack.c.b16 %v3381, %v3377
        %v4226 = vpack.c.b16 %v3382, %v3378
        %v4227 = vpack.c.b16 %v3383, %v3379
        %v4228 = vpack.c.b16 %v3384, %v3380
        %v4229 = vpack.c.b16 %v3389, %v3385
        %v4230 = vpack.c.b16 %v3390, %v3386
        %v4231 = vpack.c.b16 %v3391, %v3387
        %v4232 = vpack.c.b16 %v3392, %v3388
        %v4233 = vpack.c.b16 %v3397, %v3393
        %v4234 = vpack.c.b16 %v3398, %v3394
        %v4235 = vpack.c.b16 %v3399, %v3395
        %v4236 = vpack.c.b16 %v3400, %v3396
        %v4237 = vpack.c.b16 %v3405, %v3401
        %v4238 = vpack.c.b16 %v3406, %v3402
        %v4239 = vpack.c.b16 %v3407, %v3403
        %v4240 = vpack.c.b16 %v3408, %v3404
        %v4241 = vpack.c.b16 %v3413, %v3409
        %v4242 = vpack.c.b16 %v3414, %v3410
        %v4243 = vpack.c.b16 %v3415, %v3411
        %v4244 = vpack.c.b16 %v3416, %v3412
        %v4245 = vpack.c.b16 %v3421, %v3417
        %v4246 = vpack.c.b16 %v3422, %v3418
        %v4247 = vpack.c.b16 %v3423, %v3419
        %v4248 = vpack.c.b16 %v3424, %v3420
        %v4249 = vpack.c.b16 %v3429, %v3425
        %v4250 = vpack.c.b16 %v3430, %v3426
        %v4251 = vpack.c.b16 %v3431, %v3427
        %v4252 = vpack.c.b16 %v3432, %v3428
        %v4253 = vpack.c.b16 %v3437, %v3433
        %v4254 = vpack.c.b16 %v3438, %v3434
        %v4255 = vpack.c.b16 %v3439, %v3435
        %v4256 = vpack.c.b16 %v3440, %v3436
        %v4257 = vpack.c.b16 %v3445, %v3441
        %v4258 = vpack.c.b16 %v3446, %v3442
        %v4259 = vpack.c.b16 %v3447, %v3443
        %v4260 = vpack.c.b16 %v3448, %v3444
        %v4261 = vpack.c.b16 %v3453, %v3449
        %v4262 = vpack.c.b16 %v3454, %v3450
        %v4263 = vpack.c.b16 %v3455, %v3451
        %v4264 = vpack.c.b16 %v3456, %v3452
        %v4265 = vpack.c.b16 %v3461, %v3457
        %v4266 = vpack.c.b16 %v3462, %v3458
        %v4267 = vpack.c.b16 %v3463, %v3459
        %v4268 = vpack.c.b16 %v3464, %v3460
        %v4269 = vpack.c.b16 %v3469, %v3465
        %v4270 = vpack.c.b16 %v3470, %v3466
        %v4271 = vpack.c.b16 %v3471, %v3467
        %v4272 = vpack.c.b16 %v3472, %v3468
        %v4273 = vpack.c.b16 %v3477, %v3473
        %v4274 = vpack.c.b16 %v3478, %v3474
        %v4275 = vpack.c.b16 %v3479, %v3475
        %v4276 = vpack.c.b16 %v3480, %v3476
        %v4277 = vpack.c.b16 %v3485, %v3481
        %v4278 = vpack.c.b16 %v3486, %v3482
        %v4279 = vpack.c.b16 %v3487, %v3483
        %v4280 = vpack.c.b16 %v3488, %v3484
        %v4281 = vpack.c.b16 %v3493, %v3489
        %v4282 = vpack.c.b16 %v3494, %v3490
        %v4283 = vpack.c.b16 %v3495, %v3491
        %v4284 = vpack.c.b16 %v3496, %v3492
        %v4285 = vpack.c.b16 %v3501, %v3497
        %v4286 = vpack.c.b16 %v3502, %v3498
        %v4287 = vpack.c.b16 %v3503, %v3499
        %v4288 = vpack.c.b16 %v3504, %v3500
        %v4289 = vpack.c.b16 %v3509, %v3505
        %v4290 = vpack.c.b16 %v3510, %v3506
        %v4291 = vpack.c.b16 %v3511, %v3507
        %v4292 = vpack.c.b16 %v3512, %v3508
        %v4293 = vpack.c.b16 %v3517, %v3513
        %v4294 = vpack.c.b16 %v3518, %v3514
        %v4295 = vpack.c.b16 %v3519, %v3515
        %v4296 = vpack.c.b16 %v3520, %v3516
        %v4297 = vpack.c.b16 %v3525, %v3521
        %v4298 = vpack.c.b16 %v3526, %v3522
        %v4299 = vpack.c.b16 %v3527, %v3523
        %v4300 = vpack.c.b16 %v3528, %v3524
        %v4301 = vpack.c.b16 %v3533, %v3529
        %v4302 = vpack.c.b16 %v3534, %v3530
        %v4303 = vpack.c.b16 %v3535, %v3531
        %v4304 = vpack.c.b16 %v3536, %v3532
        %v4305 = vpack.c.b16 %v3541, %v3537
        %v4306 = vpack.c.b16 %v3542, %v3538
        %v4307 = vpack.c.b16 %v3543, %v3539
        %v4308 = vpack.c.b16 %v3544, %v3540
        %v4309 = vpack.c.b16 %v3549, %v3545
        %v4310 = vpack.c.b16 %v3550, %v3546
        %v4311 = vpack.c.b16 %v3551, %v3547
        %v4312 = vpack.c.b16 %v3552, %v3548
        %v4313 = vpack.c.b16 %v3557, %v3553
        %v4314 = vpack.c.b16 %v3558, %v3554
        %v4315 = vpack.c.b16 %v3559, %v3555
        %v4316 = vpack.c.b16 %v3560, %v3556
        %v4317 = vpack.c.b16 %v3565, %v3561
        %v4318 = vpack.c.b16 %v3566, %v3562
        %v4319 = vpack.c.b16 %v3567, %v3563
        %v4320 = vpack.c.b16 %v3568, %v3564
        %v4321 = vpack.c.b16 %v3573, %v3569
        %v4322 = vpack.c.b16 %v3574, %v3570
        %v4323 = vpack.c.b16 %v3575, %v3571
        %v4324 = vpack.c.b16 %v3576, %v3572
        %v4325 = vpack.c.b16 %v3581, %v3577
        %v4326 = vpack.c.b16 %v3582, %v3578
        %v4327 = vpack.c.b16 %v3583, %v3579
        %v4328 = vpack.c.b16 %v3584, %v3580
        %v4329 = vpack.c.b16 %v3589, %v3585
        %v4330 = vpack.c.b16 %v3590, %v3586
        %v4331 = vpack.c.b16 %v3591, %v3587
        %v4332 = vpack.c.b16 %v3592, %v3588
        %v4333 = vpack.c.b16 %v3597, %v3593
        %v4334 = vpack.c.b16 %v3598, %v3594
        %v4335 = vpack.c.b16 %v3599, %v3595
        %v4336 = vpack.c.b16 %v3600, %v3596
        %v4337 = vpack.c.b16 %v3605, %v3601
        %v4338 = vpack.c.b16 %v3606, %v3602
        %v4339 = vpack.c.b16 %v3607, %v3603
        %v4340 = vpack.c.b16 %v3608, %v3604
        %v4341 = vpack.c.b16 %v3613, %v3609
        %v4342 = vpack.c.b16 %v3614, %v3610
        %v4343 = vpack.c.b16 %v3615, %v3611
        %v4344 = vpack.c.b16 %v3616, %v3612
        %v4345 = vpack.c.b16 %v3621, %v3617
        %v4346 = vpack.c.b16 %v3622, %v3618
        %v4347 = vpack.c.b16 %v3623, %v3619
        %v4348 = vpack.c.b16 %v3624, %v3620
        %v4349 = vpack.c.b16 %v3629, %v3625
        %v4350 = vpack.c.b16 %v3630, %v3626
        %v4351 = vpack.c.b16 %v3631, %v3627
        %v4352 = vpack.c.b16 %v3632, %v3628
        %v4353 = vpack.c.b16 %v3637, %v3633
        %v4354 = vpack.c.b16 %v3638, %v3634
        %v4355 = vpack.c.b16 %v3639, %v3635
        %v4356 = vpack.c.b16 %v3640, %v3636
        %v4357 = vpack.c.b16 %v3645, %v3641
        %v4358 = vpack.c.b16 %v3646, %v3642
        %v4359 = vpack.c.b16 %v3647, %v3643
        %v4360 = vpack.c.b16 %v3648, %v3644
        %v4361 = vpack.c.b16 %v3653, %v3649
        %v4362 = vpack.c.b16 %v3654, %v3650
        %v4363 = vpack.c.b16 %v3655, %v3651
        %v4364 = vpack.c.b16 %v3656, %v3652
        %v4365 = vpack.c.b16 %v3661, %v3657
        %v4366 = vpack.c.b16 %v3662, %v3658
        %v4367 = vpack.c.b16 %v3663, %v3659
        %v4368 = vpack.c.b16 %v3664, %v3660
        %v4369 = vpack.c.b16 %v3669, %v3665
        %v4370 = vpack.c.b16 %v3670, %v3666
        %v4371 = vpack.c.b16 %v3671, %v3667
        %v4372 = vpack.c.b16 %v3672, %v3668
        %vm5073 = vcmask 916480
        %v5075 = vsel %vm5073, %v850, 0
        %5077 = vmatprep.subr.bf16.mxu0 %v3674
        %5078 = vmatpush1.bf16.msra.mxu0 %v3673
        %5079 = vmatprep.subr.bf16.mxu0 %v3678
        %5080 = vmatpush1.bf16.msra.mxu0 %v3677
        %5081 = vmatprep.subr.bf16.mxu0 %v3682
        %5082 = vmatpush1.bf16.msra.mxu0 %v3681
        %5083 = vmatprep.subr.bf16.mxu0 %v3686
        %5084 = vmatpush1.bf16.msra.mxu0 %v3685
        %5085 = vmatprep.subr.bf16.mxu0 %v3690
        %5086 = vmatpush1.bf16.msra.mxu0 %v3689
        %5087 = vmatprep.subr.bf16.mxu0 %v3694
        %5088 = vmatpush1.bf16.msra.mxu0 %v3693
        %5089 = vmatprep.subr.bf16.mxu0 %v3698
        %5090 = vmatpush1.bf16.msra.mxu0 %v3697
        %5091 = vmatprep.subr.bf16.mxu0 %v3702
        %5092 = vmatpush1.bf16.msra.mxu0 %v3701
        %5093 = vmatprep.subr.bf16.mxu0 %v3706
        %5094 = vmatpush1.bf16.msra.mxu0 %v3705
        %5095 = vmatprep.subr.bf16.mxu0 %v3710
        %5096 = vmatpush1.bf16.msra.mxu0 %v3709
        %5097 = vmatprep.subr.bf16.mxu0 %v3714
        %5098 = vmatpush1.bf16.msra.mxu0 %v3713
        %5099 = vmatprep.subr.bf16.mxu0 %v3718
        %5100 = vmatpush1.bf16.msra.mxu0 %v3717
        %5101 = vmatprep.subr.bf16.mxu0 %v3722
        %5102 = vmatpush1.bf16.msra.mxu0 %v3721
        %5103 = vmatprep.subr.bf16.mxu0 %v3726
        %5104 = vmatpush1.bf16.msra.mxu0 %v3725
        %5105 = vmatprep.subr.bf16.mxu0 %v3730
        %5106 = vmatpush1.bf16.msra.mxu0 %v3729
        %5107 = vmatprep.subr.bf16.mxu0 %v3734
        %5108 = vmatpush1.bf16.msra.mxu0 %v3733
        %5109 = vmatprep.mubr.bf16.mxu0 %v830
        %5110 = vmatmul.mubr.bf16.gmra.mrb[0].mxu0 %v829
        %v5111 = vpop.f32.mrb[0].mxu0
        %v5112 = vadd.f32 %v1556, %v5111
        %v5113 = vpop.f32.mrb[0].mxu0
        %v5114 = vadd.f32 %v1560, %v5113
        %v5115 = vpop.f32.mrb[0].mxu0
        %v5116 = vpop.f32.mrb[0].mxu0
        %5117 = vdwg.mxu0
        %5118 = vmatprep.subr.bf16.mxu0 %v3738
        %5119 = vmatpush1.bf16.msra.mxu0 %v3737
        %5120 = vmatprep.subr.bf16.mxu0 %v3742
        %5121 = vmatpush1.bf16.msra.mxu0 %v3741
        %5122 = vmatprep.subr.bf16.mxu0 %v3746
        %5123 = vmatpush1.bf16.msra.mxu0 %v3745
        %5124 = vmatprep.subr.bf16.mxu0 %v3750
        %5125 = vmatpush1.bf16.msra.mxu0 %v3749
        %5126 = vmatprep.subr.bf16.mxu0 %v3754
        %5127 = vmatpush1.bf16.msra.mxu0 %v3753
        %5128 = vmatprep.subr.bf16.mxu0 %v3758
        %5129 = vmatpush1.bf16.msra.mxu0 %v3757
        %5130 = vmatprep.subr.bf16.mxu0 %v3762
        %5131 = vmatpush1.bf16.msra.mxu0 %v3761
        %5132 = vmatprep.subr.bf16.mxu0 %v3766
        %5133 = vmatpush1.bf16.msra.mxu0 %v3765
        %5134 = vmatprep.subr.bf16.mxu0 %v3770
        %5135 = vmatpush1.bf16.msra.mxu0 %v3769
        %5136 = vmatprep.subr.bf16.mxu0 %v3774
        %5137 = vmatpush1.bf16.msra.mxu0 %v3773
        %5138 = vmatprep.subr.bf16.mxu0 %v3778
        %5139 = vmatpush1.bf16.msra.mxu0 %v3777
        %5140 = vmatprep.subr.bf16.mxu0 %v3782
        %5141 = vmatpush1.bf16.msra.mxu0 %v3781
        %5142 = vmatprep.subr.bf16.mxu0 %v3786
        %5143 = vmatpush1.bf16.msra.mxu0 %v3785
        %5144 = vmatprep.subr.bf16.mxu0 %v3790
        %5145 = vmatpush1.bf16.msra.mxu0 %v3789
        %5146 = vmatprep.subr.bf16.mxu0 %v3794
        %5147 = vmatpush1.bf16.msra.mxu0 %v3793
        %5148 = vmatprep.subr.bf16.mxu0 %v3798
        %5149 = vmatpush1.bf16.msra.mxu0 %v3797
        %5150 = vmatprep.mubr.bf16.mxu0 %v832
        %5151 = vmatmul.mubr.bf16.gmra.mrb[0].mxu0 %v831
        %v5152 = vpop.f32.mrb[0].mxu0
        %v5153 = vadd.f32 %v5112, %v5152
        %v5154 = vpop.f32.mrb[0].mxu0
        %v5155 = vadd.f32 %v5114, %v5154
        %v5156 = vpop.f32.mrb[0].mxu0
        %v5157 = vpop.f32.mrb[0].mxu0
        %5158 = vdwg.mxu0
        %5159 = vmatprep.subr.bf16.mxu0 %v3802
        %5160 = vmatpush1.bf16.msra.mxu0 %v3801
        %5161 = vmatprep.subr.bf16.mxu0 %v3806
        %5162 = vmatpush1.bf16.msra.mxu0 %v3805
        %5163 = vmatprep.subr.bf16.mxu0 %v3810
        %5164 = vmatpush1.bf16.msra.mxu0 %v3809
        %5165 = vmatprep.subr.bf16.mxu0 %v3814
        %5166 = vmatpush1.bf16.msra.mxu0 %v3813
        %5167 = vmatprep.subr.bf16.mxu0 %v3818
        %5168 = vmatpush1.bf16.msra.mxu0 %v3817
        %5169 = vmatprep.subr.bf16.mxu0 %v3822
        %5170 = vmatpush1.bf16.msra.mxu0 %v3821
        %5171 = vmatprep.subr.bf16.mxu0 %v3826
        %5172 = vmatpush1.bf16.msra.mxu0 %v3825
        %5173 = vmatprep.subr.bf16.mxu0 %v3830
        %5174 = vmatpush1.bf16.msra.mxu0 %v3829
        %5175 = vmatprep.subr.bf16.mxu0 %v3834
        %5176 = vmatpush1.bf16.msra.mxu0 %v3833
        %5177 = vmatprep.subr.bf16.mxu0 %v3838
        %5178 = vmatpush1.bf16.msra.mxu0 %v3837
        %5179 = vmatprep.subr.bf16.mxu0 %v3842
        %5180 = vmatpush1.bf16.msra.mxu0 %v3841
        %5181 = vmatprep.subr.bf16.mxu0 %v3846
        %5182 = vmatpush1.bf16.msra.mxu0 %v3845
        %5183 = vmatprep.subr.bf16.mxu0 %v3850
        %5184 = vmatpush1.bf16.msra.mxu0 %v3849
        %5185 = vmatprep.subr.bf16.mxu0 %v3854
        %5186 = vmatpush1.bf16.msra.mxu0 %v3853
        %5187 = vmatprep.subr.bf16.mxu0 %v3858
        %5188 = vmatpush1.bf16.msra.mxu0 %v3857
        %5189 = vmatprep.subr.bf16.mxu0 %v3862
        %5190 = vmatpush1.bf16.msra.mxu0 %v3861
        %5191 = vmatprep.mubr.bf16.mxu0 %v834
        %5192 = vmatmul.mubr.bf16.gmra.mrb[0].mxu0 %v833
        %v5193 = vpop.f32.mrb[0].mxu0
        %v5194 = vadd.f32 %v5153, %v5193
        %v5195 = vpop.f32.mrb[0].mxu0
        %v5196 = vadd.f32 %v5155, %v5195
        %v5197 = vpop.f32.mrb[0].mxu0
        %v5198 = vpop.f32.mrb[0].mxu0
        %5199 = vdwg.mxu0
        %5200 = vmatprep.subr.bf16.mxu0 %v3866
        %5201 = vmatpush1.bf16.msra.mxu0 %v3865
        %5202 = vmatprep.subr.bf16.mxu0 %v3870
        %5203 = vmatpush1.bf16.msra.mxu0 %v3869
        %5204 = vmatprep.subr.bf16.mxu0 %v3874
        %5205 = vmatpush1.bf16.msra.mxu0 %v3873
        %5206 = vmatprep.subr.bf16.mxu0 %v3878
        %5207 = vmatpush1.bf16.msra.mxu0 %v3877
        %5208 = vmatprep.subr.bf16.mxu0 %v3882
        %5209 = vmatpush1.bf16.msra.mxu0 %v3881
        %5210 = vmatprep.subr.bf16.mxu0 %v3886
        %5211 = vmatpush1.bf16.msra.mxu0 %v3885
        %5212 = vmatprep.subr.bf16.mxu0 %v3890
        %5213 = vmatpush1.bf16.msra.mxu0 %v3889
        %5214 = vmatprep.subr.bf16.mxu0 %v3894
        %5215 = vmatpush1.bf16.msra.mxu0 %v3893
        %5216 = vmatprep.subr.bf16.mxu0 %v3898
        %5217 = vmatpush1.bf16.msra.mxu0 %v3897
        %5218 = vmatprep.subr.bf16.mxu0 %v3902
        %5219 = vmatpush1.bf16.msra.mxu0 %v3901
        %5220 = vmatprep.subr.bf16.mxu0 %v3906
        %5221 = vmatpush1.bf16.msra.mxu0 %v3905
        %5222 = vmatprep.subr.bf16.mxu0 %v3910
        %5223 = vmatpush1.bf16.msra.mxu0 %v3909
        %5224 = vmatprep.subr.bf16.mxu0 %v3914
        %5225 = vmatpush1.bf16.msra.mxu0 %v3913
        %5226 = vmatprep.subr.bf16.mxu0 %v3918
        %5227 = vmatpush1.bf16.msra.mxu0 %v3917
        %5228 = vmatprep.subr.bf16.mxu0 %v3922
        %5229 = vmatpush1.bf16.msra.mxu0 %v3921
        %5230 = vmatprep.subr.bf16.mxu0 %v3926
        %5231 = vmatpush1.bf16.msra.mxu0 %v3925
        %5232 = vmatprep.mubr.bf16.mxu0 %v836
        %5233 = vmatmul.mubr.bf16.gmra.mrb[0].mxu0 %v835
        %v5234 = vpop.f32.mrb[0].mxu0
        %v5235 = vadd.f32 %v5194, %v5234
        %v5236 = vpop.f32.mrb[0].mxu0
        %v5237 = vadd.f32 %v5196, %v5236
        %v5238 = vpop.f32.mrb[0].mxu0
        %v5239 = vpop.f32.mrb[0].mxu0
        %5240 = vdwg.mxu0
        %5241 = vmatprep.subr.bf16.mxu0 %v3930
        %5242 = vmatpush1.bf16.msra.mxu0 %v3929
        %5243 = vmatprep.subr.bf16.mxu0 %v3934
        %5244 = vmatpush1.bf16.msra.mxu0 %v3933
        %5245 = vmatprep.subr.bf16.mxu0 %v3938
        %5246 = vmatpush1.bf16.msra.mxu0 %v3937
        %5247 = vmatprep.subr.bf16.mxu0 %v3942
        %5248 = vmatpush1.bf16.msra.mxu0 %v3941
        %5249 = vmatprep.subr.bf16.mxu0 %v3946
        %5250 = vmatpush1.bf16.msra.mxu0 %v3945
        %5251 = vmatprep.subr.bf16.mxu0 %v3950
        %5252 = vmatpush1.bf16.msra.mxu0 %v3949
        %5253 = vmatprep.subr.bf16.mxu0 %v3954
        %5254 = vmatpush1.bf16.msra.mxu0 %v3953
        %5255 = vmatprep.subr.bf16.mxu0 %v3958
        %5256 = vmatpush1.bf16.msra.mxu0 %v3957
        %5257 = vmatprep.subr.bf16.mxu0 %v3962
        %5258 = vmatpush1.bf16.msra.mxu0 %v3961
        %5259 = vmatprep.subr.bf16.mxu0 %v3966
        %5260 = vmatpush1.bf16.msra.mxu0 %v3965
        %5261 = vmatprep.subr.bf16.mxu0 %v3970
        %5262 = vmatpush1.bf16.msra.mxu0 %v3969
        %5263 = vmatprep.subr.bf16.mxu0 %v3974
        %5264 = vmatpush1.bf16.msra.mxu0 %v3973
        %5265 = vmatprep.subr.bf16.mxu0 %v3978
        %5266 = vmatpush1.bf16.msra.mxu0 %v3977
        %5267 = vmatprep.subr.bf16.mxu0 %v3982
        %5268 = vmatpush1.bf16.msra.mxu0 %v3981
        %5269 = vmatprep.subr.bf16.mxu0 %v3986
        %5270 = vmatpush1.bf16.msra.mxu0 %v3985
        %5271 = vmatprep.subr.bf16.mxu0 %v3990
        %5272 = vmatpush1.bf16.msra.mxu0 %v3989
        %5273 = vmatprep.mubr.bf16.mxu0 %v838
        %5274 = vmatmul.mubr.bf16.gmra.mrb[0].mxu0 %v837
        %v5275 = vpop.f32.mrb[0].mxu0
        %v5276 = vadd.f32 %v5235, %v5275
        %v5277 = vpop.f32.mrb[0].mxu0
        %v5278 = vadd.f32 %v5237, %v5277
        %v5279 = vpop.f32.mrb[0].mxu0
        %v5280 = vpop.f32.mrb[0].mxu0
        %5281 = vdwg.mxu0
        %5282 = vmatprep.subr.bf16.mxu0 %v3994
        %5283 = vmatpush1.bf16.msra.mxu0 %v3993
        %5284 = vmatprep.subr.bf16.mxu0 %v3998
        %5285 = vmatpush1.bf16.msra.mxu0 %v3997
        %5286 = vmatprep.subr.bf16.mxu0 %v4002
        %5287 = vmatpush1.bf16.msra.mxu0 %v4001
        %5288 = vmatprep.subr.bf16.mxu0 %v4006
        %5289 = vmatpush1.bf16.msra.mxu0 %v4005
        %5290 = vmatprep.subr.bf16.mxu0 %v4010
        %5291 = vmatpush1.bf16.msra.mxu0 %v4009
        %5292 = vmatprep.subr.bf16.mxu0 %v4014
        %5293 = vmatpush1.bf16.msra.mxu0 %v4013
        %5294 = vmatprep.subr.bf16.mxu0 %v4018
        %5295 = vmatpush1.bf16.msra.mxu0 %v4017
        %5296 = vmatprep.subr.bf16.mxu0 %v4022
        %5297 = vmatpush1.bf16.msra.mxu0 %v4021
        %5298 = vmatprep.subr.bf16.mxu0 %v4026
        %5299 = vmatpush1.bf16.msra.mxu0 %v4025
        %5300 = vmatprep.subr.bf16.mxu0 %v4030
        %5301 = vmatpush1.bf16.msra.mxu0 %v4029
        %5302 = vmatprep.subr.bf16.mxu0 %v4034
        %5303 = vmatpush1.bf16.msra.mxu0 %v4033
        %5304 = vmatprep.subr.bf16.mxu0 %v4038
        %5305 = vmatpush1.bf16.msra.mxu0 %v4037
        %5306 = vmatprep.subr.bf16.mxu0 %v4042
        %5307 = vmatpush1.bf16.msra.mxu0 %v4041
        %5308 = vmatprep.subr.bf16.mxu0 %v4046
        %5309 = vmatpush1.bf16.msra.mxu0 %v4045
        %5310 = vmatprep.subr.bf16.mxu0 %v4050
        %5311 = vmatpush1.bf16.msra.mxu0 %v4049
        %5312 = vmatprep.subr.bf16.mxu0 %v4054
        %5313 = vmatpush1.bf16.msra.mxu0 %v4053
        %5314 = vmatprep.mubr.bf16.mxu0 %v840
        %5315 = vmatmul.mubr.bf16.gmra.mrb[0].mxu0 %v839
        %v5316 = vpop.f32.mrb[0].mxu0
        %v5317 = vadd.f32 %v5276, %v5316
        %v5318 = vpop.f32.mrb[0].mxu0
        %v5319 = vadd.f32 %v5278, %v5318
        %v5320 = vpop.f32.mrb[0].mxu0
        %v5321 = vpop.f32.mrb[0].mxu0
        %5322 = vdwg.mxu0
        %5323 = vmatprep.subr.bf16.mxu0 %v4058
        %5324 = vmatpush1.bf16.msra.mxu0 %v4057
        %5325 = vmatprep.subr.bf16.mxu0 %v4062
        %5326 = vmatpush1.bf16.msra.mxu0 %v4061
        %5327 = vmatprep.subr.bf16.mxu0 %v4066
        %5328 = vmatpush1.bf16.msra.mxu0 %v4065
        %5329 = vmatprep.subr.bf16.mxu0 %v4070
        %5330 = vmatpush1.bf16.msra.mxu0 %v4069
        %5331 = vmatprep.subr.bf16.mxu0 %v4074
        %5332 = vmatpush1.bf16.msra.mxu0 %v4073
        %5333 = vmatprep.subr.bf16.mxu0 %v4078
        %5334 = vmatpush1.bf16.msra.mxu0 %v4077
        %5335 = vmatprep.subr.bf16.mxu0 %v4082
        %5336 = vmatpush1.bf16.msra.mxu0 %v4081
        %5337 = vmatprep.subr.bf16.mxu0 %v4086
        %5338 = vmatpush1.bf16.msra.mxu0 %v4085
        %5339 = vmatprep.subr.bf16.mxu0 %v4090
        %5340 = vmatpush1.bf16.msra.mxu0 %v4089
        %5341 = vmatprep.subr.bf16.mxu0 %v4094
        %5342 = vmatpush1.bf16.msra.mxu0 %v4093
        %5343 = vmatprep.subr.bf16.mxu0 %v4098
        %5344 = vmatpush1.bf16.msra.mxu0 %v4097
        %5345 = vmatprep.subr.bf16.mxu0 %v4102
        %5346 = vmatpush1.bf16.msra.mxu0 %v4101
        %5347 = vmatprep.subr.bf16.mxu0 %v4106
        %5348 = vmatpush1.bf16.msra.mxu0 %v4105
        %5349 = vmatprep.subr.bf16.mxu0 %v4110
        %5350 = vmatpush1.bf16.msra.mxu0 %v4109
        %5351 = vmatprep.subr.bf16.mxu0 %v4114
        %5352 = vmatpush1.bf16.msra.mxu0 %v4113
        %5353 = vmatprep.subr.bf16.mxu0 %v4118
        %5354 = vmatpush1.bf16.msra.mxu0 %v4117
        %5355 = vmatprep.mubr.bf16.mxu0 %v842
        %5356 = vmatmul.mubr.bf16.gmra.mrb[0].mxu0 %v841
        %v5357 = vpop.f32.mrb[0].mxu0
        %v5358 = vadd.f32 %v5317, %v5357
        %v5359 = vpop.f32.mrb[0].mxu0
        %v5360 = vadd.f32 %v5319, %v5359
        %v5361 = vpop.f32.mrb[0].mxu0
        %v5362 = vpop.f32.mrb[0].mxu0
        %5363 = vdwg.mxu0
        %5364 = vmatprep.subr.bf16.mxu0 %v4122
        %5365 = vmatpush1.bf16.msra.mxu0 %v4121
        %5366 = vmatprep.subr.bf16.mxu0 %v4126
        %5367 = vmatpush1.bf16.msra.mxu0 %v4125
        %5368 = vmatprep.subr.bf16.mxu0 %v4130
        %5369 = vmatpush1.bf16.msra.mxu0 %v4129
        %5370 = vmatprep.subr.bf16.mxu0 %v4134
        %5371 = vmatpush1.bf16.msra.mxu0 %v4133
        %5372 = vmatprep.subr.bf16.mxu0 %v4138
        %5373 = vmatpush1.bf16.msra.mxu0 %v4137
        %5374 = vmatprep.subr.bf16.mxu0 %v4142
        %5375 = vmatpush1.bf16.msra.mxu0 %v4141
        %5376 = vmatprep.subr.bf16.mxu0 %v4146
        %5377 = vmatpush1.bf16.msra.mxu0 %v4145
        %5378 = vmatprep.subr.bf16.mxu0 %v4150
        %5379 = vmatpush1.bf16.msra.mxu0 %v4149
        %5380 = vmatprep.subr.bf16.mxu0 %v4154
        %5381 = vmatpush1.bf16.msra.mxu0 %v4153
        %5382 = vmatprep.subr.bf16.mxu0 %v4158
        %5383 = vmatpush1.bf16.msra.mxu0 %v4157
        %5384 = vmatprep.subr.bf16.mxu0 %v4162
        %5385 = vmatpush1.bf16.msra.mxu0 %v4161
        %5386 = vmatprep.subr.bf16.mxu0 %v4166
        %5387 = vmatpush1.bf16.msra.mxu0 %v4165
        %5388 = vmatprep.subr.bf16.mxu0 %v4170
        %5389 = vmatpush1.bf16.msra.mxu0 %v4169
        %5390 = vmatprep.subr.bf16.mxu0 %v4174
        %5391 = vmatpush1.bf16.msra.mxu0 %v4173
        %5392 = vmatprep.subr.bf16.mxu0 %v4178
        %5393 = vmatpush1.bf16.msra.mxu0 %v4177
        %5394 = vmatprep.subr.bf16.mxu0 %v4182
        %5395 = vmatpush1.bf16.msra.mxu0 %v4181
        %5396 = vmatprep.mubr.bf16.mxu0 %v844
        %5397 = vmatmul.mubr.bf16.gmra.mrb[0].mxu0 %v843
        %v5398 = vpop.f32.mrb[0].mxu0
        %v5399 = vadd.f32 %v5358, %v5398
        %v5400 = vpop.f32.mrb[0].mxu0
        %v5401 = vadd.f32 %v5360, %v5400
        %v5402 = vpop.f32.mrb[0].mxu0
        %v5403 = vpop.f32.mrb[0].mxu0
        %5404 = vdwg.mxu0
        %5405 = vmatprep.subr.bf16.mxu0 %v4186
        %5406 = vmatpush1.bf16.msra.mxu0 %v4185
        %5407 = vmatprep.subr.bf16.mxu0 %v4190
        %5408 = vmatpush1.bf16.msra.mxu0 %v4189
        %5409 = vmatprep.subr.bf16.mxu0 %v4194
        %5410 = vmatpush1.bf16.msra.mxu0 %v4193
        %5411 = vmatprep.subr.bf16.mxu0 %v4198
        %5412 = vmatpush1.bf16.msra.mxu0 %v4197
        %5413 = vmatprep.subr.bf16.mxu0 %v4202
        %5414 = vmatpush1.bf16.msra.mxu0 %v4201
        %5415 = vmatprep.subr.bf16.mxu0 %v4206
        %5416 = vmatpush1.bf16.msra.mxu0 %v4205
        %5417 = vmatprep.subr.bf16.mxu0 %v4210
        %5418 = vmatpush1.bf16.msra.mxu0 %v4209
        %5419 = vmatprep.subr.bf16.mxu0 %v4214
        %5420 = vmatpush1.bf16.msra.mxu0 %v4213
        %5421 = vmatprep.subr.bf16.mxu0 %v4218
        %5422 = vmatpush1.bf16.msra.mxu0 %v4217
        %5423 = vmatprep.subr.bf16.mxu0 %v4222
        %5424 = vmatpush1.bf16.msra.mxu0 %v4221
        %5425 = vmatprep.subr.bf16.mxu0 %v4226
        %5426 = vmatpush1.bf16.msra.mxu0 %v4225
        %5427 = vmatprep.subr.bf16.mxu0 %v4230
        %5428 = vmatpush1.bf16.msra.mxu0 %v4229
        %5429 = vmatprep.subr.bf16.mxu0 %v4234
        %5430 = vmatpush1.bf16.msra.mxu0 %v4233
        %5431 = vmatprep.subr.bf16.mxu0 %v4238
        %5432 = vmatpush1.bf16.msra.mxu0 %v4237
        %5433 = vmatprep.subr.bf16.mxu0 %v4242
        %5434 = vmatpush1.bf16.msra.mxu0 %v4241
        %5435 = vmatprep.subr.bf16.mxu0 %v4246
        %5436 = vmatpush1.bf16.msra.mxu0 %v4245
        %5437 = vmatprep.mubr.bf16.mxu0 %v846
        %5438 = vmatmul.mubr.bf16.gmra.mrb[0].mxu0 %v845
        %v5439 = vpop.f32.mrb[0].mxu0
        %v5440 = vadd.f32 %v5399, %v5439
        %v5441 = vpop.f32.mrb[0].mxu0
        %v5442 = vadd.f32 %v5401, %v5441
        %v5443 = vpop.f32.mrb[0].mxu0
        %v5444 = vpop.f32.mrb[0].mxu0
        %5445 = vdwg.mxu0
        %5446 = vmatprep.subr.bf16.mxu0 %v4250
        %5447 = vmatpush1.bf16.msra.mxu0 %v4249
        %5448 = vmatprep.subr.bf16.mxu0 %v4254
        %5449 = vmatpush1.bf16.msra.mxu0 %v4253
        %5450 = vmatprep.subr.bf16.mxu0 %v4258
        %5451 = vmatpush1.bf16.msra.mxu0 %v4257
        %5452 = vmatprep.subr.bf16.mxu0 %v4262
        %5453 = vmatpush1.bf16.msra.mxu0 %v4261
        %5454 = vmatprep.subr.bf16.mxu0 %v4266
        %5455 = vmatpush1.bf16.msra.mxu0 %v4265
        %5456 = vmatprep.subr.bf16.mxu0 %v4270
        %5457 = vmatpush1.bf16.msra.mxu0 %v4269
        %5458 = vmatprep.subr.bf16.mxu0 %v4274
        %5459 = vmatpush1.bf16.msra.mxu0 %v4273
        %5460 = vmatprep.subr.bf16.mxu0 %v4278
        %5461 = vmatpush1.bf16.msra.mxu0 %v4277
        %5462 = vmatprep.subr.bf16.mxu0 %v4282
        %5463 = vmatpush1.bf16.msra.mxu0 %v4281
        %5464 = vmatprep.subr.bf16.mxu0 %v4286
        %5465 = vmatpush1.bf16.msra.mxu0 %v4285
        %5466 = vmatprep.subr.bf16.mxu0 %v4290
        %5467 = vmatpush1.bf16.msra.mxu0 %v4289
        %5468 = vmatprep.subr.bf16.mxu0 %v4294
        %5469 = vmatpush1.bf16.msra.mxu0 %v4293
        %5470 = vmatprep.subr.bf16.mxu0 %v4298
        %5471 = vmatpush1.bf16.msra.mxu0 %v4297
        %5472 = vmatprep.subr.bf16.mxu0 %v4302
        %5473 = vmatpush1.bf16.msra.mxu0 %v4301
        %5474 = vmatprep.subr.bf16.mxu0 %v4306
        %5475 = vmatpush1.bf16.msra.mxu0 %v4305
        %5476 = vmatprep.subr.bf16.mxu0 %v4310
        %5477 = vmatpush1.bf16.msra.mxu0 %v4309
        %5478 = vmatprep.mubr.bf16.mxu0 %v848
        %5479 = vmatmul.mubr.bf16.gmra.mrb[0].mxu0 %v847
        %v5480 = vpop.f32.mrb[0].mxu0
        %v5481 = vadd.f32 %v5440, %v5480
        %v5482 = vpop.f32.mrb[0].mxu0
        %v5483 = vadd.f32 %v5442, %v5482
        %v5484 = vpop.f32.mrb[0].mxu0
        %v5485 = vpop.f32.mrb[0].mxu0
        %5486 = vdwg.mxu0
        %5487 = vmatprep.subr.bf16.mxu0 %v4314
        %5488 = vmatpush1.bf16.msra.mxu0 %v4313
        %5489 = vmatprep.subr.bf16.mxu0 %v4318
        %5490 = vmatpush1.bf16.msra.mxu0 %v4317
        %5491 = vmatprep.subr.bf16.mxu0 %v4322
        %5492 = vmatpush1.bf16.msra.mxu0 %v4321
        %5493 = vmatprep.subr.bf16.mxu0 %v4326
        %5494 = vmatpush1.bf16.msra.mxu0 %v4325
        %5495 = vmatprep.subr.bf16.mxu0 %v4330
        %5496 = vmatpush1.bf16.msra.mxu0 %v4329
        %5497 = vmatprep.subr.bf16.mxu0 %v4334
        %5498 = vmatpush1.bf16.msra.mxu0 %v4333
        %5499 = vmatprep.subr.bf16.mxu0 %v4338
        %5500 = vmatpush1.bf16.msra.mxu0 %v4337
        %5501 = vmatprep.subr.bf16.mxu0 %v4342
        %5502 = vmatpush1.bf16.msra.mxu0 %v4341
        %5503 = vmatprep.subr.bf16.mxu0 %v4346
        %5504 = vmatpush1.bf16.msra.mxu0 %v4345
        %5505 = vmatprep.subr.bf16.mxu0 %v4350
        %5506 = vmatpush1.bf16.msra.mxu0 %v4349
        %5507 = vmatprep.subr.bf16.mxu0 %v4354
        %5508 = vmatpush1.bf16.msra.mxu0 %v4353
        %5509 = vmatprep.subr.bf16.mxu0 %v4358
        %5510 = vmatpush1.bf16.msra.mxu0 %v4357
        %5511 = vmatprep.subr.bf16.mxu0 %v4362
        %5512 = vmatpush1.bf16.msra.mxu0 %v4361
        %5513 = vmatprep.subr.bf16.mxu0 %v4366
        %5514 = vmatpush1.bf16.msra.mxu0 %v4365
        %5515 = vmatprep.subr.bf16.mxu0 %v4370
        %5516 = vmatpush1.bf16.msra.mxu0 %v4369
        %5517 = vmatprep.subr.bf16.mxu0 0
        %5518 = vmatpush1.bf16.msra.mxu0 0
        %5519 = vmatprep.mubr.bf16.mxu0 %v5075
        %5520 = vmatmul.mubr.bf16.gmra.mrb[0].mxu0 %v849
        %v5521 = vpop.f32.mrb[0].mxu0
        %v5522 = vadd.f32 %v5481, %v5521
        %v5523 = vpop.f32.mrb[0].mxu0
        %v5524 = vadd.f32 %v5483, %v5523
        %v5525 = vpop.f32.mrb[0].mxu0
        %v5526 = vpop.f32.mrb[0].mxu0
        %5527 = vdwg.mxu0
        %5528 = vmatprep.subr.bf16.mxu0 %v3676
        %5529 = vmatpush1.bf16.msra.mxu0 %v3675
        %5530 = vmatprep.subr.bf16.mxu0 %v3680
        %5531 = vmatpush1.bf16.msra.mxu0 %v3679
        %5532 = vmatprep.subr.bf16.mxu0 %v3684
        %5533 = vmatpush1.bf16.msra.mxu0 %v3683
        %5534 = vmatprep.subr.bf16.mxu0 %v3688
        %5535 = vmatpush1.bf16.msra.mxu0 %v3687
        %5536 = vmatprep.subr.bf16.mxu0 %v3692
        %5537 = vmatpush1.bf16.msra.mxu0 %v3691
        %5538 = vmatprep.subr.bf16.mxu0 %v3696
        %5539 = vmatpush1.bf16.msra.mxu0 %v3695
        %5540 = vmatprep.subr.bf16.mxu0 %v3700
        %5541 = vmatpush1.bf16.msra.mxu0 %v3699
        %5542 = vmatprep.subr.bf16.mxu0 %v3704
        %5543 = vmatpush1.bf16.msra.mxu0 %v3703
        %5544 = vmatprep.subr.bf16.mxu0 %v3708
        %5545 = vmatpush1.bf16.msra.mxu0 %v3707
        %5546 = vmatprep.subr.bf16.mxu0 %v3712
        %5547 = vmatpush1.bf16.msra.mxu0 %v3711
        %5548 = vmatprep.subr.bf16.mxu0 %v3716
        %5549 = vmatpush1.bf16.msra.mxu0 %v3715
        %5550 = vmatprep.subr.bf16.mxu0 %v3720
        %5551 = vmatpush1.bf16.msra.mxu0 %v3719
        %5552 = vmatprep.subr.bf16.mxu0 %v3724
        %5553 = vmatpush1.bf16.msra.mxu0 %v3723
        %5554 = vmatprep.subr.bf16.mxu0 %v3728
        %5555 = vmatpush1.bf16.msra.mxu0 %v3727
        %5556 = vmatprep.subr.bf16.mxu0 %v3732
        %5557 = vmatpush1.bf16.msra.mxu0 %v3731
        %5558 = vmatprep.subr.bf16.mxu0 %v3736
        %5559 = vmatpush1.bf16.msra.mxu0 %v3735
        %5560 = vmatprep.mubr.bf16.mxu0 %v830
        %5561 = vmatmul.mubr.bf16.gmra.mrb[0].mxu0 %v829
        %v5562 = vpop.f32.mrb[0].mxu0
        %v5563 = vadd.f32 %v1564, %v5562
        %v5564 = vpop.f32.mrb[0].mxu0
        %v5565 = vadd.f32 %v1568, %v5564
        %v5566 = vpop.f32.mrb[0].mxu0
        %v5567 = vpop.f32.mrb[0].mxu0
        %5568 = vdwg.mxu0
        %5569 = vmatprep.subr.bf16.mxu0 %v3740
        %5570 = vmatpush1.bf16.msra.mxu0 %v3739
        %5571 = vmatprep.subr.bf16.mxu0 %v3744
        %5572 = vmatpush1.bf16.msra.mxu0 %v3743
        %5573 = vmatprep.subr.bf16.mxu0 %v3748
        %5574 = vmatpush1.bf16.msra.mxu0 %v3747
        %5575 = vmatprep.subr.bf16.mxu0 %v3752
        %5576 = vmatpush1.bf16.msra.mxu0 %v3751
        %5577 = vmatprep.subr.bf16.mxu0 %v3756
        %5578 = vmatpush1.bf16.msra.mxu0 %v3755
        %5579 = vmatprep.subr.bf16.mxu0 %v3760
        %5580 = vmatpush1.bf16.msra.mxu0 %v3759
        %5581 = vmatprep.subr.bf16.mxu0 %v3764
        %5582 = vmatpush1.bf16.msra.mxu0 %v3763
        %5583 = vmatprep.subr.bf16.mxu0 %v3768
        %5584 = vmatpush1.bf16.msra.mxu0 %v3767
        %5585 = vmatprep.subr.bf16.mxu0 %v3772
        %5586 = vmatpush1.bf16.msra.mxu0 %v3771
        %5587 = vmatprep.subr.bf16.mxu0 %v3776
        %5588 = vmatpush1.bf16.msra.mxu0 %v3775
        %5589 = vmatprep.subr.bf16.mxu0 %v3780
        %5590 = vmatpush1.bf16.msra.mxu0 %v3779
        %5591 = vmatprep.subr.bf16.mxu0 %v3784
        %5592 = vmatpush1.bf16.msra.mxu0 %v3783
        %5593 = vmatprep.subr.bf16.mxu0 %v3788
        %5594 = vmatpush1.bf16.msra.mxu0 %v3787
        %5595 = vmatprep.subr.bf16.mxu0 %v3792
        %5596 = vmatpush1.bf16.msra.mxu0 %v3791
        %5597 = vmatprep.subr.bf16.mxu0 %v3796
        %5598 = vmatpush1.bf16.msra.mxu0 %v3795
        %5599 = vmatprep.subr.bf16.mxu0 %v3800
        %5600 = vmatpush1.bf16.msra.mxu0 %v3799
        %5601 = vmatprep.mubr.bf16.mxu0 %v832
        %5602 = vmatmul.mubr.bf16.gmra.mrb[0].mxu0 %v831
        %v5603 = vpop.f32.mrb[0].mxu0
        %v5604 = vadd.f32 %v5563, %v5603
        %v5605 = vpop.f32.mrb[0].mxu0
        %v5606 = vadd.f32 %v5565, %v5605
        %v5607 = vpop.f32.mrb[0].mxu0
        %v5608 = vpop.f32.mrb[0].mxu0
        %5609 = vdwg.mxu0
        %5610 = vmatprep.subr.bf16.mxu0 %v3804
        %5611 = vmatpush1.bf16.msra.mxu0 %v3803
        %5612 = vmatprep.subr.bf16.mxu0 %v3808
        %5613 = vmatpush1.bf16.msra.mxu0 %v3807
        %5614 = vmatprep.subr.bf16.mxu0 %v3812
        %5615 = vmatpush1.bf16.msra.mxu0 %v3811
        %5616 = vmatprep.subr.bf16.mxu0 %v3816
        %5617 = vmatpush1.bf16.msra.mxu0 %v3815
        %5618 = vmatprep.subr.bf16.mxu0 %v3820
        %5619 = vmatpush1.bf16.msra.mxu0 %v3819
        %5620 = vmatprep.subr.bf16.mxu0 %v3824
        %5621 = vmatpush1.bf16.msra.mxu0 %v3823
        %5622 = vmatprep.subr.bf16.mxu0 %v3828
        %5623 = vmatpush1.bf16.msra.mxu0 %v3827
        %5624 = vmatprep.subr.bf16.mxu0 %v3832
        %5625 = vmatpush1.bf16.msra.mxu0 %v3831
        %5626 = vmatprep.subr.bf16.mxu0 %v3836
        %5627 = vmatpush1.bf16.msra.mxu0 %v3835
        %5628 = vmatprep.subr.bf16.mxu0 %v3840
        %5629 = vmatpush1.bf16.msra.mxu0 %v3839
        %5630 = vmatprep.subr.bf16.mxu0 %v3844
        %5631 = vmatpush1.bf16.msra.mxu0 %v3843
        %5632 = vmatprep.subr.bf16.mxu0 %v3848
        %5633 = vmatpush1.bf16.msra.mxu0 %v3847
        %5634 = vmatprep.subr.bf16.mxu0 %v3852
        %5635 = vmatpush1.bf16.msra.mxu0 %v3851
        %5636 = vmatprep.subr.bf16.mxu0 %v3856
        %5637 = vmatpush1.bf16.msra.mxu0 %v3855
        %5638 = vmatprep.subr.bf16.mxu0 %v3860
        %5639 = vmatpush1.bf16.msra.mxu0 %v3859
        %5640 = vmatprep.subr.bf16.mxu0 %v3864
        %5641 = vmatpush1.bf16.msra.mxu0 %v3863
        %5642 = vmatprep.mubr.bf16.mxu0 %v834
        %5643 = vmatmul.mubr.bf16.gmra.mrb[0].mxu0 %v833
        %v5644 = vpop.f32.mrb[0].mxu0
        %v5645 = vadd.f32 %v5604, %v5644
        %v5646 = vpop.f32.mrb[0].mxu0
        %v5647 = vadd.f32 %v5606, %v5646
        %v5648 = vpop.f32.mrb[0].mxu0
        %v5649 = vpop.f32.mrb[0].mxu0
        %5650 = vdwg.mxu0
        %5651 = vmatprep.subr.bf16.mxu0 %v3868
        %5652 = vmatpush1.bf16.msra.mxu0 %v3867
        %5653 = vmatprep.subr.bf16.mxu0 %v3872
        %5654 = vmatpush1.bf16.msra.mxu0 %v3871
        %5655 = vmatprep.subr.bf16.mxu0 %v3876
        %5656 = vmatpush1.bf16.msra.mxu0 %v3875
        %5657 = vmatprep.subr.bf16.mxu0 %v3880
        %5658 = vmatpush1.bf16.msra.mxu0 %v3879
        %5659 = vmatprep.subr.bf16.mxu0 %v3884
        %5660 = vmatpush1.bf16.msra.mxu0 %v3883
        %5661 = vmatprep.subr.bf16.mxu0 %v3888
        %5662 = vmatpush1.bf16.msra.mxu0 %v3887
        %5663 = vmatprep.subr.bf16.mxu0 %v3892
        %5664 = vmatpush1.bf16.msra.mxu0 %v3891
        %5665 = vmatprep.subr.bf16.mxu0 %v3896
        %5666 = vmatpush1.bf16.msra.mxu0 %v3895
        %5667 = vmatprep.subr.bf16.mxu0 %v3900
        %5668 = vmatpush1.bf16.msra.mxu0 %v3899
        %5669 = vmatprep.subr.bf16.mxu0 %v3904
        %5670 = vmatpush1.bf16.msra.mxu0 %v3903
        %5671 = vmatprep.subr.bf16.mxu0 %v3908
        %5672 = vmatpush1.bf16.msra.mxu0 %v3907
        %5673 = vmatprep.subr.bf16.mxu0 %v3912
        %5674 = vmatpush1.bf16.msra.mxu0 %v3911
        %5675 = vmatprep.subr.bf16.mxu0 %v3916
        %5676 = vmatpush1.bf16.msra.mxu0 %v3915
        %5677 = vmatprep.subr.bf16.mxu0 %v3920
        %5678 = vmatpush1.bf16.msra.mxu0 %v3919
        %5679 = vmatprep.subr.bf16.mxu0 %v3924
        %5680 = vmatpush1.bf16.msra.mxu0 %v3923
        %5681 = vmatprep.subr.bf16.mxu0 %v3928
        %5682 = vmatpush1.bf16.msra.mxu0 %v3927
        %5683 = vmatprep.mubr.bf16.mxu0 %v836
        %5684 = vmatmul.mubr.bf16.gmra.mrb[0].mxu0 %v835
        %v5685 = vpop.f32.mrb[0].mxu0
        %v5686 = vadd.f32 %v5645, %v5685
        %v5687 = vpop.f32.mrb[0].mxu0
        %v5688 = vadd.f32 %v5647, %v5687
        %v5689 = vpop.f32.mrb[0].mxu0
        %v5690 = vpop.f32.mrb[0].mxu0
        %5691 = vdwg.mxu0
        %5692 = vmatprep.subr.bf16.mxu0 %v3932
        %5693 = vmatpush1.bf16.msra.mxu0 %v3931
        %5694 = vmatprep.subr.bf16.mxu0 %v3936
        %5695 = vmatpush1.bf16.msra.mxu0 %v3935
        %5696 = vmatprep.subr.bf16.mxu0 %v3940
        %5697 = vmatpush1.bf16.msra.mxu0 %v3939
        %5698 = vmatprep.subr.bf16.mxu0 %v3944
        %5699 = vmatpush1.bf16.msra.mxu0 %v3943
        %5700 = vmatprep.subr.bf16.mxu0 %v3948
        %5701 = vmatpush1.bf16.msra.mxu0 %v3947
        %5702 = vmatprep.subr.bf16.mxu0 %v3952
        %5703 = vmatpush1.bf16.msra.mxu0 %v3951
        %5704 = vmatprep.subr.bf16.mxu0 %v3956
        %5705 = vmatpush1.bf16.msra.mxu0 %v3955
        %5706 = vmatprep.subr.bf16.mxu0 %v3960
        %5707 = vmatpush1.bf16.msra.mxu0 %v3959
        %5708 = vmatprep.subr.bf16.mxu0 %v3964
        %5709 = vmatpush1.bf16.msra.mxu0 %v3963
        %5710 = vmatprep.subr.bf16.mxu0 %v3968
        %5711 = vmatpush1.bf16.msra.mxu0 %v3967
        %5712 = vmatprep.subr.bf16.mxu0 %v3972
        %5713 = vmatpush1.bf16.msra.mxu0 %v3971
        %5714 = vmatprep.subr.bf16.mxu0 %v3976
        %5715 = vmatpush1.bf16.msra.mxu0 %v3975
        %5716 = vmatprep.subr.bf16.mxu0 %v3980
        %5717 = vmatpush1.bf16.msra.mxu0 %v3979
        %5718 = vmatprep.subr.bf16.mxu0 %v3984
        %5719 = vmatpush1.bf16.msra.mxu0 %v3983
        %5720 = vmatprep.subr.bf16.mxu0 %v3988
        %5721 = vmatpush1.bf16.msra.mxu0 %v3987
        %5722 = vmatprep.subr.bf16.mxu0 %v3992
        %5723 = vmatpush1.bf16.msra.mxu0 %v3991
        %5724 = vmatprep.mubr.bf16.mxu0 %v838
        %5725 = vmatmul.mubr.bf16.gmra.mrb[0].mxu0 %v837
        %v5726 = vpop.f32.mrb[0].mxu0
        %v5727 = vadd.f32 %v5686, %v5726
        %v5728 = vpop.f32.mrb[0].mxu0
        %v5729 = vadd.f32 %v5688, %v5728
        %v5730 = vpop.f32.mrb[0].mxu0
        %v5731 = vpop.f32.mrb[0].mxu0
        %5732 = vdwg.mxu0
        %5733 = vmatprep.subr.bf16.mxu0 %v3996
        %5734 = vmatpush1.bf16.msra.mxu0 %v3995
        %5735 = vmatprep.subr.bf16.mxu0 %v4000
        %5736 = vmatpush1.bf16.msra.mxu0 %v3999
        %5737 = vmatprep.subr.bf16.mxu0 %v4004
        %5738 = vmatpush1.bf16.msra.mxu0 %v4003
        %5739 = vmatprep.subr.bf16.mxu0 %v4008
        %5740 = vmatpush1.bf16.msra.mxu0 %v4007
        %5741 = vmatprep.subr.bf16.mxu0 %v4012
        %5742 = vmatpush1.bf16.msra.mxu0 %v4011
        %5743 = vmatprep.subr.bf16.mxu0 %v4016
        %5744 = vmatpush1.bf16.msra.mxu0 %v4015
        %5745 = vmatprep.subr.bf16.mxu0 %v4020
        %5746 = vmatpush1.bf16.msra.mxu0 %v4019
        %5747 = vmatprep.subr.bf16.mxu0 %v4024
        %5748 = vmatpush1.bf16.msra.mxu0 %v4023
        %5749 = vmatprep.subr.bf16.mxu0 %v4028
        %5750 = vmatpush1.bf16.msra.mxu0 %v4027
        %5751 = vmatprep.subr.bf16.mxu0 %v4032
        %5752 = vmatpush1.bf16.msra.mxu0 %v4031
        %5753 = vmatprep.subr.bf16.mxu0 %v4036
        %5754 = vmatpush1.bf16.msra.mxu0 %v4035
        %5755 = vmatprep.subr.bf16.mxu0 %v4040
        %5756 = vmatpush1.bf16.msra.mxu0 %v4039
        %5757 = vmatprep.subr.bf16.mxu0 %v4044
        %5758 = vmatpush1.bf16.msra.mxu0 %v4043
        %5759 = vmatprep.subr.bf16.mxu0 %v4048
        %5760 = vmatpush1.bf16.msra.mxu0 %v4047
        %5761 = vmatprep.subr.bf16.mxu0 %v4052
        %5762 = vmatpush1.bf16.msra.mxu0 %v4051
        %5763 = vmatprep.subr.bf16.mxu0 %v4056
        %5764 = vmatpush1.bf16.msra.mxu0 %v4055
        %5765 = vmatprep.mubr.bf16.mxu0 %v840
        %5766 = vmatmul.mubr.bf16.gmra.mrb[0].mxu0 %v839
        %v5767 = vpop.f32.mrb[0].mxu0
        %v5768 = vadd.f32 %v5727, %v5767
        %v5769 = vpop.f32.mrb[0].mxu0
        %v5770 = vadd.f32 %v5729, %v5769
        %v5771 = vpop.f32.mrb[0].mxu0
        %v5772 = vpop.f32.mrb[0].mxu0
        %5773 = vdwg.mxu0
        %5774 = vmatprep.subr.bf16.mxu0 %v4060
        %5775 = vmatpush1.bf16.msra.mxu0 %v4059
        %5776 = vmatprep.subr.bf16.mxu0 %v4064
        %5777 = vmatpush1.bf16.msra.mxu0 %v4063
        %5778 = vmatprep.subr.bf16.mxu0 %v4068
        %5779 = vmatpush1.bf16.msra.mxu0 %v4067
        %5780 = vmatprep.subr.bf16.mxu0 %v4072
        %5781 = vmatpush1.bf16.msra.mxu0 %v4071
        %5782 = vmatprep.subr.bf16.mxu0 %v4076
        %5783 = vmatpush1.bf16.msra.mxu0 %v4075
        %5784 = vmatprep.subr.bf16.mxu0 %v4080
        %5785 = vmatpush1.bf16.msra.mxu0 %v4079
        %5786 = vmatprep.subr.bf16.mxu0 %v4084
        %5787 = vmatpush1.bf16.msra.mxu0 %v4083
        %5788 = vmatprep.subr.bf16.mxu0 %v4088
        %5789 = vmatpush1.bf16.msra.mxu0 %v4087
        %5790 = vmatprep.subr.bf16.mxu0 %v4092
        %5791 = vmatpush1.bf16.msra.mxu0 %v4091
        %5792 = vmatprep.subr.bf16.mxu0 %v4096
        %5793 = vmatpush1.bf16.msra.mxu0 %v4095
        %5794 = vmatprep.subr.bf16.mxu0 %v4100
        %5795 = vmatpush1.bf16.msra.mxu0 %v4099
        %5796 = vmatprep.subr.bf16.mxu0 %v4104
        %5797 = vmatpush1.bf16.msra.mxu0 %v4103
        %5798 = vmatprep.subr.bf16.mxu0 %v4108
        %5799 = vmatpush1.bf16.msra.mxu0 %v4107
        %5800 = vmatprep.subr.bf16.mxu0 %v4112
        %5801 = vmatpush1.bf16.msra.mxu0 %v4111
        %5802 = vmatprep.subr.bf16.mxu0 %v4116
        %5803 = vmatpush1.bf16.msra.mxu0 %v4115
        %5804 = vmatprep.subr.bf16.mxu0 %v4120
        %5805 = vmatpush1.bf16.msra.mxu0 %v4119
        %5806 = vmatprep.mubr.bf16.mxu0 %v842
        %5807 = vmatmul.mubr.bf16.gmra.mrb[0].mxu0 %v841
        %v5808 = vpop.f32.mrb[0].mxu0
        %v5809 = vadd.f32 %v5768, %v5808
        %v5810 = vpop.f32.mrb[0].mxu0
        %v5811 = vadd.f32 %v5770, %v5810
        %v5812 = vpop.f32.mrb[0].mxu0
        %v5813 = vpop.f32.mrb[0].mxu0
        %5814 = vdwg.mxu0
        %5815 = vmatprep.subr.bf16.mxu0 %v4124
        %5816 = vmatpush1.bf16.msra.mxu0 %v4123
        %5817 = vmatprep.subr.bf16.mxu0 %v4128
        %5818 = vmatpush1.bf16.msra.mxu0 %v4127
        %5819 = vmatprep.subr.bf16.mxu0 %v4132
        %5820 = vmatpush1.bf16.msra.mxu0 %v4131
        %5821 = vmatprep.subr.bf16.mxu0 %v4136
        %5822 = vmatpush1.bf16.msra.mxu0 %v4135
        %5823 = vmatprep.subr.bf16.mxu0 %v4140
        %5824 = vmatpush1.bf16.msra.mxu0 %v4139
        %5825 = vmatprep.subr.bf16.mxu0 %v4144
        %5826 = vmatpush1.bf16.msra.mxu0 %v4143
        %5827 = vmatprep.subr.bf16.mxu0 %v4148
        %5828 = vmatpush1.bf16.msra.mxu0 %v4147
        %5829 = vmatprep.subr.bf16.mxu0 %v4152
        %5830 = vmatpush1.bf16.msra.mxu0 %v4151
        %5831 = vmatprep.subr.bf16.mxu0 %v4156
        %5832 = vmatpush1.bf16.msra.mxu0 %v4155
        %5833 = vmatprep.subr.bf16.mxu0 %v4160
        %5834 = vmatpush1.bf16.msra.mxu0 %v4159
        %5835 = vmatprep.subr.bf16.mxu0 %v4164
        %5836 = vmatpush1.bf16.msra.mxu0 %v4163
        %5837 = vmatprep.subr.bf16.mxu0 %v4168
        %5838 = vmatpush1.bf16.msra.mxu0 %v4167
        %5839 = vmatprep.subr.bf16.mxu0 %v4172
        %5840 = vmatpush1.bf16.msra.mxu0 %v4171
        %5841 = vmatprep.subr.bf16.mxu0 %v4176
        %5842 = vmatpush1.bf16.msra.mxu0 %v4175
        %5843 = vmatprep.subr.bf16.mxu0 %v4180
        %5844 = vmatpush1.bf16.msra.mxu0 %v4179
        %5845 = vmatprep.subr.bf16.mxu0 %v4184
        %5846 = vmatpush1.bf16.msra.mxu0 %v4183
        %5847 = vmatprep.mubr.bf16.mxu0 %v844
        %5848 = vmatmul.mubr.bf16.gmra.mrb[0].mxu0 %v843
        %v5849 = vpop.f32.mrb[0].mxu0
        %v5850 = vadd.f32 %v5809, %v5849
        %v5851 = vpop.f32.mrb[0].mxu0
        %v5852 = vadd.f32 %v5811, %v5851
        %v5853 = vpop.f32.mrb[0].mxu0
        %v5854 = vpop.f32.mrb[0].mxu0
        %5855 = vdwg.mxu0
        %5856 = vmatprep.subr.bf16.mxu0 %v4188
        %5857 = vmatpush1.bf16.msra.mxu0 %v4187
        %5858 = vmatprep.subr.bf16.mxu0 %v4192
        %5859 = vmatpush1.bf16.msra.mxu0 %v4191
        %5860 = vmatprep.subr.bf16.mxu0 %v4196
        %5861 = vmatpush1.bf16.msra.mxu0 %v4195
        %5862 = vmatprep.subr.bf16.mxu0 %v4200
        %5863 = vmatpush1.bf16.msra.mxu0 %v4199
        %5864 = vmatprep.subr.bf16.mxu0 %v4204
        %5865 = vmatpush1.bf16.msra.mxu0 %v4203
        %5866 = vmatprep.subr.bf16.mxu0 %v4208
        %5867 = vmatpush1.bf16.msra.mxu0 %v4207
        %5868 = vmatprep.subr.bf16.mxu0 %v4212
        %5869 = vmatpush1.bf16.msra.mxu0 %v4211
        %5870 = vmatprep.subr.bf16.mxu0 %v4216
        %5871 = vmatpush1.bf16.msra.mxu0 %v4215
        %5872 = vmatprep.subr.bf16.mxu0 %v4220
        %5873 = vmatpush1.bf16.msra.mxu0 %v4219
        %5874 = vmatprep.subr.bf16.mxu0 %v4224
        %5875 = vmatpush1.bf16.msra.mxu0 %v4223
        %5876 = vmatprep.subr.bf16.mxu0 %v4228
        %5877 = vmatpush1.bf16.msra.mxu0 %v4227
        %5878 = vmatprep.subr.bf16.mxu0 %v4232
        %5879 = vmatpush1.bf16.msra.mxu0 %v4231
        %5880 = vmatprep.subr.bf16.mxu0 %v4236
        %5881 = vmatpush1.bf16.msra.mxu0 %v4235
        %5882 = vmatprep.subr.bf16.mxu0 %v4240
        %5883 = vmatpush1.bf16.msra.mxu0 %v4239
        %5884 = vmatprep.subr.bf16.mxu0 %v4244
        %5885 = vmatpush1.bf16.msra.mxu0 %v4243
        %5886 = vmatprep.subr.bf16.mxu0 %v4248
        %5887 = vmatpush1.bf16.msra.mxu0 %v4247
        %5888 = vmatprep.mubr.bf16.mxu0 %v846
        %5889 = vmatmul.mubr.bf16.gmra.mrb[0].mxu0 %v845
        %v5890 = vpop.f32.mrb[0].mxu0
        %v5891 = vadd.f32 %v5850, %v5890
        %v5892 = vpop.f32.mrb[0].mxu0
        %v5893 = vadd.f32 %v5852, %v5892
        %v5894 = vpop.f32.mrb[0].mxu0
        %v5895 = vpop.f32.mrb[0].mxu0
        %5896 = vdwg.mxu0
        %5897 = vmatprep.subr.bf16.mxu0 %v4252
        %5898 = vmatpush1.bf16.msra.mxu0 %v4251
        %5899 = vmatprep.subr.bf16.mxu0 %v4256
        %5900 = vmatpush1.bf16.msra.mxu0 %v4255
        %5901 = vmatprep.subr.bf16.mxu0 %v4260
        %5902 = vmatpush1.bf16.msra.mxu0 %v4259
        %5903 = vmatprep.subr.bf16.mxu0 %v4264
        %5904 = vmatpush1.bf16.msra.mxu0 %v4263
        %5905 = vmatprep.subr.bf16.mxu0 %v4268
        %5906 = vmatpush1.bf16.msra.mxu0 %v4267
        %5907 = vmatprep.subr.bf16.mxu0 %v4272
        %5908 = vmatpush1.bf16.msra.mxu0 %v4271
        %5909 = vmatprep.subr.bf16.mxu0 %v4276
        %5910 = vmatpush1.bf16.msra.mxu0 %v4275
        %5911 = vmatprep.subr.bf16.mxu0 %v4280
        %5912 = vmatpush1.bf16.msra.mxu0 %v4279
        %5913 = vmatprep.subr.bf16.mxu0 %v4284
        %5914 = vmatpush1.bf16.msra.mxu0 %v4283
        %5915 = vmatprep.subr.bf16.mxu0 %v4288
        %5916 = vmatpush1.bf16.msra.mxu0 %v4287
        %5917 = vmatprep.subr.bf16.mxu0 %v4292
        %5918 = vmatpush1.bf16.msra.mxu0 %v4291
        %5919 = vmatprep.subr.bf16.mxu0 %v4296
        %5920 = vmatpush1.bf16.msra.mxu0 %v4295
        %5921 = vmatprep.subr.bf16.mxu0 %v4300
        %5922 = vmatpush1.bf16.msra.mxu0 %v4299
        %5923 = vmatprep.subr.bf16.mxu0 %v4304
        %5924 = vmatpush1.bf16.msra.mxu0 %v4303
        %5925 = vmatprep.subr.bf16.mxu0 %v4308
        %5926 = vmatpush1.bf16.msra.mxu0 %v4307
        %5927 = vmatprep.subr.bf16.mxu0 %v4312
        %5928 = vmatpush1.bf16.msra.mxu0 %v4311
        %5929 = vmatprep.mubr.bf16.mxu0 %v848
        %5930 = vmatmul.mubr.bf16.gmra.mrb[0].mxu0 %v847
        %v5931 = vpop.f32.mrb[0].mxu0
        %v5932 = vadd.f32 %v5891, %v5931
        %v5933 = vpop.f32.mrb[0].mxu0
        %v5934 = vadd.f32 %v5893, %v5933
        %v5935 = vpop.f32.mrb[0].mxu0
        %v5936 = vpop.f32.mrb[0].mxu0
        %5937 = vdwg.mxu0
        %5938 = vmatprep.subr.bf16.mxu0 %v4316
        %5939 = vmatpush1.bf16.msra.mxu0 %v4315
        %5940 = vmatprep.subr.bf16.mxu0 %v4320
        %5941 = vmatpush1.bf16.msra.mxu0 %v4319
        %5942 = vmatprep.subr.bf16.mxu0 %v4324
        %5943 = vmatpush1.bf16.msra.mxu0 %v4323
        %5944 = vmatprep.subr.bf16.mxu0 %v4328
        %5945 = vmatpush1.bf16.msra.mxu0 %v4327
        %5946 = vmatprep.subr.bf16.mxu0 %v4332
        %5947 = vmatpush1.bf16.msra.mxu0 %v4331
        %5948 = vmatprep.subr.bf16.mxu0 %v4336
        %5949 = vmatpush1.bf16.msra.mxu0 %v4335
        %5950 = vmatprep.subr.bf16.mxu0 %v4340
        %5951 = vmatpush1.bf16.msra.mxu0 %v4339
        %5952 = vmatprep.subr.bf16.mxu0 %v4344
        %5953 = vmatpush1.bf16.msra.mxu0 %v4343
        %5954 = vmatprep.subr.bf16.mxu0 %v4348
        %5955 = vmatpush1.bf16.msra.mxu0 %v4347
        %5956 = vmatprep.subr.bf16.mxu0 %v4352
        %5957 = vmatpush1.bf16.msra.mxu0 %v4351
        %5958 = vmatprep.subr.bf16.mxu0 %v4356
        %5959 = vmatpush1.bf16.msra.mxu0 %v4355
        %5960 = vmatprep.subr.bf16.mxu0 %v4360
        %5961 = vmatpush1.bf16.msra.mxu0 %v4359
        %5962 = vmatprep.subr.bf16.mxu0 %v4364
        %5963 = vmatpush1.bf16.msra.mxu0 %v4363
        %5964 = vmatprep.subr.bf16.mxu0 %v4368
        %5965 = vmatpush1.bf16.msra.mxu0 %v4367
        %5966 = vmatprep.subr.bf16.mxu0 %v4372
        %5967 = vmatpush1.bf16.msra.mxu0 %v4371
        %5968 = vmatprep.subr.bf16.mxu0 0
        %5969 = vmatpush1.bf16.msra.mxu0 0
        %5970 = vmatprep.mubr.bf16.mxu0 %v5075
        %5971 = vmatmul.mubr.bf16.gmra.mrb[0].mxu0 %v849
        %v5972 = vpop.f32.mrb[0].mxu0
        %v5973 = vadd.f32 %v5932, %v5972
        %v5974 = vpop.f32.mrb[0].mxu0
        %v5975 = vadd.f32 %v5934, %v5974
        %v5976 = vpop.f32.mrb[0].mxu0
        %v5977 = vpop.f32.mrb[0].mxu0
        %5978 = vdwg.mxu0
        %s5979 = sld [smem:[#allocation29]]
        %vm5980 = vcmp.gt.f32.partialorder %v5522, 0.0
        %vm5981 = vcmp.gt.f32.partialorder %v5524, 0.0
        %vm5982 = vcmp.gt.f32.partialorder %v5973, 0.0
        %vm5983 = vcmp.gt.f32.partialorder %v5975, 0.0
        %v5984 = vstv %s5979
        %v5985 = vmul.f32 %v5984, %v5522
        %v5986 = vmul.f32 %v5984, %v5524
        %v5987 = vmul.f32 %v5984, %v5973
        %v5988 = vmul.f32 %v5984, %v5975
        %v5989 = vsel %vm5980, %v5522, %v5985
        %v5990 = vsel %vm5981, %v5524, %v5986
        %v5991 = vsel %vm5982, %v5973, %v5987
        %v5992 = vsel %vm5983, %v5975, %v5988
        %v5993 = vpack.c.bf16 %v5989, %v5989
        %v5994 = vpack.c.bf16 %v5990, %v5990
        %v5995 = vpack.c.bf16 %v5991, %v5991
        %v5996 = vpack.c.bf16 %v5992, %v5992
        %v5997 = vld [vmem:[#allocation8] sm:$0xff]
        %v5998 = vld [vmem:[#allocation8 + $0x8] sm:$0xff]
        %v5999 = vld [vmem:[#allocation8 + $0x10] sm:$0xff]
        %v6000 = vld [vmem:[#allocation8 + $0x18] sm:$0xff]
        %v6001 = vld [vmem:[#allocation8 + $0x20] sm:$0xff]
        %v6002 = vld [vmem:[#allocation8 + $0x28] sm:$0xff]
        %v6003 = vld [vmem:[#allocation8 + $0x30] sm:$0xff]
        %v6004 = vld [vmem:[#allocation8 + $0x38] sm:$0xff]
        %v6005 = vld [vmem:[#allocation8 + $0x40] sm:$0xff]
        %v6006 = vld [vmem:[#allocation8 + $0x48] sm:$0xff]
        %v6007 = vld [vmem:[#allocation8 + $0x50] sm:$0xff]
        %v6008 = vld [vmem:[#allocation8 + $0x58] sm:$0xff]
        %v6009 = vld [vmem:[#allocation8 + $0x60] sm:$0xff]
        %v6010 = vld [vmem:[#allocation8 + $0x68] sm:$0xff]
        %v6011 = vld [vmem:[#allocation8 + $0x70] sm:$0xff]
        %v6012 = vld [vmem:[#allocation8 + $0x78] sm:$0xff]
        %v6013 = vld [vmem:[#allocation8 + $0x80] sm:$0xff]
        %v6014 = vld [vmem:[#allocation8 + $0x88] sm:$0xff]
        %v6015 = vld [vmem:[#allocation8 + $0x90] sm:$0xff]
        %v6016 = vld [vmem:[#allocation8 + $0x98] sm:$0xff]
        %v6017 = vld [vmem:[#allocation8 + $0xa0] sm:$0xff]
        %v6018 = vld [vmem:[#allocation8 + $0xa8] sm:$0xff]
        %v6019 = vld [vmem:[#allocation8 + $0xb0] sm:$0xff]
        %v6020 = vld [vmem:[#allocation8 + $0xb8] sm:$0xff]
        %v6021 = vld [vmem:[#allocation8 + $0xc0] sm:$0xff]
        %v6022 = vld [vmem:[#allocation8 + $0xc8] sm:$0xff]
        %v6023 = vld [vmem:[#allocation8 + $0xd0] sm:$0xff]
        %v6024 = vld [vmem:[#allocation8 + $0xd8] sm:$0xff]
        %v6025 = vld [vmem:[#allocation8 + $0xe0] sm:$0xff]
        %v6026 = vld [vmem:[#allocation8 + $0xe8] sm:$0xff]
        %v6027 = vld [vmem:[#allocation8 + $0xf0] sm:$0xff]
        %v6028 = vld [vmem:[#allocation8 + $0xf8] sm:$0xff]
        %v6029 = vld [vmem:[#allocation8 + $0x100] sm:$0xff]
        %v6030 = vld [vmem:[#allocation8 + $0x108] sm:$0xff]
        %v6031 = vld [vmem:[#allocation8 + $0x110] sm:$0xff]
        %v6032 = vld [vmem:[#allocation8 + $0x118] sm:$0xff]
        %v6033 = vld [vmem:[#allocation8 + $0x120] sm:$0xff]
        %v6034 = vld [vmem:[#allocation8 + $0x128] sm:$0xff]
        %v6035 = vld [vmem:[#allocation8 + $0x130] sm:$0xff]
        %v6036 = vld [vmem:[#allocation8 + $0x138] sm:$0xff]
        %v6037 = vld [vmem:[#allocation8 + $0x140] sm:$0xff]
        %v6038 = vld [vmem:[#allocation8 + $0x148] sm:$0xff]
        %v6039 = vld [vmem:[#allocation8 + $0x150] sm:$0xff]
        %v6040 = vld [vmem:[#allocation8 + $0x158] sm:$0xff]
        %v6041 = vld [vmem:[#allocation8 + $0x160] sm:$0xff]
        %v6042 = vld [vmem:[#allocation8 + $0x168] sm:$0xff]
        %v6043 = vld [vmem:[#allocation8 + $0x170] sm:$0xff]
        %v6044 = vld [vmem:[#allocation8 + $0x178] sm:$0xff]
        %v6045 = vld [vmem:[#allocation8 + $0x180] sm:$0xff]
        %v6046 = vld [vmem:[#allocation8 + $0x188] sm:$0xff]
        %v6047 = vld [vmem:[#allocation8 + $0x190] sm:$0xff]
        %v6048 = vld [vmem:[#allocation8 + $0x198] sm:$0xff]
        %v6049 = vld [vmem:[#allocation8 + $0x1a0] sm:$0xff]
        %v6050 = vld [vmem:[#allocation8 + $0x1a8] sm:$0xff]
        %v6051 = vld [vmem:[#allocation8 + $0x1b0] sm:$0xff]
        %v6052 = vld [vmem:[#allocation8 + $0x1b8] sm:$0xff]
        %v6053 = vld [vmem:[#allocation8 + $0x1c0] sm:$0xff]
        %v6054 = vld [vmem:[#allocation8 + $0x1c8] sm:$0xff]
        %v6055 = vld [vmem:[#allocation8 + $0x1d0] sm:$0xff]
        %v6056 = vld [vmem:[#allocation8 + $0x1d8] sm:$0xff]
        %v6057 = vld [vmem:[#allocation8 + $0x1e0] sm:$0xff]
        %v6058 = vld [vmem:[#allocation8 + $0x1e8] sm:$0xff]
        %v6059 = vld [vmem:[#allocation8 + $0x1f0] sm:$0xff]
        %v6060 = vld [vmem:[#allocation8 + $0x1f8] sm:$0xff]
        %v6061 = vld [vmem:[#allocation18] sm:$0x3]
        %v6063 = vlaneseq
        %v6064 = vshrl.u32 %v6063, 7
        %v6065 = vsub.s32 0, %v6064
        %v6066 = vrot.slane %v6061, %v6065
        %v6067 = vlaneseq
        %v6068 = vshrl.u32 %v6067, 7
        %v6069 = vsub.s32 1, %v6068
        %v6070 = vrot.slane %v6061, %v6069
        %v6137 = vunpack.c.l.b16 %v5997
        %v6138 = vunpack.c.h.b16 %v5997
        %v6139 = vunpack.c.l.b16 %v5998
        %v6140 = vunpack.c.h.b16 %v5998
        %v6141 = vunpack.c.l.b16 %v5999
        %v6142 = vunpack.c.h.b16 %v5999
        %v6143 = vunpack.c.l.b16 %v6000
        %v6144 = vunpack.c.h.b16 %v6000
        %v6145 = vunpack.c.l.b16 %v6001
        %v6146 = vunpack.c.h.b16 %v6001
        %v6147 = vunpack.c.l.b16 %v6002
        %v6148 = vunpack.c.h.b16 %v6002
        %v6149 = vunpack.c.l.b16 %v6003
        %v6150 = vunpack.c.h.b16 %v6003
        %v6151 = vunpack.c.l.b16 %v6004
        %v6152 = vunpack.c.h.b16 %v6004
        %v6153 = vunpack.c.l.b16 %v6005
        %v6154 = vunpack.c.h.b16 %v6005
        %v6155 = vunpack.c.l.b16 %v6006
        %v6156 = vunpack.c.h.b16 %v6006
        %v6157 = vunpack.c.l.b16 %v6007
        %v6158 = vunpack.c.h.b16 %v6007
        %v6159 = vunpack.c.l.b16 %v6008
        %v6160 = vunpack.c.h.b16 %v6008
        %v6161 = vunpack.c.l.b16 %v6009
        %v6162 = vunpack.c.h.b16 %v6009
        %v6163 = vunpack.c.l.b16 %v6010
        %v6164 = vunpack.c.h.b16 %v6010
        %v6165 = vunpack.c.l.b16 %v6011
        %v6166 = vunpack.c.h.b16 %v6011
        %v6167 = vunpack.c.l.b16 %v6012
        %v6168 = vunpack.c.h.b16 %v6012
        %v6169 = vunpack.c.l.b16 %v6013
        %v6170 = vunpack.c.h.b16 %v6013
        %v6171 = vunpack.c.l.b16 %v6014
        %v6172 = vunpack.c.h.b16 %v6014
        %v6173 = vunpack.c.l.b16 %v6015
        %v6174 = vunpack.c.h.b16 %v6015
        %v6175 = vunpack.c.l.b16 %v6016
        %v6176 = vunpack.c.h.b16 %v6016
        %v6177 = vunpack.c.l.b16 %v6017
        %v6178 = vunpack.c.h.b16 %v6017
        %v6179 = vunpack.c.l.b16 %v6018
        %v6180 = vunpack.c.h.b16 %v6018
        %v6181 = vunpack.c.l.b16 %v6019
        %v6182 = vunpack.c.h.b16 %v6019
        %v6183 = vunpack.c.l.b16 %v6020
        %v6184 = vunpack.c.h.b16 %v6020
        %v6185 = vunpack.c.l.b16 %v6021
        %v6186 = vunpack.c.h.b16 %v6021
        %v6187 = vunpack.c.l.b16 %v6022
        %v6188 = vunpack.c.h.b16 %v6022
        %v6189 = vunpack.c.l.b16 %v6023
        %v6190 = vunpack.c.h.b16 %v6023
        %v6191 = vunpack.c.l.b16 %v6024
        %v6192 = vunpack.c.h.b16 %v6024
        %v6193 = vunpack.c.l.b16 %v6025
        %v6194 = vunpack.c.h.b16 %v6025
        %v6195 = vunpack.c.l.b16 %v6026
        %v6196 = vunpack.c.h.b16 %v6026
        %v6197 = vunpack.c.l.b16 %v6027
        %v6198 = vunpack.c.h.b16 %v6027
        %v6199 = vunpack.c.l.b16 %v6028
        %v6200 = vunpack.c.h.b16 %v6028
        %v6201 = vunpack.c.l.b16 %v6029
        %v6202 = vunpack.c.h.b16 %v6029
        %v6203 = vunpack.c.l.b16 %v6030
        %v6204 = vunpack.c.h.b16 %v6030
        %v6205 = vunpack.c.l.b16 %v6031
        %v6206 = vunpack.c.h.b16 %v6031
        %v6207 = vunpack.c.l.b16 %v6032
        %v6208 = vunpack.c.h.b16 %v6032
        %v6209 = vunpack.c.l.b16 %v6033
        %v6210 = vunpack.c.h.b16 %v6033
        %v6211 = vunpack.c.l.b16 %v6034
        %v6212 = vunpack.c.h.b16 %v6034
        %v6213 = vunpack.c.l.b16 %v6035
        %v6214 = vunpack.c.h.b16 %v6035
        %v6215 = vunpack.c.l.b16 %v6036
        %v6216 = vunpack.c.h.b16 %v6036
        %v6217 = vunpack.c.l.b16 %v6037
        %v6218 = vunpack.c.h.b16 %v6037
        %v6219 = vunpack.c.l.b16 %v6038
        %v6220 = vunpack.c.h.b16 %v6038
        %v6221 = vunpack.c.l.b16 %v6039
        %v6222 = vunpack.c.h.b16 %v6039
        %v6223 = vunpack.c.l.b16 %v6040
        %v6224 = vunpack.c.h.b16 %v6040
        %v6225 = vunpack.c.l.b16 %v6041
        %v6226 = vunpack.c.h.b16 %v6041
        %v6227 = vunpack.c.l.b16 %v6042
        %v6228 = vunpack.c.h.b16 %v6042
        %v6229 = vunpack.c.l.b16 %v6043
        %v6230 = vunpack.c.h.b16 %v6043
        %v6231 = vunpack.c.l.b16 %v6044
        %v6232 = vunpack.c.h.b16 %v6044
        %v6233 = vunpack.c.l.b16 %v6045
        %v6234 = vunpack.c.h.b16 %v6045
        %v6235 = vunpack.c.l.b16 %v6046
        %v6236 = vunpack.c.h.b16 %v6046
        %v6237 = vunpack.c.l.b16 %v6047
        %v6238 = vunpack.c.h.b16 %v6047
        %v6239 = vunpack.c.l.b16 %v6048
        %v6240 = vunpack.c.h.b16 %v6048
        %v6241 = vunpack.c.l.b16 %v6049
        %v6242 = vunpack.c.h.b16 %v6049
        %v6243 = vunpack.c.l.b16 %v6050
        %v6244 = vunpack.c.h.b16 %v6050
        %v6245 = vunpack.c.l.b16 %v6051
        %v6246 = vunpack.c.h.b16 %v6051
        %v6247 = vunpack.c.l.b16 %v6052
        %v6248 = vunpack.c.h.b16 %v6052
        %v6249 = vunpack.c.l.b16 %v6053
        %v6250 = vunpack.c.h.b16 %v6053
        %v6251 = vunpack.c.l.b16 %v6054
        %v6252 = vunpack.c.h.b16 %v6054
        %v6253 = vunpack.c.l.b16 %v6055
        %v6254 = vunpack.c.h.b16 %v6055
        %v6255 = vunpack.c.l.b16 %v6056
        %v6256 = vunpack.c.h.b16 %v6056
        %v6257 = vunpack.c.l.b16 %v6057
        %v6258 = vunpack.c.h.b16 %v6057
        %v6259 = vunpack.c.l.b16 %v6058
        %v6260 = vunpack.c.h.b16 %v6058
        %v6261 = vunpack.c.l.b16 %v6059
        %v6262 = vunpack.c.h.b16 %v6059
        %v6263 = vunpack.c.l.b16 %v6060
        %v6264 = vunpack.c.h.b16 %v6060
        %v6265 = vpack.c.b16 %v6139, %v6137
        %v6266 = vpack.c.b16 %v6140, %v6138
        %v6267 = vpack.c.b16 %v6143, %v6141
        %v6268 = vpack.c.b16 %v6144, %v6142
        %v6269 = vpack.c.b16 %v6147, %v6145
        %v6270 = vpack.c.b16 %v6148, %v6146
        %v6271 = vpack.c.b16 %v6151, %v6149
        %v6272 = vpack.c.b16 %v6152, %v6150
        %v6273 = vpack.c.b16 %v6155, %v6153
        %v6274 = vpack.c.b16 %v6156, %v6154
        %v6275 = vpack.c.b16 %v6159, %v6157
        %v6276 = vpack.c.b16 %v6160, %v6158
        %v6277 = vpack.c.b16 %v6163, %v6161
        %v6278 = vpack.c.b16 %v6164, %v6162
        %v6279 = vpack.c.b16 %v6167, %v6165
        %v6280 = vpack.c.b16 %v6168, %v6166
        %v6281 = vpack.c.b16 %v6171, %v6169
        %v6282 = vpack.c.b16 %v6172, %v6170
        %v6283 = vpack.c.b16 %v6175, %v6173
        %v6284 = vpack.c.b16 %v6176, %v6174
        %v6285 = vpack.c.b16 %v6179, %v6177
        %v6286 = vpack.c.b16 %v6180, %v6178
        %v6287 = vpack.c.b16 %v6183, %v6181
        %v6288 = vpack.c.b16 %v6184, %v6182
        %v6289 = vpack.c.b16 %v6187, %v6185
        %v6290 = vpack.c.b16 %v6188, %v6186
        %v6291 = vpack.c.b16 %v6191, %v6189
        %v6292 = vpack.c.b16 %v6192, %v6190
        %v6293 = vpack.c.b16 %v6195, %v6193
        %v6294 = vpack.c.b16 %v6196, %v6194
        %v6295 = vpack.c.b16 %v6199, %v6197
        %v6296 = vpack.c.b16 %v6200, %v6198
        %v6297 = vpack.c.b16 %v6203, %v6201
        %v6298 = vpack.c.b16 %v6204, %v6202
        %v6299 = vpack.c.b16 %v6207, %v6205
        %v6300 = vpack.c.b16 %v6208, %v6206
        %v6301 = vpack.c.b16 %v6211, %v6209
        %v6302 = vpack.c.b16 %v6212, %v6210
        %v6303 = vpack.c.b16 %v6215, %v6213
        %v6304 = vpack.c.b16 %v6216, %v6214
        %v6305 = vpack.c.b16 %v6219, %v6217
        %v6306 = vpack.c.b16 %v6220, %v6218
        %v6307 = vpack.c.b16 %v6223, %v6221
        %v6308 = vpack.c.b16 %v6224, %v6222
        %v6309 = vpack.c.b16 %v6227, %v6225
        %v6310 = vpack.c.b16 %v6228, %v6226
        %v6311 = vpack.c.b16 %v6231, %v6229
        %v6312 = vpack.c.b16 %v6232, %v6230
        %v6313 = vpack.c.b16 %v6235, %v6233
        %v6314 = vpack.c.b16 %v6236, %v6234
        %v6315 = vpack.c.b16 %v6239, %v6237
        %v6316 = vpack.c.b16 %v6240, %v6238
        %v6317 = vpack.c.b16 %v6243, %v6241
        %v6318 = vpack.c.b16 %v6244, %v6242
        %v6319 = vpack.c.b16 %v6247, %v6245
        %v6320 = vpack.c.b16 %v6248, %v6246
        %v6321 = vpack.c.b16 %v6251, %v6249
        %v6322 = vpack.c.b16 %v6252, %v6250
        %v6323 = vpack.c.b16 %v6255, %v6253
        %v6324 = vpack.c.b16 %v6256, %v6254
        %v6325 = vpack.c.b16 %v6259, %v6257
        %v6326 = vpack.c.b16 %v6260, %v6258
        %v6327 = vpack.c.b16 %v6263, %v6261
        %v6328 = vpack.c.b16 %v6264, %v6262
        %6393 = vmatprep.subr.bf16.mxu0 %v6266
        %6394 = vmatpush1.bf16.msra.mxu0 %v6265
        %6395 = vmatprep.subr.bf16.mxu0 %v6268
        %6396 = vmatpush1.bf16.msra.mxu0 %v6267
        %6397 = vmatprep.subr.bf16.mxu0 %v6270
        %6398 = vmatpush1.bf16.msra.mxu0 %v6269
        %6399 = vmatprep.subr.bf16.mxu0 %v6272
        %6400 = vmatpush1.bf16.msra.mxu0 %v6271
        %6401 = vmatprep.subr.bf16.mxu0 %v6274
        %6402 = vmatpush1.bf16.msra.mxu0 %v6273
        %6403 = vmatprep.subr.bf16.mxu0 %v6276
        %6404 = vmatpush1.bf16.msra.mxu0 %v6275
        %6405 = vmatprep.subr.bf16.mxu0 %v6278
        %6406 = vmatpush1.bf16.msra.mxu0 %v6277
        %6407 = vmatprep.subr.bf16.mxu0 %v6280
        %6408 = vmatpush1.bf16.msra.mxu0 %v6279
        %6409 = vmatprep.subr.bf16.mxu0 %v6282
        %6410 = vmatpush1.bf16.msra.mxu0 %v6281
        %6411 = vmatprep.subr.bf16.mxu0 %v6284
        %6412 = vmatpush1.bf16.msra.mxu0 %v6283
        %6413 = vmatprep.subr.bf16.mxu0 %v6286
        %6414 = vmatpush1.bf16.msra.mxu0 %v6285
        %6415 = vmatprep.subr.bf16.mxu0 %v6288
        %6416 = vmatpush1.bf16.msra.mxu0 %v6287
        %6417 = vmatprep.subr.bf16.mxu0 %v6290
        %6418 = vmatpush1.bf16.msra.mxu0 %v6289
        %6419 = vmatprep.subr.bf16.mxu0 %v6292
        %6420 = vmatpush1.bf16.msra.mxu0 %v6291
        %6421 = vmatprep.subr.bf16.mxu0 %v6294
        %6422 = vmatpush1.bf16.msra.mxu0 %v6293
        %6423 = vmatprep.subr.bf16.mxu0 %v6296
        %6424 = vmatpush1.bf16.msra.mxu0 %v6295
        %6425 = vmatprep.mubr.bf16.mxu0 %v5994
        %6426 = vmatmul.mubr.bf16.gmra.mrb[0].mxu0 %v5993
        %v6427 = vpop.f32.mrb[0].mxu0
        %v6428 = vadd.f32 %v6066, %v6427
        %v6429 = vpop.f32.mrb[0].mxu0
        %v6430 = vadd.f32 %v6070, %v6429
        %v6431 = vpop.f32.mrb[0].mxu0
        %v6432 = vpop.f32.mrb[0].mxu0
        %6433 = vdwg.mxu0
        %6434 = vmatprep.subr.bf16.mxu0 %v6298
        %6435 = vmatpush1.bf16.msra.mxu0 %v6297
        %6436 = vmatprep.subr.bf16.mxu0 %v6300
        %6437 = vmatpush1.bf16.msra.mxu0 %v6299
        %6438 = vmatprep.subr.bf16.mxu0 %v6302
        %6439 = vmatpush1.bf16.msra.mxu0 %v6301
        %6440 = vmatprep.subr.bf16.mxu0 %v6304
        %6441 = vmatpush1.bf16.msra.mxu0 %v6303
        %6442 = vmatprep.subr.bf16.mxu0 %v6306
        %6443 = vmatpush1.bf16.msra.mxu0 %v6305
        %6444 = vmatprep.subr.bf16.mxu0 %v6308
        %6445 = vmatpush1.bf16.msra.mxu0 %v6307
        %6446 = vmatprep.subr.bf16.mxu0 %v6310
        %6447 = vmatpush1.bf16.msra.mxu0 %v6309
        %6448 = vmatprep.subr.bf16.mxu0 %v6312
        %6449 = vmatpush1.bf16.msra.mxu0 %v6311
        %6450 = vmatprep.subr.bf16.mxu0 %v6314
        %6451 = vmatpush1.bf16.msra.mxu0 %v6313
        %6452 = vmatprep.subr.bf16.mxu0 %v6316
        %6453 = vmatpush1.bf16.msra.mxu0 %v6315
        %6454 = vmatprep.subr.bf16.mxu0 %v6318
        %6455 = vmatpush1.bf16.msra.mxu0 %v6317
        %6456 = vmatprep.subr.bf16.mxu0 %v6320
        %6457 = vmatpush1.bf16.msra.mxu0 %v6319
        %6458 = vmatprep.subr.bf16.mxu0 %v6322
        %6459 = vmatpush1.bf16.msra.mxu0 %v6321
        %6460 = vmatprep.subr.bf16.mxu0 %v6324
        %6461 = vmatpush1.bf16.msra.mxu0 %v6323
        %6462 = vmatprep.subr.bf16.mxu0 %v6326
        %6463 = vmatpush1.bf16.msra.mxu0 %v6325
        %6464 = vmatprep.subr.bf16.mxu0 %v6328
        %6465 = vmatpush1.bf16.msra.mxu0 %v6327
        %6466 = vmatprep.mubr.bf16.mxu0 %v5996
        %6467 = vmatmul.mubr.bf16.gmra.mrb[0].mxu0 %v5995
        %v6468 = vpop.f32.mrb[0].mxu0
        %v6469 = vadd.f32 %v6428, %v6468
        %v6470 = vpop.f32.mrb[0].mxu0
        %v6471 = vadd.f32 %v6430, %v6470
        %v6472 = vpop.f32.mrb[0].mxu0
        %v6473 = vpop.f32.mrb[0].mxu0
        %6474 = vdwg.mxu0
        %s6475 = sld [smem:[#allocation29 + $0x1]]
        %vm6476 = vcmp.gt.f32.partialorder %v6469, 0.0
        %vm6477 = vcmp.gt.f32.partialorder %v6471, 0.0
        %v6478 = vstv %s6475
        %v6479 = vmul.f32 %v6478, %v6469
        %v6480 = vmul.f32 %v6478, %v6471
        %v6481 = vsel %vm6476, %v6469, %v6479
        %v6482 = vsel %vm6477, %v6471, %v6480
        %v6483 = vpack.c.bf16 %v6481, %v6481
        %v6484 = vpack.c.bf16 %v6482, %v6482
        %v6485 = vld [vmem:[#allocation9] sm:$0xf]
        %v6486 = vld [vmem:[#allocation9 + $0x4] sm:$0xf]
        %v6487 = vld [vmem:[#allocation9 + $0x8] sm:$0xf]
        %v6488 = vld [vmem:[#allocation9 + $0xc] sm:$0xf]
        %v6489 = vld [vmem:[#allocation9 + $0x10] sm:$0xf]
        %v6490 = vld [vmem:[#allocation9 + $0x14] sm:$0xf]
        %v6491 = vld [vmem:[#allocation9 + $0x18] sm:$0xf]
        %v6492 = vld [vmem:[#allocation9 + $0x1c] sm:$0xf]
        %v6493 = vld [vmem:[#allocation9 + $0x20] sm:$0xf]
        %v6494 = vld [vmem:[#allocation9 + $0x24] sm:$0xf]
        %v6495 = vld [vmem:[#allocation9 + $0x28] sm:$0xf]
        %v6496 = vld [vmem:[#allocation9 + $0x2c] sm:$0xf]
        %v6497 = vld [vmem:[#allocation9 + $0x30] sm:$0xf]
        %v6498 = vld [vmem:[#allocation9 + $0x34] sm:$0xf]
        %v6499 = vld [vmem:[#allocation9 + $0x38] sm:$0xf]
        %v6500 = vld [vmem:[#allocation9 + $0x3c] sm:$0xf]
        %v6501 = vld [vmem:[#allocation9 + $0x40] sm:$0xf]
        %v6502 = vld [vmem:[#allocation9 + $0x44] sm:$0xf]
        %v6503 = vld [vmem:[#allocation9 + $0x48] sm:$0xf]
        %v6504 = vld [vmem:[#allocation9 + $0x4c] sm:$0xf]
        %v6505 = vld [vmem:[#allocation9 + $0x50] sm:$0xf]
        %v6506 = vld [vmem:[#allocation9 + $0x54] sm:$0xf]
        %v6507 = vld [vmem:[#allocation9 + $0x58] sm:$0xf]
        %v6508 = vld [vmem:[#allocation9 + $0x5c] sm:$0xf]
        %v6509 = vld [vmem:[#allocation9 + $0x60] sm:$0xf]
        %v6510 = vld [vmem:[#allocation9 + $0x64] sm:$0xf]
        %v6511 = vld [vmem:[#allocation9 + $0x68] sm:$0xf]
        %v6512 = vld [vmem:[#allocation9 + $0x6c] sm:$0xf]
        %v6513 = vld [vmem:[#allocation9 + $0x70] sm:$0xf]
        %v6514 = vld [vmem:[#allocation9 + $0x74] sm:$0xf]
        %v6515 = vld [vmem:[#allocation9 + $0x78] sm:$0xf]
        %v6516 = vld [vmem:[#allocation9 + $0x7c] sm:$0xf]
        %v6517 = vld [vmem:[#allocation20] sm:$0x1]
        %v6519 = vlaneseq
        %v6520 = vshrl.u32 %v6519, 7
        %v6521 = vsub.s32 0, %v6520
        %v6522 = vrot.slane %v6517, %v6521
        %v6556 = vunpack.c.l.b16 %v6485
        %v6557 = vunpack.c.l.b16 %v6486
        %v6558 = vunpack.c.l.b16 %v6487
        %v6559 = vunpack.c.l.b16 %v6488
        %v6560 = vunpack.c.l.b16 %v6489
        %v6561 = vunpack.c.l.b16 %v6490
        %v6562 = vunpack.c.l.b16 %v6491
        %v6563 = vunpack.c.l.b16 %v6492
        %v6564 = vunpack.c.l.b16 %v6493
        %v6565 = vunpack.c.l.b16 %v6494
        %v6566 = vunpack.c.l.b16 %v6495
        %v6567 = vunpack.c.l.b16 %v6496
        %v6568 = vunpack.c.l.b16 %v6497
        %v6569 = vunpack.c.l.b16 %v6498
        %v6570 = vunpack.c.l.b16 %v6499
        %v6571 = vunpack.c.l.b16 %v6500
        %v6572 = vunpack.c.l.b16 %v6501
        %v6573 = vunpack.c.l.b16 %v6502
        %v6574 = vunpack.c.l.b16 %v6503
        %v6575 = vunpack.c.l.b16 %v6504
        %v6576 = vunpack.c.l.b16 %v6505
        %v6577 = vunpack.c.l.b16 %v6506
        %v6578 = vunpack.c.l.b16 %v6507
        %v6579 = vunpack.c.l.b16 %v6508
        %v6580 = vunpack.c.l.b16 %v6509
        %v6581 = vunpack.c.l.b16 %v6510
        %v6582 = vunpack.c.l.b16 %v6511
        %v6583 = vunpack.c.l.b16 %v6512
        %v6584 = vunpack.c.l.b16 %v6513
        %v6585 = vunpack.c.l.b16 %v6514
        %v6586 = vunpack.c.l.b16 %v6515
        %v6587 = vunpack.c.l.b16 %v6516
        %v6588 = vpack.c.b16 %v6557, %v6556
        %v6589 = vpack.c.b16 %v6559, %v6558
        %v6590 = vpack.c.b16 %v6561, %v6560
        %v6591 = vpack.c.b16 %v6563, %v6562
        %v6592 = vpack.c.b16 %v6565, %v6564
        %v6593 = vpack.c.b16 %v6567, %v6566
        %v6594 = vpack.c.b16 %v6569, %v6568
        %v6595 = vpack.c.b16 %v6571, %v6570
        %v6596 = vpack.c.b16 %v6573, %v6572
        %v6597 = vpack.c.b16 %v6575, %v6574
        %v6598 = vpack.c.b16 %v6577, %v6576
        %v6599 = vpack.c.b16 %v6579, %v6578
        %v6600 = vpack.c.b16 %v6581, %v6580
        %v6601 = vpack.c.b16 %v6583, %v6582
        %v6602 = vpack.c.b16 %v6585, %v6584
        %v6603 = vpack.c.b16 %v6587, %v6586
        %6620 = vmatprep.subr.bf16.mxu0 0
        %6621 = vmatpush1.bf16.msra.mxu0 %v6588
        %6622 = vmatprep.subr.bf16.mxu0 0
        %6623 = vmatpush1.bf16.msra.mxu0 %v6589
        %6624 = vmatprep.subr.bf16.mxu0 0
        %6625 = vmatpush1.bf16.msra.mxu0 %v6590
        %6626 = vmatprep.subr.bf16.mxu0 0
        %6627 = vmatpush1.bf16.msra.mxu0 %v6591
        %6628 = vmatprep.subr.bf16.mxu0 0
        %6629 = vmatpush1.bf16.msra.mxu0 %v6592
        %6630 = vmatprep.subr.bf16.mxu0 0
        %6631 = vmatpush1.bf16.msra.mxu0 %v6593
        %6632 = vmatprep.subr.bf16.mxu0 0
        %6633 = vmatpush1.bf16.msra.mxu0 %v6594
        %6634 = vmatprep.subr.bf16.mxu0 0
        %6635 = vmatpush1.bf16.msra.mxu0 %v6595
        %6636 = vmatprep.subr.bf16.mxu0 0
        %6637 = vmatpush1.bf16.msra.mxu0 %v6596
        %6638 = vmatprep.subr.bf16.mxu0 0
        %6639 = vmatpush1.bf16.msra.mxu0 %v6597
        %6640 = vmatprep.subr.bf16.mxu0 0
        %6641 = vmatpush1.bf16.msra.mxu0 %v6598
        %6642 = vmatprep.subr.bf16.mxu0 0
        %6643 = vmatpush1.bf16.msra.mxu0 %v6599
        %6644 = vmatprep.subr.bf16.mxu0 0
        %6645 = vmatpush1.bf16.msra.mxu0 %v6600
        %6646 = vmatprep.subr.bf16.mxu0 0
        %6647 = vmatpush1.bf16.msra.mxu0 %v6601
        %6648 = vmatprep.subr.bf16.mxu0 0
        %6649 = vmatpush1.bf16.msra.mxu0 %v6602
        %6650 = vmatprep.subr.bf16.mxu0 0
        %6651 = vmatpush1.bf16.msra.mxu0 %v6603
        %6652 = vmatprep.mubr.bf16.mxu0 %v6484
        %6653 = vmatmul.mubr.bf16.gmra.mrb[0].mxu0 %v6483
        %v6654 = vpop.f32.mrb[0].mxu0
        %v6655 = vadd.f32 %v6522, %v6654
        %v6656 = vpop.f32.mrb[0].mxu0
        %v6657 = vpop.f32.mrb[0].mxu0
        %v6658 = vpop.f32.mrb[0].mxu0
        %6659 = vdwg.mxu0
        %s6660 = sld [smem:[#allocation29 + $0x2]]
        %vm6661 = vcmp.gt.f32.partialorder %v6655, 0.0
        %v6662 = vstv %s6660
        %v6663 = vmul.f32 %v6662, %v6655
        %v6664 = vsel %vm6661, %v6655, %v6663
        %v6665 = vpack.c.bf16 %v6664, %v6664
        %v6666 = vld [vmem:[%s4] sm:$0xf]
        %v6667 = vld [vmem:[%s4 + $0x4] sm:$0xf]
        %v6668 = vld [vmem:[%s4 + $0x8] sm:$0xf]
        %v6669 = vld [vmem:[%s4 + $0xc] sm:$0xf]
        %v6670 = vld [vmem:[%s4 + $0x10] sm:$0xf]
        %v6671 = vld [vmem:[%s4 + $0x14] sm:$0xf]
        %v6672 = vld [vmem:[%s4 + $0x18] sm:$0xf]
        %v6673 = vld [vmem:[%s4 + $0x1c] sm:$0xf]
        %v6674 = vld [vmem:[%s4 + $0x20] sm:$0xf]
        %v6675 = vld [vmem:[%s4 + $0x24] sm:$0xf]
        %v6676 = vld [vmem:[%s4 + $0x28] sm:$0xf]
        %v6677 = vld [vmem:[%s4 + $0x2c] sm:$0xf]
        %v6678 = vld [vmem:[%s4 + $0x30] sm:$0xf]
        %v6679 = vld [vmem:[%s4 + $0x34] sm:$0xf]
        %v6680 = vld [vmem:[%s4 + $0x38] sm:$0xf]
        %v6681 = vld [vmem:[%s4 + $0x3c] sm:$0xf]
        %v6682 = vld [vmem:[#allocation21] sm:$0x1]
        %v6684 = vlaneseq
        %v6685 = vshrl.u32 %v6684, 7
        %v6686 = vsub.s32 0, %v6685
        %v6687 = vrot.slane %v6682, %v6686
        %v6705 = vunpack.c.l.b16 %v6666
        %v6706 = vunpack.c.l.b16 %v6667
        %v6707 = vunpack.c.l.b16 %v6668
        %v6708 = vunpack.c.l.b16 %v6669
        %v6709 = vunpack.c.l.b16 %v6670
        %v6710 = vunpack.c.l.b16 %v6671
        %v6711 = vunpack.c.l.b16 %v6672
        %v6712 = vunpack.c.l.b16 %v6673
        %v6713 = vunpack.c.l.b16 %v6674
        %v6714 = vunpack.c.l.b16 %v6675
        %v6715 = vunpack.c.l.b16 %v6676
        %v6716 = vunpack.c.l.b16 %v6677
        %v6717 = vunpack.c.l.b16 %v6678
        %v6718 = vunpack.c.l.b16 %v6679
        %v6719 = vunpack.c.l.b16 %v6680
        %v6720 = vunpack.c.l.b16 %v6681
        %v6721 = vpack.c.b16 %v6706, %v6705
        %v6722 = vpack.c.b16 %v6708, %v6707
        %v6723 = vpack.c.b16 %v6710, %v6709
        %v6724 = vpack.c.b16 %v6712, %v6711
        %v6725 = vpack.c.b16 %v6714, %v6713
        %v6726 = vpack.c.b16 %v6716, %v6715
        %v6727 = vpack.c.b16 %v6718, %v6717
        %v6728 = vpack.c.b16 %v6720, %v6719
        %6737 = vmatprep.subr.bf16.mxu0 0
        %6738 = vmatpush1.bf16.msra.mxu0 %v6721
        %6739 = vmatprep.subr.bf16.mxu0 0
        %6740 = vmatpush1.bf16.msra.mxu0 %v6722
        %6741 = vmatprep.subr.bf16.mxu0 0
        %6742 = vmatpush1.bf16.msra.mxu0 %v6723
        %6743 = vmatprep.subr.bf16.mxu0 0
        %6744 = vmatpush1.bf16.msra.mxu0 %v6724
        %6745 = vmatprep.subr.bf16.mxu0 0
        %6746 = vmatpush1.bf16.msra.mxu0 %v6725
        %6747 = vmatprep.subr.bf16.mxu0 0
        %6748 = vmatpush1.bf16.msra.mxu0 %v6726
        %6749 = vmatprep.subr.bf16.mxu0 0
        %6750 = vmatpush1.bf16.msra.mxu0 %v6727
        %6751 = vmatprep.subr.bf16.mxu0 0
        %6752 = vmatpush1.bf16.msra.mxu0 %v6728
        %6753 = vmatprep.subr.bf16.mxu0 0
        %6754 = vmatpush1.bf16.msra.mxu0 0
        %6755 = vmatprep.subr.bf16.mxu0 0
        %6756 = vmatpush1.bf16.msra.mxu0 0
        %6757 = vmatprep.subr.bf16.mxu0 0
        %6758 = vmatpush1.bf16.msra.mxu0 0
        %6759 = vmatprep.subr.bf16.mxu0 0
        %6760 = vmatpush1.bf16.msra.mxu0 0
        %6761 = vmatprep.subr.bf16.mxu0 0
        %6762 = vmatpush1.bf16.msra.mxu0 0
        %6763 = vmatprep.subr.bf16.mxu0 0
        %6764 = vmatpush1.bf16.msra.mxu0 0
        %6765 = vmatprep.subr.bf16.mxu0 0
        %6766 = vmatpush1.bf16.msra.mxu0 0
        %6767 = vmatprep.subr.bf16.mxu0 0
        %6768 = vmatpush1.bf16.msra.mxu0 0
        %6769 = vmatprep.mubr.bf16.mxu0 0
        %6770 = vmatmul.mubr.bf16.gmra.mrb[0].mxu0 %v6665
        %v6771 = vpop.f32.mrb[0].mxu0
        %v6772 = vadd.f32 %v6687, %v6771
        %v6773 = vpop.f32.mrb[0].mxu0
        %v6774 = vpop.f32.mrb[0].mxu0
        %v6775 = vpop.f32.mrb[0].mxu0
        %6776 = vdwg.mxu0
        %v6777 = vpack.c.bf16 %v6772, %v6772
        %v6778 = vld [vmem:[#allocation11] sm:$0xf]
        %v6779 = vld [vmem:[#allocation11 + $0x4] sm:$0xf]
        %v6780 = vld [vmem:[#allocation11 + $0x8] sm:$0xf]
        %v6781 = vld [vmem:[#allocation11 + $0xc] sm:$0x3]
        %v6782 = vld [vmem:[#allocation23] sm:$0x1]
        %v6784 = vlaneseq
        %v6785 = vshrl.u32 %v6784, 7
        %v6786 = vsub.s32 0, %v6785
        %v6787 = vrot.slane %v6782, %v6786
        %v6793 = vunpack.c.l.b16 %v6778
        %v6794 = vunpack.c.l.b16 %v6779
        %v6795 = vunpack.c.l.b16 %v6780
        %v6796 = vunpack.c.l.b16 %v6781
        %v6797 = vpack.c.b16 %v6794, %v6793
        %v6798 = vpack.c.b16 %v6796, %v6795
        %vm6800 = vcmask 228352
        %v6802 = vsel %vm6800, %v6777, 0
        %vm6804 = vcmask 1045504
        %v6806 = vsel %vm6804, %v6798, 0
        %6808 = vmatprep.subr.bf16.mxu0 0
        %6809 = vmatpush1.bf16.msra.mxu0 %v6797
        %6810 = vmatprep.subr.bf16.mxu0 0
        %6811 = vmatpush1.bf16.msra.mxu0 %v6806
        %6812 = vmatprep.subr.bf16.mxu0 0
        %6813 = vmatpush1.bf16.msra.mxu0 0
        %6814 = vmatprep.subr.bf16.mxu0 0
        %6815 = vmatpush1.bf16.msra.mxu0 0
        %6816 = vmatprep.subr.bf16.mxu0 0
        %6817 = vmatpush1.bf16.msra.mxu0 0
        %6818 = vmatprep.subr.bf16.mxu0 0
        %6819 = vmatpush1.bf16.msra.mxu0 0
        %6820 = vmatprep.subr.bf16.mxu0 0
        %6821 = vmatpush1.bf16.msra.mxu0 0
        %6822 = vmatprep.subr.bf16.mxu0 0
        %6823 = vmatpush1.bf16.msra.mxu0 0
        %6824 = vmatprep.subr.bf16.mxu0 0
        %6825 = vmatpush1.bf16.msra.mxu0 0
        %6826 = vmatprep.subr.bf16.mxu0 0
        %6827 = vmatpush1.bf16.msra.mxu0 0
        %6828 = vmatprep.subr.bf16.mxu0 0
        %6829 = vmatpush1.bf16.msra.mxu0 0
        %6830 = vmatprep.subr.bf16.mxu0 0
        %6831 = vmatpush1.bf16.msra.mxu0 0
        %6832 = vmatprep.subr.bf16.mxu0 0
        %6833 = vmatpush1.bf16.msra.mxu0 0
        %6834 = vmatprep.subr.bf16.mxu0 0
        %6835 = vmatpush1.bf16.msra.mxu0 0
        %6836 = vmatprep.subr.bf16.mxu0 0
        %6837 = vmatpush1.bf16.msra.mxu0 0
        %6838 = vmatprep.subr.bf16.mxu0 0
        %6839 = vmatpush1.bf16.msra.mxu0 0
        %6840 = vmatprep.mubr.bf16.mxu0 0
        %6841 = vmatmul.mubr.bf16.gmra.mrb[0].mxu0 %v6802
        %v6842 = vpop.f32.mrb[0].mxu0
        %v6843 = vadd.f32 %v6787, %v6842
        %v6844 = vpop.f32.mrb[0].mxu0
        %v6845 = vpop.f32.mrb[0].mxu0
        %v6846 = vpop.f32.mrb[0].mxu0
        %6847 = vdwg.mxu0
        %s6848 = sld [smem:[#allocation29 + $0x3]]
        %vm6849 = vcmp.gt.f32.partialorder %v6843, 0.0
        %v6850 = vstv %s6848
        %v6851 = vmul.f32 %v6850, %v6843
        %v6852 = vsel %vm6849, %v6843, %v6851
        %v6853 = vpack.c.bf16 %v6852, %v6852
        %v6854 = vld [vmem:[#allocation12] sm:$0xff]
        %v6855 = vld [vmem:[#allocation12 + $0x8] sm:$0xff]
        %v6856 = vld [vmem:[#allocation12 + $0x10] sm:$0xff]
        %v6857 = vld [vmem:[#allocation12 + $0x18] sm:$0xff]
        %v6858 = vld [vmem:[#allocation12 + $0x20] sm:$0xff]
        %v6859 = vld [vmem:[#allocation12 + $0x28] sm:$0xff]
        %v6860 = vld [vmem:[#allocation12 + $0x30] sm:$0xff]
        %v6861 = vld [vmem:[#allocation12 + $0x38] sm:$0xff]
        %v6862 = vld [vmem:[#allocation12 + $0x40] sm:$0xff]
        %v6863 = vld [vmem:[#allocation12 + $0x48] sm:$0xff]
        %v6864 = vld [vmem:[#allocation12 + $0x50] sm:$0xff]
        %v6865 = vld [vmem:[#allocation12 + $0x58] sm:$0xff]
        %v6866 = vld [vmem:[#allocation12 + $0x60] sm:$0xff]
        %v6867 = vld [vmem:[#allocation12 + $0x68] sm:$0xff]
        %v6868 = vld [vmem:[#allocation12 + $0x70] sm:$0xff]
        %v6869 = vld [vmem:[#allocation12 + $0x78] sm:$0xff]
        %v6870 = vld [vmem:[#allocation24] sm:$0x3]
        %v6872 = vlaneseq
        %v6873 = vshrl.u32 %v6872, 7
        %v6874 = vsub.s32 0, %v6873
        %v6875 = vrot.slane %v6870, %v6874
        %v6876 = vlaneseq
        %v6877 = vshrl.u32 %v6876, 7
        %v6878 = vsub.s32 1, %v6877
        %v6879 = vrot.slane %v6870, %v6878
        %v6898 = vunpack.c.l.b16 %v6854
        %v6899 = vunpack.c.h.b16 %v6854
        %v6900 = vunpack.c.l.b16 %v6855
        %v6901 = vunpack.c.h.b16 %v6855
        %v6902 = vunpack.c.l.b16 %v6856
        %v6903 = vunpack.c.h.b16 %v6856
        %v6904 = vunpack.c.l.b16 %v6857
        %v6905 = vunpack.c.h.b16 %v6857
        %v6906 = vunpack.c.l.b16 %v6858
        %v6907 = vunpack.c.h.b16 %v6858
        %v6908 = vunpack.c.l.b16 %v6859
        %v6909 = vunpack.c.h.b16 %v6859
        %v6910 = vunpack.c.l.b16 %v6860
        %v6911 = vunpack.c.h.b16 %v6860
        %v6912 = vunpack.c.l.b16 %v6861
        %v6913 = vunpack.c.h.b16 %v6861
        %v6914 = vunpack.c.l.b16 %v6862
        %v6915 = vunpack.c.h.b16 %v6862
        %v6916 = vunpack.c.l.b16 %v6863
        %v6917 = vunpack.c.h.b16 %v6863
        %v6918 = vunpack.c.l.b16 %v6864
        %v6919 = vunpack.c.h.b16 %v6864
        %v6920 = vunpack.c.l.b16 %v6865
        %v6921 = vunpack.c.h.b16 %v6865
        %v6922 = vunpack.c.l.b16 %v6866
        %v6923 = vunpack.c.h.b16 %v6866
        %v6924 = vunpack.c.l.b16 %v6867
        %v6925 = vunpack.c.h.b16 %v6867
        %v6926 = vunpack.c.l.b16 %v6868
        %v6927 = vunpack.c.h.b16 %v6868
        %v6928 = vunpack.c.l.b16 %v6869
        %v6929 = vunpack.c.h.b16 %v6869
        %v6930 = vpack.c.b16 %v6900, %v6898
        %v6931 = vpack.c.b16 %v6901, %v6899
        %v6932 = vpack.c.b16 %v6904, %v6902
        %v6933 = vpack.c.b16 %v6905, %v6903
        %v6934 = vpack.c.b16 %v6908, %v6906
        %v6935 = vpack.c.b16 %v6909, %v6907
        %v6936 = vpack.c.b16 %v6912, %v6910
        %v6937 = vpack.c.b16 %v6913, %v6911
        %v6938 = vpack.c.b16 %v6916, %v6914
        %v6939 = vpack.c.b16 %v6917, %v6915
        %v6940 = vpack.c.b16 %v6920, %v6918
        %v6941 = vpack.c.b16 %v6921, %v6919
        %v6942 = vpack.c.b16 %v6924, %v6922
        %v6943 = vpack.c.b16 %v6925, %v6923
        %v6944 = vpack.c.b16 %v6928, %v6926
        %v6945 = vpack.c.b16 %v6929, %v6927
        %6962 = vmatprep.subr.bf16.mxu0 %v6931
        %6963 = vmatpush1.bf16.msra.mxu0 %v6930
        %6964 = vmatprep.subr.bf16.mxu0 %v6933
        %6965 = vmatpush1.bf16.msra.mxu0 %v6932
        %6966 = vmatprep.subr.bf16.mxu0 %v6935
        %6967 = vmatpush1.bf16.msra.mxu0 %v6934
        %6968 = vmatprep.subr.bf16.mxu0 %v6937
        %6969 = vmatpush1.bf16.msra.mxu0 %v6936
        %6970 = vmatprep.subr.bf16.mxu0 %v6939
        %6971 = vmatpush1.bf16.msra.mxu0 %v6938
        %6972 = vmatprep.subr.bf16.mxu0 %v6941
        %6973 = vmatpush1.bf16.msra.mxu0 %v6940
        %6974 = vmatprep.subr.bf16.mxu0 %v6943
        %6975 = vmatpush1.bf16.msra.mxu0 %v6942
        %6976 = vmatprep.subr.bf16.mxu0 %v6945
        %6977 = vmatpush1.bf16.msra.mxu0 %v6944
        %6978 = vmatprep.subr.bf16.mxu0 0
        %6979 = vmatpush1.bf16.msra.mxu0 0
        %6980 = vmatprep.subr.bf16.mxu0 0
        %6981 = vmatpush1.bf16.msra.mxu0 0
        %6982 = vmatprep.subr.bf16.mxu0 0
        %6983 = vmatpush1.bf16.msra.mxu0 0
        %6984 = vmatprep.subr.bf16.mxu0 0
        %6985 = vmatpush1.bf16.msra.mxu0 0
        %6986 = vmatprep.subr.bf16.mxu0 0
        %6987 = vmatpush1.bf16.msra.mxu0 0
        %6988 = vmatprep.subr.bf16.mxu0 0
        %6989 = vmatpush1.bf16.msra.mxu0 0
        %6990 = vmatprep.subr.bf16.mxu0 0
        %6991 = vmatpush1.bf16.msra.mxu0 0
        %6992 = vmatprep.subr.bf16.mxu0 0
        %6993 = vmatpush1.bf16.msra.mxu0 0
        %6994 = vmatprep.mubr.bf16.mxu0 0
        %6995 = vmatmul.mubr.bf16.gmra.mrb[0].mxu0 %v6853
        %v6996 = vpop.f32.mrb[0].mxu0
        %v6997 = vadd.f32 %v6875, %v6996
        %v6998 = vpop.f32.mrb[0].mxu0
        %v6999 = vadd.f32 %v6879, %v6998
        %v7000 = vpop.f32.mrb[0].mxu0
        %v7001 = vpop.f32.mrb[0].mxu0
        %7002 = vdwg.mxu0
        %s7003 = sld [smem:[#allocation29 + $0x4]]
        %vm7004 = vcmp.gt.f32.partialorder %v6997, 0.0
        %vm7005 = vcmp.gt.f32.partialorder %v6999, 0.0
        %v7006 = vstv %s7003
        %v7007 = vmul.f32 %v7006, %v6997
        %v7008 = vmul.f32 %v7006, %v6999
        %v7009 = vsel %vm7004, %v6997, %v7007
        %v7010 = vsel %vm7005, %v6999, %v7008
        %v7011 = vpack.c.bf16 %v7009, %v7009
        %v7012 = vpack.c.bf16 %v7010, %v7010
        %v7013 = vld [vmem:[#allocation14] sm:$0xff]
        %v7014 = vld [vmem:[#allocation14 + $0x8] sm:$0xff]
        %v7015 = vld [vmem:[#allocation14 + $0x10] sm:$0xff]
        %v7016 = vld [vmem:[#allocation14 + $0x18] sm:$0xff]
        %v7017 = vld [vmem:[#allocation14 + $0x20] sm:$0xff]
        %v7018 = vld [vmem:[#allocation14 + $0x28] sm:$0xff]
        %v7019 = vld [vmem:[#allocation14 + $0x30] sm:$0xff]
        %v7020 = vld [vmem:[#allocation14 + $0x38] sm:$0xff]
        %v7021 = vld [vmem:[#allocation14 + $0x40] sm:$0xff]
        %v7022 = vld [vmem:[#allocation14 + $0x48] sm:$0xff]
        %v7023 = vld [vmem:[#allocation14 + $0x50] sm:$0xff]
        %v7024 = vld [vmem:[#allocation14 + $0x58] sm:$0xff]
        %v7025 = vld [vmem:[#allocation14 + $0x60] sm:$0xff]
        %v7026 = vld [vmem:[#allocation14 + $0x68] sm:$0xff]
        %v7027 = vld [vmem:[#allocation14 + $0x70] sm:$0xff]
        %v7028 = vld [vmem:[#allocation14 + $0x78] sm:$0xff]
        %v7029 = vld [vmem:[#allocation14 + $0x80] sm:$0xff]
        %v7030 = vld [vmem:[#allocation14 + $0x88] sm:$0xff]
        %v7031 = vld [vmem:[#allocation14 + $0x90] sm:$0xff]
        %v7032 = vld [vmem:[#allocation14 + $0x98] sm:$0xff]
        %v7033 = vld [vmem:[#allocation14 + $0xa0] sm:$0xff]
        %v7034 = vld [vmem:[#allocation14 + $0xa8] sm:$0xff]
        %v7035 = vld [vmem:[#allocation14 + $0xb0] sm:$0xff]
        %v7036 = vld [vmem:[#allocation14 + $0xb8] sm:$0xff]
        %v7037 = vld [vmem:[#allocation14 + $0xc0] sm:$0xff]
        %v7038 = vld [vmem:[#allocation14 + $0xc8] sm:$0xff]
        %v7039 = vld [vmem:[#allocation14 + $0xd0] sm:$0xff]
        %v7040 = vld [vmem:[#allocation14 + $0xd8] sm:$0xff]
        %v7041 = vld [vmem:[#allocation14 + $0xe0] sm:$0xff]
        %v7042 = vld [vmem:[#allocation14 + $0xe8] sm:$0xff]
        %v7043 = vld [vmem:[#allocation14 + $0xf0] sm:$0xff]
        %v7044 = vld [vmem:[#allocation14 + $0xf8] sm:$0xff]
        %v7045 = vld [vmem:[#allocation14 + $0x100] sm:$0xff]
        %v7046 = vld [vmem:[#allocation14 + $0x108] sm:$0xff]
        %v7047 = vld [vmem:[#allocation14 + $0x110] sm:$0xff]
        %v7048 = vld [vmem:[#allocation14 + $0x118] sm:$0xff]
        %v7049 = vld [vmem:[#allocation14 + $0x120] sm:$0xff]
        %v7050 = vld [vmem:[#allocation14 + $0x128] sm:$0xff]
        %v7051 = vld [vmem:[#allocation14 + $0x130] sm:$0xff]
        %v7052 = vld [vmem:[#allocation14 + $0x138] sm:$0xff]
        %v7053 = vld [vmem:[#allocation14 + $0x140] sm:$0xff]
        %v7054 = vld [vmem:[#allocation14 + $0x148] sm:$0xff]
        %v7055 = vld [vmem:[#allocation14 + $0x150] sm:$0xff]
        %v7056 = vld [vmem:[#allocation14 + $0x158] sm:$0xff]
        %v7057 = vld [vmem:[#allocation14 + $0x160] sm:$0xff]
        %v7058 = vld [vmem:[#allocation14 + $0x168] sm:$0xff]
        %v7059 = vld [vmem:[#allocation14 + $0x170] sm:$0xff]
        %v7060 = vld [vmem:[#allocation14 + $0x178] sm:$0xff]
        %v7061 = vld [vmem:[#allocation14 + $0x180] sm:$0xff]
        %v7062 = vld [vmem:[#allocation14 + $0x188] sm:$0xff]
        %v7063 = vld [vmem:[#allocation14 + $0x190] sm:$0xff]
        %v7064 = vld [vmem:[#allocation14 + $0x198] sm:$0xff]
        %v7065 = vld [vmem:[#allocation14 + $0x1a0] sm:$0xff]
        %v7066 = vld [vmem:[#allocation14 + $0x1a8] sm:$0xff]
        %v7067 = vld [vmem:[#allocation14 + $0x1b0] sm:$0xff]
        %v7068 = vld [vmem:[#allocation14 + $0x1b8] sm:$0xff]
        %v7069 = vld [vmem:[#allocation14 + $0x1c0] sm:$0xff]
        %v7070 = vld [vmem:[#allocation14 + $0x1c8] sm:$0xff]
        %v7071 = vld [vmem:[#allocation14 + $0x1d0] sm:$0xff]
        %v7072 = vld [vmem:[#allocation14 + $0x1d8] sm:$0xff]
        %v7073 = vld [vmem:[#allocation14 + $0x1e0] sm:$0xff]
        %v7074 = vld [vmem:[#allocation14 + $0x1e8] sm:$0xff]
        %v7075 = vld [vmem:[#allocation14 + $0x1f0] sm:$0xff]
        %v7076 = vld [vmem:[#allocation14 + $0x1f8] sm:$0xff]
        %v7077 = vld [vmem:[#allocation26] sm:$0xf]
        %v7079 = vlaneseq
        %v7080 = vshrl.u32 %v7079, 7
        %v7081 = vsub.s32 0, %v7080
        %v7082 = vrot.slane %v7077, %v7081
        %v7083 = vlaneseq
        %v7084 = vshrl.u32 %v7083, 7
        %v7085 = vsub.s32 1, %v7084
        %v7086 = vrot.slane %v7077, %v7085
        %v7087 = vlaneseq
        %v7088 = vshrl.u32 %v7087, 7
        %v7089 = vsub.s32 2, %v7088
        %v7090 = vrot.slane %v7077, %v7089
        %v7091 = vlaneseq
        %v7092 = vshrl.u32 %v7091, 7
        %v7093 = vsub.s32 3, %v7092
        %v7094 = vrot.slane %v7077, %v7093
        %v7163 = vunpack.c.l.b16 %v7013
        %v7164 = vunpack.c.h.b16 %v7013
        %v7165 = vunpack.c.l.b16 %v7014
        %v7166 = vunpack.c.h.b16 %v7014
        %v7167 = vunpack.c.l.b16 %v7015
        %v7168 = vunpack.c.h.b16 %v7015
        %v7169 = vunpack.c.l.b16 %v7016
        %v7170 = vunpack.c.h.b16 %v7016
        %v7171 = vunpack.c.l.b16 %v7017
        %v7172 = vunpack.c.h.b16 %v7017
        %v7173 = vunpack.c.l.b16 %v7018
        %v7174 = vunpack.c.h.b16 %v7018
        %v7175 = vunpack.c.l.b16 %v7019
        %v7176 = vunpack.c.h.b16 %v7019
        %v7177 = vunpack.c.l.b16 %v7020
        %v7178 = vunpack.c.h.b16 %v7020
        %v7179 = vunpack.c.l.b16 %v7021
        %v7180 = vunpack.c.h.b16 %v7021
        %v7181 = vunpack.c.l.b16 %v7022
        %v7182 = vunpack.c.h.b16 %v7022
        %v7183 = vunpack.c.l.b16 %v7023
        %v7184 = vunpack.c.h.b16 %v7023
        %v7185 = vunpack.c.l.b16 %v7024
        %v7186 = vunpack.c.h.b16 %v7024
        %v7187 = vunpack.c.l.b16 %v7025
        %v7188 = vunpack.c.h.b16 %v7025
        %v7189 = vunpack.c.l.b16 %v7026
        %v7190 = vunpack.c.h.b16 %v7026
        %v7191 = vunpack.c.l.b16 %v7027
        %v7192 = vunpack.c.h.b16 %v7027
        %v7193 = vunpack.c.l.b16 %v7028
        %v7194 = vunpack.c.h.b16 %v7028
        %v7195 = vunpack.c.l.b16 %v7029
        %v7196 = vunpack.c.h.b16 %v7029
        %v7197 = vunpack.c.l.b16 %v7030
        %v7198 = vunpack.c.h.b16 %v7030
        %v7199 = vunpack.c.l.b16 %v7031
        %v7200 = vunpack.c.h.b16 %v7031
        %v7201 = vunpack.c.l.b16 %v7032
        %v7202 = vunpack.c.h.b16 %v7032
        %v7203 = vunpack.c.l.b16 %v7033
        %v7204 = vunpack.c.h.b16 %v7033
        %v7205 = vunpack.c.l.b16 %v7034
        %v7206 = vunpack.c.h.b16 %v7034
        %v7207 = vunpack.c.l.b16 %v7035
        %v7208 = vunpack.c.h.b16 %v7035
        %v7209 = vunpack.c.l.b16 %v7036
        %v7210 = vunpack.c.h.b16 %v7036
        %v7211 = vunpack.c.l.b16 %v7037
        %v7212 = vunpack.c.h.b16 %v7037
        %v7213 = vunpack.c.l.b16 %v7038
        %v7214 = vunpack.c.h.b16 %v7038
        %v7215 = vunpack.c.l.b16 %v7039
        %v7216 = vunpack.c.h.b16 %v7039
        %v7217 = vunpack.c.l.b16 %v7040
        %v7218 = vunpack.c.h.b16 %v7040
        %v7219 = vunpack.c.l.b16 %v7041
        %v7220 = vunpack.c.h.b16 %v7041
        %v7221 = vunpack.c.l.b16 %v7042
        %v7222 = vunpack.c.h.b16 %v7042
        %v7223 = vunpack.c.l.b16 %v7043
        %v7224 = vunpack.c.h.b16 %v7043
        %v7225 = vunpack.c.l.b16 %v7044
        %v7226 = vunpack.c.h.b16 %v7044
        %v7227 = vunpack.c.l.b16 %v7045
        %v7228 = vunpack.c.h.b16 %v7045
        %v7229 = vunpack.c.l.b16 %v7046
        %v7230 = vunpack.c.h.b16 %v7046
        %v7231 = vunpack.c.l.b16 %v7047
        %v7232 = vunpack.c.h.b16 %v7047
        %v7233 = vunpack.c.l.b16 %v7048
        %v7234 = vunpack.c.h.b16 %v7048
        %v7235 = vunpack.c.l.b16 %v7049
        %v7236 = vunpack.c.h.b16 %v7049
        %v7237 = vunpack.c.l.b16 %v7050
        %v7238 = vunpack.c.h.b16 %v7050
        %v7239 = vunpack.c.l.b16 %v7051
        %v7240 = vunpack.c.h.b16 %v7051
        %v7241 = vunpack.c.l.b16 %v7052
        %v7242 = vunpack.c.h.b16 %v7052
        %v7243 = vunpack.c.l.b16 %v7053
        %v7244 = vunpack.c.h.b16 %v7053
        %v7245 = vunpack.c.l.b16 %v7054
        %v7246 = vunpack.c.h.b16 %v7054
        %v7247 = vunpack.c.l.b16 %v7055
        %v7248 = vunpack.c.h.b16 %v7055
        %v7249 = vunpack.c.l.b16 %v7056
        %v7250 = vunpack.c.h.b16 %v7056
        %v7251 = vunpack.c.l.b16 %v7057
        %v7252 = vunpack.c.h.b16 %v7057
        %v7253 = vunpack.c.l.b16 %v7058
        %v7254 = vunpack.c.h.b16 %v7058
        %v7255 = vunpack.c.l.b16 %v7059
        %v7256 = vunpack.c.h.b16 %v7059
        %v7257 = vunpack.c.l.b16 %v7060
        %v7258 = vunpack.c.h.b16 %v7060
        %v7259 = vunpack.c.l.b16 %v7061
        %v7260 = vunpack.c.h.b16 %v7061
        %v7261 = vunpack.c.l.b16 %v7062
        %v7262 = vunpack.c.h.b16 %v7062
        %v7263 = vunpack.c.l.b16 %v7063
        %v7264 = vunpack.c.h.b16 %v7063
        %v7265 = vunpack.c.l.b16 %v7064
        %v7266 = vunpack.c.h.b16 %v7064
        %v7267 = vunpack.c.l.b16 %v7065
        %v7268 = vunpack.c.h.b16 %v7065
        %v7269 = vunpack.c.l.b16 %v7066
        %v7270 = vunpack.c.h.b16 %v7066
        %v7271 = vunpack.c.l.b16 %v7067
        %v7272 = vunpack.c.h.b16 %v7067
        %v7273 = vunpack.c.l.b16 %v7068
        %v7274 = vunpack.c.h.b16 %v7068
        %v7275 = vunpack.c.l.b16 %v7069
        %v7276 = vunpack.c.h.b16 %v7069
        %v7277 = vunpack.c.l.b16 %v7070
        %v7278 = vunpack.c.h.b16 %v7070
        %v7279 = vunpack.c.l.b16 %v7071
        %v7280 = vunpack.c.h.b16 %v7071
        %v7281 = vunpack.c.l.b16 %v7072
        %v7282 = vunpack.c.h.b16 %v7072
        %v7283 = vunpack.c.l.b16 %v7073
        %v7284 = vunpack.c.h.b16 %v7073
        %v7285 = vunpack.c.l.b16 %v7074
        %v7286 = vunpack.c.h.b16 %v7074
        %v7287 = vunpack.c.l.b16 %v7075
        %v7288 = vunpack.c.h.b16 %v7075
        %v7289 = vunpack.c.l.b16 %v7076
        %v7290 = vunpack.c.h.b16 %v7076
        %v7291 = vpack.c.b16 %v7167, %v7163
        %v7292 = vpack.c.b16 %v7168, %v7164
        %v7293 = vpack.c.b16 %v7169, %v7165
        %v7294 = vpack.c.b16 %v7170, %v7166
        %v7295 = vpack.c.b16 %v7175, %v7171
        %v7296 = vpack.c.b16 %v7176, %v7172
        %v7297 = vpack.c.b16 %v7177, %v7173
        %v7298 = vpack.c.b16 %v7178, %v7174
        %v7299 = vpack.c.b16 %v7183, %v7179
        %v7300 = vpack.c.b16 %v7184, %v7180
        %v7301 = vpack.c.b16 %v7185, %v7181
        %v7302 = vpack.c.b16 %v7186, %v7182
        %v7303 = vpack.c.b16 %v7191, %v7187
        %v7304 = vpack.c.b16 %v7192, %v7188
        %v7305 = vpack.c.b16 %v7193, %v7189
        %v7306 = vpack.c.b16 %v7194, %v7190
        %v7307 = vpack.c.b16 %v7199, %v7195
        %v7308 = vpack.c.b16 %v7200, %v7196
        %v7309 = vpack.c.b16 %v7201, %v7197
        %v7310 = vpack.c.b16 %v7202, %v7198
        %v7311 = vpack.c.b16 %v7207, %v7203
        %v7312 = vpack.c.b16 %v7208, %v7204
        %v7313 = vpack.c.b16 %v7209, %v7205
        %v7314 = vpack.c.b16 %v7210, %v7206
        %v7315 = vpack.c.b16 %v7215, %v7211
        %v7316 = vpack.c.b16 %v7216, %v7212
        %v7317 = vpack.c.b16 %v7217, %v7213
        %v7318 = vpack.c.b16 %v7218, %v7214
        %v7319 = vpack.c.b16 %v7223, %v7219
        %v7320 = vpack.c.b16 %v7224, %v7220
        %v7321 = vpack.c.b16 %v7225, %v7221
        %v7322 = vpack.c.b16 %v7226, %v7222
        %v7323 = vpack.c.b16 %v7231, %v7227
        %v7324 = vpack.c.b16 %v7232, %v7228
        %v7325 = vpack.c.b16 %v7233, %v7229
        %v7326 = vpack.c.b16 %v7234, %v7230
        %v7327 = vpack.c.b16 %v7239, %v7235
        %v7328 = vpack.c.b16 %v7240, %v7236
        %v7329 = vpack.c.b16 %v7241, %v7237
        %v7330 = vpack.c.b16 %v7242, %v7238
        %v7331 = vpack.c.b16 %v7247, %v7243
        %v7332 = vpack.c.b16 %v7248, %v7244
        %v7333 = vpack.c.b16 %v7249, %v7245
        %v7334 = vpack.c.b16 %v7250, %v7246
        %v7335 = vpack.c.b16 %v7255, %v7251
        %v7336 = vpack.c.b16 %v7256, %v7252
        %v7337 = vpack.c.b16 %v7257, %v7253
        %v7338 = vpack.c.b16 %v7258, %v7254
        %v7339 = vpack.c.b16 %v7263, %v7259
        %v7340 = vpack.c.b16 %v7264, %v7260
        %v7341 = vpack.c.b16 %v7265, %v7261
        %v7342 = vpack.c.b16 %v7266, %v7262
        %v7343 = vpack.c.b16 %v7271, %v7267
        %v7344 = vpack.c.b16 %v7272, %v7268
        %v7345 = vpack.c.b16 %v7273, %v7269
        %v7346 = vpack.c.b16 %v7274, %v7270
        %v7347 = vpack.c.b16 %v7279, %v7275
        %v7348 = vpack.c.b16 %v7280, %v7276
        %v7349 = vpack.c.b16 %v7281, %v7277
        %v7350 = vpack.c.b16 %v7282, %v7278
        %v7351 = vpack.c.b16 %v7287, %v7283
        %v7352 = vpack.c.b16 %v7288, %v7284
        %v7353 = vpack.c.b16 %v7289, %v7285
        %v7354 = vpack.c.b16 %v7290, %v7286
        %7419 = vmatprep.subr.bf16.mxu0 %v7292
        %7420 = vmatpush1.bf16.msra.mxu0 %v7291
        %7421 = vmatprep.subr.bf16.mxu0 %v7296
        %7422 = vmatpush1.bf16.msra.mxu0 %v7295
        %7423 = vmatprep.subr.bf16.mxu0 %v7300
        %7424 = vmatpush1.bf16.msra.mxu0 %v7299
        %7425 = vmatprep.subr.bf16.mxu0 %v7304
        %7426 = vmatpush1.bf16.msra.mxu0 %v7303
        %7427 = vmatprep.subr.bf16.mxu0 %v7308
        %7428 = vmatpush1.bf16.msra.mxu0 %v7307
        %7429 = vmatprep.subr.bf16.mxu0 %v7312
        %7430 = vmatpush1.bf16.msra.mxu0 %v7311
        %7431 = vmatprep.subr.bf16.mxu0 %v7316
        %7432 = vmatpush1.bf16.msra.mxu0 %v7315
        %7433 = vmatprep.subr.bf16.mxu0 %v7320
        %7434 = vmatpush1.bf16.msra.mxu0 %v7319
        %7435 = vmatprep.subr.bf16.mxu0 %v7324
        %7436 = vmatpush1.bf16.msra.mxu0 %v7323
        %7437 = vmatprep.subr.bf16.mxu0 %v7328
        %7438 = vmatpush1.bf16.msra.mxu0 %v7327
        %7439 = vmatprep.subr.bf16.mxu0 %v7332
        %7440 = vmatpush1.bf16.msra.mxu0 %v7331
        %7441 = vmatprep.subr.bf16.mxu0 %v7336
        %7442 = vmatpush1.bf16.msra.mxu0 %v7335
        %7443 = vmatprep.subr.bf16.mxu0 %v7340
        %7444 = vmatpush1.bf16.msra.mxu0 %v7339
        %7445 = vmatprep.subr.bf16.mxu0 %v7344
        %7446 = vmatpush1.bf16.msra.mxu0 %v7343
        %7447 = vmatprep.subr.bf16.mxu0 %v7348
        %7448 = vmatpush1.bf16.msra.mxu0 %v7347
        %7449 = vmatprep.subr.bf16.mxu0 %v7352
        %7450 = vmatpush1.bf16.msra.mxu0 %v7351
        %7451 = vmatprep.mubr.bf16.mxu0 %v7012
        %7452 = vmatmul.mubr.bf16.gmra.mrb[0].mxu0 %v7011
        %v7453 = vpop.f32.mrb[0].mxu0
        %v7454 = vadd.f32 %v7082, %v7453
        %v7455 = vpop.f32.mrb[0].mxu0
        %v7456 = vadd.f32 %v7086, %v7455
        %v7457 = vpop.f32.mrb[0].mxu0
        %v7458 = vpop.f32.mrb[0].mxu0
        %7459 = vdwg.mxu0
        %7460 = vmatprep.subr.bf16.mxu0 %v7294
        %7461 = vmatpush1.bf16.msra.mxu0 %v7293
        %7462 = vmatprep.subr.bf16.mxu0 %v7298
        %7463 = vmatpush1.bf16.msra.mxu0 %v7297
        %7464 = vmatprep.subr.bf16.mxu0 %v7302
        %7465 = vmatpush1.bf16.msra.mxu0 %v7301
        %7466 = vmatprep.subr.bf16.mxu0 %v7306
        %7467 = vmatpush1.bf16.msra.mxu0 %v7305
        %7468 = vmatprep.subr.bf16.mxu0 %v7310
        %7469 = vmatpush1.bf16.msra.mxu0 %v7309
        %7470 = vmatprep.subr.bf16.mxu0 %v7314
        %7471 = vmatpush1.bf16.msra.mxu0 %v7313
        %7472 = vmatprep.subr.bf16.mxu0 %v7318
        %7473 = vmatpush1.bf16.msra.mxu0 %v7317
        %7474 = vmatprep.subr.bf16.mxu0 %v7322
        %7475 = vmatpush1.bf16.msra.mxu0 %v7321
        %7476 = vmatprep.subr.bf16.mxu0 %v7326
        %7477 = vmatpush1.bf16.msra.mxu0 %v7325
        %7478 = vmatprep.subr.bf16.mxu0 %v7330
        %7479 = vmatpush1.bf16.msra.mxu0 %v7329
        %7480 = vmatprep.subr.bf16.mxu0 %v7334
        %7481 = vmatpush1.bf16.msra.mxu0 %v7333
        %7482 = vmatprep.subr.bf16.mxu0 %v7338
        %7483 = vmatpush1.bf16.msra.mxu0 %v7337
        %7484 = vmatprep.subr.bf16.mxu0 %v7342
        %7485 = vmatpush1.bf16.msra.mxu0 %v7341
        %7486 = vmatprep.subr.bf16.mxu0 %v7346
        %7487 = vmatpush1.bf16.msra.mxu0 %v7345
        %7488 = vmatprep.subr.bf16.mxu0 %v7350
        %7489 = vmatpush1.bf16.msra.mxu0 %v7349
        %7490 = vmatprep.subr.bf16.mxu0 %v7354
        %7491 = vmatpush1.bf16.msra.mxu0 %v7353
        %7492 = vmatprep.mubr.bf16.mxu0 %v7012
        %7493 = vmatmul.mubr.bf16.gmra.mrb[0].mxu0 %v7011
        %v7494 = vpop.f32.mrb[0].mxu0
        %v7495 = vadd.f32 %v7090, %v7494
        %v7496 = vpop.f32.mrb[0].mxu0
        %v7497 = vadd.f32 %v7094, %v7496
        %v7498 = vpop.f32.mrb[0].mxu0
        %v7499 = vpop.f32.mrb[0].mxu0
        %7500 = vdwg.mxu0
        %s7501 = sld [smem:[#allocation29 + $0x5]]
        %vm7502 = vcmp.gt.f32.partialorder %v7454, 0.0
        %vm7503 = vcmp.gt.f32.partialorder %v7456, 0.0
        %vm7504 = vcmp.gt.f32.partialorder %v7495, 0.0
        %vm7505 = vcmp.gt.f32.partialorder %v7497, 0.0
        %v7506 = vstv %s7501
        %v7507 = vmul.f32 %v7506, %v7454
        %v7508 = vmul.f32 %v7506, %v7456
        %v7509 = vmul.f32 %v7506, %v7495
        %v7510 = vmul.f32 %v7506, %v7497
        %v7511 = vsel %vm7502, %v7454, %v7507
        %v7512 = vsel %vm7503, %v7456, %v7508
        %v7513 = vsel %vm7504, %v7495, %v7509
        %v7514 = vsel %vm7505, %v7497, %v7510
        %v7515 = vpack.c.bf16 %v7511, %v7511
        %v7516 = vpack.c.bf16 %v7512, %v7512
        %v7517 = vpack.c.bf16 %v7513, %v7513
        %v7518 = vpack.c.bf16 %v7514, %v7514
        %v7519 = vld [vmem:[#allocation15] sm:$0xff]
        %v7520 = vld [vmem:[#allocation15 + $0x8] sm:$0xff]
        %v7521 = vld [vmem:[#allocation15 + $0x10] sm:$0xff]
        %v7522 = vld [vmem:[#allocation15 + $0x18] sm:$0xff]
        %v7523 = vld [vmem:[#allocation15 + $0x20] sm:$0xff]
        %v7524 = vld [vmem:[#allocation15 + $0x28] sm:$0xff]
        %v7525 = vld [vmem:[#allocation15 + $0x30] sm:$0xff]
        %v7526 = vld [vmem:[#allocation15 + $0x38] sm:$0xff]
        %v7527 = vld [vmem:[#allocation15 + $0x40] sm:$0xff]
        %v7528 = vld [vmem:[#allocation15 + $0x48] sm:$0xff]
        %v7529 = vld [vmem:[#allocation15 + $0x50] sm:$0xff]
        %v7530 = vld [vmem:[#allocation15 + $0x58] sm:$0xff]
        %v7531 = vld [vmem:[#allocation15 + $0x60] sm:$0xff]
        %v7532 = vld [vmem:[#allocation15 + $0x68] sm:$0xff]
        %v7533 = vld [vmem:[#allocation15 + $0x70] sm:$0xff]
        %v7534 = vld [vmem:[#allocation15 + $0x78] sm:$0xff]
        %v7535 = vld [vmem:[#allocation15 + $0x80] sm:$0xff]
        %v7536 = vld [vmem:[#allocation15 + $0x88] sm:$0xff]
        %v7537 = vld [vmem:[#allocation15 + $0x90] sm:$0xff]
        %v7538 = vld [vmem:[#allocation15 + $0x98] sm:$0xff]
        %v7539 = vld [vmem:[#allocation15 + $0xa0] sm:$0xff]
        %v7540 = vld [vmem:[#allocation15 + $0xa8] sm:$0xff]
        %v7541 = vld [vmem:[#allocation15 + $0xb0] sm:$0xff]
        %v7542 = vld [vmem:[#allocation15 + $0xb8] sm:$0xff]
        %v7543 = vld [vmem:[#allocation15 + $0xc0] sm:$0xff]
        %v7544 = vld [vmem:[#allocation15 + $0xc8] sm:$0xff]
        %v7545 = vld [vmem:[#allocation15 + $0xd0] sm:$0xff]
        %v7546 = vld [vmem:[#allocation15 + $0xd8] sm:$0xff]
        %v7547 = vld [vmem:[#allocation15 + $0xe0] sm:$0xff]
        %v7548 = vld [vmem:[#allocation15 + $0xe8] sm:$0xff]
        %v7549 = vld [vmem:[#allocation15 + $0xf0] sm:$0xff]
        %v7550 = vld [vmem:[#allocation15 + $0xf8] sm:$0xff]
        %v7551 = vld [vmem:[#allocation15 + $0x100] sm:$0xff]
        %v7552 = vld [vmem:[#allocation15 + $0x108] sm:$0xff]
        %v7553 = vld [vmem:[#allocation15 + $0x110] sm:$0xff]
        %v7554 = vld [vmem:[#allocation15 + $0x118] sm:$0xff]
        %v7555 = vld [vmem:[#allocation15 + $0x120] sm:$0xff]
        %v7556 = vld [vmem:[#allocation15 + $0x128] sm:$0xff]
        %v7557 = vld [vmem:[#allocation15 + $0x130] sm:$0xff]
        %v7558 = vld [vmem:[#allocation15 + $0x138] sm:$0xff]
        %v7559 = vld [vmem:[#allocation15 + $0x140] sm:$0xff]
        %v7560 = vld [vmem:[#allocation15 + $0x148] sm:$0xff]
        %v7561 = vld [vmem:[#allocation15 + $0x150] sm:$0xff]
        %v7562 = vld [vmem:[#allocation15 + $0x158] sm:$0xff]
        %v7563 = vld [vmem:[#allocation15 + $0x160] sm:$0xff]
        %v7564 = vld [vmem:[#allocation15 + $0x168] sm:$0xff]
        %v7565 = vld [vmem:[#allocation15 + $0x170] sm:$0xff]
        %v7566 = vld [vmem:[#allocation15 + $0x178] sm:$0xff]
        %v7567 = vld [vmem:[#allocation15 + $0x180] sm:$0xff]
        %v7568 = vld [vmem:[#allocation15 + $0x188] sm:$0xff]
        %v7569 = vld [vmem:[#allocation15 + $0x190] sm:$0xff]
        %v7570 = vld [vmem:[#allocation15 + $0x198] sm:$0xff]
        %v7571 = vld [vmem:[#allocation15 + $0x1a0] sm:$0xff]
        %v7572 = vld [vmem:[#allocation15 + $0x1a8] sm:$0xff]
        %v7573 = vld [vmem:[#allocation15 + $0x1b0] sm:$0xff]
        %v7574 = vld [vmem:[#allocation15 + $0x1b8] sm:$0xff]
        %v7575 = vld [vmem:[#allocation15 + $0x1c0] sm:$0xff]
        %v7576 = vld [vmem:[#allocation15 + $0x1c8] sm:$0xff]
        %v7577 = vld [vmem:[#allocation15 + $0x1d0] sm:$0xff]
        %v7578 = vld [vmem:[#allocation15 + $0x1d8] sm:$0xff]
        %v7579 = vld [vmem:[#allocation15 + $0x1e0] sm:$0xff]
        %v7580 = vld [vmem:[#allocation15 + $0x1e8] sm:$0xff]
        %v7581 = vld [vmem:[#allocation15 + $0x1f0] sm:$0xff]
        %v7582 = vld [vmem:[#allocation15 + $0x1f8] sm:$0xff]
        %v7583 = vld [vmem:[#allocation15 + $0x200] sm:$0xff]
        %v7584 = vld [vmem:[#allocation15 + $0x208] sm:$0xff]
        %v7585 = vld [vmem:[#allocation15 + $0x210] sm:$0xff]
        %v7586 = vld [vmem:[#allocation15 + $0x218] sm:$0xff]
        %v7587 = vld [vmem:[#allocation15 + $0x220] sm:$0xff]
        %v7588 = vld [vmem:[#allocation15 + $0x228] sm:$0xff]
        %v7589 = vld [vmem:[#allocation15 + $0x230] sm:$0xff]
        %v7590 = vld [vmem:[#allocation15 + $0x238] sm:$0xff]
        %v7591 = vld [vmem:[#allocation15 + $0x240] sm:$0xff]
        %v7592 = vld [vmem:[#allocation15 + $0x248] sm:$0xff]
        %v7593 = vld [vmem:[#allocation15 + $0x250] sm:$0xff]
        %v7594 = vld [vmem:[#allocation15 + $0x258] sm:$0xff]
        %v7595 = vld [vmem:[#allocation15 + $0x260] sm:$0xff]
        %v7596 = vld [vmem:[#allocation15 + $0x268] sm:$0xff]
        %v7597 = vld [vmem:[#allocation15 + $0x270] sm:$0xff]
        %v7598 = vld [vmem:[#allocation15 + $0x278] sm:$0xff]
        %v7599 = vld [vmem:[#allocation15 + $0x280] sm:$0xff]
        %v7600 = vld [vmem:[#allocation15 + $0x288] sm:$0xff]
        %v7601 = vld [vmem:[#allocation15 + $0x290] sm:$0xff]
        %v7602 = vld [vmem:[#allocation15 + $0x298] sm:$0xff]
        %v7603 = vld [vmem:[#allocation15 + $0x2a0] sm:$0xff]
        %v7604 = vld [vmem:[#allocation15 + $0x2a8] sm:$0xff]
        %v7605 = vld [vmem:[#allocation15 + $0x2b0] sm:$0xff]
        %v7606 = vld [vmem:[#allocation15 + $0x2b8] sm:$0xff]
        %v7607 = vld [vmem:[#allocation15 + $0x2c0] sm:$0xff]
        %v7608 = vld [vmem:[#allocation15 + $0x2c8] sm:$0xff]
        %v7609 = vld [vmem:[#allocation15 + $0x2d0] sm:$0xff]
        %v7610 = vld [vmem:[#allocation15 + $0x2d8] sm:$0xff]
        %v7611 = vld [vmem:[#allocation15 + $0x2e0] sm:$0xff]
        %v7612 = vld [vmem:[#allocation15 + $0x2e8] sm:$0xff]
        %v7613 = vld [vmem:[#allocation15 + $0x2f0] sm:$0xff]
        %v7614 = vld [vmem:[#allocation15 + $0x2f8] sm:$0xff]
        %v7615 = vld [vmem:[#allocation15 + $0x300] sm:$0xff]
        %v7616 = vld [vmem:[#allocation15 + $0x308] sm:$0xff]
        %v7617 = vld [vmem:[#allocation15 + $0x310] sm:$0xff]
        %v7618 = vld [vmem:[#allocation15 + $0x318] sm:$0xff]
        %v7619 = vld [vmem:[#allocation15 + $0x320] sm:$0xff]
        %v7620 = vld [vmem:[#allocation15 + $0x328] sm:$0xff]
        %v7621 = vld [vmem:[#allocation15 + $0x330] sm:$0xff]
        %v7622 = vld [vmem:[#allocation15 + $0x338] sm:$0xff]
        %v7623 = vld [vmem:[#allocation15 + $0x340] sm:$0xff]
        %v7624 = vld [vmem:[#allocation15 + $0x348] sm:$0xff]
        %v7625 = vld [vmem:[#allocation15 + $0x350] sm:$0xff]
        %v7626 = vld [vmem:[#allocation15 + $0x358] sm:$0xff]
        %v7627 = vld [vmem:[#allocation15 + $0x360] sm:$0xff]
        %v7628 = vld [vmem:[#allocation15 + $0x368] sm:$0xff]
        %v7629 = vld [vmem:[#allocation15 + $0x370] sm:$0xff]
        %v7630 = vld [vmem:[#allocation15 + $0x378] sm:$0xff]
        %v7631 = vld [vmem:[#allocation15 + $0x380] sm:$0xff]
        %v7632 = vld [vmem:[#allocation15 + $0x388] sm:$0xff]
        %v7633 = vld [vmem:[#allocation15 + $0x390] sm:$0xff]
        %v7634 = vld [vmem:[#allocation15 + $0x398] sm:$0xff]
        %v7635 = vld [vmem:[#allocation15 + $0x3a0] sm:$0xff]
        %v7636 = vld [vmem:[#allocation15 + $0x3a8] sm:$0xff]
        %v7637 = vld [vmem:[#allocation15 + $0x3b0] sm:$0xff]
        %v7638 = vld [vmem:[#allocation15 + $0x3b8] sm:$0xff]
        %v7639 = vld [vmem:[#allocation15 + $0x3c0] sm:$0xff]
        %v7640 = vld [vmem:[#allocation15 + $0x3c8] sm:$0xff]
        %v7641 = vld [vmem:[#allocation15 + $0x3d0] sm:$0xff]
        %v7642 = vld [vmem:[#allocation15 + $0x3d8] sm:$0xff]
        %v7643 = vld [vmem:[#allocation15 + $0x3e0] sm:$0xff]
        %v7644 = vld [vmem:[#allocation15 + $0x3e8] sm:$0xff]
        %v7645 = vld [vmem:[#allocation15 + $0x3f0] sm:$0xff]
        %v7646 = vld [vmem:[#allocation15 + $0x3f8] sm:$0xff]
        %v7647 = vld [vmem:[#allocation15 + $0x400] sm:$0xff]
        %v7648 = vld [vmem:[#allocation15 + $0x408] sm:$0xff]
        %v7649 = vld [vmem:[#allocation15 + $0x410] sm:$0xff]
        %v7650 = vld [vmem:[#allocation15 + $0x418] sm:$0xff]
        %v7651 = vld [vmem:[#allocation15 + $0x420] sm:$0xff]
        %v7652 = vld [vmem:[#allocation15 + $0x428] sm:$0xff]
        %v7653 = vld [vmem:[#allocation15 + $0x430] sm:$0xff]
        %v7654 = vld [vmem:[#allocation15 + $0x438] sm:$0xff]
        %v7655 = vld [vmem:[#allocation15 + $0x440] sm:$0xff]
        %v7656 = vld [vmem:[#allocation15 + $0x448] sm:$0xff]
        %v7657 = vld [vmem:[#allocation15 + $0x450] sm:$0xff]
        %v7658 = vld [vmem:[#allocation15 + $0x458] sm:$0xff]
        %v7659 = vld [vmem:[#allocation15 + $0x460] sm:$0xff]
        %v7660 = vld [vmem:[#allocation15 + $0x468] sm:$0xff]
        %v7661 = vld [vmem:[#allocation15 + $0x470] sm:$0xff]
        %v7662 = vld [vmem:[#allocation15 + $0x478] sm:$0xff]
        %v7663 = vld [vmem:[#allocation15 + $0x480] sm:$0xff]
        %v7664 = vld [vmem:[#allocation15 + $0x488] sm:$0xff]
        %v7665 = vld [vmem:[#allocation15 + $0x490] sm:$0xff]
        %v7666 = vld [vmem:[#allocation15 + $0x498] sm:$0xff]
        %v7667 = vld [vmem:[#allocation15 + $0x4a0] sm:$0xff]
        %v7668 = vld [vmem:[#allocation15 + $0x4a8] sm:$0xff]
        %v7669 = vld [vmem:[#allocation15 + $0x4b0] sm:$0xff]
        %v7670 = vld [vmem:[#allocation15 + $0x4b8] sm:$0xff]
        %v7671 = vld [vmem:[#allocation15 + $0x4c0] sm:$0xff]
        %v7672 = vld [vmem:[#allocation15 + $0x4c8] sm:$0xff]
        %v7673 = vld [vmem:[#allocation15 + $0x4d0] sm:$0xff]
        %v7674 = vld [vmem:[#allocation15 + $0x4d8] sm:$0xff]
        %v7675 = vld [vmem:[#allocation15 + $0x4e0] sm:$0xff]
        %v7676 = vld [vmem:[#allocation15 + $0x4e8] sm:$0xff]
        %v7677 = vld [vmem:[#allocation15 + $0x4f0] sm:$0xff]
        %v7678 = vld [vmem:[#allocation15 + $0x4f8] sm:$0xff]
        %v7679 = vld [vmem:[#allocation15 + $0x500] sm:$0xff]
        %v7680 = vld [vmem:[#allocation15 + $0x508] sm:$0xff]
        %v7681 = vld [vmem:[#allocation15 + $0x510] sm:$0xff]
        %v7682 = vld [vmem:[#allocation15 + $0x518] sm:$0xff]
        %v7683 = vld [vmem:[#allocation15 + $0x520] sm:$0xff]
        %v7684 = vld [vmem:[#allocation15 + $0x528] sm:$0xff]
        %v7685 = vld [vmem:[#allocation15 + $0x530] sm:$0xff]
        %v7686 = vld [vmem:[#allocation15 + $0x538] sm:$0xff]
        %v7687 = vld [vmem:[#allocation15 + $0x540] sm:$0xff]
        %v7688 = vld [vmem:[#allocation15 + $0x548] sm:$0xff]
        %v7689 = vld [vmem:[#allocation15 + $0x550] sm:$0xff]
        %v7690 = vld [vmem:[#allocation15 + $0x558] sm:$0xff]
        %v7691 = vld [vmem:[#allocation15 + $0x560] sm:$0xff]
        %v7692 = vld [vmem:[#allocation15 + $0x568] sm:$0xff]
        %v7693 = vld [vmem:[#allocation15 + $0x570] sm:$0xff]
        %v7694 = vld [vmem:[#allocation15 + $0x578] sm:$0xff]
        %v7695 = vld [vmem:[#allocation15 + $0x580] sm:$0xff]
        %v7696 = vld [vmem:[#allocation15 + $0x588] sm:$0xff]
        %v7697 = vld [vmem:[#allocation15 + $0x590] sm:$0xff]
        %v7698 = vld [vmem:[#allocation15 + $0x598] sm:$0xff]
        %v7699 = vld [vmem:[#allocation15 + $0x5a0] sm:$0xff]
        %v7700 = vld [vmem:[#allocation15 + $0x5a8] sm:$0xff]
        %v7701 = vld [vmem:[#allocation15 + $0x5b0] sm:$0xff]
        %v7702 = vld [vmem:[#allocation15 + $0x5b8] sm:$0xff]
        %v7703 = vld [vmem:[#allocation15 + $0x5c0] sm:$0xff]
        %v7704 = vld [vmem:[#allocation15 + $0x5c8] sm:$0xff]
        %v7705 = vld [vmem:[#allocation15 + $0x5d0] sm:$0xff]
        %v7706 = vld [vmem:[#allocation15 + $0x5d8] sm:$0xff]
        %v7707 = vld [vmem:[#allocation15 + $0x5e0] sm:$0xff]
        %v7708 = vld [vmem:[#allocation15 + $0x5e8] sm:$0xff]
        %v7709 = vld [vmem:[#allocation15 + $0x5f0] sm:$0xff]
        %v7710 = vld [vmem:[#allocation15 + $0x5f8] sm:$0xff]
        %v7711 = vld [vmem:[#allocation15 + $0x600] sm:$0xff]
        %v7712 = vld [vmem:[#allocation15 + $0x608] sm:$0xff]
        %v7713 = vld [vmem:[#allocation15 + $0x610] sm:$0xff]
        %v7714 = vld [vmem:[#allocation15 + $0x618] sm:$0xff]
        %v7715 = vld [vmem:[#allocation15 + $0x620] sm:$0xff]
        %v7716 = vld [vmem:[#allocation15 + $0x628] sm:$0xff]
        %v7717 = vld [vmem:[#allocation15 + $0x630] sm:$0xff]
        %v7718 = vld [vmem:[#allocation15 + $0x638] sm:$0xff]
        %v7719 = vld [vmem:[#allocation15 + $0x640] sm:$0xff]
        %v7720 = vld [vmem:[#allocation15 + $0x648] sm:$0xff]
        %v7721 = vld [vmem:[#allocation15 + $0x650] sm:$0xff]
        %v7722 = vld [vmem:[#allocation15 + $0x658] sm:$0xff]
        %v7723 = vld [vmem:[#allocation15 + $0x660] sm:$0xff]
        %v7724 = vld [vmem:[#allocation15 + $0x668] sm:$0xff]
        %v7725 = vld [vmem:[#allocation15 + $0x670] sm:$0xff]
        %v7726 = vld [vmem:[#allocation15 + $0x678] sm:$0xff]
        %v7727 = vld [vmem:[#allocation15 + $0x680] sm:$0xff]
        %v7728 = vld [vmem:[#allocation15 + $0x688] sm:$0xff]
        %v7729 = vld [vmem:[#allocation15 + $0x690] sm:$0xff]
        %v7730 = vld [vmem:[#allocation15 + $0x698] sm:$0xff]
        %v7731 = vld [vmem:[#allocation15 + $0x6a0] sm:$0xff]
        %v7732 = vld [vmem:[#allocation15 + $0x6a8] sm:$0xff]
        %v7733 = vld [vmem:[#allocation15 + $0x6b0] sm:$0xff]
        %v7734 = vld [vmem:[#allocation15 + $0x6b8] sm:$0xff]
        %v7735 = vld [vmem:[#allocation15 + $0x6c0] sm:$0xff]
        %v7736 = vld [vmem:[#allocation15 + $0x6c8] sm:$0xff]
        %v7737 = vld [vmem:[#allocation15 + $0x6d0] sm:$0xff]
        %v7738 = vld [vmem:[#allocation15 + $0x6d8] sm:$0xff]
        %v7739 = vld [vmem:[#allocation15 + $0x6e0] sm:$0xff]
        %v7740 = vld [vmem:[#allocation15 + $0x6e8] sm:$0xff]
        %v7741 = vld [vmem:[#allocation15 + $0x6f0] sm:$0xff]
        %v7742 = vld [vmem:[#allocation15 + $0x6f8] sm:$0xff]
        %v7743 = vld [vmem:[#allocation15 + $0x700] sm:$0xff]
        %v7744 = vld [vmem:[#allocation15 + $0x708] sm:$0xff]
        %v7745 = vld [vmem:[#allocation15 + $0x710] sm:$0xff]
        %v7746 = vld [vmem:[#allocation15 + $0x718] sm:$0xff]
        %v7747 = vld [vmem:[#allocation15 + $0x720] sm:$0xff]
        %v7748 = vld [vmem:[#allocation15 + $0x728] sm:$0xff]
        %v7749 = vld [vmem:[#allocation15 + $0x730] sm:$0xff]
        %v7750 = vld [vmem:[#allocation15 + $0x738] sm:$0xff]
        %v7751 = vld [vmem:[#allocation15 + $0x740] sm:$0xff]
        %v7752 = vld [vmem:[#allocation15 + $0x748] sm:$0xff]
        %v7753 = vld [vmem:[#allocation15 + $0x750] sm:$0xff]
        %v7754 = vld [vmem:[#allocation15 + $0x758] sm:$0xff]
        %v7755 = vld [vmem:[#allocation15 + $0x760] sm:$0xff]
        %v7756 = vld [vmem:[#allocation15 + $0x768] sm:$0xff]
        %v7757 = vld [vmem:[#allocation15 + $0x770] sm:$0xff]
        %v7758 = vld [vmem:[#allocation15 + $0x778] sm:$0xff]
        %v7759 = vld [vmem:[#allocation15 + $0x780] sm:$0xff]
        %v7760 = vld [vmem:[#allocation15 + $0x788] sm:$0xff]
        %v7761 = vld [vmem:[#allocation15 + $0x790] sm:$0xff]
        %v7762 = vld [vmem:[#allocation15 + $0x798] sm:$0xff]
        %v7763 = vld [vmem:[#allocation15 + $0x7a0] sm:$0xff]
        %v7764 = vld [vmem:[#allocation15 + $0x7a8] sm:$0xff]
        %v7765 = vld [vmem:[#allocation15 + $0x7b0] sm:$0xff]
        %v7766 = vld [vmem:[#allocation15 + $0x7b8] sm:$0xff]
        %v7767 = vld [vmem:[#allocation15 + $0x7c0] sm:$0xff]
        %v7768 = vld [vmem:[#allocation15 + $0x7c8] sm:$0xff]
        %v7769 = vld [vmem:[#allocation15 + $0x7d0] sm:$0xff]
        %v7770 = vld [vmem:[#allocation15 + $0x7d8] sm:$0xff]
        %v7771 = vld [vmem:[#allocation15 + $0x7e0] sm:$0xff]
        %v7772 = vld [vmem:[#allocation15 + $0x7e8] sm:$0xff]
        %v7773 = vld [vmem:[#allocation15 + $0x7f0] sm:$0xff]
        %v7774 = vld [vmem:[#allocation15 + $0x7f8] sm:$0xff]
        %v7775 = vld [vmem:[#allocation15 + $0x800] sm:$0xff]
        %v7776 = vld [vmem:[#allocation15 + $0x808] sm:$0xff]
        %v7777 = vld [vmem:[#allocation15 + $0x810] sm:$0xff]
        %v7778 = vld [vmem:[#allocation15 + $0x818] sm:$0xff]
        %v7779 = vld [vmem:[#allocation15 + $0x820] sm:$0xff]
        %v7780 = vld [vmem:[#allocation15 + $0x828] sm:$0xff]
        %v7781 = vld [vmem:[#allocation15 + $0x830] sm:$0xff]
        %v7782 = vld [vmem:[#allocation15 + $0x838] sm:$0xff]
        %v7783 = vld [vmem:[#allocation15 + $0x840] sm:$0xff]
        %v7784 = vld [vmem:[#allocation15 + $0x848] sm:$0xff]
        %v7785 = vld [vmem:[#allocation15 + $0x850] sm:$0xff]
        %v7786 = vld [vmem:[#allocation15 + $0x858] sm:$0xff]
        %v7787 = vld [vmem:[#allocation15 + $0x860] sm:$0xff]
        %v7788 = vld [vmem:[#allocation15 + $0x868] sm:$0xff]
        %v7789 = vld [vmem:[#allocation15 + $0x870] sm:$0xff]
        %v7790 = vld [vmem:[#allocation15 + $0x878] sm:$0xff]
        %v7791 = vld [vmem:[#allocation15 + $0x880] sm:$0xff]
        %v7792 = vld [vmem:[#allocation15 + $0x888] sm:$0xff]
        %v7793 = vld [vmem:[#allocation15 + $0x890] sm:$0xff]
        %v7794 = vld [vmem:[#allocation15 + $0x898] sm:$0xff]
        %v7795 = vld [vmem:[#allocation15 + $0x8a0] sm:$0xff]
        %v7796 = vld [vmem:[#allocation15 + $0x8a8] sm:$0xff]
        %v7797 = vld [vmem:[#allocation15 + $0x8b0] sm:$0xff]
        %v7798 = vld [vmem:[#allocation15 + $0x8b8] sm:$0xff]
        %v7799 = vld [vmem:[#allocation15 + $0x8c0] sm:$0xff]
        %v7800 = vld [vmem:[#allocation15 + $0x8c8] sm:$0xff]
        %v7801 = vld [vmem:[#allocation15 + $0x8d0] sm:$0xff]
        %v7802 = vld [vmem:[#allocation15 + $0x8d8] sm:$0xff]
        %v7803 = vld [vmem:[#allocation15 + $0x8e0] sm:$0xff]
        %v7804 = vld [vmem:[#allocation15 + $0x8e8] sm:$0xff]
        %v7805 = vld [vmem:[#allocation15 + $0x8f0] sm:$0xff]
        %v7806 = vld [vmem:[#allocation15 + $0x8f8] sm:$0xff]
        %v7807 = vld [vmem:[#allocation15 + $0x900] sm:$0xff]
        %v7808 = vld [vmem:[#allocation15 + $0x908] sm:$0xff]
        %v7809 = vld [vmem:[#allocation15 + $0x910] sm:$0xff]
        %v7810 = vld [vmem:[#allocation15 + $0x918] sm:$0xff]
        %v7811 = vld [vmem:[#allocation15 + $0x920] sm:$0xff]
        %v7812 = vld [vmem:[#allocation15 + $0x928] sm:$0xff]
        %v7813 = vld [vmem:[#allocation15 + $0x930] sm:$0xff]
        %v7814 = vld [vmem:[#allocation15 + $0x938] sm:$0xff]
        %v7815 = vld [vmem:[#allocation15 + $0x940] sm:$0xff]
        %v7816 = vld [vmem:[#allocation15 + $0x948] sm:$0xff]
        %v7817 = vld [vmem:[#allocation15 + $0x950] sm:$0xff]
        %v7818 = vld [vmem:[#allocation15 + $0x958] sm:$0xff]
        %v7819 = vld [vmem:[#allocation15 + $0x960] sm:$0xff]
        %v7820 = vld [vmem:[#allocation15 + $0x968] sm:$0xff]
        %v7821 = vld [vmem:[#allocation15 + $0x970] sm:$0xff]
        %v7822 = vld [vmem:[#allocation15 + $0x978] sm:$0xff]
        %v7823 = vld [vmem:[#allocation15 + $0x980] sm:$0xff]
        %v7824 = vld [vmem:[#allocation15 + $0x988] sm:$0xff]
        %v7825 = vld [vmem:[#allocation15 + $0x990] sm:$0xff]
        %v7826 = vld [vmem:[#allocation15 + $0x998] sm:$0xff]
        %v7827 = vld [vmem:[#allocation15 + $0x9a0] sm:$0xff]
        %v7828 = vld [vmem:[#allocation15 + $0x9a8] sm:$0xff]
        %v7829 = vld [vmem:[#allocation15 + $0x9b0] sm:$0xff]
        %v7830 = vld [vmem:[#allocation15 + $0x9b8] sm:$0xff]
        %v7831 = vld [vmem:[#allocation15 + $0x9c0] sm:$0xff]
        %v7832 = vld [vmem:[#allocation15 + $0x9c8] sm:$0xff]
        %v7833 = vld [vmem:[#allocation15 + $0x9d0] sm:$0xff]
        %v7834 = vld [vmem:[#allocation15 + $0x9d8] sm:$0xff]
        %v7835 = vld [vmem:[#allocation15 + $0x9e0] sm:$0xff]
        %v7836 = vld [vmem:[#allocation15 + $0x9e8] sm:$0xff]
        %v7837 = vld [vmem:[#allocation15 + $0x9f0] sm:$0xff]
        %v7838 = vld [vmem:[#allocation15 + $0x9f8] sm:$0xff]
        %v7839 = vld [vmem:[#allocation15 + $0xa00] sm:$0xff]
        %v7840 = vld [vmem:[#allocation15 + $0xa08] sm:$0xff]
        %v7841 = vld [vmem:[#allocation15 + $0xa10] sm:$0xff]
        %v7842 = vld [vmem:[#allocation15 + $0xa18] sm:$0xff]
        %v7843 = vld [vmem:[#allocation15 + $0xa20] sm:$0xff]
        %v7844 = vld [vmem:[#allocation15 + $0xa28] sm:$0xff]
        %v7845 = vld [vmem:[#allocation15 + $0xa30] sm:$0xff]
        %v7846 = vld [vmem:[#allocation15 + $0xa38] sm:$0xff]
        %v7847 = vld [vmem:[#allocation15 + $0xa40] sm:$0xff]
        %v7848 = vld [vmem:[#allocation15 + $0xa48] sm:$0xff]
        %v7849 = vld [vmem:[#allocation15 + $0xa50] sm:$0xff]
        %v7850 = vld [vmem:[#allocation15 + $0xa58] sm:$0xff]
        %v7851 = vld [vmem:[#allocation15 + $0xa60] sm:$0xff]
        %v7852 = vld [vmem:[#allocation15 + $0xa68] sm:$0xff]
        %v7853 = vld [vmem:[#allocation15 + $0xa70] sm:$0xff]
        %v7854 = vld [vmem:[#allocation15 + $0xa78] sm:$0xff]
        %v7855 = vld [vmem:[#allocation15 + $0xa80] sm:$0xff]
        %v7856 = vld [vmem:[#allocation15 + $0xa88] sm:$0xff]
        %v7857 = vld [vmem:[#allocation15 + $0xa90] sm:$0xff]
        %v7858 = vld [vmem:[#allocation15 + $0xa98] sm:$0xff]
        %v7859 = vld [vmem:[#allocation15 + $0xaa0] sm:$0xff]
        %v7860 = vld [vmem:[#allocation15 + $0xaa8] sm:$0xff]
        %v7861 = vld [vmem:[#allocation15 + $0xab0] sm:$0xff]
        %v7862 = vld [vmem:[#allocation15 + $0xab8] sm:$0xff]
        %v7863 = vld [vmem:[#allocation15 + $0xac0] sm:$0xff]
        %v7864 = vld [vmem:[#allocation15 + $0xac8] sm:$0xff]
        %v7865 = vld [vmem:[#allocation15 + $0xad0] sm:$0xff]
        %v7866 = vld [vmem:[#allocation15 + $0xad8] sm:$0xff]
        %v7867 = vld [vmem:[#allocation15 + $0xae0] sm:$0xff]
        %v7868 = vld [vmem:[#allocation15 + $0xae8] sm:$0xff]
        %v7869 = vld [vmem:[#allocation15 + $0xaf0] sm:$0xff]
        %v7870 = vld [vmem:[#allocation15 + $0xaf8] sm:$0xff]
        %v7871 = vld [vmem:[#allocation15 + $0xb00] sm:$0xff]
        %v7872 = vld [vmem:[#allocation15 + $0xb08] sm:$0xff]
        %v7873 = vld [vmem:[#allocation15 + $0xb10] sm:$0xff]
        %v7874 = vld [vmem:[#allocation15 + $0xb18] sm:$0xff]
        %v7875 = vld [vmem:[#allocation15 + $0xb20] sm:$0xff]
        %v7876 = vld [vmem:[#allocation15 + $0xb28] sm:$0xff]
        %v7877 = vld [vmem:[#allocation15 + $0xb30] sm:$0xff]
        %v7878 = vld [vmem:[#allocation15 + $0xb38] sm:$0xff]
        %v7879 = vld [vmem:[#allocation15 + $0xb40] sm:$0xff]
        %v7880 = vld [vmem:[#allocation15 + $0xb48] sm:$0xff]
        %v7881 = vld [vmem:[#allocation15 + $0xb50] sm:$0xff]
        %v7882 = vld [vmem:[#allocation15 + $0xb58] sm:$0xff]
        %v7883 = vld [vmem:[#allocation15 + $0xb60] sm:$0xff]
        %v7884 = vld [vmem:[#allocation15 + $0xb68] sm:$0xff]
        %v7885 = vld [vmem:[#allocation15 + $0xb70] sm:$0xff]
        %v7886 = vld [vmem:[#allocation15 + $0xb78] sm:$0xff]
        %v7887 = vld [vmem:[#allocation15 + $0xb80] sm:$0xff]
        %v7888 = vld [vmem:[#allocation15 + $0xb88] sm:$0xff]
        %v7889 = vld [vmem:[#allocation15 + $0xb90] sm:$0xff]
        %v7890 = vld [vmem:[#allocation15 + $0xb98] sm:$0xff]
        %v7891 = vld [vmem:[#allocation15 + $0xba0] sm:$0xff]
        %v7892 = vld [vmem:[#allocation15 + $0xba8] sm:$0xff]
        %v7893 = vld [vmem:[#allocation15 + $0xbb0] sm:$0xff]
        %v7894 = vld [vmem:[#allocation15 + $0xbb8] sm:$0xff]
        %v7895 = vld [vmem:[#allocation15 + $0xbc0] sm:$0xff]
        %v7896 = vld [vmem:[#allocation15 + $0xbc8] sm:$0xff]
        %v7897 = vld [vmem:[#allocation15 + $0xbd0] sm:$0xff]
        %v7898 = vld [vmem:[#allocation15 + $0xbd8] sm:$0xff]
        %v7899 = vld [vmem:[#allocation15 + $0xbe0] sm:$0xff]
        %v7900 = vld [vmem:[#allocation15 + $0xbe8] sm:$0xff]
        %v7901 = vld [vmem:[#allocation15 + $0xbf0] sm:$0xff]
        %v7902 = vld [vmem:[#allocation15 + $0xbf8] sm:$0xff]
        %v7903 = vld [vmem:[#allocation15 + $0xc00] sm:$0xff]
        %v7904 = vld [vmem:[#allocation15 + $0xc08] sm:$0xff]
        %v7905 = vld [vmem:[#allocation15 + $0xc10] sm:$0xff]
        %v7906 = vld [vmem:[#allocation15 + $0xc18] sm:$0xff]
        %v7907 = vld [vmem:[#allocation15 + $0xc20] sm:$0xff]
        %v7908 = vld [vmem:[#allocation15 + $0xc28] sm:$0xff]
        %v7909 = vld [vmem:[#allocation15 + $0xc30] sm:$0xff]
        %v7910 = vld [vmem:[#allocation15 + $0xc38] sm:$0xff]
        %v7911 = vld [vmem:[#allocation15 + $0xc40] sm:$0xff]
        %v7912 = vld [vmem:[#allocation15 + $0xc48] sm:$0xff]
        %v7913 = vld [vmem:[#allocation15 + $0xc50] sm:$0xff]
        %v7914 = vld [vmem:[#allocation15 + $0xc58] sm:$0xff]
        %v7915 = vld [vmem:[#allocation15 + $0xc60] sm:$0xff]
        %v7916 = vld [vmem:[#allocation15 + $0xc68] sm:$0xff]
        %v7917 = vld [vmem:[#allocation15 + $0xc70] sm:$0xff]
        %v7918 = vld [vmem:[#allocation15 + $0xc78] sm:$0xff]
        %v7919 = vld [vmem:[#allocation15 + $0xc80] sm:$0xff]
        %v7920 = vld [vmem:[#allocation15 + $0xc88] sm:$0xff]
        %v7921 = vld [vmem:[#allocation15 + $0xc90] sm:$0xff]
        %v7922 = vld [vmem:[#allocation15 + $0xc98] sm:$0xff]
        %v7923 = vld [vmem:[#allocation15 + $0xca0] sm:$0xff]
        %v7924 = vld [vmem:[#allocation15 + $0xca8] sm:$0xff]
        %v7925 = vld [vmem:[#allocation15 + $0xcb0] sm:$0xff]
        %v7926 = vld [vmem:[#allocation15 + $0xcb8] sm:$0xff]
        %v7927 = vld [vmem:[#allocation15 + $0xcc0] sm:$0xff]
        %v7928 = vld [vmem:[#allocation15 + $0xcc8] sm:$0xff]
        %v7929 = vld [vmem:[#allocation15 + $0xcd0] sm:$0xff]
        %v7930 = vld [vmem:[#allocation15 + $0xcd8] sm:$0xff]
        %v7931 = vld [vmem:[#allocation15 + $0xce0] sm:$0xff]
        %v7932 = vld [vmem:[#allocation15 + $0xce8] sm:$0xff]
        %v7933 = vld [vmem:[#allocation15 + $0xcf0] sm:$0xff]
        %v7934 = vld [vmem:[#allocation15 + $0xcf8] sm:$0xff]
        %v7935 = vld [vmem:[#allocation15 + $0xd00] sm:$0xff]
        %v7936 = vld [vmem:[#allocation15 + $0xd08] sm:$0xff]
        %v7937 = vld [vmem:[#allocation15 + $0xd10] sm:$0xff]
        %v7938 = vld [vmem:[#allocation15 + $0xd18] sm:$0xff]
        %v7939 = vld [vmem:[#allocation15 + $0xd20] sm:$0xff]
        %v7940 = vld [vmem:[#allocation15 + $0xd28] sm:$0xff]
        %v7941 = vld [vmem:[#allocation15 + $0xd30] sm:$0xff]
        %v7942 = vld [vmem:[#allocation15 + $0xd38] sm:$0xff]
        %v7943 = vld [vmem:[#allocation15 + $0xd40] sm:$0xff]
        %v7944 = vld [vmem:[#allocation15 + $0xd48] sm:$0xff]
        %v7945 = vld [vmem:[#allocation15 + $0xd50] sm:$0xff]
        %v7946 = vld [vmem:[#allocation15 + $0xd58] sm:$0xff]
        %v7947 = vld [vmem:[#allocation15 + $0xd60] sm:$0xff]
        %v7948 = vld [vmem:[#allocation15 + $0xd68] sm:$0xff]
        %v7949 = vld [vmem:[#allocation15 + $0xd70] sm:$0xff]
        %v7950 = vld [vmem:[#allocation15 + $0xd78] sm:$0xff]
        %v7951 = vld [vmem:[#allocation15 + $0xd80] sm:$0xff]
        %v7952 = vld [vmem:[#allocation15 + $0xd88] sm:$0xff]
        %v7953 = vld [vmem:[#allocation15 + $0xd90] sm:$0xff]
        %v7954 = vld [vmem:[#allocation15 + $0xd98] sm:$0xff]
        %v7955 = vld [vmem:[#allocation15 + $0xda0] sm:$0xff]
        %v7956 = vld [vmem:[#allocation15 + $0xda8] sm:$0xff]
        %v7957 = vld [vmem:[#allocation15 + $0xdb0] sm:$0xff]
        %v7958 = vld [vmem:[#allocation15 + $0xdb8] sm:$0xff]
        %v7959 = vld [vmem:[#allocation15 + $0xdc0] sm:$0xff]
        %v7960 = vld [vmem:[#allocation15 + $0xdc8] sm:$0xff]
        %v7961 = vld [vmem:[#allocation15 + $0xdd0] sm:$0xff]
        %v7962 = vld [vmem:[#allocation15 + $0xdd8] sm:$0xff]
        %v7963 = vld [vmem:[#allocation15 + $0xde0] sm:$0xff]
        %v7964 = vld [vmem:[#allocation15 + $0xde8] sm:$0xff]
        %v7965 = vld [vmem:[#allocation15 + $0xdf0] sm:$0xff]
        %v7966 = vld [vmem:[#allocation15 + $0xdf8] sm:$0xff]
        %v7967 = vld [vmem:[#allocation15 + $0xe00] sm:$0xff]
        %v7968 = vld [vmem:[#allocation15 + $0xe08] sm:$0xff]
        %v7969 = vld [vmem:[#allocation15 + $0xe10] sm:$0xff]
        %v7970 = vld [vmem:[#allocation15 + $0xe18] sm:$0xff]
        %v7971 = vld [vmem:[#allocation15 + $0xe20] sm:$0xff]
        %v7972 = vld [vmem:[#allocation15 + $0xe28] sm:$0xff]
        %v7973 = vld [vmem:[#allocation15 + $0xe30] sm:$0xff]
        %v7974 = vld [vmem:[#allocation15 + $0xe38] sm:$0xff]
        %v7975 = vld [vmem:[#allocation15 + $0xe40] sm:$0xff]
        %v7976 = vld [vmem:[#allocation15 + $0xe48] sm:$0xff]
        %v7977 = vld [vmem:[#allocation15 + $0xe50] sm:$0xff]
        %v7978 = vld [vmem:[#allocation15 + $0xe58] sm:$0xff]
        %v7979 = vld [vmem:[#allocation15 + $0xe60] sm:$0xff]
        %v7980 = vld [vmem:[#allocation15 + $0xe68] sm:$0xff]
        %v7981 = vld [vmem:[#allocation15 + $0xe70] sm:$0xff]
        %v7982 = vld [vmem:[#allocation15 + $0xe78] sm:$0xff]
        %v7983 = vld [vmem:[#allocation15 + $0xe80] sm:$0xff]
        %v7984 = vld [vmem:[#allocation15 + $0xe88] sm:$0xff]
        %v7985 = vld [vmem:[#allocation15 + $0xe90] sm:$0xff]
        %v7986 = vld [vmem:[#allocation15 + $0xe98] sm:$0xff]
        %v7987 = vld [vmem:[#allocation15 + $0xea0] sm:$0xff]
        %v7988 = vld [vmem:[#allocation15 + $0xea8] sm:$0xff]
        %v7989 = vld [vmem:[#allocation15 + $0xeb0] sm:$0xff]
        %v7990 = vld [vmem:[#allocation15 + $0xeb8] sm:$0xff]
        %v7991 = vld [vmem:[#allocation15 + $0xec0] sm:$0xff]
        %v7992 = vld [vmem:[#allocation15 + $0xec8] sm:$0xff]
        %v7993 = vld [vmem:[#allocation15 + $0xed0] sm:$0xff]
        %v7994 = vld [vmem:[#allocation15 + $0xed8] sm:$0xff]
        %v7995 = vld [vmem:[#allocation15 + $0xee0] sm:$0xff]
        %v7996 = vld [vmem:[#allocation15 + $0xee8] sm:$0xff]
        %v7997 = vld [vmem:[#allocation15 + $0xef0] sm:$0xff]
        %v7998 = vld [vmem:[#allocation15 + $0xef8] sm:$0xff]
        %v7999 = vld [vmem:[#allocation15 + $0xf00] sm:$0xff]
        %v8000 = vld [vmem:[#allocation15 + $0xf08] sm:$0xff]
        %v8001 = vld [vmem:[#allocation15 + $0xf10] sm:$0xff]
        %v8002 = vld [vmem:[#allocation15 + $0xf18] sm:$0xff]
        %v8003 = vld [vmem:[#allocation15 + $0xf20] sm:$0xff]
        %v8004 = vld [vmem:[#allocation15 + $0xf28] sm:$0xff]
        %v8005 = vld [vmem:[#allocation15 + $0xf30] sm:$0xff]
        %v8006 = vld [vmem:[#allocation15 + $0xf38] sm:$0xff]
        %v8007 = vld [vmem:[#allocation15 + $0xf40] sm:$0xff]
        %v8008 = vld [vmem:[#allocation15 + $0xf48] sm:$0xff]
        %v8009 = vld [vmem:[#allocation15 + $0xf50] sm:$0xff]
        %v8010 = vld [vmem:[#allocation15 + $0xf58] sm:$0xff]
        %v8011 = vld [vmem:[#allocation15 + $0xf60] sm:$0xff]
        %v8012 = vld [vmem:[#allocation15 + $0xf68] sm:$0xff]
        %v8013 = vld [vmem:[#allocation15 + $0xf70] sm:$0xff]
        %v8014 = vld [vmem:[#allocation15 + $0xf78] sm:$0xff]
        %v8015 = vld [vmem:[#allocation15 + $0xf80] sm:$0xff]
        %v8016 = vld [vmem:[#allocation15 + $0xf88] sm:$0xff]
        %v8017 = vld [vmem:[#allocation15 + $0xf90] sm:$0xff]
        %v8018 = vld [vmem:[#allocation15 + $0xf98] sm:$0xff]
        %v8019 = vld [vmem:[#allocation15 + $0xfa0] sm:$0xff]
        %v8020 = vld [vmem:[#allocation15 + $0xfa8] sm:$0xff]
        %v8021 = vld [vmem:[#allocation15 + $0xfb0] sm:$0xff]
        %v8022 = vld [vmem:[#allocation15 + $0xfb8] sm:$0xff]
        %v8023 = vld [vmem:[#allocation15 + $0xfc0] sm:$0xff]
        %v8024 = vld [vmem:[#allocation15 + $0xfc8] sm:$0xff]
        %v8025 = vld [vmem:[#allocation15 + $0xfd0] sm:$0xff]
        %v8026 = vld [vmem:[#allocation15 + $0xfd8] sm:$0xff]
        %v8027 = vld [vmem:[#allocation15 + $0xfe0] sm:$0xff]
        %v8028 = vld [vmem:[#allocation15 + $0xfe8] sm:$0xff]
        %v8029 = vld [vmem:[#allocation15 + $0xff0] sm:$0xff]
        %v8030 = vld [vmem:[#allocation15 + $0xff8] sm:$0xff]
        %v8031 = vld [vmem:[#allocation15 + $0x1000] sm:$0xff]
        %v8032 = vld [vmem:[#allocation15 + $0x1008] sm:$0xff]
        %v8033 = vld [vmem:[#allocation15 + $0x1010] sm:$0xff]
        %v8034 = vld [vmem:[#allocation15 + $0x1018] sm:$0xff]
        %v8035 = vld [vmem:[#allocation15 + $0x1020] sm:$0xff]
        %v8036 = vld [vmem:[#allocation15 + $0x1028] sm:$0xff]
        %v8037 = vld [vmem:[#allocation15 + $0x1030] sm:$0xff]
        %v8038 = vld [vmem:[#allocation15 + $0x1038] sm:$0xff]
        %v8039 = vld [vmem:[#allocation15 + $0x1040] sm:$0xff]
        %v8040 = vld [vmem:[#allocation15 + $0x1048] sm:$0xff]
        %v8041 = vld [vmem:[#allocation15 + $0x1050] sm:$0xff]
        %v8042 = vld [vmem:[#allocation15 + $0x1058] sm:$0xff]
        %v8043 = vld [vmem:[#allocation15 + $0x1060] sm:$0xff]
        %v8044 = vld [vmem:[#allocation15 + $0x1068] sm:$0xff]
        %v8045 = vld [vmem:[#allocation15 + $0x1070] sm:$0xff]
        %v8046 = vld [vmem:[#allocation15 + $0x1078] sm:$0xff]
        %v8047 = vld [vmem:[#allocation15 + $0x1080] sm:$0xff]
        %v8048 = vld [vmem:[#allocation15 + $0x1088] sm:$0xff]
        %v8049 = vld [vmem:[#allocation15 + $0x1090] sm:$0xff]
        %v8050 = vld [vmem:[#allocation15 + $0x1098] sm:$0xff]
        %v8051 = vld [vmem:[#allocation15 + $0x10a0] sm:$0xff]
        %v8052 = vld [vmem:[#allocation15 + $0x10a8] sm:$0xff]
        %v8053 = vld [vmem:[#allocation15 + $0x10b0] sm:$0xff]
        %v8054 = vld [vmem:[#allocation15 + $0x10b8] sm:$0xff]
        %v8055 = vld [vmem:[#allocation15 + $0x10c0] sm:$0xff]
        %v8056 = vld [vmem:[#allocation15 + $0x10c8] sm:$0xff]
        %v8057 = vld [vmem:[#allocation15 + $0x10d0] sm:$0xff]
        %v8058 = vld [vmem:[#allocation15 + $0x10d8] sm:$0xff]
        %v8059 = vld [vmem:[#allocation15 + $0x10e0] sm:$0xff]
        %v8060 = vld [vmem:[#allocation15 + $0x10e8] sm:$0xff]
        %v8061 = vld [vmem:[#allocation15 + $0x10f0] sm:$0xff]
        %v8062 = vld [vmem:[#allocation15 + $0x10f8] sm:$0xff]
        %v8063 = vld [vmem:[#allocation15 + $0x1100] sm:$0xff]
        %v8064 = vld [vmem:[#allocation15 + $0x1108] sm:$0xff]
        %v8065 = vld [vmem:[#allocation15 + $0x1110] sm:$0xff]
        %v8066 = vld [vmem:[#allocation15 + $0x1118] sm:$0xff]
        %v8067 = vld [vmem:[#allocation15 + $0x1120] sm:$0xff]
        %v8068 = vld [vmem:[#allocation15 + $0x1128] sm:$0xff]
        %v8069 = vld [vmem:[#allocation15 + $0x1130] sm:$0xff]
        %v8070 = vld [vmem:[#allocation15 + $0x1138] sm:$0xff]
        %v8071 = vld [vmem:[#allocation15 + $0x1140] sm:$0xff]
        %v8072 = vld [vmem:[#allocation15 + $0x1148] sm:$0xff]
        %v8073 = vld [vmem:[#allocation15 + $0x1150] sm:$0xff]
        %v8074 = vld [vmem:[#allocation15 + $0x1158] sm:$0xff]
        %v8075 = vld [vmem:[#allocation15 + $0x1160] sm:$0xff]
        %v8076 = vld [vmem:[#allocation15 + $0x1168] sm:$0xff]
        %v8077 = vld [vmem:[#allocation15 + $0x1170] sm:$0xff]
        %v8078 = vld [vmem:[#allocation15 + $0x1178] sm:$0xff]
        %v8079 = vld [vmem:[#allocation15 + $0x1180] sm:$0xff]
        %v8080 = vld [vmem:[#allocation15 + $0x1188] sm:$0xff]
        %v8081 = vld [vmem:[#allocation15 + $0x1190] sm:$0xff]
        %v8082 = vld [vmem:[#allocation15 + $0x1198] sm:$0xff]
        %v8083 = vld [vmem:[#allocation15 + $0x11a0] sm:$0xff]
        %v8084 = vld [vmem:[#allocation15 + $0x11a8] sm:$0xff]
        %v8085 = vld [vmem:[#allocation15 + $0x11b0] sm:$0xff]
        %v8086 = vld [vmem:[#allocation15 + $0x11b8] sm:$0xff]
        %v8087 = vld [vmem:[#allocation15 + $0x11c0] sm:$0xff]
        %v8088 = vld [vmem:[#allocation15 + $0x11c8] sm:$0xff]
        %v8089 = vld [vmem:[#allocation15 + $0x11d0] sm:$0xff]
        %v8090 = vld [vmem:[#allocation15 + $0x11d8] sm:$0xff]
        %v8091 = vld [vmem:[#allocation15 + $0x11e0] sm:$0xff]
        %v8092 = vld [vmem:[#allocation15 + $0x11e8] sm:$0xff]
        %v8093 = vld [vmem:[#allocation15 + $0x11f0] sm:$0xff]
        %v8094 = vld [vmem:[#allocation15 + $0x11f8] sm:$0xff]
        %v8095 = vld [vmem:[#allocation15 + $0x1200] sm:$0xff]
        %v8096 = vld [vmem:[#allocation15 + $0x1208] sm:$0xff]
        %v8097 = vld [vmem:[#allocation15 + $0x1210] sm:$0xff]
        %v8098 = vld [vmem:[#allocation15 + $0x1218] sm:$0xff]
        %v8099 = vld [vmem:[#allocation15 + $0x1220] sm:$0xff]
        %v8100 = vld [vmem:[#allocation15 + $0x1228] sm:$0xff]
        %v8101 = vld [vmem:[#allocation15 + $0x1230] sm:$0xff]
        %v8102 = vld [vmem:[#allocation15 + $0x1238] sm:$0xff]
        %v8103 = vld [vmem:[#allocation15 + $0x1240] sm:$0xff]
        %v8104 = vld [vmem:[#allocation15 + $0x1248] sm:$0xff]
        %v8105 = vld [vmem:[#allocation15 + $0x1250] sm:$0xff]
        %v8106 = vld [vmem:[#allocation15 + $0x1258] sm:$0xff]
        %v8107 = vld [vmem:[#allocation15 + $0x1260] sm:$0xff]
        %v8108 = vld [vmem:[#allocation15 + $0x1268] sm:$0xff]
        %v8109 = vld [vmem:[#allocation15 + $0x1270] sm:$0xff]
        %v8110 = vld [vmem:[#allocation15 + $0x1278] sm:$0xff]
        %v8111 = vld [vmem:[#allocation15 + $0x1280] sm:$0xff]
        %v8112 = vld [vmem:[#allocation15 + $0x1288] sm:$0xff]
        %v8113 = vld [vmem:[#allocation15 + $0x1290] sm:$0xff]
        %v8114 = vld [vmem:[#allocation15 + $0x1298] sm:$0xff]
        %v8115 = vld [vmem:[#allocation15 + $0x12a0] sm:$0xff]
        %v8116 = vld [vmem:[#allocation15 + $0x12a8] sm:$0xff]
        %v8117 = vld [vmem:[#allocation15 + $0x12b0] sm:$0xff]
        %v8118 = vld [vmem:[#allocation15 + $0x12b8] sm:$0xff]
        %v8119 = vld [vmem:[#allocation15 + $0x12c0] sm:$0xff]
        %v8120 = vld [vmem:[#allocation15 + $0x12c8] sm:$0xff]
        %v8121 = vld [vmem:[#allocation15 + $0x12d0] sm:$0xff]
        %v8122 = vld [vmem:[#allocation15 + $0x12d8] sm:$0xff]
        %v8123 = vld [vmem:[#allocation15 + $0x12e0] sm:$0xff]
        %v8124 = vld [vmem:[#allocation15 + $0x12e8] sm:$0xff]
        %v8125 = vld [vmem:[#allocation15 + $0x12f0] sm:$0xff]
        %v8126 = vld [vmem:[#allocation15 + $0x12f8] sm:$0xff]
        %v8127 = vld [vmem:[#allocation15 + $0x1300] sm:$0xff]
        %v8128 = vld [vmem:[#allocation15 + $0x1308] sm:$0xff]
        %v8129 = vld [vmem:[#allocation15 + $0x1310] sm:$0xff]
        %v8130 = vld [vmem:[#allocation15 + $0x1318] sm:$0xff]
        %v8131 = vld [vmem:[#allocation15 + $0x1320] sm:$0xff]
        %v8132 = vld [vmem:[#allocation15 + $0x1328] sm:$0xff]
        %v8133 = vld [vmem:[#allocation15 + $0x1330] sm:$0xff]
        %v8134 = vld [vmem:[#allocation15 + $0x1338] sm:$0xff]
        %v8135 = vld [vmem:[#allocation15 + $0x1340] sm:$0xff]
        %v8136 = vld [vmem:[#allocation15 + $0x1348] sm:$0xff]
        %v8137 = vld [vmem:[#allocation15 + $0x1350] sm:$0xff]
        %v8138 = vld [vmem:[#allocation15 + $0x1358] sm:$0xff]
        %v8139 = vld [vmem:[#allocation15 + $0x1360] sm:$0xff]
        %v8140 = vld [vmem:[#allocation15 + $0x1368] sm:$0xff]
        %v8141 = vld [vmem:[#allocation15 + $0x1370] sm:$0xff]
        %v8142 = vld [vmem:[#allocation15 + $0x1378] sm:$0xff]
        %v8143 = vld [vmem:[#allocation15 + $0x1380] sm:$0xff]
        %v8144 = vld [vmem:[#allocation15 + $0x1388] sm:$0xff]
        %v8145 = vld [vmem:[#allocation15 + $0x1390] sm:$0xff]
        %v8146 = vld [vmem:[#allocation15 + $0x1398] sm:$0xff]
        %v8147 = vld [vmem:[#allocation15 + $0x13a0] sm:$0xff]
        %v8148 = vld [vmem:[#allocation15 + $0x13a8] sm:$0xff]
        %v8149 = vld [vmem:[#allocation15 + $0x13b0] sm:$0xff]
        %v8150 = vld [vmem:[#allocation15 + $0x13b8] sm:$0xff]
        %v8151 = vld [vmem:[#allocation15 + $0x13c0] sm:$0xff]
        %v8152 = vld [vmem:[#allocation15 + $0x13c8] sm:$0xff]
        %v8153 = vld [vmem:[#allocation15 + $0x13d0] sm:$0xff]
        %v8154 = vld [vmem:[#allocation15 + $0x13d8] sm:$0xff]
        %v8155 = vld [vmem:[#allocation15 + $0x13e0] sm:$0xff]
        %v8156 = vld [vmem:[#allocation15 + $0x13e8] sm:$0xff]
        %v8157 = vld [vmem:[#allocation15 + $0x13f0] sm:$0xff]
        %v8158 = vld [vmem:[#allocation15 + $0x13f8] sm:$0xff]
        %v8159 = vld [vmem:[#allocation15 + $0x1400] sm:$0xff]
        %v8160 = vld [vmem:[#allocation15 + $0x1408] sm:$0xff]
        %v8161 = vld [vmem:[#allocation15 + $0x1410] sm:$0xff]
        %v8162 = vld [vmem:[#allocation15 + $0x1418] sm:$0xff]
        %v8163 = vld [vmem:[#allocation15 + $0x1420] sm:$0xff]
        %v8164 = vld [vmem:[#allocation15 + $0x1428] sm:$0xff]
        %v8165 = vld [vmem:[#allocation15 + $0x1430] sm:$0xff]
        %v8166 = vld [vmem:[#allocation15 + $0x1438] sm:$0xff]
        %v8167 = vld [vmem:[#allocation15 + $0x1440] sm:$0xff]
        %v8168 = vld [vmem:[#allocation15 + $0x1448] sm:$0xff]
        %v8169 = vld [vmem:[#allocation15 + $0x1450] sm:$0xff]
        %v8170 = vld [vmem:[#allocation15 + $0x1458] sm:$0xff]
        %v8171 = vld [vmem:[#allocation15 + $0x1460] sm:$0xff]
        %v8172 = vld [vmem:[#allocation15 + $0x1468] sm:$0xff]
        %v8173 = vld [vmem:[#allocation15 + $0x1470] sm:$0xff]
        %v8174 = vld [vmem:[#allocation15 + $0x1478] sm:$0xff]
        %v8175 = vld [vmem:[#allocation15 + $0x1480] sm:$0xff]
        %v8176 = vld [vmem:[#allocation15 + $0x1488] sm:$0xff]
        %v8177 = vld [vmem:[#allocation15 + $0x1490] sm:$0xff]
        %v8178 = vld [vmem:[#allocation15 + $0x1498] sm:$0xff]
        %v8179 = vld [vmem:[#allocation15 + $0x14a0] sm:$0xff]
        %v8180 = vld [vmem:[#allocation15 + $0x14a8] sm:$0xff]
        %v8181 = vld [vmem:[#allocation15 + $0x14b0] sm:$0xff]
        %v8182 = vld [vmem:[#allocation15 + $0x14b8] sm:$0xff]
        %v8183 = vld [vmem:[#allocation15 + $0x14c0] sm:$0xff]
        %v8184 = vld [vmem:[#allocation15 + $0x14c8] sm:$0xff]
        %v8185 = vld [vmem:[#allocation15 + $0x14d0] sm:$0xff]
        %v8186 = vld [vmem:[#allocation15 + $0x14d8] sm:$0xff]
        %v8187 = vld [vmem:[#allocation15 + $0x14e0] sm:$0xff]
        %v8188 = vld [vmem:[#allocation15 + $0x14e8] sm:$0xff]
        %v8189 = vld [vmem:[#allocation15 + $0x14f0] sm:$0xff]
        %v8190 = vld [vmem:[#allocation15 + $0x14f8] sm:$0xff]
        %v8191 = vld [vmem:[#allocation15 + $0x1500] sm:$0xff]
        %v8192 = vld [vmem:[#allocation15 + $0x1508] sm:$0xff]
        %v8193 = vld [vmem:[#allocation15 + $0x1510] sm:$0xff]
        %v8194 = vld [vmem:[#allocation15 + $0x1518] sm:$0xff]
        %v8195 = vld [vmem:[#allocation15 + $0x1520] sm:$0xff]
        %v8196 = vld [vmem:[#allocation15 + $0x1528] sm:$0xff]
        %v8197 = vld [vmem:[#allocation15 + $0x1530] sm:$0xff]
        %v8198 = vld [vmem:[#allocation15 + $0x1538] sm:$0xff]
        %v8199 = vld [vmem:[#allocation15 + $0x1540] sm:$0xff]
        %v8200 = vld [vmem:[#allocation15 + $0x1548] sm:$0xff]
        %v8201 = vld [vmem:[#allocation15 + $0x1550] sm:$0xff]
        %v8202 = vld [vmem:[#allocation15 + $0x1558] sm:$0xff]
        %v8203 = vld [vmem:[#allocation15 + $0x1560] sm:$0xff]
        %v8204 = vld [vmem:[#allocation15 + $0x1568] sm:$0xff]
        %v8205 = vld [vmem:[#allocation15 + $0x1570] sm:$0xff]
        %v8206 = vld [vmem:[#allocation15 + $0x1578] sm:$0xff]
        %v8207 = vld [vmem:[#allocation15 + $0x1580] sm:$0xff]
        %v8208 = vld [vmem:[#allocation15 + $0x1588] sm:$0xff]
        %v8209 = vld [vmem:[#allocation15 + $0x1590] sm:$0xff]
        %v8210 = vld [vmem:[#allocation15 + $0x1598] sm:$0xff]
        %v8211 = vld [vmem:[#allocation15 + $0x15a0] sm:$0xff]
        %v8212 = vld [vmem:[#allocation15 + $0x15a8] sm:$0xff]
        %v8213 = vld [vmem:[#allocation15 + $0x15b0] sm:$0xff]
        %v8214 = vld [vmem:[#allocation15 + $0x15b8] sm:$0xff]
        %v8215 = vld [vmem:[#allocation15 + $0x15c0] sm:$0xff]
        %v8216 = vld [vmem:[#allocation15 + $0x15c8] sm:$0xff]
        %v8217 = vld [vmem:[#allocation15 + $0x15d0] sm:$0xff]
        %v8218 = vld [vmem:[#allocation15 + $0x15d8] sm:$0xff]
        %v8219 = vld [vmem:[#allocation15 + $0x15e0] sm:$0xff]
        %v8220 = vld [vmem:[#allocation15 + $0x15e8] sm:$0xff]
        %v8221 = vld [vmem:[#allocation15 + $0x15f0] sm:$0xff]
        %v8222 = vld [vmem:[#allocation15 + $0x15f8] sm:$0xff]
        %v8223 = vld [vmem:[#allocation27] sm:$0xff]
        %v8224 = vld [vmem:[#allocation27 + $0x8] sm:$0xff]
        %v8225 = vld [vmem:[#allocation27 + $0x10] sm:$0x3f]
        %v8229 = vlaneseq
        %v8230 = vshrl.u32 %v8229, 7
        %v8231 = vsub.s32 0, %v8230
        %v8232 = vrot.slane %v8223, %v8231
        %v8233 = vlaneseq
        %v8234 = vshrl.u32 %v8233, 7
        %v8235 = vsub.s32 1, %v8234
        %v8236 = vrot.slane %v8223, %v8235
        %v8237 = vlaneseq
        %v8238 = vshrl.u32 %v8237, 7
        %v8239 = vsub.s32 2, %v8238
        %v8240 = vrot.slane %v8223, %v8239
        %v8241 = vlaneseq
        %v8242 = vshrl.u32 %v8241, 7
        %v8243 = vsub.s32 3, %v8242
        %v8244 = vrot.slane %v8223, %v8243
        %v8245 = vlaneseq
        %v8246 = vshrl.u32 %v8245, 7
        %v8247 = vsub.s32 4, %v8246
        %v8248 = vrot.slane %v8223, %v8247
        %v8249 = vlaneseq
        %v8250 = vshrl.u32 %v8249, 7
        %v8251 = vsub.s32 5, %v8250
        %v8252 = vrot.slane %v8223, %v8251
        %v8253 = vlaneseq
        %v8254 = vshrl.u32 %v8253, 7
        %v8255 = vsub.s32 6, %v8254
        %v8256 = vrot.slane %v8223, %v8255
        %v8257 = vlaneseq
        %v8258 = vshrl.u32 %v8257, 7
        %v8259 = vsub.s32 7, %v8258
        %v8260 = vrot.slane %v8223, %v8259
        %v8261 = vlaneseq
        %v8262 = vshrl.u32 %v8261, 7
        %v8263 = vsub.s32 0, %v8262
        %v8264 = vrot.slane %v8224, %v8263
        %v8265 = vlaneseq
        %v8266 = vshrl.u32 %v8265, 7
        %v8267 = vsub.s32 1, %v8266
        %v8268 = vrot.slane %v8224, %v8267
        %v8269 = vlaneseq
        %v8270 = vshrl.u32 %v8269, 7
        %v8271 = vsub.s32 2, %v8270
        %v8272 = vrot.slane %v8224, %v8271
        %v8273 = vlaneseq
        %v8274 = vshrl.u32 %v8273, 7
        %v8275 = vsub.s32 3, %v8274
        %v8276 = vrot.slane %v8224, %v8275
        %v8277 = vlaneseq
        %v8278 = vshrl.u32 %v8277, 7
        %v8279 = vsub.s32 4, %v8278
        %v8280 = vrot.slane %v8224, %v8279
        %v8281 = vlaneseq
        %v8282 = vshrl.u32 %v8281, 7
        %v8283 = vsub.s32 5, %v8282
        %v8284 = vrot.slane %v8224, %v8283
        %v8285 = vlaneseq
        %v8286 = vshrl.u32 %v8285, 7
        %v8287 = vsub.s32 6, %v8286
        %v8288 = vrot.slane %v8224, %v8287
        %v8289 = vlaneseq
        %v8290 = vshrl.u32 %v8289, 7
        %v8291 = vsub.s32 7, %v8290
        %v8292 = vrot.slane %v8224, %v8291
        %v8293 = vlaneseq
        %v8294 = vshrl.u32 %v8293, 7
        %v8295 = vsub.s32 0, %v8294
        %v8296 = vrot.slane %v8225, %v8295
        %v8297 = vlaneseq
        %v8298 = vshrl.u32 %v8297, 7
        %v8299 = vsub.s32 1, %v8298
        %v8300 = vrot.slane %v8225, %v8299
        %v8301 = vlaneseq
        %v8302 = vshrl.u32 %v8301, 7
        %v8303 = vsub.s32 2, %v8302
        %v8304 = vrot.slane %v8225, %v8303
        %v8305 = vlaneseq
        %v8306 = vshrl.u32 %v8305, 7
        %v8307 = vsub.s32 3, %v8306
        %v8308 = vrot.slane %v8225, %v8307
        %v8309 = vlaneseq
        %v8310 = vshrl.u32 %v8309, 7
        %v8311 = vsub.s32 4, %v8310
        %v8312 = vrot.slane %v8225, %v8311
        %v8313 = vlaneseq
        %v8314 = vshrl.u32 %v8313, 7
        %v8315 = vsub.s32 5, %v8314
        %v8316 = vrot.slane %v8225, %v8315
        %v9043 = vunpack.c.l.b16 %v7519
        %v9044 = vunpack.c.h.b16 %v7519
        %v9045 = vunpack.c.l.b16 %v7520
        %v9046 = vunpack.c.h.b16 %v7520
        %v9047 = vunpack.c.l.b16 %v7521
        %v9048 = vunpack.c.h.b16 %v7521
        %v9049 = vunpack.c.l.b16 %v7522
        %v9050 = vunpack.c.h.b16 %v7522
        %v9051 = vunpack.c.l.b16 %v7523
        %v9052 = vunpack.c.h.b16 %v7523
        %v9053 = vunpack.c.l.b16 %v7524
        %v9054 = vunpack.c.h.b16 %v7524
        %v9055 = vunpack.c.l.b16 %v7525
        %v9056 = vunpack.c.h.b16 %v7525
        %v9057 = vunpack.c.l.b16 %v7526
        %v9058 = vunpack.c.h.b16 %v7526
        %v9059 = vunpack.c.l.b16 %v7527
        %v9060 = vunpack.c.h.b16 %v7527
        %v9061 = vunpack.c.l.b16 %v7528
        %v9062 = vunpack.c.h.b16 %v7528
        %v9063 = vunpack.c.l.b16 %v7529
        %v9064 = vunpack.c.h.b16 %v7529
        %v9065 = vunpack.c.l.b16 %v7530
        %v9066 = vunpack.c.h.b16 %v7530
        %v9067 = vunpack.c.l.b16 %v7531
        %v9068 = vunpack.c.h.b16 %v7531
        %v9069 = vunpack.c.l.b16 %v7532
        %v9070 = vunpack.c.h.b16 %v7532
        %v9071 = vunpack.c.l.b16 %v7533
        %v9072 = vunpack.c.h.b16 %v7533
        %v9073 = vunpack.c.l.b16 %v7534
        %v9074 = vunpack.c.h.b16 %v7534
        %v9075 = vunpack.c.l.b16 %v7535
        %v9076 = vunpack.c.h.b16 %v7535
        %v9077 = vunpack.c.l.b16 %v7536
        %v9078 = vunpack.c.h.b16 %v7536
        %v9079 = vunpack.c.l.b16 %v7537
        %v9080 = vunpack.c.h.b16 %v7537
        %v9081 = vunpack.c.l.b16 %v7538
        %v9082 = vunpack.c.h.b16 %v7538
        %v9083 = vunpack.c.l.b16 %v7539
        %v9084 = vunpack.c.h.b16 %v7539
        %v9085 = vunpack.c.l.b16 %v7540
        %v9086 = vunpack.c.h.b16 %v7540
        %v9087 = vunpack.c.l.b16 %v7541
        %v9088 = vunpack.c.h.b16 %v7541
        %v9089 = vunpack.c.l.b16 %v7542
        %v9090 = vunpack.c.h.b16 %v7542
        %v9091 = vunpack.c.l.b16 %v7543
        %v9092 = vunpack.c.h.b16 %v7543
        %v9093 = vunpack.c.l.b16 %v7544
        %v9094 = vunpack.c.h.b16 %v7544
        %v9095 = vunpack.c.l.b16 %v7545
        %v9096 = vunpack.c.h.b16 %v7545
        %v9097 = vunpack.c.l.b16 %v7546
        %v9098 = vunpack.c.h.b16 %v7546
        %v9099 = vunpack.c.l.b16 %v7547
        %v9100 = vunpack.c.h.b16 %v7547
        %v9101 = vunpack.c.l.b16 %v7548
        %v9102 = vunpack.c.h.b16 %v7548
        %v9103 = vunpack.c.l.b16 %v7549
        %v9104 = vunpack.c.h.b16 %v7549
        %v9105 = vunpack.c.l.b16 %v7550
        %v9106 = vunpack.c.h.b16 %v7550
        %v9107 = vunpack.c.l.b16 %v7551
        %v9108 = vunpack.c.h.b16 %v7551
        %v9109 = vunpack.c.l.b16 %v7552
        %v9110 = vunpack.c.h.b16 %v7552
        %v9111 = vunpack.c.l.b16 %v7553
        %v9112 = vunpack.c.h.b16 %v7553
        %v9113 = vunpack.c.l.b16 %v7554
        %v9114 = vunpack.c.h.b16 %v7554
        %v9115 = vunpack.c.l.b16 %v7555
        %v9116 = vunpack.c.h.b16 %v7555
        %v9117 = vunpack.c.l.b16 %v7556
        %v9118 = vunpack.c.h.b16 %v7556
        %v9119 = vunpack.c.l.b16 %v7557
        %v9120 = vunpack.c.h.b16 %v7557
        %v9121 = vunpack.c.l.b16 %v7558
        %v9122 = vunpack.c.h.b16 %v7558
        %v9123 = vunpack.c.l.b16 %v7559
        %v9124 = vunpack.c.h.b16 %v7559
        %v9125 = vunpack.c.l.b16 %v7560
        %v9126 = vunpack.c.h.b16 %v7560
        %v9127 = vunpack.c.l.b16 %v7561
        %v9128 = vunpack.c.h.b16 %v7561
        %v9129 = vunpack.c.l.b16 %v7562
        %v9130 = vunpack.c.h.b16 %v7562
        %v9131 = vunpack.c.l.b16 %v7563
        %v9132 = vunpack.c.h.b16 %v7563
        %v9133 = vunpack.c.l.b16 %v7564
        %v9134 = vunpack.c.h.b16 %v7564
        %v9135 = vunpack.c.l.b16 %v7565
        %v9136 = vunpack.c.h.b16 %v7565
        %v9137 = vunpack.c.l.b16 %v7566
        %v9138 = vunpack.c.h.b16 %v7566
        %v9139 = vunpack.c.l.b16 %v7567
        %v9140 = vunpack.c.h.b16 %v7567
        %v9141 = vunpack.c.l.b16 %v7568
        %v9142 = vunpack.c.h.b16 %v7568
        %v9143 = vunpack.c.l.b16 %v7569
        %v9144 = vunpack.c.h.b16 %v7569
        %v9145 = vunpack.c.l.b16 %v7570
        %v9146 = vunpack.c.h.b16 %v7570
        %v9147 = vunpack.c.l.b16 %v7571
        %v9148 = vunpack.c.h.b16 %v7571
        %v9149 = vunpack.c.l.b16 %v7572
        %v9150 = vunpack.c.h.b16 %v7572
        %v9151 = vunpack.c.l.b16 %v7573
        %v9152 = vunpack.c.h.b16 %v7573
        %v9153 = vunpack.c.l.b16 %v7574
        %v9154 = vunpack.c.h.b16 %v7574
        %v9155 = vunpack.c.l.b16 %v7575
        %v9156 = vunpack.c.h.b16 %v7575
        %v9157 = vunpack.c.l.b16 %v7576
        %v9158 = vunpack.c.h.b16 %v7576
        %v9159 = vunpack.c.l.b16 %v7577
        %v9160 = vunpack.c.h.b16 %v7577
        %v9161 = vunpack.c.l.b16 %v7578
        %v9162 = vunpack.c.h.b16 %v7578
        %v9163 = vunpack.c.l.b16 %v7579
        %v9164 = vunpack.c.h.b16 %v7579
        %v9165 = vunpack.c.l.b16 %v7580
        %v9166 = vunpack.c.h.b16 %v7580
        %v9167 = vunpack.c.l.b16 %v7581
        %v9168 = vunpack.c.h.b16 %v7581
        %v9169 = vunpack.c.l.b16 %v7582
        %v9170 = vunpack.c.h.b16 %v7582
        %v9171 = vunpack.c.l.b16 %v7583
        %v9172 = vunpack.c.h.b16 %v7583
        %v9173 = vunpack.c.l.b16 %v7584
        %v9174 = vunpack.c.h.b16 %v7584
        %v9175 = vunpack.c.l.b16 %v7585
        %v9176 = vunpack.c.h.b16 %v7585
        %v9177 = vunpack.c.l.b16 %v7586
        %v9178 = vunpack.c.h.b16 %v7586
        %v9179 = vunpack.c.l.b16 %v7587
        %v9180 = vunpack.c.h.b16 %v7587
        %v9181 = vunpack.c.l.b16 %v7588
        %v9182 = vunpack.c.h.b16 %v7588
        %v9183 = vunpack.c.l.b16 %v7589
        %v9184 = vunpack.c.h.b16 %v7589
        %v9185 = vunpack.c.l.b16 %v7590
        %v9186 = vunpack.c.h.b16 %v7590
        %v9187 = vunpack.c.l.b16 %v7591
        %v9188 = vunpack.c.h.b16 %v7591
        %v9189 = vunpack.c.l.b16 %v7592
        %v9190 = vunpack.c.h.b16 %v7592
        %v9191 = vunpack.c.l.b16 %v7593
        %v9192 = vunpack.c.h.b16 %v7593
        %v9193 = vunpack.c.l.b16 %v7594
        %v9194 = vunpack.c.h.b16 %v7594
        %v9195 = vunpack.c.l.b16 %v7595
        %v9196 = vunpack.c.h.b16 %v7595
        %v9197 = vunpack.c.l.b16 %v7596
        %v9198 = vunpack.c.h.b16 %v7596
        %v9199 = vunpack.c.l.b16 %v7597
        %v9200 = vunpack.c.h.b16 %v7597
        %v9201 = vunpack.c.l.b16 %v7598
        %v9202 = vunpack.c.h.b16 %v7598
        %v9203 = vunpack.c.l.b16 %v7599
        %v9204 = vunpack.c.h.b16 %v7599
        %v9205 = vunpack.c.l.b16 %v7600
        %v9206 = vunpack.c.h.b16 %v7600
        %v9207 = vunpack.c.l.b16 %v7601
        %v9208 = vunpack.c.h.b16 %v7601
        %v9209 = vunpack.c.l.b16 %v7602
        %v9210 = vunpack.c.h.b16 %v7602
        %v9211 = vunpack.c.l.b16 %v7603
        %v9212 = vunpack.c.h.b16 %v7603
        %v9213 = vunpack.c.l.b16 %v7604
        %v9214 = vunpack.c.h.b16 %v7604
        %v9215 = vunpack.c.l.b16 %v7605
        %v9216 = vunpack.c.h.b16 %v7605
        %v9217 = vunpack.c.l.b16 %v7606
        %v9218 = vunpack.c.h.b16 %v7606
        %v9219 = vunpack.c.l.b16 %v7607
        %v9220 = vunpack.c.h.b16 %v7607
        %v9221 = vunpack.c.l.b16 %v7608
        %v9222 = vunpack.c.h.b16 %v7608
        %v9223 = vunpack.c.l.b16 %v7609
        %v9224 = vunpack.c.h.b16 %v7609
        %v9225 = vunpack.c.l.b16 %v7610
        %v9226 = vunpack.c.h.b16 %v7610
        %v9227 = vunpack.c.l.b16 %v7611
        %v9228 = vunpack.c.h.b16 %v7611
        %v9229 = vunpack.c.l.b16 %v7612
        %v9230 = vunpack.c.h.b16 %v7612
        %v9231 = vunpack.c.l.b16 %v7613
        %v9232 = vunpack.c.h.b16 %v7613
        %v9233 = vunpack.c.l.b16 %v7614
        %v9234 = vunpack.c.h.b16 %v7614
        %v9235 = vunpack.c.l.b16 %v7615
        %v9236 = vunpack.c.h.b16 %v7615
        %v9237 = vunpack.c.l.b16 %v7616
        %v9238 = vunpack.c.h.b16 %v7616
        %v9239 = vunpack.c.l.b16 %v7617
        %v9240 = vunpack.c.h.b16 %v7617
        %v9241 = vunpack.c.l.b16 %v7618
        %v9242 = vunpack.c.h.b16 %v7618
        %v9243 = vunpack.c.l.b16 %v7619
        %v9244 = vunpack.c.h.b16 %v7619
        %v9245 = vunpack.c.l.b16 %v7620
        %v9246 = vunpack.c.h.b16 %v7620
        %v9247 = vunpack.c.l.b16 %v7621
        %v9248 = vunpack.c.h.b16 %v7621
        %v9249 = vunpack.c.l.b16 %v7622
        %v9250 = vunpack.c.h.b16 %v7622
        %v9251 = vunpack.c.l.b16 %v7623
        %v9252 = vunpack.c.h.b16 %v7623
        %v9253 = vunpack.c.l.b16 %v7624
        %v9254 = vunpack.c.h.b16 %v7624
        %v9255 = vunpack.c.l.b16 %v7625
        %v9256 = vunpack.c.h.b16 %v7625
        %v9257 = vunpack.c.l.b16 %v7626
        %v9258 = vunpack.c.h.b16 %v7626
        %v9259 = vunpack.c.l.b16 %v7627
        %v9260 = vunpack.c.h.b16 %v7627
        %v9261 = vunpack.c.l.b16 %v7628
        %v9262 = vunpack.c.h.b16 %v7628
        %v9263 = vunpack.c.l.b16 %v7629
        %v9264 = vunpack.c.h.b16 %v7629
        %v9265 = vunpack.c.l.b16 %v7630
        %v9266 = vunpack.c.h.b16 %v7630
        %v9267 = vunpack.c.l.b16 %v7631
        %v9268 = vunpack.c.h.b16 %v7631
        %v9269 = vunpack.c.l.b16 %v7632
        %v9270 = vunpack.c.h.b16 %v7632
        %v9271 = vunpack.c.l.b16 %v7633
        %v9272 = vunpack.c.h.b16 %v7633
        %v9273 = vunpack.c.l.b16 %v7634
        %v9274 = vunpack.c.h.b16 %v7634
        %v9275 = vunpack.c.l.b16 %v7635
        %v9276 = vunpack.c.h.b16 %v7635
        %v9277 = vunpack.c.l.b16 %v7636
        %v9278 = vunpack.c.h.b16 %v7636
        %v9279 = vunpack.c.l.b16 %v7637
        %v9280 = vunpack.c.h.b16 %v7637
        %v9281 = vunpack.c.l.b16 %v7638
        %v9282 = vunpack.c.h.b16 %v7638
        %v9283 = vunpack.c.l.b16 %v7639
        %v9284 = vunpack.c.h.b16 %v7639
        %v9285 = vunpack.c.l.b16 %v7640
        %v9286 = vunpack.c.h.b16 %v7640
        %v9287 = vunpack.c.l.b16 %v7641
        %v9288 = vunpack.c.h.b16 %v7641
        %v9289 = vunpack.c.l.b16 %v7642
        %v9290 = vunpack.c.h.b16 %v7642
        %v9291 = vunpack.c.l.b16 %v7643
        %v9292 = vunpack.c.h.b16 %v7643
        %v9293 = vunpack.c.l.b16 %v7644
        %v9294 = vunpack.c.h.b16 %v7644
        %v9295 = vunpack.c.l.b16 %v7645
        %v9296 = vunpack.c.h.b16 %v7645
        %v9297 = vunpack.c.l.b16 %v7646
        %v9298 = vunpack.c.h.b16 %v7646
        %v9299 = vunpack.c.l.b16 %v7647
        %v9300 = vunpack.c.h.b16 %v7647
        %v9301 = vunpack.c.l.b16 %v7648
        %v9302 = vunpack.c.h.b16 %v7648
        %v9303 = vunpack.c.l.b16 %v7649
        %v9304 = vunpack.c.h.b16 %v7649
        %v9305 = vunpack.c.l.b16 %v7650
        %v9306 = vunpack.c.h.b16 %v7650
        %v9307 = vunpack.c.l.b16 %v7651
        %v9308 = vunpack.c.h.b16 %v7651
        %v9309 = vunpack.c.l.b16 %v7652
        %v9310 = vunpack.c.h.b16 %v7652
        %v9311 = vunpack.c.l.b16 %v7653
        %v9312 = vunpack.c.h.b16 %v7653
        %v9313 = vunpack.c.l.b16 %v7654
        %v9314 = vunpack.c.h.b16 %v7654
        %v9315 = vunpack.c.l.b16 %v7655
        %v9316 = vunpack.c.h.b16 %v7655
        %v9317 = vunpack.c.l.b16 %v7656
        %v9318 = vunpack.c.h.b16 %v7656
        %v9319 = vunpack.c.l.b16 %v7657
        %v9320 = vunpack.c.h.b16 %v7657
        %v9321 = vunpack.c.l.b16 %v7658
        %v9322 = vunpack.c.h.b16 %v7658
        %v9323 = vunpack.c.l.b16 %v7659
        %v9324 = vunpack.c.h.b16 %v7659
        %v9325 = vunpack.c.l.b16 %v7660
        %v9326 = vunpack.c.h.b16 %v7660
        %v9327 = vunpack.c.l.b16 %v7661
        %v9328 = vunpack.c.h.b16 %v7661
        %v9329 = vunpack.c.l.b16 %v7662
        %v9330 = vunpack.c.h.b16 %v7662
        %v9331 = vunpack.c.l.b16 %v7663
        %v9332 = vunpack.c.h.b16 %v7663
        %v9333 = vunpack.c.l.b16 %v7664
        %v9334 = vunpack.c.h.b16 %v7664
        %v9335 = vunpack.c.l.b16 %v7665
        %v9336 = vunpack.c.h.b16 %v7665
        %v9337 = vunpack.c.l.b16 %v7666
        %v9338 = vunpack.c.h.b16 %v7666
        %v9339 = vunpack.c.l.b16 %v7667
        %v9340 = vunpack.c.h.b16 %v7667
        %v9341 = vunpack.c.l.b16 %v7668
        %v9342 = vunpack.c.h.b16 %v7668
        %v9343 = vunpack.c.l.b16 %v7669
        %v9344 = vunpack.c.h.b16 %v7669
        %v9345 = vunpack.c.l.b16 %v7670
        %v9346 = vunpack.c.h.b16 %v7670
        %v9347 = vunpack.c.l.b16 %v7671
        %v9348 = vunpack.c.h.b16 %v7671
        %v9349 = vunpack.c.l.b16 %v7672
        %v9350 = vunpack.c.h.b16 %v7672
        %v9351 = vunpack.c.l.b16 %v7673
        %v9352 = vunpack.c.h.b16 %v7673
        %v9353 = vunpack.c.l.b16 %v7674
        %v9354 = vunpack.c.h.b16 %v7674
        %v9355 = vunpack.c.l.b16 %v7675
        %v9356 = vunpack.c.h.b16 %v7675
        %v9357 = vunpack.c.l.b16 %v7676
        %v9358 = vunpack.c.h.b16 %v7676
        %v9359 = vunpack.c.l.b16 %v7677
        %v9360 = vunpack.c.h.b16 %v7677
        %v9361 = vunpack.c.l.b16 %v7678
        %v9362 = vunpack.c.h.b16 %v7678
        %v9363 = vunpack.c.l.b16 %v7679
        %v9364 = vunpack.c.h.b16 %v7679
        %v9365 = vunpack.c.l.b16 %v7680
        %v9366 = vunpack.c.h.b16 %v7680
        %v9367 = vunpack.c.l.b16 %v7681
        %v9368 = vunpack.c.h.b16 %v7681
        %v9369 = vunpack.c.l.b16 %v7682
        %v9370 = vunpack.c.h.b16 %v7682
        %v9371 = vunpack.c.l.b16 %v7683
        %v9372 = vunpack.c.h.b16 %v7683
        %v9373 = vunpack.c.l.b16 %v7684
        %v9374 = vunpack.c.h.b16 %v7684
        %v9375 = vunpack.c.l.b16 %v7685
        %v9376 = vunpack.c.h.b16 %v7685
        %v9377 = vunpack.c.l.b16 %v7686
        %v9378 = vunpack.c.h.b16 %v7686
        %v9379 = vunpack.c.l.b16 %v7687
        %v9380 = vunpack.c.h.b16 %v7687
        %v9381 = vunpack.c.l.b16 %v7688
        %v9382 = vunpack.c.h.b16 %v7688
        %v9383 = vunpack.c.l.b16 %v7689
        %v9384 = vunpack.c.h.b16 %v7689
        %v9385 = vunpack.c.l.b16 %v7690
        %v9386 = vunpack.c.h.b16 %v7690
        %v9387 = vunpack.c.l.b16 %v7691
        %v9388 = vunpack.c.h.b16 %v7691
        %v9389 = vunpack.c.l.b16 %v7692
        %v9390 = vunpack.c.h.b16 %v7692
        %v9391 = vunpack.c.l.b16 %v7693
        %v9392 = vunpack.c.h.b16 %v7693
        %v9393 = vunpack.c.l.b16 %v7694
        %v9394 = vunpack.c.h.b16 %v7694
        %v9395 = vunpack.c.l.b16 %v7695
        %v9396 = vunpack.c.h.b16 %v7695
        %v9397 = vunpack.c.l.b16 %v7696
        %v9398 = vunpack.c.h.b16 %v7696
        %v9399 = vunpack.c.l.b16 %v7697
        %v9400 = vunpack.c.h.b16 %v7697
        %v9401 = vunpack.c.l.b16 %v7698
        %v9402 = vunpack.c.h.b16 %v7698
        %v9403 = vunpack.c.l.b16 %v7699
        %v9404 = vunpack.c.h.b16 %v7699
        %v9405 = vunpack.c.l.b16 %v7700
        %v9406 = vunpack.c.h.b16 %v7700
        %v9407 = vunpack.c.l.b16 %v7701
        %v9408 = vunpack.c.h.b16 %v7701
        %v9409 = vunpack.c.l.b16 %v7702
        %v9410 = vunpack.c.h.b16 %v7702
        %v9411 = vunpack.c.l.b16 %v7703
        %v9412 = vunpack.c.h.b16 %v7703
        %v9413 = vunpack.c.l.b16 %v7704
        %v9414 = vunpack.c.h.b16 %v7704
        %v9415 = vunpack.c.l.b16 %v7705
        %v9416 = vunpack.c.h.b16 %v7705
        %v9417 = vunpack.c.l.b16 %v7706
        %v9418 = vunpack.c.h.b16 %v7706
        %v9419 = vunpack.c.l.b16 %v7707
        %v9420 = vunpack.c.h.b16 %v7707
        %v9421 = vunpack.c.l.b16 %v7708
        %v9422 = vunpack.c.h.b16 %v7708
        %v9423 = vunpack.c.l.b16 %v7709
        %v9424 = vunpack.c.h.b16 %v7709
        %v9425 = vunpack.c.l.b16 %v7710
        %v9426 = vunpack.c.h.b16 %v7710
        %v9427 = vunpack.c.l.b16 %v7711
        %v9428 = vunpack.c.h.b16 %v7711
        %v9429 = vunpack.c.l.b16 %v7712
        %v9430 = vunpack.c.h.b16 %v7712
        %v9431 = vunpack.c.l.b16 %v7713
        %v9432 = vunpack.c.h.b16 %v7713
        %v9433 = vunpack.c.l.b16 %v7714
        %v9434 = vunpack.c.h.b16 %v7714
        %v9435 = vunpack.c.l.b16 %v7715
        %v9436 = vunpack.c.h.b16 %v7715
        %v9437 = vunpack.c.l.b16 %v7716
        %v9438 = vunpack.c.h.b16 %v7716
        %v9439 = vunpack.c.l.b16 %v7717
        %v9440 = vunpack.c.h.b16 %v7717
        %v9441 = vunpack.c.l.b16 %v7718
        %v9442 = vunpack.c.h.b16 %v7718
        %v9443 = vunpack.c.l.b16 %v7719
        %v9444 = vunpack.c.h.b16 %v7719
        %v9445 = vunpack.c.l.b16 %v7720
        %v9446 = vunpack.c.h.b16 %v7720
        %v9447 = vunpack.c.l.b16 %v7721
        %v9448 = vunpack.c.h.b16 %v7721
        %v9449 = vunpack.c.l.b16 %v7722
        %v9450 = vunpack.c.h.b16 %v7722
        %v9451 = vunpack.c.l.b16 %v7723
        %v9452 = vunpack.c.h.b16 %v7723
        %v9453 = vunpack.c.l.b16 %v7724
        %v9454 = vunpack.c.h.b16 %v7724
        %v9455 = vunpack.c.l.b16 %v7725
        %v9456 = vunpack.c.h.b16 %v7725
        %v9457 = vunpack.c.l.b16 %v7726
        %v9458 = vunpack.c.h.b16 %v7726
        %v9459 = vunpack.c.l.b16 %v7727
        %v9460 = vunpack.c.h.b16 %v7727
        %v9461 = vunpack.c.l.b16 %v7728
        %v9462 = vunpack.c.h.b16 %v7728
        %v9463 = vunpack.c.l.b16 %v7729
        %v9464 = vunpack.c.h.b16 %v7729
        %v9465 = vunpack.c.l.b16 %v7730
        %v9466 = vunpack.c.h.b16 %v7730
        %v9467 = vunpack.c.l.b16 %v7731
        %v9468 = vunpack.c.h.b16 %v7731
        %v9469 = vunpack.c.l.b16 %v7732
        %v9470 = vunpack.c.h.b16 %v7732
        %v9471 = vunpack.c.l.b16 %v7733
        %v9472 = vunpack.c.h.b16 %v7733
        %v9473 = vunpack.c.l.b16 %v7734
        %v9474 = vunpack.c.h.b16 %v7734
        %v9475 = vunpack.c.l.b16 %v7735
        %v9476 = vunpack.c.h.b16 %v7735
        %v9477 = vunpack.c.l.b16 %v7736
        %v9478 = vunpack.c.h.b16 %v7736
        %v9479 = vunpack.c.l.b16 %v7737
        %v9480 = vunpack.c.h.b16 %v7737
        %v9481 = vunpack.c.l.b16 %v7738
        %v9482 = vunpack.c.h.b16 %v7738
        %v9483 = vunpack.c.l.b16 %v7739
        %v9484 = vunpack.c.h.b16 %v7739
        %v9485 = vunpack.c.l.b16 %v7740
        %v9486 = vunpack.c.h.b16 %v7740
        %v9487 = vunpack.c.l.b16 %v7741
        %v9488 = vunpack.c.h.b16 %v7741
        %v9489 = vunpack.c.l.b16 %v7742
        %v9490 = vunpack.c.h.b16 %v7742
        %v9491 = vunpack.c.l.b16 %v7743
        %v9492 = vunpack.c.h.b16 %v7743
        %v9493 = vunpack.c.l.b16 %v7744
        %v9494 = vunpack.c.h.b16 %v7744
        %v9495 = vunpack.c.l.b16 %v7745
        %v9496 = vunpack.c.h.b16 %v7745
        %v9497 = vunpack.c.l.b16 %v7746
        %v9498 = vunpack.c.h.b16 %v7746
        %v9499 = vunpack.c.l.b16 %v7747
        %v9500 = vunpack.c.h.b16 %v7747
        %v9501 = vunpack.c.l.b16 %v7748
        %v9502 = vunpack.c.h.b16 %v7748
        %v9503 = vunpack.c.l.b16 %v7749
        %v9504 = vunpack.c.h.b16 %v7749
        %v9505 = vunpack.c.l.b16 %v7750
        %v9506 = vunpack.c.h.b16 %v7750
        %v9507 = vunpack.c.l.b16 %v7751
        %v9508 = vunpack.c.h.b16 %v7751
        %v9509 = vunpack.c.l.b16 %v7752
        %v9510 = vunpack.c.h.b16 %v7752
        %v9511 = vunpack.c.l.b16 %v7753
        %v9512 = vunpack.c.h.b16 %v7753
        %v9513 = vunpack.c.l.b16 %v7754
        %v9514 = vunpack.c.h.b16 %v7754
        %v9515 = vunpack.c.l.b16 %v7755
        %v9516 = vunpack.c.h.b16 %v7755
        %v9517 = vunpack.c.l.b16 %v7756
        %v9518 = vunpack.c.h.b16 %v7756
        %v9519 = vunpack.c.l.b16 %v7757
        %v9520 = vunpack.c.h.b16 %v7757
        %v9521 = vunpack.c.l.b16 %v7758
        %v9522 = vunpack.c.h.b16 %v7758
        %v9523 = vunpack.c.l.b16 %v7759
        %v9524 = vunpack.c.h.b16 %v7759
        %v9525 = vunpack.c.l.b16 %v7760
        %v9526 = vunpack.c.h.b16 %v7760
        %v9527 = vunpack.c.l.b16 %v7761
        %v9528 = vunpack.c.h.b16 %v7761
        %v9529 = vunpack.c.l.b16 %v7762
        %v9530 = vunpack.c.h.b16 %v7762
        %v9531 = vunpack.c.l.b16 %v7763
        %v9532 = vunpack.c.h.b16 %v7763
        %v9533 = vunpack.c.l.b16 %v7764
        %v9534 = vunpack.c.h.b16 %v7764
        %v9535 = vunpack.c.l.b16 %v7765
        %v9536 = vunpack.c.h.b16 %v7765
        %v9537 = vunpack.c.l.b16 %v7766
        %v9538 = vunpack.c.h.b16 %v7766
        %v9539 = vunpack.c.l.b16 %v7767
        %v9540 = vunpack.c.h.b16 %v7767
        %v9541 = vunpack.c.l.b16 %v7768
        %v9542 = vunpack.c.h.b16 %v7768
        %v9543 = vunpack.c.l.b16 %v7769
        %v9544 = vunpack.c.h.b16 %v7769
        %v9545 = vunpack.c.l.b16 %v7770
        %v9546 = vunpack.c.h.b16 %v7770
        %v9547 = vunpack.c.l.b16 %v7771
        %v9548 = vunpack.c.h.b16 %v7771
        %v9549 = vunpack.c.l.b16 %v7772
        %v9550 = vunpack.c.h.b16 %v7772
        %v9551 = vunpack.c.l.b16 %v7773
        %v9552 = vunpack.c.h.b16 %v7773
        %v9553 = vunpack.c.l.b16 %v7774
        %v9554 = vunpack.c.h.b16 %v7774
        %v9555 = vunpack.c.l.b16 %v7775
        %v9556 = vunpack.c.h.b16 %v7775
        %v9557 = vunpack.c.l.b16 %v7776
        %v9558 = vunpack.c.h.b16 %v7776
        %v9559 = vunpack.c.l.b16 %v7777
        %v9560 = vunpack.c.h.b16 %v7777
        %v9561 = vunpack.c.l.b16 %v7778
        %v9562 = vunpack.c.h.b16 %v7778
        %v9563 = vunpack.c.l.b16 %v7779
        %v9564 = vunpack.c.h.b16 %v7779
        %v9565 = vunpack.c.l.b16 %v7780
        %v9566 = vunpack.c.h.b16 %v7780
        %v9567 = vunpack.c.l.b16 %v7781
        %v9568 = vunpack.c.h.b16 %v7781
        %v9569 = vunpack.c.l.b16 %v7782
        %v9570 = vunpack.c.h.b16 %v7782
        %v9571 = vunpack.c.l.b16 %v7783
        %v9572 = vunpack.c.h.b16 %v7783
        %v9573 = vunpack.c.l.b16 %v7784
        %v9574 = vunpack.c.h.b16 %v7784
        %v9575 = vunpack.c.l.b16 %v7785
        %v9576 = vunpack.c.h.b16 %v7785
        %v9577 = vunpack.c.l.b16 %v7786
        %v9578 = vunpack.c.h.b16 %v7786
        %v9579 = vunpack.c.l.b16 %v7787
        %v9580 = vunpack.c.h.b16 %v7787
        %v9581 = vunpack.c.l.b16 %v7788
        %v9582 = vunpack.c.h.b16 %v7788
        %v9583 = vunpack.c.l.b16 %v7789
        %v9584 = vunpack.c.h.b16 %v7789
        %v9585 = vunpack.c.l.b16 %v7790
        %v9586 = vunpack.c.h.b16 %v7790
        %v9587 = vunpack.c.l.b16 %v7791
        %v9588 = vunpack.c.h.b16 %v7791
        %v9589 = vunpack.c.l.b16 %v7792
        %v9590 = vunpack.c.h.b16 %v7792
        %v9591 = vunpack.c.l.b16 %v7793
        %v9592 = vunpack.c.h.b16 %v7793
        %v9593 = vunpack.c.l.b16 %v7794
        %v9594 = vunpack.c.h.b16 %v7794
        %v9595 = vunpack.c.l.b16 %v7795
        %v9596 = vunpack.c.h.b16 %v7795
        %v9597 = vunpack.c.l.b16 %v7796
        %v9598 = vunpack.c.h.b16 %v7796
        %v9599 = vunpack.c.l.b16 %v7797
        %v9600 = vunpack.c.h.b16 %v7797
        %v9601 = vunpack.c.l.b16 %v7798
        %v9602 = vunpack.c.h.b16 %v7798
        %v9603 = vunpack.c.l.b16 %v7799
        %v9604 = vunpack.c.h.b16 %v7799
        %v9605 = vunpack.c.l.b16 %v7800
        %v9606 = vunpack.c.h.b16 %v7800
        %v9607 = vunpack.c.l.b16 %v7801
        %v9608 = vunpack.c.h.b16 %v7801
        %v9609 = vunpack.c.l.b16 %v7802
        %v9610 = vunpack.c.h.b16 %v7802
        %v9611 = vunpack.c.l.b16 %v7803
        %v9612 = vunpack.c.h.b16 %v7803
        %v9613 = vunpack.c.l.b16 %v7804
        %v9614 = vunpack.c.h.b16 %v7804
        %v9615 = vunpack.c.l.b16 %v7805
        %v9616 = vunpack.c.h.b16 %v7805
        %v9617 = vunpack.c.l.b16 %v7806
        %v9618 = vunpack.c.h.b16 %v7806
        %v9619 = vunpack.c.l.b16 %v7807
        %v9620 = vunpack.c.h.b16 %v7807
        %v9621 = vunpack.c.l.b16 %v7808
        %v9622 = vunpack.c.h.b16 %v7808
        %v9623 = vunpack.c.l.b16 %v7809
        %v9624 = vunpack.c.h.b16 %v7809
        %v9625 = vunpack.c.l.b16 %v7810
        %v9626 = vunpack.c.h.b16 %v7810
        %v9627 = vunpack.c.l.b16 %v7811
        %v9628 = vunpack.c.h.b16 %v7811
        %v9629 = vunpack.c.l.b16 %v7812
        %v9630 = vunpack.c.h.b16 %v7812
        %v9631 = vunpack.c.l.b16 %v7813
        %v9632 = vunpack.c.h.b16 %v7813
        %v9633 = vunpack.c.l.b16 %v7814
        %v9634 = vunpack.c.h.b16 %v7814
        %v9635 = vunpack.c.l.b16 %v7815
        %v9636 = vunpack.c.h.b16 %v7815
        %v9637 = vunpack.c.l.b16 %v7816
        %v9638 = vunpack.c.h.b16 %v7816
        %v9639 = vunpack.c.l.b16 %v7817
        %v9640 = vunpack.c.h.b16 %v7817
        %v9641 = vunpack.c.l.b16 %v7818
        %v9642 = vunpack.c.h.b16 %v7818
        %v9643 = vunpack.c.l.b16 %v7819
        %v9644 = vunpack.c.h.b16 %v7819
        %v9645 = vunpack.c.l.b16 %v7820
        %v9646 = vunpack.c.h.b16 %v7820
        %v9647 = vunpack.c.l.b16 %v7821
        %v9648 = vunpack.c.h.b16 %v7821
        %v9649 = vunpack.c.l.b16 %v7822
        %v9650 = vunpack.c.h.b16 %v7822
        %v9651 = vunpack.c.l.b16 %v7823
        %v9652 = vunpack.c.h.b16 %v7823
        %v9653 = vunpack.c.l.b16 %v7824
        %v9654 = vunpack.c.h.b16 %v7824
        %v9655 = vunpack.c.l.b16 %v7825
        %v9656 = vunpack.c.h.b16 %v7825
        %v9657 = vunpack.c.l.b16 %v7826
        %v9658 = vunpack.c.h.b16 %v7826
        %v9659 = vunpack.c.l.b16 %v7827
        %v9660 = vunpack.c.h.b16 %v7827
        %v9661 = vunpack.c.l.b16 %v7828
        %v9662 = vunpack.c.h.b16 %v7828
        %v9663 = vunpack.c.l.b16 %v7829
        %v9664 = vunpack.c.h.b16 %v7829
        %v9665 = vunpack.c.l.b16 %v7830
        %v9666 = vunpack.c.h.b16 %v7830
        %v9667 = vunpack.c.l.b16 %v7831
        %v9668 = vunpack.c.h.b16 %v7831
        %v9669 = vunpack.c.l.b16 %v7832
        %v9670 = vunpack.c.h.b16 %v7832
        %v9671 = vunpack.c.l.b16 %v7833
        %v9672 = vunpack.c.h.b16 %v7833
        %v9673 = vunpack.c.l.b16 %v7834
        %v9674 = vunpack.c.h.b16 %v7834
        %v9675 = vunpack.c.l.b16 %v7835
        %v9676 = vunpack.c.h.b16 %v7835
        %v9677 = vunpack.c.l.b16 %v7836
        %v9678 = vunpack.c.h.b16 %v7836
        %v9679 = vunpack.c.l.b16 %v7837
        %v9680 = vunpack.c.h.b16 %v7837
        %v9681 = vunpack.c.l.b16 %v7838
        %v9682 = vunpack.c.h.b16 %v7838
        %v9683 = vunpack.c.l.b16 %v7839
        %v9684 = vunpack.c.h.b16 %v7839
        %v9685 = vunpack.c.l.b16 %v7840
        %v9686 = vunpack.c.h.b16 %v7840
        %v9687 = vunpack.c.l.b16 %v7841
        %v9688 = vunpack.c.h.b16 %v7841
        %v9689 = vunpack.c.l.b16 %v7842
        %v9690 = vunpack.c.h.b16 %v7842
        %v9691 = vunpack.c.l.b16 %v7843
        %v9692 = vunpack.c.h.b16 %v7843
        %v9693 = vunpack.c.l.b16 %v7844
        %v9694 = vunpack.c.h.b16 %v7844
        %v9695 = vunpack.c.l.b16 %v7845
        %v9696 = vunpack.c.h.b16 %v7845
        %v9697 = vunpack.c.l.b16 %v7846
        %v9698 = vunpack.c.h.b16 %v7846
        %v9699 = vunpack.c.l.b16 %v7847
        %v9700 = vunpack.c.h.b16 %v7847
        %v9701 = vunpack.c.l.b16 %v7848
        %v9702 = vunpack.c.h.b16 %v7848
        %v9703 = vunpack.c.l.b16 %v7849
        %v9704 = vunpack.c.h.b16 %v7849
        %v9705 = vunpack.c.l.b16 %v7850
        %v9706 = vunpack.c.h.b16 %v7850
        %v9707 = vunpack.c.l.b16 %v7851
        %v9708 = vunpack.c.h.b16 %v7851
        %v9709 = vunpack.c.l.b16 %v7852
        %v9710 = vunpack.c.h.b16 %v7852
        %v9711 = vunpack.c.l.b16 %v7853
        %v9712 = vunpack.c.h.b16 %v7853
        %v9713 = vunpack.c.l.b16 %v7854
        %v9714 = vunpack.c.h.b16 %v7854
        %v9715 = vunpack.c.l.b16 %v7855
        %v9716 = vunpack.c.h.b16 %v7855
        %v9717 = vunpack.c.l.b16 %v7856
        %v9718 = vunpack.c.h.b16 %v7856
        %v9719 = vunpack.c.l.b16 %v7857
        %v9720 = vunpack.c.h.b16 %v7857
        %v9721 = vunpack.c.l.b16 %v7858
        %v9722 = vunpack.c.h.b16 %v7858
        %v9723 = vunpack.c.l.b16 %v7859
        %v9724 = vunpack.c.h.b16 %v7859
        %v9725 = vunpack.c.l.b16 %v7860
        %v9726 = vunpack.c.h.b16 %v7860
        %v9727 = vunpack.c.l.b16 %v7861
        %v9728 = vunpack.c.h.b16 %v7861
        %v9729 = vunpack.c.l.b16 %v7862
        %v9730 = vunpack.c.h.b16 %v7862
        %v9731 = vunpack.c.l.b16 %v7863
        %v9732 = vunpack.c.h.b16 %v7863
        %v9733 = vunpack.c.l.b16 %v7864
        %v9734 = vunpack.c.h.b16 %v7864
        %v9735 = vunpack.c.l.b16 %v7865
        %v9736 = vunpack.c.h.b16 %v7865
        %v9737 = vunpack.c.l.b16 %v7866
        %v9738 = vunpack.c.h.b16 %v7866
        %v9739 = vunpack.c.l.b16 %v7867
        %v9740 = vunpack.c.h.b16 %v7867
        %v9741 = vunpack.c.l.b16 %v7868
        %v9742 = vunpack.c.h.b16 %v7868
        %v9743 = vunpack.c.l.b16 %v7869
        %v9744 = vunpack.c.h.b16 %v7869
        %v9745 = vunpack.c.l.b16 %v7870
        %v9746 = vunpack.c.h.b16 %v7870
        %v9747 = vunpack.c.l.b16 %v7871
        %v9748 = vunpack.c.h.b16 %v7871
        %v9749 = vunpack.c.l.b16 %v7872
        %v9750 = vunpack.c.h.b16 %v7872
        %v9751 = vunpack.c.l.b16 %v7873
        %v9752 = vunpack.c.h.b16 %v7873
        %v9753 = vunpack.c.l.b16 %v7874
        %v9754 = vunpack.c.h.b16 %v7874
        %v9755 = vunpack.c.l.b16 %v7875
        %v9756 = vunpack.c.h.b16 %v7875
        %v9757 = vunpack.c.l.b16 %v7876
        %v9758 = vunpack.c.h.b16 %v7876
        %v9759 = vunpack.c.l.b16 %v7877
        %v9760 = vunpack.c.h.b16 %v7877
        %v9761 = vunpack.c.l.b16 %v7878
        %v9762 = vunpack.c.h.b16 %v7878
        %v9763 = vunpack.c.l.b16 %v7879
        %v9764 = vunpack.c.h.b16 %v7879
        %v9765 = vunpack.c.l.b16 %v7880
        %v9766 = vunpack.c.h.b16 %v7880
        %v9767 = vunpack.c.l.b16 %v7881
        %v9768 = vunpack.c.h.b16 %v7881
        %v9769 = vunpack.c.l.b16 %v7882
        %v9770 = vunpack.c.h.b16 %v7882
        %v9771 = vunpack.c.l.b16 %v7883
        %v9772 = vunpack.c.h.b16 %v7883
        %v9773 = vunpack.c.l.b16 %v7884
        %v9774 = vunpack.c.h.b16 %v7884
        %v9775 = vunpack.c.l.b16 %v7885
        %v9776 = vunpack.c.h.b16 %v7885
        %v9777 = vunpack.c.l.b16 %v7886
        %v9778 = vunpack.c.h.b16 %v7886
        %v9779 = vunpack.c.l.b16 %v7887
        %v9780 = vunpack.c.h.b16 %v7887
        %v9781 = vunpack.c.l.b16 %v7888
        %v9782 = vunpack.c.h.b16 %v7888
        %v9783 = vunpack.c.l.b16 %v7889
        %v9784 = vunpack.c.h.b16 %v7889
        %v9785 = vunpack.c.l.b16 %v7890
        %v9786 = vunpack.c.h.b16 %v7890
        %v9787 = vunpack.c.l.b16 %v7891
        %v9788 = vunpack.c.h.b16 %v7891
        %v9789 = vunpack.c.l.b16 %v7892
        %v9790 = vunpack.c.h.b16 %v7892
        %v9791 = vunpack.c.l.b16 %v7893
        %v9792 = vunpack.c.h.b16 %v7893
        %v9793 = vunpack.c.l.b16 %v7894
        %v9794 = vunpack.c.h.b16 %v7894
        %v9795 = vunpack.c.l.b16 %v7895
        %v9796 = vunpack.c.h.b16 %v7895
        %v9797 = vunpack.c.l.b16 %v7896
        %v9798 = vunpack.c.h.b16 %v7896
        %v9799 = vunpack.c.l.b16 %v7897
        %v9800 = vunpack.c.h.b16 %v7897
        %v9801 = vunpack.c.l.b16 %v7898
        %v9802 = vunpack.c.h.b16 %v7898
        %v9803 = vunpack.c.l.b16 %v7899
        %v9804 = vunpack.c.h.b16 %v7899
        %v9805 = vunpack.c.l.b16 %v7900
        %v9806 = vunpack.c.h.b16 %v7900
        %v9807 = vunpack.c.l.b16 %v7901
        %v9808 = vunpack.c.h.b16 %v7901
        %v9809 = vunpack.c.l.b16 %v7902
        %v9810 = vunpack.c.h.b16 %v7902
        %v9811 = vunpack.c.l.b16 %v7903
        %v9812 = vunpack.c.h.b16 %v7903
        %v9813 = vunpack.c.l.b16 %v7904
        %v9814 = vunpack.c.h.b16 %v7904
        %v9815 = vunpack.c.l.b16 %v7905
        %v9816 = vunpack.c.h.b16 %v7905
        %v9817 = vunpack.c.l.b16 %v7906
        %v9818 = vunpack.c.h.b16 %v7906
        %v9819 = vunpack.c.l.b16 %v7907
        %v9820 = vunpack.c.h.b16 %v7907
        %v9821 = vunpack.c.l.b16 %v7908
        %v9822 = vunpack.c.h.b16 %v7908
        %v9823 = vunpack.c.l.b16 %v7909
        %v9824 = vunpack.c.h.b16 %v7909
        %v9825 = vunpack.c.l.b16 %v7910
        %v9826 = vunpack.c.h.b16 %v7910
        %v9827 = vunpack.c.l.b16 %v7911
        %v9828 = vunpack.c.h.b16 %v7911
        %v9829 = vunpack.c.l.b16 %v7912
        %v9830 = vunpack.c.h.b16 %v7912
        %v9831 = vunpack.c.l.b16 %v7913
        %v9832 = vunpack.c.h.b16 %v7913
        %v9833 = vunpack.c.l.b16 %v7914
        %v9834 = vunpack.c.h.b16 %v7914
        %v9835 = vunpack.c.l.b16 %v7915
        %v9836 = vunpack.c.h.b16 %v7915
        %v9837 = vunpack.c.l.b16 %v7916
        %v9838 = vunpack.c.h.b16 %v7916
        %v9839 = vunpack.c.l.b16 %v7917
        %v9840 = vunpack.c.h.b16 %v7917
        %v9841 = vunpack.c.l.b16 %v7918
        %v9842 = vunpack.c.h.b16 %v7918
        %v9843 = vunpack.c.l.b16 %v7919
        %v9844 = vunpack.c.h.b16 %v7919
        %v9845 = vunpack.c.l.b16 %v7920
        %v9846 = vunpack.c.h.b16 %v7920
        %v9847 = vunpack.c.l.b16 %v7921
        %v9848 = vunpack.c.h.b16 %v7921
        %v9849 = vunpack.c.l.b16 %v7922
        %v9850 = vunpack.c.h.b16 %v7922
        %v9851 = vunpack.c.l.b16 %v7923
        %v9852 = vunpack.c.h.b16 %v7923
        %v9853 = vunpack.c.l.b16 %v7924
        %v9854 = vunpack.c.h.b16 %v7924
        %v9855 = vunpack.c.l.b16 %v7925
        %v9856 = vunpack.c.h.b16 %v7925
        %v9857 = vunpack.c.l.b16 %v7926
        %v9858 = vunpack.c.h.b16 %v7926
        %v9859 = vunpack.c.l.b16 %v7927
        %v9860 = vunpack.c.h.b16 %v7927
        %v9861 = vunpack.c.l.b16 %v7928
        %v9862 = vunpack.c.h.b16 %v7928
        %v9863 = vunpack.c.l.b16 %v7929
        %v9864 = vunpack.c.h.b16 %v7929
        %v9865 = vunpack.c.l.b16 %v7930
        %v9866 = vunpack.c.h.b16 %v7930
        %v9867 = vunpack.c.l.b16 %v7931
        %v9868 = vunpack.c.h.b16 %v7931
        %v9869 = vunpack.c.l.b16 %v7932
        %v9870 = vunpack.c.h.b16 %v7932
        %v9871 = vunpack.c.l.b16 %v7933
        %v9872 = vunpack.c.h.b16 %v7933
        %v9873 = vunpack.c.l.b16 %v7934
        %v9874 = vunpack.c.h.b16 %v7934
        %v9875 = vunpack.c.l.b16 %v7935
        %v9876 = vunpack.c.h.b16 %v7935
        %v9877 = vunpack.c.l.b16 %v7936
        %v9878 = vunpack.c.h.b16 %v7936
        %v9879 = vunpack.c.l.b16 %v7937
        %v9880 = vunpack.c.h.b16 %v7937
        %v9881 = vunpack.c.l.b16 %v7938
        %v9882 = vunpack.c.h.b16 %v7938
        %v9883 = vunpack.c.l.b16 %v7939
        %v9884 = vunpack.c.h.b16 %v7939
        %v9885 = vunpack.c.l.b16 %v7940
        %v9886 = vunpack.c.h.b16 %v7940
        %v9887 = vunpack.c.l.b16 %v7941
        %v9888 = vunpack.c.h.b16 %v7941
        %v9889 = vunpack.c.l.b16 %v7942
        %v9890 = vunpack.c.h.b16 %v7942
        %v9891 = vunpack.c.l.b16 %v7943
        %v9892 = vunpack.c.h.b16 %v7943
        %v9893 = vunpack.c.l.b16 %v7944
        %v9894 = vunpack.c.h.b16 %v7944
        %v9895 = vunpack.c.l.b16 %v7945
        %v9896 = vunpack.c.h.b16 %v7945
        %v9897 = vunpack.c.l.b16 %v7946
        %v9898 = vunpack.c.h.b16 %v7946
        %v9899 = vunpack.c.l.b16 %v7947
        %v9900 = vunpack.c.h.b16 %v7947
        %v9901 = vunpack.c.l.b16 %v7948
        %v9902 = vunpack.c.h.b16 %v7948
        %v9903 = vunpack.c.l.b16 %v7949
        %v9904 = vunpack.c.h.b16 %v7949
        %v9905 = vunpack.c.l.b16 %v7950
        %v9906 = vunpack.c.h.b16 %v7950
        %v9907 = vunpack.c.l.b16 %v7951
        %v9908 = vunpack.c.h.b16 %v7951
        %v9909 = vunpack.c.l.b16 %v7952
        %v9910 = vunpack.c.h.b16 %v7952
        %v9911 = vunpack.c.l.b16 %v7953
        %v9912 = vunpack.c.h.b16 %v7953
        %v9913 = vunpack.c.l.b16 %v7954
        %v9914 = vunpack.c.h.b16 %v7954
        %v9915 = vunpack.c.l.b16 %v7955
        %v9916 = vunpack.c.h.b16 %v7955
        %v9917 = vunpack.c.l.b16 %v7956
        %v9918 = vunpack.c.h.b16 %v7956
        %v9919 = vunpack.c.l.b16 %v7957
        %v9920 = vunpack.c.h.b16 %v7957
        %v9921 = vunpack.c.l.b16 %v7958
        %v9922 = vunpack.c.h.b16 %v7958
        %v9923 = vunpack.c.l.b16 %v7959
        %v9924 = vunpack.c.h.b16 %v7959
        %v9925 = vunpack.c.l.b16 %v7960
        %v9926 = vunpack.c.h.b16 %v7960
        %v9927 = vunpack.c.l.b16 %v7961
        %v9928 = vunpack.c.h.b16 %v7961
        %v9929 = vunpack.c.l.b16 %v7962
        %v9930 = vunpack.c.h.b16 %v7962
        %v9931 = vunpack.c.l.b16 %v7963
        %v9932 = vunpack.c.h.b16 %v7963
        %v9933 = vunpack.c.l.b16 %v7964
        %v9934 = vunpack.c.h.b16 %v7964
        %v9935 = vunpack.c.l.b16 %v7965
        %v9936 = vunpack.c.h.b16 %v7965
        %v9937 = vunpack.c.l.b16 %v7966
        %v9938 = vunpack.c.h.b16 %v7966
        %v9939 = vunpack.c.l.b16 %v7967
        %v9940 = vunpack.c.h.b16 %v7967
        %v9941 = vunpack.c.l.b16 %v7968
        %v9942 = vunpack.c.h.b16 %v7968
        %v9943 = vunpack.c.l.b16 %v7969
        %v9944 = vunpack.c.h.b16 %v7969
        %v9945 = vunpack.c.l.b16 %v7970
        %v9946 = vunpack.c.h.b16 %v7970
        %v9947 = vunpack.c.l.b16 %v7971
        %v9948 = vunpack.c.h.b16 %v7971
        %v9949 = vunpack.c.l.b16 %v7972
        %v9950 = vunpack.c.h.b16 %v7972
        %v9951 = vunpack.c.l.b16 %v7973
        %v9952 = vunpack.c.h.b16 %v7973
        %v9953 = vunpack.c.l.b16 %v7974
        %v9954 = vunpack.c.h.b16 %v7974
        %v9955 = vunpack.c.l.b16 %v7975
        %v9956 = vunpack.c.h.b16 %v7975
        %v9957 = vunpack.c.l.b16 %v7976
        %v9958 = vunpack.c.h.b16 %v7976
        %v9959 = vunpack.c.l.b16 %v7977
        %v9960 = vunpack.c.h.b16 %v7977
        %v9961 = vunpack.c.l.b16 %v7978
        %v9962 = vunpack.c.h.b16 %v7978
        %v9963 = vunpack.c.l.b16 %v7979
        %v9964 = vunpack.c.h.b16 %v7979
        %v9965 = vunpack.c.l.b16 %v7980
        %v9966 = vunpack.c.h.b16 %v7980
        %v9967 = vunpack.c.l.b16 %v7981
        %v9968 = vunpack.c.h.b16 %v7981
        %v9969 = vunpack.c.l.b16 %v7982
        %v9970 = vunpack.c.h.b16 %v7982
        %v9971 = vunpack.c.l.b16 %v7983
        %v9972 = vunpack.c.h.b16 %v7983
        %v9973 = vunpack.c.l.b16 %v7984
        %v9974 = vunpack.c.h.b16 %v7984
        %v9975 = vunpack.c.l.b16 %v7985
        %v9976 = vunpack.c.h.b16 %v7985
        %v9977 = vunpack.c.l.b16 %v7986
        %v9978 = vunpack.c.h.b16 %v7986
        %v9979 = vunpack.c.l.b16 %v7987
        %v9980 = vunpack.c.h.b16 %v7987
        %v9981 = vunpack.c.l.b16 %v7988
        %v9982 = vunpack.c.h.b16 %v7988
        %v9983 = vunpack.c.l.b16 %v7989
        %v9984 = vunpack.c.h.b16 %v7989
        %v9985 = vunpack.c.l.b16 %v7990
        %v9986 = vunpack.c.h.b16 %v7990
        %v9987 = vunpack.c.l.b16 %v7991
        %v9988 = vunpack.c.h.b16 %v7991
        %v9989 = vunpack.c.l.b16 %v7992
        %v9990 = vunpack.c.h.b16 %v7992
        %v9991 = vunpack.c.l.b16 %v7993
        %v9992 = vunpack.c.h.b16 %v7993
        %v9993 = vunpack.c.l.b16 %v7994
        %v9994 = vunpack.c.h.b16 %v7994
        %v9995 = vunpack.c.l.b16 %v7995
        %v9996 = vunpack.c.h.b16 %v7995
        %v9997 = vunpack.c.l.b16 %v7996
        %v9998 = vunpack.c.h.b16 %v7996
        %v9999 = vunpack.c.l.b16 %v7997
        %v10000 = vunpack.c.h.b16 %v7997
        %v10001 = vunpack.c.l.b16 %v7998
        %v10002 = vunpack.c.h.b16 %v7998
        %v10003 = vunpack.c.l.b16 %v7999
        %v10004 = vunpack.c.h.b16 %v7999
        %v10005 = vunpack.c.l.b16 %v8000
        %v10006 = vunpack.c.h.b16 %v8000
        %v10007 = vunpack.c.l.b16 %v8001
        %v10008 = vunpack.c.h.b16 %v8001
        %v10009 = vunpack.c.l.b16 %v8002
        %v10010 = vunpack.c.h.b16 %v8002
        %v10011 = vunpack.c.l.b16 %v8003
        %v10012 = vunpack.c.h.b16 %v8003
        %v10013 = vunpack.c.l.b16 %v8004
        %v10014 = vunpack.c.h.b16 %v8004
        %v10015 = vunpack.c.l.b16 %v8005
        %v10016 = vunpack.c.h.b16 %v8005
        %v10017 = vunpack.c.l.b16 %v8006
        %v10018 = vunpack.c.h.b16 %v8006
        %v10019 = vunpack.c.l.b16 %v8007
        %v10020 = vunpack.c.h.b16 %v8007
        %v10021 = vunpack.c.l.b16 %v8008
        %v10022 = vunpack.c.h.b16 %v8008
        %v10023 = vunpack.c.l.b16 %v8009
        %v10024 = vunpack.c.h.b16 %v8009
        %v10025 = vunpack.c.l.b16 %v8010
        %v10026 = vunpack.c.h.b16 %v8010
        %v10027 = vunpack.c.l.b16 %v8011
        %v10028 = vunpack.c.h.b16 %v8011
        %v10029 = vunpack.c.l.b16 %v8012
        %v10030 = vunpack.c.h.b16 %v8012
        %v10031 = vunpack.c.l.b16 %v8013
        %v10032 = vunpack.c.h.b16 %v8013
        %v10033 = vunpack.c.l.b16 %v8014
        %v10034 = vunpack.c.h.b16 %v8014
        %v10035 = vunpack.c.l.b16 %v8015
        %v10036 = vunpack.c.h.b16 %v8015
        %v10037 = vunpack.c.l.b16 %v8016
        %v10038 = vunpack.c.h.b16 %v8016
        %v10039 = vunpack.c.l.b16 %v8017
        %v10040 = vunpack.c.h.b16 %v8017
        %v10041 = vunpack.c.l.b16 %v8018
        %v10042 = vunpack.c.h.b16 %v8018
        %v10043 = vunpack.c.l.b16 %v8019
        %v10044 = vunpack.c.h.b16 %v8019
        %v10045 = vunpack.c.l.b16 %v8020
        %v10046 = vunpack.c.h.b16 %v8020
        %v10047 = vunpack.c.l.b16 %v8021
        %v10048 = vunpack.c.h.b16 %v8021
        %v10049 = vunpack.c.l.b16 %v8022
        %v10050 = vunpack.c.h.b16 %v8022
        %v10051 = vunpack.c.l.b16 %v8023
        %v10052 = vunpack.c.h.b16 %v8023
        %v10053 = vunpack.c.l.b16 %v8024
        %v10054 = vunpack.c.h.b16 %v8024
        %v10055 = vunpack.c.l.b16 %v8025
        %v10056 = vunpack.c.h.b16 %v8025
        %v10057 = vunpack.c.l.b16 %v8026
        %v10058 = vunpack.c.h.b16 %v8026
        %v10059 = vunpack.c.l.b16 %v8027
        %v10060 = vunpack.c.h.b16 %v8027
        %v10061 = vunpack.c.l.b16 %v8028
        %v10062 = vunpack.c.h.b16 %v8028
        %v10063 = vunpack.c.l.b16 %v8029
        %v10064 = vunpack.c.h.b16 %v8029
        %v10065 = vunpack.c.l.b16 %v8030
        %v10066 = vunpack.c.h.b16 %v8030
        %v10067 = vunpack.c.l.b16 %v8031
        %v10068 = vunpack.c.h.b16 %v8031
        %v10069 = vunpack.c.l.b16 %v8032
        %v10070 = vunpack.c.h.b16 %v8032
        %v10071 = vunpack.c.l.b16 %v8033
        %v10072 = vunpack.c.h.b16 %v8033
        %v10073 = vunpack.c.l.b16 %v8034
        %v10074 = vunpack.c.h.b16 %v8034
        %v10075 = vunpack.c.l.b16 %v8035
        %v10076 = vunpack.c.h.b16 %v8035
        %v10077 = vunpack.c.l.b16 %v8036
        %v10078 = vunpack.c.h.b16 %v8036
        %v10079 = vunpack.c.l.b16 %v8037
        %v10080 = vunpack.c.h.b16 %v8037
        %v10081 = vunpack.c.l.b16 %v8038
        %v10082 = vunpack.c.h.b16 %v8038
        %v10083 = vunpack.c.l.b16 %v8039
        %v10084 = vunpack.c.h.b16 %v8039
        %v10085 = vunpack.c.l.b16 %v8040
        %v10086 = vunpack.c.h.b16 %v8040
        %v10087 = vunpack.c.l.b16 %v8041
        %v10088 = vunpack.c.h.b16 %v8041
        %v10089 = vunpack.c.l.b16 %v8042
        %v10090 = vunpack.c.h.b16 %v8042
        %v10091 = vunpack.c.l.b16 %v8043
        %v10092 = vunpack.c.h.b16 %v8043
        %v10093 = vunpack.c.l.b16 %v8044
        %v10094 = vunpack.c.h.b16 %v8044
        %v10095 = vunpack.c.l.b16 %v8045
        %v10096 = vunpack.c.h.b16 %v8045
        %v10097 = vunpack.c.l.b16 %v8046
        %v10098 = vunpack.c.h.b16 %v8046
        %v10099 = vunpack.c.l.b16 %v8047
        %v10100 = vunpack.c.h.b16 %v8047
        %v10101 = vunpack.c.l.b16 %v8048
        %v10102 = vunpack.c.h.b16 %v8048
        %v10103 = vunpack.c.l.b16 %v8049
        %v10104 = vunpack.c.h.b16 %v8049
        %v10105 = vunpack.c.l.b16 %v8050
        %v10106 = vunpack.c.h.b16 %v8050
        %v10107 = vunpack.c.l.b16 %v8051
        %v10108 = vunpack.c.h.b16 %v8051
        %v10109 = vunpack.c.l.b16 %v8052
        %v10110 = vunpack.c.h.b16 %v8052
        %v10111 = vunpack.c.l.b16 %v8053
        %v10112 = vunpack.c.h.b16 %v8053
        %v10113 = vunpack.c.l.b16 %v8054
        %v10114 = vunpack.c.h.b16 %v8054
        %v10115 = vunpack.c.l.b16 %v8055
        %v10116 = vunpack.c.h.b16 %v8055
        %v10117 = vunpack.c.l.b16 %v8056
        %v10118 = vunpack.c.h.b16 %v8056
        %v10119 = vunpack.c.l.b16 %v8057
        %v10120 = vunpack.c.h.b16 %v8057
        %v10121 = vunpack.c.l.b16 %v8058
        %v10122 = vunpack.c.h.b16 %v8058
        %v10123 = vunpack.c.l.b16 %v8059
        %v10124 = vunpack.c.h.b16 %v8059
        %v10125 = vunpack.c.l.b16 %v8060
        %v10126 = vunpack.c.h.b16 %v8060
        %v10127 = vunpack.c.l.b16 %v8061
        %v10128 = vunpack.c.h.b16 %v8061
        %v10129 = vunpack.c.l.b16 %v8062
        %v10130 = vunpack.c.h.b16 %v8062
        %v10131 = vunpack.c.l.b16 %v8063
        %v10132 = vunpack.c.h.b16 %v8063
        %v10133 = vunpack.c.l.b16 %v8064
        %v10134 = vunpack.c.h.b16 %v8064
        %v10135 = vunpack.c.l.b16 %v8065
        %v10136 = vunpack.c.h.b16 %v8065
        %v10137 = vunpack.c.l.b16 %v8066
        %v10138 = vunpack.c.h.b16 %v8066
        %v10139 = vunpack.c.l.b16 %v8067
        %v10140 = vunpack.c.h.b16 %v8067
        %v10141 = vunpack.c.l.b16 %v8068
        %v10142 = vunpack.c.h.b16 %v8068
        %v10143 = vunpack.c.l.b16 %v8069
        %v10144 = vunpack.c.h.b16 %v8069
        %v10145 = vunpack.c.l.b16 %v8070
        %v10146 = vunpack.c.h.b16 %v8070
        %v10147 = vunpack.c.l.b16 %v8071
        %v10148 = vunpack.c.h.b16 %v8071
        %v10149 = vunpack.c.l.b16 %v8072
        %v10150 = vunpack.c.h.b16 %v8072
        %v10151 = vunpack.c.l.b16 %v8073
        %v10152 = vunpack.c.h.b16 %v8073
        %v10153 = vunpack.c.l.b16 %v8074
        %v10154 = vunpack.c.h.b16 %v8074
        %v10155 = vunpack.c.l.b16 %v8075
        %v10156 = vunpack.c.h.b16 %v8075
        %v10157 = vunpack.c.l.b16 %v8076
        %v10158 = vunpack.c.h.b16 %v8076
        %v10159 = vunpack.c.l.b16 %v8077
        %v10160 = vunpack.c.h.b16 %v8077
        %v10161 = vunpack.c.l.b16 %v8078
        %v10162 = vunpack.c.h.b16 %v8078
        %v10163 = vunpack.c.l.b16 %v8079
        %v10164 = vunpack.c.h.b16 %v8079
        %v10165 = vunpack.c.l.b16 %v8080
        %v10166 = vunpack.c.h.b16 %v8080
        %v10167 = vunpack.c.l.b16 %v8081
        %v10168 = vunpack.c.h.b16 %v8081
        %v10169 = vunpack.c.l.b16 %v8082
        %v10170 = vunpack.c.h.b16 %v8082
        %v10171 = vunpack.c.l.b16 %v8083
        %v10172 = vunpack.c.h.b16 %v8083
        %v10173 = vunpack.c.l.b16 %v8084
        %v10174 = vunpack.c.h.b16 %v8084
        %v10175 = vunpack.c.l.b16 %v8085
        %v10176 = vunpack.c.h.b16 %v8085
        %v10177 = vunpack.c.l.b16 %v8086
        %v10178 = vunpack.c.h.b16 %v8086
        %v10179 = vunpack.c.l.b16 %v8087
        %v10180 = vunpack.c.h.b16 %v8087
        %v10181 = vunpack.c.l.b16 %v8088
        %v10182 = vunpack.c.h.b16 %v8088
        %v10183 = vunpack.c.l.b16 %v8089
        %v10184 = vunpack.c.h.b16 %v8089
        %v10185 = vunpack.c.l.b16 %v8090
        %v10186 = vunpack.c.h.b16 %v8090
        %v10187 = vunpack.c.l.b16 %v8091
        %v10188 = vunpack.c.h.b16 %v8091
        %v10189 = vunpack.c.l.b16 %v8092
        %v10190 = vunpack.c.h.b16 %v8092
        %v10191 = vunpack.c.l.b16 %v8093
        %v10192 = vunpack.c.h.b16 %v8093
        %v10193 = vunpack.c.l.b16 %v8094
        %v10194 = vunpack.c.h.b16 %v8094
        %v10195 = vunpack.c.l.b16 %v8095
        %v10196 = vunpack.c.h.b16 %v8095
        %v10197 = vunpack.c.l.b16 %v8096
        %v10198 = vunpack.c.h.b16 %v8096
        %v10199 = vunpack.c.l.b16 %v8097
        %v10200 = vunpack.c.h.b16 %v8097
        %v10201 = vunpack.c.l.b16 %v8098
        %v10202 = vunpack.c.h.b16 %v8098
        %v10203 = vunpack.c.l.b16 %v8099
        %v10204 = vunpack.c.h.b16 %v8099
        %v10205 = vunpack.c.l.b16 %v8100
        %v10206 = vunpack.c.h.b16 %v8100
        %v10207 = vunpack.c.l.b16 %v8101
        %v10208 = vunpack.c.h.b16 %v8101
        %v10209 = vunpack.c.l.b16 %v8102
        %v10210 = vunpack.c.h.b16 %v8102
        %v10211 = vunpack.c.l.b16 %v8103
        %v10212 = vunpack.c.h.b16 %v8103
        %v10213 = vunpack.c.l.b16 %v8104
        %v10214 = vunpack.c.h.b16 %v8104
        %v10215 = vunpack.c.l.b16 %v8105
        %v10216 = vunpack.c.h.b16 %v8105
        %v10217 = vunpack.c.l.b16 %v8106
        %v10218 = vunpack.c.h.b16 %v8106
        %v10219 = vunpack.c.l.b16 %v8107
        %v10220 = vunpack.c.h.b16 %v8107
        %v10221 = vunpack.c.l.b16 %v8108
        %v10222 = vunpack.c.h.b16 %v8108
        %v10223 = vunpack.c.l.b16 %v8109
        %v10224 = vunpack.c.h.b16 %v8109
        %v10225 = vunpack.c.l.b16 %v8110
        %v10226 = vunpack.c.h.b16 %v8110
        %v10227 = vunpack.c.l.b16 %v8111
        %v10228 = vunpack.c.h.b16 %v8111
        %v10229 = vunpack.c.l.b16 %v8112
        %v10230 = vunpack.c.h.b16 %v8112
        %v10231 = vunpack.c.l.b16 %v8113
        %v10232 = vunpack.c.h.b16 %v8113
        %v10233 = vunpack.c.l.b16 %v8114
        %v10234 = vunpack.c.h.b16 %v8114
        %v10235 = vunpack.c.l.b16 %v8115
        %v10236 = vunpack.c.h.b16 %v8115
        %v10237 = vunpack.c.l.b16 %v8116
        %v10238 = vunpack.c.h.b16 %v8116
        %v10239 = vunpack.c.l.b16 %v8117
        %v10240 = vunpack.c.h.b16 %v8117
        %v10241 = vunpack.c.l.b16 %v8118
        %v10242 = vunpack.c.h.b16 %v8118
        %v10243 = vunpack.c.l.b16 %v8119
        %v10244 = vunpack.c.h.b16 %v8119
        %v10245 = vunpack.c.l.b16 %v8120
        %v10246 = vunpack.c.h.b16 %v8120
        %v10247 = vunpack.c.l.b16 %v8121
        %v10248 = vunpack.c.h.b16 %v8121
        %v10249 = vunpack.c.l.b16 %v8122
        %v10250 = vunpack.c.h.b16 %v8122
        %v10251 = vunpack.c.l.b16 %v8123
        %v10252 = vunpack.c.h.b16 %v8123
        %v10253 = vunpack.c.l.b16 %v8124
        %v10254 = vunpack.c.h.b16 %v8124
        %v10255 = vunpack.c.l.b16 %v8125
        %v10256 = vunpack.c.h.b16 %v8125
        %v10257 = vunpack.c.l.b16 %v8126
        %v10258 = vunpack.c.h.b16 %v8126
        %v10259 = vunpack.c.l.b16 %v8127
        %v10260 = vunpack.c.h.b16 %v8127
        %v10261 = vunpack.c.l.b16 %v8128
        %v10262 = vunpack.c.h.b16 %v8128
        %v10263 = vunpack.c.l.b16 %v8129
        %v10264 = vunpack.c.h.b16 %v8129
        %v10265 = vunpack.c.l.b16 %v8130
        %v10266 = vunpack.c.h.b16 %v8130
        %v10267 = vunpack.c.l.b16 %v8131
        %v10268 = vunpack.c.h.b16 %v8131
        %v10269 = vunpack.c.l.b16 %v8132
        %v10270 = vunpack.c.h.b16 %v8132
        %v10271 = vunpack.c.l.b16 %v8133
        %v10272 = vunpack.c.h.b16 %v8133
        %v10273 = vunpack.c.l.b16 %v8134
        %v10274 = vunpack.c.h.b16 %v8134
        %v10275 = vunpack.c.l.b16 %v8135
        %v10276 = vunpack.c.h.b16 %v8135
        %v10277 = vunpack.c.l.b16 %v8136
        %v10278 = vunpack.c.h.b16 %v8136
        %v10279 = vunpack.c.l.b16 %v8137
        %v10280 = vunpack.c.h.b16 %v8137
        %v10281 = vunpack.c.l.b16 %v8138
        %v10282 = vunpack.c.h.b16 %v8138
        %v10283 = vunpack.c.l.b16 %v8139
        %v10284 = vunpack.c.h.b16 %v8139
        %v10285 = vunpack.c.l.b16 %v8140
        %v10286 = vunpack.c.h.b16 %v8140
        %v10287 = vunpack.c.l.b16 %v8141
        %v10288 = vunpack.c.h.b16 %v8141
        %v10289 = vunpack.c.l.b16 %v8142
        %v10290 = vunpack.c.h.b16 %v8142
        %v10291 = vunpack.c.l.b16 %v8143
        %v10292 = vunpack.c.h.b16 %v8143
        %v10293 = vunpack.c.l.b16 %v8144
        %v10294 = vunpack.c.h.b16 %v8144
        %v10295 = vunpack.c.l.b16 %v8145
        %v10296 = vunpack.c.h.b16 %v8145
        %v10297 = vunpack.c.l.b16 %v8146
        %v10298 = vunpack.c.h.b16 %v8146
        %v10299 = vunpack.c.l.b16 %v8147
        %v10300 = vunpack.c.h.b16 %v8147
        %v10301 = vunpack.c.l.b16 %v8148
        %v10302 = vunpack.c.h.b16 %v8148
        %v10303 = vunpack.c.l.b16 %v8149
        %v10304 = vunpack.c.h.b16 %v8149
        %v10305 = vunpack.c.l.b16 %v8150
        %v10306 = vunpack.c.h.b16 %v8150
        %v10307 = vunpack.c.l.b16 %v8151
        %v10308 = vunpack.c.h.b16 %v8151
        %v10309 = vunpack.c.l.b16 %v8152
        %v10310 = vunpack.c.h.b16 %v8152
        %v10311 = vunpack.c.l.b16 %v8153
        %v10312 = vunpack.c.h.b16 %v8153
        %v10313 = vunpack.c.l.b16 %v8154
        %v10314 = vunpack.c.h.b16 %v8154
        %v10315 = vunpack.c.l.b16 %v8155
        %v10316 = vunpack.c.h.b16 %v8155
        %v10317 = vunpack.c.l.b16 %v8156
        %v10318 = vunpack.c.h.b16 %v8156
        %v10319 = vunpack.c.l.b16 %v8157
        %v10320 = vunpack.c.h.b16 %v8157
        %v10321 = vunpack.c.l.b16 %v8158
        %v10322 = vunpack.c.h.b16 %v8158
        %v10323 = vunpack.c.l.b16 %v8159
        %v10324 = vunpack.c.h.b16 %v8159
        %v10325 = vunpack.c.l.b16 %v8160
        %v10326 = vunpack.c.h.b16 %v8160
        %v10327 = vunpack.c.l.b16 %v8161
        %v10328 = vunpack.c.h.b16 %v8161
        %v10329 = vunpack.c.l.b16 %v8162
        %v10330 = vunpack.c.h.b16 %v8162
        %v10331 = vunpack.c.l.b16 %v8163
        %v10332 = vunpack.c.h.b16 %v8163
        %v10333 = vunpack.c.l.b16 %v8164
        %v10334 = vunpack.c.h.b16 %v8164
        %v10335 = vunpack.c.l.b16 %v8165
        %v10336 = vunpack.c.h.b16 %v8165
        %v10337 = vunpack.c.l.b16 %v8166
        %v10338 = vunpack.c.h.b16 %v8166
        %v10339 = vunpack.c.l.b16 %v8167
        %v10340 = vunpack.c.h.b16 %v8167
        %v10341 = vunpack.c.l.b16 %v8168
        %v10342 = vunpack.c.h.b16 %v8168
        %v10343 = vunpack.c.l.b16 %v8169
        %v10344 = vunpack.c.h.b16 %v8169
        %v10345 = vunpack.c.l.b16 %v8170
        %v10346 = vunpack.c.h.b16 %v8170
        %v10347 = vunpack.c.l.b16 %v8171
        %v10348 = vunpack.c.h.b16 %v8171
        %v10349 = vunpack.c.l.b16 %v8172
        %v10350 = vunpack.c.h.b16 %v8172
        %v10351 = vunpack.c.l.b16 %v8173
        %v10352 = vunpack.c.h.b16 %v8173
        %v10353 = vunpack.c.l.b16 %v8174
        %v10354 = vunpack.c.h.b16 %v8174
        %v10355 = vunpack.c.l.b16 %v8175
        %v10356 = vunpack.c.h.b16 %v8175
        %v10357 = vunpack.c.l.b16 %v8176
        %v10358 = vunpack.c.h.b16 %v8176
        %v10359 = vunpack.c.l.b16 %v8177
        %v10360 = vunpack.c.h.b16 %v8177
        %v10361 = vunpack.c.l.b16 %v8178
        %v10362 = vunpack.c.h.b16 %v8178
        %v10363 = vunpack.c.l.b16 %v8179
        %v10364 = vunpack.c.h.b16 %v8179
        %v10365 = vunpack.c.l.b16 %v8180
        %v10366 = vunpack.c.h.b16 %v8180
        %v10367 = vunpack.c.l.b16 %v8181
        %v10368 = vunpack.c.h.b16 %v8181
        %v10369 = vunpack.c.l.b16 %v8182
        %v10370 = vunpack.c.h.b16 %v8182
        %v10371 = vunpack.c.l.b16 %v8183
        %v10372 = vunpack.c.h.b16 %v8183
        %v10373 = vunpack.c.l.b16 %v8184
        %v10374 = vunpack.c.h.b16 %v8184
        %v10375 = vunpack.c.l.b16 %v8185
        %v10376 = vunpack.c.h.b16 %v8185
        %v10377 = vunpack.c.l.b16 %v8186
        %v10378 = vunpack.c.h.b16 %v8186
        %v10379 = vunpack.c.l.b16 %v8187
        %v10380 = vunpack.c.h.b16 %v8187
        %v10381 = vunpack.c.l.b16 %v8188
        %v10382 = vunpack.c.h.b16 %v8188
        %v10383 = vunpack.c.l.b16 %v8189
        %v10384 = vunpack.c.h.b16 %v8189
        %v10385 = vunpack.c.l.b16 %v8190
        %v10386 = vunpack.c.h.b16 %v8190
        %v10387 = vunpack.c.l.b16 %v8191
        %v10388 = vunpack.c.h.b16 %v8191
        %v10389 = vunpack.c.l.b16 %v8192
        %v10390 = vunpack.c.h.b16 %v8192
        %v10391 = vunpack.c.l.b16 %v8193
        %v10392 = vunpack.c.h.b16 %v8193
        %v10393 = vunpack.c.l.b16 %v8194
        %v10394 = vunpack.c.h.b16 %v8194
        %v10395 = vunpack.c.l.b16 %v8195
        %v10396 = vunpack.c.h.b16 %v8195
        %v10397 = vunpack.c.l.b16 %v8196
        %v10398 = vunpack.c.h.b16 %v8196
        %v10399 = vunpack.c.l.b16 %v8197
        %v10400 = vunpack.c.h.b16 %v8197
        %v10401 = vunpack.c.l.b16 %v8198
        %v10402 = vunpack.c.h.b16 %v8198
        %v10403 = vunpack.c.l.b16 %v8199
        %v10404 = vunpack.c.h.b16 %v8199
        %v10405 = vunpack.c.l.b16 %v8200
        %v10406 = vunpack.c.h.b16 %v8200
        %v10407 = vunpack.c.l.b16 %v8201
        %v10408 = vunpack.c.h.b16 %v8201
        %v10409 = vunpack.c.l.b16 %v8202
        %v10410 = vunpack.c.h.b16 %v8202
        %v10411 = vunpack.c.l.b16 %v8203
        %v10412 = vunpack.c.h.b16 %v8203
        %v10413 = vunpack.c.l.b16 %v8204
        %v10414 = vunpack.c.h.b16 %v8204
        %v10415 = vunpack.c.l.b16 %v8205
        %v10416 = vunpack.c.h.b16 %v8205
        %v10417 = vunpack.c.l.b16 %v8206
        %v10418 = vunpack.c.h.b16 %v8206
        %v10419 = vunpack.c.l.b16 %v8207
        %v10420 = vunpack.c.h.b16 %v8207
        %v10421 = vunpack.c.l.b16 %v8208
        %v10422 = vunpack.c.h.b16 %v8208
        %v10423 = vunpack.c.l.b16 %v8209
        %v10424 = vunpack.c.h.b16 %v8209
        %v10425 = vunpack.c.l.b16 %v8210
        %v10426 = vunpack.c.h.b16 %v8210
        %v10427 = vunpack.c.l.b16 %v8211
        %v10428 = vunpack.c.h.b16 %v8211
        %v10429 = vunpack.c.l.b16 %v8212
        %v10430 = vunpack.c.h.b16 %v8212
        %v10431 = vunpack.c.l.b16 %v8213
        %v10432 = vunpack.c.h.b16 %v8213
        %v10433 = vunpack.c.l.b16 %v8214
        %v10434 = vunpack.c.h.b16 %v8214
        %v10435 = vunpack.c.l.b16 %v8215
        %v10436 = vunpack.c.h.b16 %v8215
        %v10437 = vunpack.c.l.b16 %v8216
        %v10438 = vunpack.c.h.b16 %v8216
        %v10439 = vunpack.c.l.b16 %v8217
        %v10440 = vunpack.c.h.b16 %v8217
        %v10441 = vunpack.c.l.b16 %v8218
        %v10442 = vunpack.c.h.b16 %v8218
        %v10443 = vunpack.c.l.b16 %v8219
        %v10444 = vunpack.c.h.b16 %v8219
        %v10445 = vunpack.c.l.b16 %v8220
        %v10446 = vunpack.c.h.b16 %v8220
        %v10447 = vunpack.c.l.b16 %v8221
        %v10448 = vunpack.c.h.b16 %v8221
        %v10449 = vunpack.c.l.b16 %v8222
        %v10450 = vunpack.c.h.b16 %v8222
        %v10451 = vpack.c.b16 %v9065, %v9043
        %v10452 = vpack.c.b16 %v9066, %v9044
        %v10453 = vpack.c.b16 %v9067, %v9045
        %v10454 = vpack.c.b16 %v9068, %v9046
        %v10455 = vpack.c.b16 %v9069, %v9047
        %v10456 = vpack.c.b16 %v9070, %v9048
        %v10457 = vpack.c.b16 %v9071, %v9049
        %v10458 = vpack.c.b16 %v9072, %v9050
        %v10459 = vpack.c.b16 %v9073, %v9051
        %v10460 = vpack.c.b16 %v9074, %v9052
        %v10461 = vpack.c.b16 %v9075, %v9053
        %v10462 = vpack.c.b16 %v9076, %v9054
        %v10463 = vpack.c.b16 %v9077, %v9055
        %v10464 = vpack.c.b16 %v9078, %v9056
        %v10465 = vpack.c.b16 %v9079, %v9057
        %v10466 = vpack.c.b16 %v9080, %v9058
        %v10467 = vpack.c.b16 %v9081, %v9059
        %v10468 = vpack.c.b16 %v9082, %v9060
        %v10469 = vpack.c.b16 %v9083, %v9061
        %v10470 = vpack.c.b16 %v9084, %v9062
        %v10471 = vpack.c.b16 %v9085, %v9063
        %v10472 = vpack.c.b16 %v9086, %v9064
        %v10473 = vpack.c.b16 %v9109, %v9087
        %v10474 = vpack.c.b16 %v9110, %v9088
        %v10475 = vpack.c.b16 %v9111, %v9089
        %v10476 = vpack.c.b16 %v9112, %v9090
        %v10477 = vpack.c.b16 %v9113, %v9091
        %v10478 = vpack.c.b16 %v9114, %v9092
        %v10479 = vpack.c.b16 %v9115, %v9093
        %v10480 = vpack.c.b16 %v9116, %v9094
        %v10481 = vpack.c.b16 %v9117, %v9095
        %v10482 = vpack.c.b16 %v9118, %v9096
        %v10483 = vpack.c.b16 %v9119, %v9097
        %v10484 = vpack.c.b16 %v9120, %v9098
        %v10485 = vpack.c.b16 %v9121, %v9099
        %v10486 = vpack.c.b16 %v9122, %v9100
        %v10487 = vpack.c.b16 %v9123, %v9101
        %v10488 = vpack.c.b16 %v9124, %v9102
        %v10489 = vpack.c.b16 %v9125, %v9103
        %v10490 = vpack.c.b16 %v9126, %v9104
        %v10491 = vpack.c.b16 %v9127, %v9105
        %v10492 = vpack.c.b16 %v9128, %v9106
        %v10493 = vpack.c.b16 %v9129, %v9107
        %v10494 = vpack.c.b16 %v9130, %v9108
        %v10495 = vpack.c.b16 %v9153, %v9131
        %v10496 = vpack.c.b16 %v9154, %v9132
        %v10497 = vpack.c.b16 %v9155, %v9133
        %v10498 = vpack.c.b16 %v9156, %v9134
        %v10499 = vpack.c.b16 %v9157, %v9135
        %v10500 = vpack.c.b16 %v9158, %v9136
        %v10501 = vpack.c.b16 %v9159, %v9137
        %v10502 = vpack.c.b16 %v9160, %v9138
        %v10503 = vpack.c.b16 %v9161, %v9139
        %v10504 = vpack.c.b16 %v9162, %v9140
        %v10505 = vpack.c.b16 %v9163, %v9141
        %v10506 = vpack.c.b16 %v9164, %v9142
        %v10507 = vpack.c.b16 %v9165, %v9143
        %v10508 = vpack.c.b16 %v9166, %v9144
        %v10509 = vpack.c.b16 %v9167, %v9145
        %v10510 = vpack.c.b16 %v9168, %v9146
        %v10511 = vpack.c.b16 %v9169, %v9147
        %v10512 = vpack.c.b16 %v9170, %v9148
        %v10513 = vpack.c.b16 %v9171, %v9149
        %v10514 = vpack.c.b16 %v9172, %v9150
        %v10515 = vpack.c.b16 %v9173, %v9151
        %v10516 = vpack.c.b16 %v9174, %v9152
        %v10517 = vpack.c.b16 %v9197, %v9175
        %v10518 = vpack.c.b16 %v9198, %v9176
        %v10519 = vpack.c.b16 %v9199, %v9177
        %v10520 = vpack.c.b16 %v9200, %v9178
        %v10521 = vpack.c.b16 %v9201, %v9179
        %v10522 = vpack.c.b16 %v9202, %v9180
        %v10523 = vpack.c.b16 %v9203, %v9181
        %v10524 = vpack.c.b16 %v9204, %v9182
        %v10525 = vpack.c.b16 %v9205, %v9183
        %v10526 = vpack.c.b16 %v9206, %v9184
        %v10527 = vpack.c.b16 %v9207, %v9185
        %v10528 = vpack.c.b16 %v9208, %v9186
        %v10529 = vpack.c.b16 %v9209, %v9187
        %v10530 = vpack.c.b16 %v9210, %v9188
        %v10531 = vpack.c.b16 %v9211, %v9189
        %v10532 = vpack.c.b16 %v9212, %v9190
        %v10533 = vpack.c.b16 %v9213, %v9191
        %v10534 = vpack.c.b16 %v9214, %v9192
        %v10535 = vpack.c.b16 %v9215, %v9193
        %v10536 = vpack.c.b16 %v9216, %v9194
        %v10537 = vpack.c.b16 %v9217, %v9195
        %v10538 = vpack.c.b16 %v9218, %v9196
        %v10539 = vpack.c.b16 %v9241, %v9219
        %v10540 = vpack.c.b16 %v9242, %v9220
        %v10541 = vpack.c.b16 %v9243, %v9221
        %v10542 = vpack.c.b16 %v9244, %v9222
        %v10543 = vpack.c.b16 %v9245, %v9223
        %v10544 = vpack.c.b16 %v9246, %v9224
        %v10545 = vpack.c.b16 %v9247, %v9225
        %v10546 = vpack.c.b16 %v9248, %v9226
        %v10547 = vpack.c.b16 %v9249, %v9227
        %v10548 = vpack.c.b16 %v9250, %v9228
        %v10549 = vpack.c.b16 %v9251, %v9229
        %v10550 = vpack.c.b16 %v9252, %v9230
        %v10551 = vpack.c.b16 %v9253, %v9231
        %v10552 = vpack.c.b16 %v9254, %v9232
        %v10553 = vpack.c.b16 %v9255, %v9233
        %v10554 = vpack.c.b16 %v9256, %v9234
        %v10555 = vpack.c.b16 %v9257, %v9235
        %v10556 = vpack.c.b16 %v9258, %v9236
        %v10557 = vpack.c.b16 %v9259, %v9237
        %v10558 = vpack.c.b16 %v9260, %v9238
        %v10559 = vpack.c.b16 %v9261, %v9239
        %v10560 = vpack.c.b16 %v9262, %v9240
        %v10561 = vpack.c.b16 %v9285, %v9263
        %v10562 = vpack.c.b16 %v9286, %v9264
        %v10563 = vpack.c.b16 %v9287, %v9265
        %v10564 = vpack.c.b16 %v9288, %v9266
        %v10565 = vpack.c.b16 %v9289, %v9267
        %v10566 = vpack.c.b16 %v9290, %v9268
        %v10567 = vpack.c.b16 %v9291, %v9269
        %v10568 = vpack.c.b16 %v9292, %v9270
        %v10569 = vpack.c.b16 %v9293, %v9271
        %v10570 = vpack.c.b16 %v9294, %v9272
        %v10571 = vpack.c.b16 %v9295, %v9273
        %v10572 = vpack.c.b16 %v9296, %v9274
        %v10573 = vpack.c.b16 %v9297, %v9275
        %v10574 = vpack.c.b16 %v9298, %v9276
        %v10575 = vpack.c.b16 %v9299, %v9277
        %v10576 = vpack.c.b16 %v9300, %v9278
        %v10577 = vpack.c.b16 %v9301, %v9279
        %v10578 = vpack.c.b16 %v9302, %v9280
        %v10579 = vpack.c.b16 %v9303, %v9281
        %v10580 = vpack.c.b16 %v9304, %v9282
        %v10581 = vpack.c.b16 %v9305, %v9283
        %v10582 = vpack.c.b16 %v9306, %v9284
        %v10583 = vpack.c.b16 %v9329, %v9307
        %v10584 = vpack.c.b16 %v9330, %v9308
        %v10585 = vpack.c.b16 %v9331, %v9309
        %v10586 = vpack.c.b16 %v9332, %v9310
        %v10587 = vpack.c.b16 %v9333, %v9311
        %v10588 = vpack.c.b16 %v9334, %v9312
        %v10589 = vpack.c.b16 %v9335, %v9313
        %v10590 = vpack.c.b16 %v9336, %v9314
        %v10591 = vpack.c.b16 %v9337, %v9315
        %v10592 = vpack.c.b16 %v9338, %v9316
        %v10593 = vpack.c.b16 %v9339, %v9317
        %v10594 = vpack.c.b16 %v9340, %v9318
        %v10595 = vpack.c.b16 %v9341, %v9319
        %v10596 = vpack.c.b16 %v9342, %v9320
        %v10597 = vpack.c.b16 %v9343, %v9321
        %v10598 = vpack.c.b16 %v9344, %v9322
        %v10599 = vpack.c.b16 %v9345, %v9323
        %v10600 = vpack.c.b16 %v9346, %v9324
        %v10601 = vpack.c.b16 %v9347, %v9325
        %v10602 = vpack.c.b16 %v9348, %v9326
        %v10603 = vpack.c.b16 %v9349, %v9327
        %v10604 = vpack.c.b16 %v9350, %v9328
        %v10605 = vpack.c.b16 %v9373, %v9351
        %v10606 = vpack.c.b16 %v9374, %v9352
        %v10607 = vpack.c.b16 %v9375, %v9353
        %v10608 = vpack.c.b16 %v9376, %v9354
        %v10609 = vpack.c.b16 %v9377, %v9355
        %v10610 = vpack.c.b16 %v9378, %v9356
        %v10611 = vpack.c.b16 %v9379, %v9357
        %v10612 = vpack.c.b16 %v9380, %v9358
        %v10613 = vpack.c.b16 %v9381, %v9359
        %v10614 = vpack.c.b16 %v9382, %v9360
        %v10615 = vpack.c.b16 %v9383, %v9361
        %v10616 = vpack.c.b16 %v9384, %v9362
        %v10617 = vpack.c.b16 %v9385, %v9363
        %v10618 = vpack.c.b16 %v9386, %v9364
        %v10619 = vpack.c.b16 %v9387, %v9365
        %v10620 = vpack.c.b16 %v9388, %v9366
        %v10621 = vpack.c.b16 %v9389, %v9367
        %v10622 = vpack.c.b16 %v9390, %v9368
        %v10623 = vpack.c.b16 %v9391, %v9369
        %v10624 = vpack.c.b16 %v9392, %v9370
        %v10625 = vpack.c.b16 %v9393, %v9371
        %v10626 = vpack.c.b16 %v9394, %v9372
        %v10627 = vpack.c.b16 %v9417, %v9395
        %v10628 = vpack.c.b16 %v9418, %v9396
        %v10629 = vpack.c.b16 %v9419, %v9397
        %v10630 = vpack.c.b16 %v9420, %v9398
        %v10631 = vpack.c.b16 %v9421, %v9399
        %v10632 = vpack.c.b16 %v9422, %v9400
        %v10633 = vpack.c.b16 %v9423, %v9401
        %v10634 = vpack.c.b16 %v9424, %v9402
        %v10635 = vpack.c.b16 %v9425, %v9403
        %v10636 = vpack.c.b16 %v9426, %v9404
        %v10637 = vpack.c.b16 %v9427, %v9405
        %v10638 = vpack.c.b16 %v9428, %v9406
        %v10639 = vpack.c.b16 %v9429, %v9407
        %v10640 = vpack.c.b16 %v9430, %v9408
        %v10641 = vpack.c.b16 %v9431, %v9409
        %v10642 = vpack.c.b16 %v9432, %v9410
        %v10643 = vpack.c.b16 %v9433, %v9411
        %v10644 = vpack.c.b16 %v9434, %v9412
        %v10645 = vpack.c.b16 %v9435, %v9413
        %v10646 = vpack.c.b16 %v9436, %v9414
        %v10647 = vpack.c.b16 %v9437, %v9415
        %v10648 = vpack.c.b16 %v9438, %v9416
        %v10649 = vpack.c.b16 %v9461, %v9439
        %v10650 = vpack.c.b16 %v9462, %v9440
        %v10651 = vpack.c.b16 %v9463, %v9441
        %v10652 = vpack.c.b16 %v9464, %v9442
        %v10653 = vpack.c.b16 %v9465, %v9443
        %v10654 = vpack.c.b16 %v9466, %v9444
        %v10655 = vpack.c.b16 %v9467, %v9445
        %v10656 = vpack.c.b16 %v9468, %v9446
        %v10657 = vpack.c.b16 %v9469, %v9447
        %v10658 = vpack.c.b16 %v9470, %v9448
        %v10659 = vpack.c.b16 %v9471, %v9449
        %v10660 = vpack.c.b16 %v9472, %v9450
        %v10661 = vpack.c.b16 %v9473, %v9451
        %v10662 = vpack.c.b16 %v9474, %v9452
        %v10663 = vpack.c.b16 %v9475, %v9453
        %v10664 = vpack.c.b16 %v9476, %v9454
        %v10665 = vpack.c.b16 %v9477, %v9455
        %v10666 = vpack.c.b16 %v9478, %v9456
        %v10667 = vpack.c.b16 %v9479, %v9457
        %v10668 = vpack.c.b16 %v9480, %v9458
        %v10669 = vpack.c.b16 %v9481, %v9459
        %v10670 = vpack.c.b16 %v9482, %v9460
        %v10671 = vpack.c.b16 %v9505, %v9483
        %v10672 = vpack.c.b16 %v9506, %v9484
        %v10673 = vpack.c.b16 %v9507, %v9485
        %v10674 = vpack.c.b16 %v9508, %v9486
        %v10675 = vpack.c.b16 %v9509, %v9487
        %v10676 = vpack.c.b16 %v9510, %v9488
        %v10677 = vpack.c.b16 %v9511, %v9489
        %v10678 = vpack.c.b16 %v9512, %v9490
        %v10679 = vpack.c.b16 %v9513, %v9491
        %v10680 = vpack.c.b16 %v9514, %v9492
        %v10681 = vpack.c.b16 %v9515, %v9493
        %v10682 = vpack.c.b16 %v9516, %v9494
        %v10683 = vpack.c.b16 %v9517, %v9495
        %v10684 = vpack.c.b16 %v9518, %v9496
        %v10685 = vpack.c.b16 %v9519, %v9497
        %v10686 = vpack.c.b16 %v9520, %v9498
        %v10687 = vpack.c.b16 %v9521, %v9499
        %v10688 = vpack.c.b16 %v9522, %v9500
        %v10689 = vpack.c.b16 %v9523, %v9501
        %v10690 = vpack.c.b16 %v9524, %v9502
        %v10691 = vpack.c.b16 %v9525, %v9503
        %v10692 = vpack.c.b16 %v9526, %v9504
        %v10693 = vpack.c.b16 %v9549, %v9527
        %v10694 = vpack.c.b16 %v9550, %v9528
        %v10695 = vpack.c.b16 %v9551, %v9529
        %v10696 = vpack.c.b16 %v9552, %v9530
        %v10697 = vpack.c.b16 %v9553, %v9531
        %v10698 = vpack.c.b16 %v9554, %v9532
        %v10699 = vpack.c.b16 %v9555, %v9533
        %v10700 = vpack.c.b16 %v9556, %v9534
        %v10701 = vpack.c.b16 %v9557, %v9535
        %v10702 = vpack.c.b16 %v9558, %v9536
        %v10703 = vpack.c.b16 %v9559, %v9537
        %v10704 = vpack.c.b16 %v9560, %v9538
        %v10705 = vpack.c.b16 %v9561, %v9539
        %v10706 = vpack.c.b16 %v9562, %v9540
        %v10707 = vpack.c.b16 %v9563, %v9541
        %v10708 = vpack.c.b16 %v9564, %v9542
        %v10709 = vpack.c.b16 %v9565, %v9543
        %v10710 = vpack.c.b16 %v9566, %v9544
        %v10711 = vpack.c.b16 %v9567, %v9545
        %v10712 = vpack.c.b16 %v9568, %v9546
        %v10713 = vpack.c.b16 %v9569, %v9547
        %v10714 = vpack.c.b16 %v9570, %v9548
        %v10715 = vpack.c.b16 %v9593, %v9571
        %v10716 = vpack.c.b16 %v9594, %v9572
        %v10717 = vpack.c.b16 %v9595, %v9573
        %v10718 = vpack.c.b16 %v9596, %v9574
        %v10719 = vpack.c.b16 %v9597, %v9575
        %v10720 = vpack.c.b16 %v9598, %v9576
        %v10721 = vpack.c.b16 %v9599, %v9577
        %v10722 = vpack.c.b16 %v9600, %v9578
        %v10723 = vpack.c.b16 %v9601, %v9579
        %v10724 = vpack.c.b16 %v9602, %v9580
        %v10725 = vpack.c.b16 %v9603, %v9581
        %v10726 = vpack.c.b16 %v9604, %v9582
        %v10727 = vpack.c.b16 %v9605, %v9583
        %v10728 = vpack.c.b16 %v9606, %v9584
        %v10729 = vpack.c.b16 %v9607, %v9585
        %v10730 = vpack.c.b16 %v9608, %v9586
        %v10731 = vpack.c.b16 %v9609, %v9587
        %v10732 = vpack.c.b16 %v9610, %v9588
        %v10733 = vpack.c.b16 %v9611, %v9589
        %v10734 = vpack.c.b16 %v9612, %v9590
        %v10735 = vpack.c.b16 %v9613, %v9591
        %v10736 = vpack.c.b16 %v9614, %v9592
        %v10737 = vpack.c.b16 %v9637, %v9615
        %v10738 = vpack.c.b16 %v9638, %v9616
        %v10739 = vpack.c.b16 %v9639, %v9617
        %v10740 = vpack.c.b16 %v9640, %v9618
        %v10741 = vpack.c.b16 %v9641, %v9619
        %v10742 = vpack.c.b16 %v9642, %v9620
        %v10743 = vpack.c.b16 %v9643, %v9621
        %v10744 = vpack.c.b16 %v9644, %v9622
        %v10745 = vpack.c.b16 %v9645, %v9623
        %v10746 = vpack.c.b16 %v9646, %v9624
        %v10747 = vpack.c.b16 %v9647, %v9625
        %v10748 = vpack.c.b16 %v9648, %v9626
        %v10749 = vpack.c.b16 %v9649, %v9627
        %v10750 = vpack.c.b16 %v9650, %v9628
        %v10751 = vpack.c.b16 %v9651, %v9629
        %v10752 = vpack.c.b16 %v9652, %v9630
        %v10753 = vpack.c.b16 %v9653, %v9631
        %v10754 = vpack.c.b16 %v9654, %v9632
        %v10755 = vpack.c.b16 %v9655, %v9633
        %v10756 = vpack.c.b16 %v9656, %v9634
        %v10757 = vpack.c.b16 %v9657, %v9635
        %v10758 = vpack.c.b16 %v9658, %v9636
        %v10759 = vpack.c.b16 %v9681, %v9659
        %v10760 = vpack.c.b16 %v9682, %v9660
        %v10761 = vpack.c.b16 %v9683, %v9661
        %v10762 = vpack.c.b16 %v9684, %v9662
        %v10763 = vpack.c.b16 %v9685, %v9663
        %v10764 = vpack.c.b16 %v9686, %v9664
        %v10765 = vpack.c.b16 %v9687, %v9665
        %v10766 = vpack.c.b16 %v9688, %v9666
        %v10767 = vpack.c.b16 %v9689, %v9667
        %v10768 = vpack.c.b16 %v9690, %v9668
        %v10769 = vpack.c.b16 %v9691, %v9669
        %v10770 = vpack.c.b16 %v9692, %v9670
        %v10771 = vpack.c.b16 %v9693, %v9671
        %v10772 = vpack.c.b16 %v9694, %v9672
        %v10773 = vpack.c.b16 %v9695, %v9673
        %v10774 = vpack.c.b16 %v9696, %v9674
        %v10775 = vpack.c.b16 %v9697, %v9675
        %v10776 = vpack.c.b16 %v9698, %v9676
        %v10777 = vpack.c.b16 %v9699, %v9677
        %v10778 = vpack.c.b16 %v9700, %v9678
        %v10779 = vpack.c.b16 %v9701, %v9679
        %v10780 = vpack.c.b16 %v9702, %v9680
        %v10781 = vpack.c.b16 %v9725, %v9703
        %v10782 = vpack.c.b16 %v9726, %v9704
        %v10783 = vpack.c.b16 %v9727, %v9705
        %v10784 = vpack.c.b16 %v9728, %v9706
        %v10785 = vpack.c.b16 %v9729, %v9707
        %v10786 = vpack.c.b16 %v9730, %v9708
        %v10787 = vpack.c.b16 %v9731, %v9709
        %v10788 = vpack.c.b16 %v9732, %v9710
        %v10789 = vpack.c.b16 %v9733, %v9711
        %v10790 = vpack.c.b16 %v9734, %v9712
        %v10791 = vpack.c.b16 %v9735, %v9713
        %v10792 = vpack.c.b16 %v9736, %v9714
        %v10793 = vpack.c.b16 %v9737, %v9715
        %v10794 = vpack.c.b16 %v9738, %v9716
        %v10795 = vpack.c.b16 %v9739, %v9717
        %v10796 = vpack.c.b16 %v9740, %v9718
        %v10797 = vpack.c.b16 %v9741, %v9719
        %v10798 = vpack.c.b16 %v9742, %v9720
        %v10799 = vpack.c.b16 %v9743, %v9721
        %v10800 = vpack.c.b16 %v9744, %v9722
        %v10801 = vpack.c.b16 %v9745, %v9723
        %v10802 = vpack.c.b16 %v9746, %v9724
        %v10803 = vpack.c.b16 %v9769, %v9747
        %v10804 = vpack.c.b16 %v9770, %v9748
        %v10805 = vpack.c.b16 %v9771, %v9749
        %v10806 = vpack.c.b16 %v9772, %v9750
        %v10807 = vpack.c.b16 %v9773, %v9751
        %v10808 = vpack.c.b16 %v9774, %v9752
        %v10809 = vpack.c.b16 %v9775, %v9753
        %v10810 = vpack.c.b16 %v9776, %v9754
        %v10811 = vpack.c.b16 %v9777, %v9755
        %v10812 = vpack.c.b16 %v9778, %v9756
        %v10813 = vpack.c.b16 %v9779, %v9757
        %v10814 = vpack.c.b16 %v9780, %v9758
        %v10815 = vpack.c.b16 %v9781, %v9759
        %v10816 = vpack.c.b16 %v9782, %v9760
        %v10817 = vpack.c.b16 %v9783, %v9761
        %v10818 = vpack.c.b16 %v9784, %v9762
        %v10819 = vpack.c.b16 %v9785, %v9763
        %v10820 = vpack.c.b16 %v9786, %v9764
        %v10821 = vpack.c.b16 %v9787, %v9765
        %v10822 = vpack.c.b16 %v9788, %v9766
        %v10823 = vpack.c.b16 %v9789, %v9767
        %v10824 = vpack.c.b16 %v9790, %v9768
        %v10825 = vpack.c.b16 %v9813, %v9791
        %v10826 = vpack.c.b16 %v9814, %v9792
        %v10827 = vpack.c.b16 %v9815, %v9793
        %v10828 = vpack.c.b16 %v9816, %v9794
        %v10829 = vpack.c.b16 %v9817, %v9795
        %v10830 = vpack.c.b16 %v9818, %v9796
        %v10831 = vpack.c.b16 %v9819, %v9797
        %v10832 = vpack.c.b16 %v9820, %v9798
        %v10833 = vpack.c.b16 %v9821, %v9799
        %v10834 = vpack.c.b16 %v9822, %v9800
        %v10835 = vpack.c.b16 %v9823, %v9801
        %v10836 = vpack.c.b16 %v9824, %v9802
        %v10837 = vpack.c.b16 %v9825, %v9803
        %v10838 = vpack.c.b16 %v9826, %v9804
        %v10839 = vpack.c.b16 %v9827, %v9805
        %v10840 = vpack.c.b16 %v9828, %v9806
        %v10841 = vpack.c.b16 %v9829, %v9807
        %v10842 = vpack.c.b16 %v9830, %v9808
        %v10843 = vpack.c.b16 %v9831, %v9809
        %v10844 = vpack.c.b16 %v9832, %v9810
        %v10845 = vpack.c.b16 %v9833, %v9811
        %v10846 = vpack.c.b16 %v9834, %v9812
        %v10847 = vpack.c.b16 %v9857, %v9835
        %v10848 = vpack.c.b16 %v9858, %v9836
        %v10849 = vpack.c.b16 %v9859, %v9837
        %v10850 = vpack.c.b16 %v9860, %v9838
        %v10851 = vpack.c.b16 %v9861, %v9839
        %v10852 = vpack.c.b16 %v9862, %v9840
        %v10853 = vpack.c.b16 %v9863, %v9841
        %v10854 = vpack.c.b16 %v9864, %v9842
        %v10855 = vpack.c.b16 %v9865, %v9843
        %v10856 = vpack.c.b16 %v9866, %v9844
        %v10857 = vpack.c.b16 %v9867, %v9845
        %v10858 = vpack.c.b16 %v9868, %v9846
        %v10859 = vpack.c.b16 %v9869, %v9847
        %v10860 = vpack.c.b16 %v9870, %v9848
        %v10861 = vpack.c.b16 %v9871, %v9849
        %v10862 = vpack.c.b16 %v9872, %v9850
        %v10863 = vpack.c.b16 %v9873, %v9851
        %v10864 = vpack.c.b16 %v9874, %v9852
        %v10865 = vpack.c.b16 %v9875, %v9853
        %v10866 = vpack.c.b16 %v9876, %v9854
        %v10867 = vpack.c.b16 %v9877, %v9855
        %v10868 = vpack.c.b16 %v9878, %v9856
        %v10869 = vpack.c.b16 %v9901, %v9879
        %v10870 = vpack.c.b16 %v9902, %v9880
        %v10871 = vpack.c.b16 %v9903, %v9881
        %v10872 = vpack.c.b16 %v9904, %v9882
        %v10873 = vpack.c.b16 %v9905, %v9883
        %v10874 = vpack.c.b16 %v9906, %v9884
        %v10875 = vpack.c.b16 %v9907, %v9885
        %v10876 = vpack.c.b16 %v9908, %v9886
        %v10877 = vpack.c.b16 %v9909, %v9887
        %v10878 = vpack.c.b16 %v9910, %v9888
        %v10879 = vpack.c.b16 %v9911, %v9889
        %v10880 = vpack.c.b16 %v9912, %v9890
        %v10881 = vpack.c.b16 %v9913, %v9891
        %v10882 = vpack.c.b16 %v9914, %v9892
        %v10883 = vpack.c.b16 %v9915, %v9893
        %v10884 = vpack.c.b16 %v9916, %v9894
        %v10885 = vpack.c.b16 %v9917, %v9895
        %v10886 = vpack.c.b16 %v9918, %v9896
        %v10887 = vpack.c.b16 %v9919, %v9897
        %v10888 = vpack.c.b16 %v9920, %v9898
        %v10889 = vpack.c.b16 %v9921, %v9899
        %v10890 = vpack.c.b16 %v9922, %v9900
        %v10891 = vpack.c.b16 %v9945, %v9923
        %v10892 = vpack.c.b16 %v9946, %v9924
        %v10893 = vpack.c.b16 %v9947, %v9925
        %v10894 = vpack.c.b16 %v9948, %v9926
        %v10895 = vpack.c.b16 %v9949, %v9927
        %v10896 = vpack.c.b16 %v9950, %v9928
        %v10897 = vpack.c.b16 %v9951, %v9929
        %v10898 = vpack.c.b16 %v9952, %v9930
        %v10899 = vpack.c.b16 %v9953, %v9931
        %v10900 = vpack.c.b16 %v9954, %v9932
        %v10901 = vpack.c.b16 %v9955, %v9933
        %v10902 = vpack.c.b16 %v9956, %v9934
        %v10903 = vpack.c.b16 %v9957, %v9935
        %v10904 = vpack.c.b16 %v9958, %v9936
        %v10905 = vpack.c.b16 %v9959, %v9937
        %v10906 = vpack.c.b16 %v9960, %v9938
        %v10907 = vpack.c.b16 %v9961, %v9939
        %v10908 = vpack.c.b16 %v9962, %v9940
        %v10909 = vpack.c.b16 %v9963, %v9941
        %v10910 = vpack.c.b16 %v9964, %v9942
        %v10911 = vpack.c.b16 %v9965, %v9943
        %v10912 = vpack.c.b16 %v9966, %v9944
        %v10913 = vpack.c.b16 %v9989, %v9967
        %v10914 = vpack.c.b16 %v9990, %v9968
        %v10915 = vpack.c.b16 %v9991, %v9969
        %v10916 = vpack.c.b16 %v9992, %v9970
        %v10917 = vpack.c.b16 %v9993, %v9971
        %v10918 = vpack.c.b16 %v9994, %v9972
        %v10919 = vpack.c.b16 %v9995, %v9973
        %v10920 = vpack.c.b16 %v9996, %v9974
        %v10921 = vpack.c.b16 %v9997, %v9975
        %v10922 = vpack.c.b16 %v9998, %v9976
        %v10923 = vpack.c.b16 %v9999, %v9977
        %v10924 = vpack.c.b16 %v10000, %v9978
        %v10925 = vpack.c.b16 %v10001, %v9979
        %v10926 = vpack.c.b16 %v10002, %v9980
        %v10927 = vpack.c.b16 %v10003, %v9981
        %v10928 = vpack.c.b16 %v10004, %v9982
        %v10929 = vpack.c.b16 %v10005, %v9983
        %v10930 = vpack.c.b16 %v10006, %v9984
        %v10931 = vpack.c.b16 %v10007, %v9985
        %v10932 = vpack.c.b16 %v10008, %v9986
        %v10933 = vpack.c.b16 %v10009, %v9987
        %v10934 = vpack.c.b16 %v10010, %v9988
        %v10935 = vpack.c.b16 %v10033, %v10011
        %v10936 = vpack.c.b16 %v10034, %v10012
        %v10937 = vpack.c.b16 %v10035, %v10013
        %v10938 = vpack.c.b16 %v10036, %v10014
        %v10939 = vpack.c.b16 %v10037, %v10015
        %v10940 = vpack.c.b16 %v10038, %v10016
        %v10941 = vpack.c.b16 %v10039, %v10017
        %v10942 = vpack.c.b16 %v10040, %v10018
        %v10943 = vpack.c.b16 %v10041, %v10019
        %v10944 = vpack.c.b16 %v10042, %v10020
        %v10945 = vpack.c.b16 %v10043, %v10021
        %v10946 = vpack.c.b16 %v10044, %v10022
        %v10947 = vpack.c.b16 %v10045, %v10023
        %v10948 = vpack.c.b16 %v10046, %v10024
        %v10949 = vpack.c.b16 %v10047, %v10025
        %v10950 = vpack.c.b16 %v10048, %v10026
        %v10951 = vpack.c.b16 %v10049, %v10027
        %v10952 = vpack.c.b16 %v10050, %v10028
        %v10953 = vpack.c.b16 %v10051, %v10029
        %v10954 = vpack.c.b16 %v10052, %v10030
        %v10955 = vpack.c.b16 %v10053, %v10031
        %v10956 = vpack.c.b16 %v10054, %v10032
        %v10957 = vpack.c.b16 %v10077, %v10055
        %v10958 = vpack.c.b16 %v10078, %v10056
        %v10959 = vpack.c.b16 %v10079, %v10057
        %v10960 = vpack.c.b16 %v10080, %v10058
        %v10961 = vpack.c.b16 %v10081, %v10059
        %v10962 = vpack.c.b16 %v10082, %v10060
        %v10963 = vpack.c.b16 %v10083, %v10061
        %v10964 = vpack.c.b16 %v10084, %v10062
        %v10965 = vpack.c.b16 %v10085, %v10063
        %v10966 = vpack.c.b16 %v10086, %v10064
        %v10967 = vpack.c.b16 %v10087, %v10065
        %v10968 = vpack.c.b16 %v10088, %v10066
        %v10969 = vpack.c.b16 %v10089, %v10067
        %v10970 = vpack.c.b16 %v10090, %v10068
        %v10971 = vpack.c.b16 %v10091, %v10069
        %v10972 = vpack.c.b16 %v10092, %v10070
        %v10973 = vpack.c.b16 %v10093, %v10071
        %v10974 = vpack.c.b16 %v10094, %v10072
        %v10975 = vpack.c.b16 %v10095, %v10073
        %v10976 = vpack.c.b16 %v10096, %v10074
        %v10977 = vpack.c.b16 %v10097, %v10075
        %v10978 = vpack.c.b16 %v10098, %v10076
        %v10979 = vpack.c.b16 %v10121, %v10099
        %v10980 = vpack.c.b16 %v10122, %v10100
        %v10981 = vpack.c.b16 %v10123, %v10101
        %v10982 = vpack.c.b16 %v10124, %v10102
        %v10983 = vpack.c.b16 %v10125, %v10103
        %v10984 = vpack.c.b16 %v10126, %v10104
        %v10985 = vpack.c.b16 %v10127, %v10105
        %v10986 = vpack.c.b16 %v10128, %v10106
        %v10987 = vpack.c.b16 %v10129, %v10107
        %v10988 = vpack.c.b16 %v10130, %v10108
        %v10989 = vpack.c.b16 %v10131, %v10109
        %v10990 = vpack.c.b16 %v10132, %v10110
        %v10991 = vpack.c.b16 %v10133, %v10111
        %v10992 = vpack.c.b16 %v10134, %v10112
        %v10993 = vpack.c.b16 %v10135, %v10113
        %v10994 = vpack.c.b16 %v10136, %v10114
        %v10995 = vpack.c.b16 %v10137, %v10115
        %v10996 = vpack.c.b16 %v10138, %v10116
        %v10997 = vpack.c.b16 %v10139, %v10117
        %v10998 = vpack.c.b16 %v10140, %v10118
        %v10999 = vpack.c.b16 %v10141, %v10119
        %v11000 = vpack.c.b16 %v10142, %v10120
        %v11001 = vpack.c.b16 %v10165, %v10143
        %v11002 = vpack.c.b16 %v10166, %v10144
        %v11003 = vpack.c.b16 %v10167, %v10145
        %v11004 = vpack.c.b16 %v10168, %v10146
        %v11005 = vpack.c.b16 %v10169, %v10147
        %v11006 = vpack.c.b16 %v10170, %v10148
        %v11007 = vpack.c.b16 %v10171, %v10149
        %v11008 = vpack.c.b16 %v10172, %v10150
        %v11009 = vpack.c.b16 %v10173, %v10151
        %v11010 = vpack.c.b16 %v10174, %v10152
        %v11011 = vpack.c.b16 %v10175, %v10153
        %v11012 = vpack.c.b16 %v10176, %v10154
        %v11013 = vpack.c.b16 %v10177, %v10155
        %v11014 = vpack.c.b16 %v10178, %v10156
        %v11015 = vpack.c.b16 %v10179, %v10157
        %v11016 = vpack.c.b16 %v10180, %v10158
        %v11017 = vpack.c.b16 %v10181, %v10159
        %v11018 = vpack.c.b16 %v10182, %v10160
        %v11019 = vpack.c.b16 %v10183, %v10161
        %v11020 = vpack.c.b16 %v10184, %v10162
        %v11021 = vpack.c.b16 %v10185, %v10163
        %v11022 = vpack.c.b16 %v10186, %v10164
        %v11023 = vpack.c.b16 %v10209, %v10187
        %v11024 = vpack.c.b16 %v10210, %v10188
        %v11025 = vpack.c.b16 %v10211, %v10189
        %v11026 = vpack.c.b16 %v10212, %v10190
        %v11027 = vpack.c.b16 %v10213, %v10191
        %v11028 = vpack.c.b16 %v10214, %v10192
        %v11029 = vpack.c.b16 %v10215, %v10193
        %v11030 = vpack.c.b16 %v10216, %v10194
        %v11031 = vpack.c.b16 %v10217, %v10195
        %v11032 = vpack.c.b16 %v10218, %v10196
        %v11033 = vpack.c.b16 %v10219, %v10197
        %v11034 = vpack.c.b16 %v10220, %v10198
        %v11035 = vpack.c.b16 %v10221, %v10199
        %v11036 = vpack.c.b16 %v10222, %v10200
        %v11037 = vpack.c.b16 %v10223, %v10201
        %v11038 = vpack.c.b16 %v10224, %v10202
        %v11039 = vpack.c.b16 %v10225, %v10203
        %v11040 = vpack.c.b16 %v10226, %v10204
        %v11041 = vpack.c.b16 %v10227, %v10205
        %v11042 = vpack.c.b16 %v10228, %v10206
        %v11043 = vpack.c.b16 %v10229, %v10207
        %v11044 = vpack.c.b16 %v10230, %v10208
        %v11045 = vpack.c.b16 %v10253, %v10231
        %v11046 = vpack.c.b16 %v10254, %v10232
        %v11047 = vpack.c.b16 %v10255, %v10233
        %v11048 = vpack.c.b16 %v10256, %v10234
        %v11049 = vpack.c.b16 %v10257, %v10235
        %v11050 = vpack.c.b16 %v10258, %v10236
        %v11051 = vpack.c.b16 %v10259, %v10237
        %v11052 = vpack.c.b16 %v10260, %v10238
        %v11053 = vpack.c.b16 %v10261, %v10239
        %v11054 = vpack.c.b16 %v10262, %v10240
        %v11055 = vpack.c.b16 %v10263, %v10241
        %v11056 = vpack.c.b16 %v10264, %v10242
        %v11057 = vpack.c.b16 %v10265, %v10243
        %v11058 = vpack.c.b16 %v10266, %v10244
        %v11059 = vpack.c.b16 %v10267, %v10245
        %v11060 = vpack.c.b16 %v10268, %v10246
        %v11061 = vpack.c.b16 %v10269, %v10247
        %v11062 = vpack.c.b16 %v10270, %v10248
        %v11063 = vpack.c.b16 %v10271, %v10249
        %v11064 = vpack.c.b16 %v10272, %v10250
        %v11065 = vpack.c.b16 %v10273, %v10251
        %v11066 = vpack.c.b16 %v10274, %v10252
        %v11067 = vpack.c.b16 %v10297, %v10275
        %v11068 = vpack.c.b16 %v10298, %v10276
        %v11069 = vpack.c.b16 %v10299, %v10277
        %v11070 = vpack.c.b16 %v10300, %v10278
        %v11071 = vpack.c.b16 %v10301, %v10279
        %v11072 = vpack.c.b16 %v10302, %v10280
        %v11073 = vpack.c.b16 %v10303, %v10281
        %v11074 = vpack.c.b16 %v10304, %v10282
        %v11075 = vpack.c.b16 %v10305, %v10283
        %v11076 = vpack.c.b16 %v10306, %v10284
        %v11077 = vpack.c.b16 %v10307, %v10285
        %v11078 = vpack.c.b16 %v10308, %v10286
        %v11079 = vpack.c.b16 %v10309, %v10287
        %v11080 = vpack.c.b16 %v10310, %v10288
        %v11081 = vpack.c.b16 %v10311, %v10289
        %v11082 = vpack.c.b16 %v10312, %v10290
        %v11083 = vpack.c.b16 %v10313, %v10291
        %v11084 = vpack.c.b16 %v10314, %v10292
        %v11085 = vpack.c.b16 %v10315, %v10293
        %v11086 = vpack.c.b16 %v10316, %v10294
        %v11087 = vpack.c.b16 %v10317, %v10295
        %v11088 = vpack.c.b16 %v10318, %v10296
        %v11089 = vpack.c.b16 %v10341, %v10319
        %v11090 = vpack.c.b16 %v10342, %v10320
        %v11091 = vpack.c.b16 %v10343, %v10321
        %v11092 = vpack.c.b16 %v10344, %v10322
        %v11093 = vpack.c.b16 %v10345, %v10323
        %v11094 = vpack.c.b16 %v10346, %v10324
        %v11095 = vpack.c.b16 %v10347, %v10325
        %v11096 = vpack.c.b16 %v10348, %v10326
        %v11097 = vpack.c.b16 %v10349, %v10327
        %v11098 = vpack.c.b16 %v10350, %v10328
        %v11099 = vpack.c.b16 %v10351, %v10329
        %v11100 = vpack.c.b16 %v10352, %v10330
        %v11101 = vpack.c.b16 %v10353, %v10331
        %v11102 = vpack.c.b16 %v10354, %v10332
        %v11103 = vpack.c.b16 %v10355, %v10333
        %v11104 = vpack.c.b16 %v10356, %v10334
        %v11105 = vpack.c.b16 %v10357, %v10335
        %v11106 = vpack.c.b16 %v10358, %v10336
        %v11107 = vpack.c.b16 %v10359, %v10337
        %v11108 = vpack.c.b16 %v10360, %v10338
        %v11109 = vpack.c.b16 %v10361, %v10339
        %v11110 = vpack.c.b16 %v10362, %v10340
        %v11111 = vpack.c.b16 %v10385, %v10363
        %v11112 = vpack.c.b16 %v10386, %v10364
        %v11113 = vpack.c.b16 %v10387, %v10365
        %v11114 = vpack.c.b16 %v10388, %v10366
        %v11115 = vpack.c.b16 %v10389, %v10367
        %v11116 = vpack.c.b16 %v10390, %v10368
        %v11117 = vpack.c.b16 %v10391, %v10369
        %v11118 = vpack.c.b16 %v10392, %v10370
        %v11119 = vpack.c.b16 %v10393, %v10371
        %v11120 = vpack.c.b16 %v10394, %v10372
        %v11121 = vpack.c.b16 %v10395, %v10373
        %v11122 = vpack.c.b16 %v10396, %v10374
        %v11123 = vpack.c.b16 %v10397, %v10375
        %v11124 = vpack.c.b16 %v10398, %v10376
        %v11125 = vpack.c.b16 %v10399, %v10377
        %v11126 = vpack.c.b16 %v10400, %v10378
        %v11127 = vpack.c.b16 %v10401, %v10379
        %v11128 = vpack.c.b16 %v10402, %v10380
        %v11129 = vpack.c.b16 %v10403, %v10381
        %v11130 = vpack.c.b16 %v10404, %v10382
        %v11131 = vpack.c.b16 %v10405, %v10383
        %v11132 = vpack.c.b16 %v10406, %v10384
        %v11133 = vpack.c.b16 %v10429, %v10407
        %v11134 = vpack.c.b16 %v10430, %v10408
        %v11135 = vpack.c.b16 %v10431, %v10409
        %v11136 = vpack.c.b16 %v10432, %v10410
        %v11137 = vpack.c.b16 %v10433, %v10411
        %v11138 = vpack.c.b16 %v10434, %v10412
        %v11139 = vpack.c.b16 %v10435, %v10413
        %v11140 = vpack.c.b16 %v10436, %v10414
        %v11141 = vpack.c.b16 %v10437, %v10415
        %v11142 = vpack.c.b16 %v10438, %v10416
        %v11143 = vpack.c.b16 %v10439, %v10417
        %v11144 = vpack.c.b16 %v10440, %v10418
        %v11145 = vpack.c.b16 %v10441, %v10419
        %v11146 = vpack.c.b16 %v10442, %v10420
        %v11147 = vpack.c.b16 %v10443, %v10421
        %v11148 = vpack.c.b16 %v10444, %v10422
        %v11149 = vpack.c.b16 %v10445, %v10423
        %v11150 = vpack.c.b16 %v10446, %v10424
        %v11151 = vpack.c.b16 %v10447, %v10425
        %v11152 = vpack.c.b16 %v10448, %v10426
        %v11153 = vpack.c.b16 %v10449, %v10427
        %v11154 = vpack.c.b16 %v10450, %v10428
        %11859 = vmatprep.subr.bf16.mxu0 %v10452
        %11860 = vmatpush1.bf16.msra.mxu0 %v10451
        %11861 = vmatprep.subr.bf16.mxu0 %v10474
        %11862 = vmatpush1.bf16.msra.mxu0 %v10473
        %11863 = vmatprep.subr.bf16.mxu0 %v10496
        %11864 = vmatpush1.bf16.msra.mxu0 %v10495
        %11865 = vmatprep.subr.bf16.mxu0 %v10518
        %11866 = vmatpush1.bf16.msra.mxu0 %v10517
        %11867 = vmatprep.subr.bf16.mxu0 %v10540
        %11868 = vmatpush1.bf16.msra.mxu0 %v10539
        %11869 = vmatprep.subr.bf16.mxu0 %v10562
        %11870 = vmatpush1.bf16.msra.mxu0 %v10561
        %11871 = vmatprep.subr.bf16.mxu0 %v10584
        %11872 = vmatpush1.bf16.msra.mxu0 %v10583
        %11873 = vmatprep.subr.bf16.mxu0 %v10606
        %11874 = vmatpush1.bf16.msra.mxu0 %v10605
        %11875 = vmatprep.subr.bf16.mxu0 %v10628
        %11876 = vmatpush1.bf16.msra.mxu0 %v10627
        %11877 = vmatprep.subr.bf16.mxu0 %v10650
        %11878 = vmatpush1.bf16.msra.mxu0 %v10649
        %11879 = vmatprep.subr.bf16.mxu0 %v10672
        %11880 = vmatpush1.bf16.msra.mxu0 %v10671
        %11881 = vmatprep.subr.bf16.mxu0 %v10694
        %11882 = vmatpush1.bf16.msra.mxu0 %v10693
        %11883 = vmatprep.subr.bf16.mxu0 %v10716
        %11884 = vmatpush1.bf16.msra.mxu0 %v10715
        %11885 = vmatprep.subr.bf16.mxu0 %v10738
        %11886 = vmatpush1.bf16.msra.mxu0 %v10737
        %11887 = vmatprep.subr.bf16.mxu0 %v10760
        %11888 = vmatpush1.bf16.msra.mxu0 %v10759
        %11889 = vmatprep.subr.bf16.mxu0 %v10782
        %11890 = vmatpush1.bf16.msra.mxu0 %v10781
        %11891 = vmatprep.mubr.bf16.mxu0 %v7516
        %11892 = vmatmul.mubr.bf16.gmra.mrb[0].mxu0 %v7515
        %v11893 = vpop.f32.mrb[0].mxu0
        %v11894 = vadd.f32 %v8232, %v11893
        %v11895 = vpop.f32.mrb[0].mxu0
        %v11896 = vadd.f32 %v8236, %v11895
        %v11897 = vpop.f32.mrb[0].mxu0
        %v11898 = vpop.f32.mrb[0].mxu0
        %11899 = vdwg.mxu0
        %11900 = vmatprep.subr.bf16.mxu0 %v10804
        %11901 = vmatpush1.bf16.msra.mxu0 %v10803
        %11902 = vmatprep.subr.bf16.mxu0 %v10826
        %11903 = vmatpush1.bf16.msra.mxu0 %v10825
        %11904 = vmatprep.subr.bf16.mxu0 %v10848
        %11905 = vmatpush1.bf16.msra.mxu0 %v10847
        %11906 = vmatprep.subr.bf16.mxu0 %v10870
        %11907 = vmatpush1.bf16.msra.mxu0 %v10869
        %11908 = vmatprep.subr.bf16.mxu0 %v10892
        %11909 = vmatpush1.bf16.msra.mxu0 %v10891
        %11910 = vmatprep.subr.bf16.mxu0 %v10914
        %11911 = vmatpush1.bf16.msra.mxu0 %v10913
        %11912 = vmatprep.subr.bf16.mxu0 %v10936
        %11913 = vmatpush1.bf16.msra.mxu0 %v10935
        %11914 = vmatprep.subr.bf16.mxu0 %v10958
        %11915 = vmatpush1.bf16.msra.mxu0 %v10957
        %11916 = vmatprep.subr.bf16.mxu0 %v10980
        %11917 = vmatpush1.bf16.msra.mxu0 %v10979
        %11918 = vmatprep.subr.bf16.mxu0 %v11002
        %11919 = vmatpush1.bf16.msra.mxu0 %v11001
        %11920 = vmatprep.subr.bf16.mxu0 %v11024
        %11921 = vmatpush1.bf16.msra.mxu0 %v11023
        %11922 = vmatprep.subr.bf16.mxu0 %v11046
        %11923 = vmatpush1.bf16.msra.mxu0 %v11045
        %11924 = vmatprep.subr.bf16.mxu0 %v11068
        %11925 = vmatpush1.bf16.msra.mxu0 %v11067
        %11926 = vmatprep.subr.bf16.mxu0 %v11090
        %11927 = vmatpush1.bf16.msra.mxu0 %v11089
        %11928 = vmatprep.subr.bf16.mxu0 %v11112
        %11929 = vmatpush1.bf16.msra.mxu0 %v11111
        %11930 = vmatprep.subr.bf16.mxu0 %v11134
        %11931 = vmatpush1.bf16.msra.mxu0 %v11133
        %11932 = vmatprep.mubr.bf16.mxu0 %v7518
        %11933 = vmatmul.mubr.bf16.gmra.mrb[0].mxu0 %v7517
        %v11934 = vpop.f32.mrb[0].mxu0
        %v11935 = vadd.f32 %v11894, %v11934
        %v11936 = vpop.f32.mrb[0].mxu0
        %v11937 = vadd.f32 %v11896, %v11936
        %v11938 = vpop.f32.mrb[0].mxu0
        %v11939 = vpop.f32.mrb[0].mxu0
        %11940 = vdwg.mxu0
        %11941 = vmatprep.subr.bf16.mxu0 %v10454
        %11942 = vmatpush1.bf16.msra.mxu0 %v10453
        %11943 = vmatprep.subr.bf16.mxu0 %v10476
        %11944 = vmatpush1.bf16.msra.mxu0 %v10475
        %11945 = vmatprep.subr.bf16.mxu0 %v10498
        %11946 = vmatpush1.bf16.msra.mxu0 %v10497
        %11947 = vmatprep.subr.bf16.mxu0 %v10520
        %11948 = vmatpush1.bf16.msra.mxu0 %v10519
        %11949 = vmatprep.subr.bf16.mxu0 %v10542
        %11950 = vmatpush1.bf16.msra.mxu0 %v10541
        %11951 = vmatprep.subr.bf16.mxu0 %v10564
        %11952 = vmatpush1.bf16.msra.mxu0 %v10563
        %11953 = vmatprep.subr.bf16.mxu0 %v10586
        %11954 = vmatpush1.bf16.msra.mxu0 %v10585
        %11955 = vmatprep.subr.bf16.mxu0 %v10608
        %11956 = vmatpush1.bf16.msra.mxu0 %v10607
        %11957 = vmatprep.subr.bf16.mxu0 %v10630
        %11958 = vmatpush1.bf16.msra.mxu0 %v10629
        %11959 = vmatprep.subr.bf16.mxu0 %v10652
        %11960 = vmatpush1.bf16.msra.mxu0 %v10651
        %11961 = vmatprep.subr.bf16.mxu0 %v10674
        %11962 = vmatpush1.bf16.msra.mxu0 %v10673
        %11963 = vmatprep.subr.bf16.mxu0 %v10696
        %11964 = vmatpush1.bf16.msra.mxu0 %v10695
        %11965 = vmatprep.subr.bf16.mxu0 %v10718
        %11966 = vmatpush1.bf16.msra.mxu0 %v10717
        %11967 = vmatprep.subr.bf16.mxu0 %v10740
        %11968 = vmatpush1.bf16.msra.mxu0 %v10739
        %11969 = vmatprep.subr.bf16.mxu0 %v10762
        %11970 = vmatpush1.bf16.msra.mxu0 %v10761
        %11971 = vmatprep.subr.bf16.mxu0 %v10784
        %11972 = vmatpush1.bf16.msra.mxu0 %v10783
        %11973 = vmatprep.mubr.bf16.mxu0 %v7516
        %11974 = vmatmul.mubr.bf16.gmra.mrb[0].mxu0 %v7515
        %v11975 = vpop.f32.mrb[0].mxu0
        %v11976 = vadd.f32 %v8240, %v11975
        %v11977 = vpop.f32.mrb[0].mxu0
        %v11978 = vadd.f32 %v8244, %v11977
        %v11979 = vpop.f32.mrb[0].mxu0
        %v11980 = vpop.f32.mrb[0].mxu0
        %11981 = vdwg.mxu0
        %11982 = vmatprep.subr.bf16.mxu0 %v10806
        %11983 = vmatpush1.bf16.msra.mxu0 %v10805
        %11984 = vmatprep.subr.bf16.mxu0 %v10828
        %11985 = vmatpush1.bf16.msra.mxu0 %v10827
        %11986 = vmatprep.subr.bf16.mxu0 %v10850
        %11987 = vmatpush1.bf16.msra.mxu0 %v10849
        %11988 = vmatprep.subr.bf16.mxu0 %v10872
        %11989 = vmatpush1.bf16.msra.mxu0 %v10871
        %11990 = vmatprep.subr.bf16.mxu0 %v10894
        %11991 = vmatpush1.bf16.msra.mxu0 %v10893
        %11992 = vmatprep.subr.bf16.mxu0 %v10916
        %11993 = vmatpush1.bf16.msra.mxu0 %v10915
        %11994 = vmatprep.subr.bf16.mxu0 %v10938
        %11995 = vmatpush1.bf16.msra.mxu0 %v10937
        %11996 = vmatprep.subr.bf16.mxu0 %v10960
        %11997 = vmatpush1.bf16.msra.mxu0 %v10959
        %11998 = vmatprep.subr.bf16.mxu0 %v10982
        %11999 = vmatpush1.bf16.msra.mxu0 %v10981
        %12000 = vmatprep.subr.bf16.mxu0 %v11004
        %12001 = vmatpush1.bf16.msra.mxu0 %v11003
        %12002 = vmatprep.subr.bf16.mxu0 %v11026
        %12003 = vmatpush1.bf16.msra.mxu0 %v11025
        %12004 = vmatprep.subr.bf16.mxu0 %v11048
        %12005 = vmatpush1.bf16.msra.mxu0 %v11047
        %12006 = vmatprep.subr.bf16.mxu0 %v11070
        %12007 = vmatpush1.bf16.msra.mxu0 %v11069
        %12008 = vmatprep.subr.bf16.mxu0 %v11092
        %12009 = vmatpush1.bf16.msra.mxu0 %v11091
        %12010 = vmatprep.subr.bf16.mxu0 %v11114
        %12011 = vmatpush1.bf16.msra.mxu0 %v11113
        %12012 = vmatprep.subr.bf16.mxu0 %v11136
        %12013 = vmatpush1.bf16.msra.mxu0 %v11135
        %12014 = vmatprep.mubr.bf16.mxu0 %v7518
        %12015 = vmatmul.mubr.bf16.gmra.mrb[0].mxu0 %v7517
        %v12016 = vpop.f32.mrb[0].mxu0
        %v12017 = vadd.f32 %v11976, %v12016
        %v12018 = vpop.f32.mrb[0].mxu0
        %v12019 = vadd.f32 %v11978, %v12018
        %v12020 = vpop.f32.mrb[0].mxu0
        %v12021 = vpop.f32.mrb[0].mxu0
        %12022 = vdwg.mxu0
        %12023 = vmatprep.subr.bf16.mxu0 %v10456
        %12024 = vmatpush1.bf16.msra.mxu0 %v10455
        %12025 = vmatprep.subr.bf16.mxu0 %v10478
        %12026 = vmatpush1.bf16.msra.mxu0 %v10477
        %12027 = vmatprep.subr.bf16.mxu0 %v10500
        %12028 = vmatpush1.bf16.msra.mxu0 %v10499
        %12029 = vmatprep.subr.bf16.mxu0 %v10522
        %12030 = vmatpush1.bf16.msra.mxu0 %v10521
        %12031 = vmatprep.subr.bf16.mxu0 %v10544
        %12032 = vmatpush1.bf16.msra.mxu0 %v10543
        %12033 = vmatprep.subr.bf16.mxu0 %v10566
        %12034 = vmatpush1.bf16.msra.mxu0 %v10565
        %12035 = vmatprep.subr.bf16.mxu0 %v10588
        %12036 = vmatpush1.bf16.msra.mxu0 %v10587
        %12037 = vmatprep.subr.bf16.mxu0 %v10610
        %12038 = vmatpush1.bf16.msra.mxu0 %v10609
        %12039 = vmatprep.subr.bf16.mxu0 %v10632
        %12040 = vmatpush1.bf16.msra.mxu0 %v10631
        %12041 = vmatprep.subr.bf16.mxu0 %v10654
        %12042 = vmatpush1.bf16.msra.mxu0 %v10653
        %12043 = vmatprep.subr.bf16.mxu0 %v10676
        %12044 = vmatpush1.bf16.msra.mxu0 %v10675
        %12045 = vmatprep.subr.bf16.mxu0 %v10698
        %12046 = vmatpush1.bf16.msra.mxu0 %v10697
        %12047 = vmatprep.subr.bf16.mxu0 %v10720
        %12048 = vmatpush1.bf16.msra.mxu0 %v10719
        %12049 = vmatprep.subr.bf16.mxu0 %v10742
        %12050 = vmatpush1.bf16.msra.mxu0 %v10741
        %12051 = vmatprep.subr.bf16.mxu0 %v10764
        %12052 = vmatpush1.bf16.msra.mxu0 %v10763
        %12053 = vmatprep.subr.bf16.mxu0 %v10786
        %12054 = vmatpush1.bf16.msra.mxu0 %v10785
        %12055 = vmatprep.mubr.bf16.mxu0 %v7516
        %12056 = vmatmul.mubr.bf16.gmra.mrb[0].mxu0 %v7515
        %v12057 = vpop.f32.mrb[0].mxu0
        %v12058 = vadd.f32 %v8248, %v12057
        %v12059 = vpop.f32.mrb[0].mxu0
        %v12060 = vadd.f32 %v8252, %v12059
        %v12061 = vpop.f32.mrb[0].mxu0
        %v12062 = vpop.f32.mrb[0].mxu0
        %12063 = vdwg.mxu0
        %12064 = vmatprep.subr.bf16.mxu0 %v10808
        %12065 = vmatpush1.bf16.msra.mxu0 %v10807
        %12066 = vmatprep.subr.bf16.mxu0 %v10830
        %12067 = vmatpush1.bf16.msra.mxu0 %v10829
        %12068 = vmatprep.subr.bf16.mxu0 %v10852
        %12069 = vmatpush1.bf16.msra.mxu0 %v10851
        %12070 = vmatprep.subr.bf16.mxu0 %v10874
        %12071 = vmatpush1.bf16.msra.mxu0 %v10873
        %12072 = vmatprep.subr.bf16.mxu0 %v10896
        %12073 = vmatpush1.bf16.msra.mxu0 %v10895
        %12074 = vmatprep.subr.bf16.mxu0 %v10918
        %12075 = vmatpush1.bf16.msra.mxu0 %v10917
        %12076 = vmatprep.subr.bf16.mxu0 %v10940
        %12077 = vmatpush1.bf16.msra.mxu0 %v10939
        %12078 = vmatprep.subr.bf16.mxu0 %v10962
        %12079 = vmatpush1.bf16.msra.mxu0 %v10961
        %12080 = vmatprep.subr.bf16.mxu0 %v10984
        %12081 = vmatpush1.bf16.msra.mxu0 %v10983
        %12082 = vmatprep.subr.bf16.mxu0 %v11006
        %12083 = vmatpush1.bf16.msra.mxu0 %v11005
        %12084 = vmatprep.subr.bf16.mxu0 %v11028
        %12085 = vmatpush1.bf16.msra.mxu0 %v11027
        %12086 = vmatprep.subr.bf16.mxu0 %v11050
        %12087 = vmatpush1.bf16.msra.mxu0 %v11049
        %12088 = vmatprep.subr.bf16.mxu0 %v11072
        %12089 = vmatpush1.bf16.msra.mxu0 %v11071
        %12090 = vmatprep.subr.bf16.mxu0 %v11094
        %12091 = vmatpush1.bf16.msra.mxu0 %v11093
        %12092 = vmatprep.subr.bf16.mxu0 %v11116
        %12093 = vmatpush1.bf16.msra.mxu0 %v11115
        %12094 = vmatprep.subr.bf16.mxu0 %v11138
        %12095 = vmatpush1.bf16.msra.mxu0 %v11137
        %12096 = vmatprep.mubr.bf16.mxu0 %v7518
        %12097 = vmatmul.mubr.bf16.gmra.mrb[0].mxu0 %v7517
        %v12098 = vpop.f32.mrb[0].mxu0
        %v12099 = vadd.f32 %v12058, %v12098
        %v12100 = vpop.f32.mrb[0].mxu0
        %v12101 = vadd.f32 %v12060, %v12100
        %v12102 = vpop.f32.mrb[0].mxu0
        %v12103 = vpop.f32.mrb[0].mxu0
        %12104 = vdwg.mxu0
        %12105 = vmatprep.subr.bf16.mxu0 %v10458
        %12106 = vmatpush1.bf16.msra.mxu0 %v10457
        %12107 = vmatprep.subr.bf16.mxu0 %v10480
        %12108 = vmatpush1.bf16.msra.mxu0 %v10479
        %12109 = vmatprep.subr.bf16.mxu0 %v10502
        %12110 = vmatpush1.bf16.msra.mxu0 %v10501
        %12111 = vmatprep.subr.bf16.mxu0 %v10524
        %12112 = vmatpush1.bf16.msra.mxu0 %v10523
        %12113 = vmatprep.subr.bf16.mxu0 %v10546
        %12114 = vmatpush1.bf16.msra.mxu0 %v10545
        %12115 = vmatprep.subr.bf16.mxu0 %v10568
        %12116 = vmatpush1.bf16.msra.mxu0 %v10567
        %12117 = vmatprep.subr.bf16.mxu0 %v10590
        %12118 = vmatpush1.bf16.msra.mxu0 %v10589
        %12119 = vmatprep.subr.bf16.mxu0 %v10612
        %12120 = vmatpush1.bf16.msra.mxu0 %v10611
        %12121 = vmatprep.subr.bf16.mxu0 %v10634
        %12122 = vmatpush1.bf16.msra.mxu0 %v10633
        %12123 = vmatprep.subr.bf16.mxu0 %v10656
        %12124 = vmatpush1.bf16.msra.mxu0 %v10655
        %12125 = vmatprep.subr.bf16.mxu0 %v10678
        %12126 = vmatpush1.bf16.msra.mxu0 %v10677
        %12127 = vmatprep.subr.bf16.mxu0 %v10700
        %12128 = vmatpush1.bf16.msra.mxu0 %v10699
        %12129 = vmatprep.subr.bf16.mxu0 %v10722
        %12130 = vmatpush1.bf16.msra.mxu0 %v10721
        %12131 = vmatprep.subr.bf16.mxu0 %v10744
        %12132 = vmatpush1.bf16.msra.mxu0 %v10743
        %12133 = vmatprep.subr.bf16.mxu0 %v10766
        %12134 = vmatpush1.bf16.msra.mxu0 %v10765
        %12135 = vmatprep.subr.bf16.mxu0 %v10788
        %12136 = vmatpush1.bf16.msra.mxu0 %v10787
        %12137 = vmatprep.mubr.bf16.mxu0 %v7516
        %12138 = vmatmul.mubr.bf16.gmra.mrb[0].mxu0 %v7515
        %v12139 = vpop.f32.mrb[0].mxu0
        %v12140 = vadd.f32 %v8256, %v12139
        %v12141 = vpop.f32.mrb[0].mxu0
        %v12142 = vadd.f32 %v8260, %v12141
        %v12143 = vpop.f32.mrb[0].mxu0
        %v12144 = vpop.f32.mrb[0].mxu0
        %12145 = vdwg.mxu0
        %12146 = vmatprep.subr.bf16.mxu0 %v10810
        %12147 = vmatpush1.bf16.msra.mxu0 %v10809
        %12148 = vmatprep.subr.bf16.mxu0 %v10832
        %12149 = vmatpush1.bf16.msra.mxu0 %v10831
        %12150 = vmatprep.subr.bf16.mxu0 %v10854
        %12151 = vmatpush1.bf16.msra.mxu0 %v10853
        %12152 = vmatprep.subr.bf16.mxu0 %v10876
        %12153 = vmatpush1.bf16.msra.mxu0 %v10875
        %12154 = vmatprep.subr.bf16.mxu0 %v10898
        %12155 = vmatpush1.bf16.msra.mxu0 %v10897
        %12156 = vmatprep.subr.bf16.mxu0 %v10920
        %12157 = vmatpush1.bf16.msra.mxu0 %v10919
        %12158 = vmatprep.subr.bf16.mxu0 %v10942
        %12159 = vmatpush1.bf16.msra.mxu0 %v10941
        %12160 = vmatprep.subr.bf16.mxu0 %v10964
        %12161 = vmatpush1.bf16.msra.mxu0 %v10963
        %12162 = vmatprep.subr.bf16.mxu0 %v10986
        %12163 = vmatpush1.bf16.msra.mxu0 %v10985
        %12164 = vmatprep.subr.bf16.mxu0 %v11008
        %12165 = vmatpush1.bf16.msra.mxu0 %v11007
        %12166 = vmatprep.subr.bf16.mxu0 %v11030
        %12167 = vmatpush1.bf16.msra.mxu0 %v11029
        %12168 = vmatprep.subr.bf16.mxu0 %v11052
        %12169 = vmatpush1.bf16.msra.mxu0 %v11051
        %12170 = vmatprep.subr.bf16.mxu0 %v11074
        %12171 = vmatpush1.bf16.msra.mxu0 %v11073
        %12172 = vmatprep.subr.bf16.mxu0 %v11096
        %12173 = vmatpush1.bf16.msra.mxu0 %v11095
        %12174 = vmatprep.subr.bf16.mxu0 %v11118
        %12175 = vmatpush1.bf16.msra.mxu0 %v11117
        %12176 = vmatprep.subr.bf16.mxu0 %v11140
        %12177 = vmatpush1.bf16.msra.mxu0 %v11139
        %12178 = vmatprep.mubr.bf16.mxu0 %v7518
        %12179 = vmatmul.mubr.bf16.gmra.mrb[0].mxu0 %v7517
        %v12180 = vpop.f32.mrb[0].mxu0
        %v12181 = vadd.f32 %v12140, %v12180
        %v12182 = vpop.f32.mrb[0].mxu0
        %v12183 = vadd.f32 %v12142, %v12182
        %v12184 = vpop.f32.mrb[0].mxu0
        %v12185 = vpop.f32.mrb[0].mxu0
        %12186 = vdwg.mxu0
        %12187 = vmatprep.subr.bf16.mxu0 %v10460
        %12188 = vmatpush1.bf16.msra.mxu0 %v10459
        %12189 = vmatprep.subr.bf16.mxu0 %v10482
        %12190 = vmatpush1.bf16.msra.mxu0 %v10481
        %12191 = vmatprep.subr.bf16.mxu0 %v10504
        %12192 = vmatpush1.bf16.msra.mxu0 %v10503
        %12193 = vmatprep.subr.bf16.mxu0 %v10526
        %12194 = vmatpush1.bf16.msra.mxu0 %v10525
        %12195 = vmatprep.subr.bf16.mxu0 %v10548
        %12196 = vmatpush1.bf16.msra.mxu0 %v10547
        %12197 = vmatprep.subr.bf16.mxu0 %v10570
        %12198 = vmatpush1.bf16.msra.mxu0 %v10569
        %12199 = vmatprep.subr.bf16.mxu0 %v10592
        %12200 = vmatpush1.bf16.msra.mxu0 %v10591
        %12201 = vmatprep.subr.bf16.mxu0 %v10614
        %12202 = vmatpush1.bf16.msra.mxu0 %v10613
        %12203 = vmatprep.subr.bf16.mxu0 %v10636
        %12204 = vmatpush1.bf16.msra.mxu0 %v10635
        %12205 = vmatprep.subr.bf16.mxu0 %v10658
        %12206 = vmatpush1.bf16.msra.mxu0 %v10657
        %12207 = vmatprep.subr.bf16.mxu0 %v10680
        %12208 = vmatpush1.bf16.msra.mxu0 %v10679
        %12209 = vmatprep.subr.bf16.mxu0 %v10702
        %12210 = vmatpush1.bf16.msra.mxu0 %v10701
        %12211 = vmatprep.subr.bf16.mxu0 %v10724
        %12212 = vmatpush1.bf16.msra.mxu0 %v10723
        %12213 = vmatprep.subr.bf16.mxu0 %v10746
        %12214 = vmatpush1.bf16.msra.mxu0 %v10745
        %12215 = vmatprep.subr.bf16.mxu0 %v10768
        %12216 = vmatpush1.bf16.msra.mxu0 %v10767
        %12217 = vmatprep.subr.bf16.mxu0 %v10790
        %12218 = vmatpush1.bf16.msra.mxu0 %v10789
        %12219 = vmatprep.mubr.bf16.mxu0 %v7516
        %12220 = vmatmul.mubr.bf16.gmra.mrb[0].mxu0 %v7515
        %v12221 = vpop.f32.mrb[0].mxu0
        %v12222 = vadd.f32 %v8264, %v12221
        %v12223 = vpop.f32.mrb[0].mxu0
        %v12224 = vadd.f32 %v8268, %v12223
        %v12225 = vpop.f32.mrb[0].mxu0
        %v12226 = vpop.f32.mrb[0].mxu0
        %12227 = vdwg.mxu0
        %12228 = vmatprep.subr.bf16.mxu0 %v10812
        %12229 = vmatpush1.bf16.msra.mxu0 %v10811
        %12230 = vmatprep.subr.bf16.mxu0 %v10834
        %12231 = vmatpush1.bf16.msra.mxu0 %v10833
        %12232 = vmatprep.subr.bf16.mxu0 %v10856
        %12233 = vmatpush1.bf16.msra.mxu0 %v10855
        %12234 = vmatprep.subr.bf16.mxu0 %v10878
        %12235 = vmatpush1.bf16.msra.mxu0 %v10877
        %12236 = vmatprep.subr.bf16.mxu0 %v10900
        %12237 = vmatpush1.bf16.msra.mxu0 %v10899
        %12238 = vmatprep.subr.bf16.mxu0 %v10922
        %12239 = vmatpush1.bf16.msra.mxu0 %v10921
        %12240 = vmatprep.subr.bf16.mxu0 %v10944
        %12241 = vmatpush1.bf16.msra.mxu0 %v10943
        %12242 = vmatprep.subr.bf16.mxu0 %v10966
        %12243 = vmatpush1.bf16.msra.mxu0 %v10965
        %12244 = vmatprep.subr.bf16.mxu0 %v10988
        %12245 = vmatpush1.bf16.msra.mxu0 %v10987
        %12246 = vmatprep.subr.bf16.mxu0 %v11010
        %12247 = vmatpush1.bf16.msra.mxu0 %v11009
        %12248 = vmatprep.subr.bf16.mxu0 %v11032
        %12249 = vmatpush1.bf16.msra.mxu0 %v11031
        %12250 = vmatprep.subr.bf16.mxu0 %v11054
        %12251 = vmatpush1.bf16.msra.mxu0 %v11053
        %12252 = vmatprep.subr.bf16.mxu0 %v11076
        %12253 = vmatpush1.bf16.msra.mxu0 %v11075
        %12254 = vmatprep.subr.bf16.mxu0 %v11098
        %12255 = vmatpush1.bf16.msra.mxu0 %v11097
        %12256 = vmatprep.subr.bf16.mxu0 %v11120
        %12257 = vmatpush1.bf16.msra.mxu0 %v11119
        %12258 = vmatprep.subr.bf16.mxu0 %v11142
        %12259 = vmatpush1.bf16.msra.mxu0 %v11141
        %12260 = vmatprep.mubr.bf16.mxu0 %v7518
        %12261 = vmatmul.mubr.bf16.gmra.mrb[0].mxu0 %v7517
        %v12262 = vpop.f32.mrb[0].mxu0
        %v12263 = vadd.f32 %v12222, %v12262
        %v12264 = vpop.f32.mrb[0].mxu0
        %v12265 = vadd.f32 %v12224, %v12264
        %v12266 = vpop.f32.mrb[0].mxu0
        %v12267 = vpop.f32.mrb[0].mxu0
        %12268 = vdwg.mxu0
        %12269 = vmatprep.subr.bf16.mxu0 %v10462
        %12270 = vmatpush1.bf16.msra.mxu0 %v10461
        %12271 = vmatprep.subr.bf16.mxu0 %v10484
        %12272 = vmatpush1.bf16.msra.mxu0 %v10483
        %12273 = vmatprep.subr.bf16.mxu0 %v10506
        %12274 = vmatpush1.bf16.msra.mxu0 %v10505
        %12275 = vmatprep.subr.bf16.mxu0 %v10528
        %12276 = vmatpush1.bf16.msra.mxu0 %v10527
        %12277 = vmatprep.subr.bf16.mxu0 %v10550
        %12278 = vmatpush1.bf16.msra.mxu0 %v10549
        %12279 = vmatprep.subr.bf16.mxu0 %v10572
        %12280 = vmatpush1.bf16.msra.mxu0 %v10571
        %12281 = vmatprep.subr.bf16.mxu0 %v10594
        %12282 = vmatpush1.bf16.msra.mxu0 %v10593
        %12283 = vmatprep.subr.bf16.mxu0 %v10616
        %12284 = vmatpush1.bf16.msra.mxu0 %v10615
        %12285 = vmatprep.subr.bf16.mxu0 %v10638
        %12286 = vmatpush1.bf16.msra.mxu0 %v10637
        %12287 = vmatprep.subr.bf16.mxu0 %v10660
        %12288 = vmatpush1.bf16.msra.mxu0 %v10659
        %12289 = vmatprep.subr.bf16.mxu0 %v10682
        %12290 = vmatpush1.bf16.msra.mxu0 %v10681
        %12291 = vmatprep.subr.bf16.mxu0 %v10704
        %12292 = vmatpush1.bf16.msra.mxu0 %v10703
        %12293 = vmatprep.subr.bf16.mxu0 %v10726
        %12294 = vmatpush1.bf16.msra.mxu0 %v10725
        %12295 = vmatprep.subr.bf16.mxu0 %v10748
        %12296 = vmatpush1.bf16.msra.mxu0 %v10747
        %12297 = vmatprep.subr.bf16.mxu0 %v10770
        %12298 = vmatpush1.bf16.msra.mxu0 %v10769
        %12299 = vmatprep.subr.bf16.mxu0 %v10792
        %12300 = vmatpush1.bf16.msra.mxu0 %v10791
        %12301 = vmatprep.mubr.bf16.mxu0 %v7516
        %12302 = vmatmul.mubr.bf16.gmra.mrb[0].mxu0 %v7515
        %v12303 = vpop.f32.mrb[0].mxu0
        %v12304 = vadd.f32 %v8272, %v12303
        %v12305 = vpop.f32.mrb[0].mxu0
        %v12306 = vadd.f32 %v8276, %v12305
        %v12307 = vpop.f32.mrb[0].mxu0
        %v12308 = vpop.f32.mrb[0].mxu0
        %12309 = vdwg.mxu0
        %12310 = vmatprep.subr.bf16.mxu0 %v10814
        %12311 = vmatpush1.bf16.msra.mxu0 %v10813
        %12312 = vmatprep.subr.bf16.mxu0 %v10836
        %12313 = vmatpush1.bf16.msra.mxu0 %v10835
        %12314 = vmatprep.subr.bf16.mxu0 %v10858
        %12315 = vmatpush1.bf16.msra.mxu0 %v10857
        %12316 = vmatprep.subr.bf16.mxu0 %v10880
        %12317 = vmatpush1.bf16.msra.mxu0 %v10879
        %12318 = vmatprep.subr.bf16.mxu0 %v10902
        %12319 = vmatpush1.bf16.msra.mxu0 %v10901
        %12320 = vmatprep.subr.bf16.mxu0 %v10924
        %12321 = vmatpush1.bf16.msra.mxu0 %v10923
        %12322 = vmatprep.subr.bf16.mxu0 %v10946
        %12323 = vmatpush1.bf16.msra.mxu0 %v10945
        %12324 = vmatprep.subr.bf16.mxu0 %v10968
        %12325 = vmatpush1.bf16.msra.mxu0 %v10967
        %12326 = vmatprep.subr.bf16.mxu0 %v10990
        %12327 = vmatpush1.bf16.msra.mxu0 %v10989
        %12328 = vmatprep.subr.bf16.mxu0 %v11012
        %12329 = vmatpush1.bf16.msra.mxu0 %v11011
        %12330 = vmatprep.subr.bf16.mxu0 %v11034
        %12331 = vmatpush1.bf16.msra.mxu0 %v11033
        %12332 = vmatprep.subr.bf16.mxu0 %v11056
        %12333 = vmatpush1.bf16.msra.mxu0 %v11055
        %12334 = vmatprep.subr.bf16.mxu0 %v11078
        %12335 = vmatpush1.bf16.msra.mxu0 %v11077
        %12336 = vmatprep.subr.bf16.mxu0 %v11100
        %12337 = vmatpush1.bf16.msra.mxu0 %v11099
        %12338 = vmatprep.subr.bf16.mxu0 %v11122
        %12339 = vmatpush1.bf16.msra.mxu0 %v11121
        %12340 = vmatprep.subr.bf16.mxu0 %v11144
        %12341 = vmatpush1.bf16.msra.mxu0 %v11143
        %12342 = vmatprep.mubr.bf16.mxu0 %v7518
        %12343 = vmatmul.mubr.bf16.gmra.mrb[0].mxu0 %v7517
        %v12344 = vpop.f32.mrb[0].mxu0
        %v12345 = vadd.f32 %v12304, %v12344
        %v12346 = vpop.f32.mrb[0].mxu0
        %v12347 = vadd.f32 %v12306, %v12346
        %v12348 = vpop.f32.mrb[0].mxu0
        %v12349 = vpop.f32.mrb[0].mxu0
        %12350 = vdwg.mxu0
        %12351 = vmatprep.subr.bf16.mxu0 %v10464
        %12352 = vmatpush1.bf16.msra.mxu0 %v10463
        %12353 = vmatprep.subr.bf16.mxu0 %v10486
        %12354 = vmatpush1.bf16.msra.mxu0 %v10485
        %12355 = vmatprep.subr.bf16.mxu0 %v10508
        %12356 = vmatpush1.bf16.msra.mxu0 %v10507
        %12357 = vmatprep.subr.bf16.mxu0 %v10530
        %12358 = vmatpush1.bf16.msra.mxu0 %v10529
        %12359 = vmatprep.subr.bf16.mxu0 %v10552
        %12360 = vmatpush1.bf16.msra.mxu0 %v10551
        %12361 = vmatprep.subr.bf16.mxu0 %v10574
        %12362 = vmatpush1.bf16.msra.mxu0 %v10573
        %12363 = vmatprep.subr.bf16.mxu0 %v10596
        %12364 = vmatpush1.bf16.msra.mxu0 %v10595
        %12365 = vmatprep.subr.bf16.mxu0 %v10618
        %12366 = vmatpush1.bf16.msra.mxu0 %v10617
        %12367 = vmatprep.subr.bf16.mxu0 %v10640
        %12368 = vmatpush1.bf16.msra.mxu0 %v10639
        %12369 = vmatprep.subr.bf16.mxu0 %v10662
        %12370 = vmatpush1.bf16.msra.mxu0 %v10661
        %12371 = vmatprep.subr.bf16.mxu0 %v10684
        %12372 = vmatpush1.bf16.msra.mxu0 %v10683
        %12373 = vmatprep.subr.bf16.mxu0 %v10706
        %12374 = vmatpush1.bf16.msra.mxu0 %v10705
        %12375 = vmatprep.subr.bf16.mxu0 %v10728
        %12376 = vmatpush1.bf16.msra.mxu0 %v10727
        %12377 = vmatprep.subr.bf16.mxu0 %v10750
        %12378 = vmatpush1.bf16.msra.mxu0 %v10749
        %12379 = vmatprep.subr.bf16.mxu0 %v10772
        %12380 = vmatpush1.bf16.msra.mxu0 %v10771
        %12381 = vmatprep.subr.bf16.mxu0 %v10794
        %12382 = vmatpush1.bf16.msra.mxu0 %v10793
        %12383 = vmatprep.mubr.bf16.mxu0 %v7516
        %12384 = vmatmul.mubr.bf16.gmra.mrb[0].mxu0 %v7515
        %v12385 = vpop.f32.mrb[0].mxu0
        %v12386 = vadd.f32 %v8280, %v12385
        %v12387 = vpop.f32.mrb[0].mxu0
        %v12388 = vadd.f32 %v8284, %v12387
        %v12389 = vpop.f32.mrb[0].mxu0
        %v12390 = vpop.f32.mrb[0].mxu0
        %12391 = vdwg.mxu0
        %12392 = vmatprep.subr.bf16.mxu0 %v10816
        %12393 = vmatpush1.bf16.msra.mxu0 %v10815
        %12394 = vmatprep.subr.bf16.mxu0 %v10838
        %12395 = vmatpush1.bf16.msra.mxu0 %v10837
        %12396 = vmatprep.subr.bf16.mxu0 %v10860
        %12397 = vmatpush1.bf16.msra.mxu0 %v10859
        %12398 = vmatprep.subr.bf16.mxu0 %v10882
        %12399 = vmatpush1.bf16.msra.mxu0 %v10881
        %12400 = vmatprep.subr.bf16.mxu0 %v10904
        %12401 = vmatpush1.bf16.msra.mxu0 %v10903
        %12402 = vmatprep.subr.bf16.mxu0 %v10926
        %12403 = vmatpush1.bf16.msra.mxu0 %v10925
        %12404 = vmatprep.subr.bf16.mxu0 %v10948
        %12405 = vmatpush1.bf16.msra.mxu0 %v10947
        %12406 = vmatprep.subr.bf16.mxu0 %v10970
        %12407 = vmatpush1.bf16.msra.mxu0 %v10969
        %12408 = vmatprep.subr.bf16.mxu0 %v10992
        %12409 = vmatpush1.bf16.msra.mxu0 %v10991
        %12410 = vmatprep.subr.bf16.mxu0 %v11014
        %12411 = vmatpush1.bf16.msra.mxu0 %v11013
        %12412 = vmatprep.subr.bf16.mxu0 %v11036
        %12413 = vmatpush1.bf16.msra.mxu0 %v11035
        %12414 = vmatprep.subr.bf16.mxu0 %v11058
        %12415 = vmatpush1.bf16.msra.mxu0 %v11057
        %12416 = vmatprep.subr.bf16.mxu0 %v11080
        %12417 = vmatpush1.bf16.msra.mxu0 %v11079
        %12418 = vmatprep.subr.bf16.mxu0 %v11102
        %12419 = vmatpush1.bf16.msra.mxu0 %v11101
        %12420 = vmatprep.subr.bf16.mxu0 %v11124
        %12421 = vmatpush1.bf16.msra.mxu0 %v11123
        %12422 = vmatprep.subr.bf16.mxu0 %v11146
        %12423 = vmatpush1.bf16.msra.mxu0 %v11145
        %12424 = vmatprep.mubr.bf16.mxu0 %v7518
        %12425 = vmatmul.mubr.bf16.gmra.mrb[0].mxu0 %v7517
        %v12426 = vpop.f32.mrb[0].mxu0
        %v12427 = vadd.f32 %v12386, %v12426
        %v12428 = vpop.f32.mrb[0].mxu0
        %v12429 = vadd.f32 %v12388, %v12428
        %v12430 = vpop.f32.mrb[0].mxu0
        %v12431 = vpop.f32.mrb[0].mxu0
        %12432 = vdwg.mxu0
        %12433 = vmatprep.subr.bf16.mxu0 %v10466
        %12434 = vmatpush1.bf16.msra.mxu0 %v10465
        %12435 = vmatprep.subr.bf16.mxu0 %v10488
        %12436 = vmatpush1.bf16.msra.mxu0 %v10487
        %12437 = vmatprep.subr.bf16.mxu0 %v10510
        %12438 = vmatpush1.bf16.msra.mxu0 %v10509
        %12439 = vmatprep.subr.bf16.mxu0 %v10532
        %12440 = vmatpush1.bf16.msra.mxu0 %v10531
        %12441 = vmatprep.subr.bf16.mxu0 %v10554
        %12442 = vmatpush1.bf16.msra.mxu0 %v10553
        %12443 = vmatprep.subr.bf16.mxu0 %v10576
        %12444 = vmatpush1.bf16.msra.mxu0 %v10575
        %12445 = vmatprep.subr.bf16.mxu0 %v10598
        %12446 = vmatpush1.bf16.msra.mxu0 %v10597
        %12447 = vmatprep.subr.bf16.mxu0 %v10620
        %12448 = vmatpush1.bf16.msra.mxu0 %v10619
        %12449 = vmatprep.subr.bf16.mxu0 %v10642
        %12450 = vmatpush1.bf16.msra.mxu0 %v10641
        %12451 = vmatprep.subr.bf16.mxu0 %v10664
        %12452 = vmatpush1.bf16.msra.mxu0 %v10663
        %12453 = vmatprep.subr.bf16.mxu0 %v10686
        %12454 = vmatpush1.bf16.msra.mxu0 %v10685
        %12455 = vmatprep.subr.bf16.mxu0 %v10708
        %12456 = vmatpush1.bf16.msra.mxu0 %v10707
        %12457 = vmatprep.subr.bf16.mxu0 %v10730
        %12458 = vmatpush1.bf16.msra.mxu0 %v10729
        %12459 = vmatprep.subr.bf16.mxu0 %v10752
        %12460 = vmatpush1.bf16.msra.mxu0 %v10751
        %12461 = vmatprep.subr.bf16.mxu0 %v10774
        %12462 = vmatpush1.bf16.msra.mxu0 %v10773
        %12463 = vmatprep.subr.bf16.mxu0 %v10796
        %12464 = vmatpush1.bf16.msra.mxu0 %v10795
        %12465 = vmatprep.mubr.bf16.mxu0 %v7516
        %12466 = vmatmul.mubr.bf16.gmra.mrb[0].mxu0 %v7515
        %v12467 = vpop.f32.mrb[0].mxu0
        %v12468 = vadd.f32 %v8288, %v12467
        %v12469 = vpop.f32.mrb[0].mxu0
        %v12470 = vadd.f32 %v8292, %v12469
        %v12471 = vpop.f32.mrb[0].mxu0
        %v12472 = vpop.f32.mrb[0].mxu0
        %12473 = vdwg.mxu0
        %12474 = vmatprep.subr.bf16.mxu0 %v10818
        %12475 = vmatpush1.bf16.msra.mxu0 %v10817
        %12476 = vmatprep.subr.bf16.mxu0 %v10840
        %12477 = vmatpush1.bf16.msra.mxu0 %v10839
        %12478 = vmatprep.subr.bf16.mxu0 %v10862
        %12479 = vmatpush1.bf16.msra.mxu0 %v10861
        %12480 = vmatprep.subr.bf16.mxu0 %v10884
        %12481 = vmatpush1.bf16.msra.mxu0 %v10883
        %12482 = vmatprep.subr.bf16.mxu0 %v10906
        %12483 = vmatpush1.bf16.msra.mxu0 %v10905
        %12484 = vmatprep.subr.bf16.mxu0 %v10928
        %12485 = vmatpush1.bf16.msra.mxu0 %v10927
        %12486 = vmatprep.subr.bf16.mxu0 %v10950
        %12487 = vmatpush1.bf16.msra.mxu0 %v10949
        %12488 = vmatprep.subr.bf16.mxu0 %v10972
        %12489 = vmatpush1.bf16.msra.mxu0 %v10971
        %12490 = vmatprep.subr.bf16.mxu0 %v10994
        %12491 = vmatpush1.bf16.msra.mxu0 %v10993
        %12492 = vmatprep.subr.bf16.mxu0 %v11016
        %12493 = vmatpush1.bf16.msra.mxu0 %v11015
        %12494 = vmatprep.subr.bf16.mxu0 %v11038
        %12495 = vmatpush1.bf16.msra.mxu0 %v11037
        %12496 = vmatprep.subr.bf16.mxu0 %v11060
        %12497 = vmatpush1.bf16.msra.mxu0 %v11059
        %12498 = vmatprep.subr.bf16.mxu0 %v11082
        %12499 = vmatpush1.bf16.msra.mxu0 %v11081
        %12500 = vmatprep.subr.bf16.mxu0 %v11104
        %12501 = vmatpush1.bf16.msra.mxu0 %v11103
        %12502 = vmatprep.subr.bf16.mxu0 %v11126
        %12503 = vmatpush1.bf16.msra.mxu0 %v11125
        %12504 = vmatprep.subr.bf16.mxu0 %v11148
        %12505 = vmatpush1.bf16.msra.mxu0 %v11147
        %12506 = vmatprep.mubr.bf16.mxu0 %v7518
        %12507 = vmatmul.mubr.bf16.gmra.mrb[0].mxu0 %v7517
        %v12508 = vpop.f32.mrb[0].mxu0
        %v12509 = vadd.f32 %v12468, %v12508
        %v12510 = vpop.f32.mrb[0].mxu0
        %v12511 = vadd.f32 %v12470, %v12510
        %v12512 = vpop.f32.mrb[0].mxu0
        %v12513 = vpop.f32.mrb[0].mxu0
        %12514 = vdwg.mxu0
        %12515 = vmatprep.subr.bf16.mxu0 %v10468
        %12516 = vmatpush1.bf16.msra.mxu0 %v10467
        %12517 = vmatprep.subr.bf16.mxu0 %v10490
        %12518 = vmatpush1.bf16.msra.mxu0 %v10489
        %12519 = vmatprep.subr.bf16.mxu0 %v10512
        %12520 = vmatpush1.bf16.msra.mxu0 %v10511
        %12521 = vmatprep.subr.bf16.mxu0 %v10534
        %12522 = vmatpush1.bf16.msra.mxu0 %v10533
        %12523 = vmatprep.subr.bf16.mxu0 %v10556
        %12524 = vmatpush1.bf16.msra.mxu0 %v10555
        %12525 = vmatprep.subr.bf16.mxu0 %v10578
        %12526 = vmatpush1.bf16.msra.mxu0 %v10577
        %12527 = vmatprep.subr.bf16.mxu0 %v10600
        %12528 = vmatpush1.bf16.msra.mxu0 %v10599
        %12529 = vmatprep.subr.bf16.mxu0 %v10622
        %12530 = vmatpush1.bf16.msra.mxu0 %v10621
        %12531 = vmatprep.subr.bf16.mxu0 %v10644
        %12532 = vmatpush1.bf16.msra.mxu0 %v10643
        %12533 = vmatprep.subr.bf16.mxu0 %v10666
        %12534 = vmatpush1.bf16.msra.mxu0 %v10665
        %12535 = vmatprep.subr.bf16.mxu0 %v10688
        %12536 = vmatpush1.bf16.msra.mxu0 %v10687
        %12537 = vmatprep.subr.bf16.mxu0 %v10710
        %12538 = vmatpush1.bf16.msra.mxu0 %v10709
        %12539 = vmatprep.subr.bf16.mxu0 %v10732
        %12540 = vmatpush1.bf16.msra.mxu0 %v10731
        %12541 = vmatprep.subr.bf16.mxu0 %v10754
        %12542 = vmatpush1.bf16.msra.mxu0 %v10753
        %12543 = vmatprep.subr.bf16.mxu0 %v10776
        %12544 = vmatpush1.bf16.msra.mxu0 %v10775
        %12545 = vmatprep.subr.bf16.mxu0 %v10798
        %12546 = vmatpush1.bf16.msra.mxu0 %v10797
        %12547 = vmatprep.mubr.bf16.mxu0 %v7516
        %12548 = vmatmul.mubr.bf16.gmra.mrb[0].mxu0 %v7515
        %v12549 = vpop.f32.mrb[0].mxu0
        %v12550 = vadd.f32 %v8296, %v12549
        %v12551 = vpop.f32.mrb[0].mxu0
        %v12552 = vadd.f32 %v8300, %v12551
        %v12553 = vpop.f32.mrb[0].mxu0
        %v12554 = vpop.f32.mrb[0].mxu0
        %12555 = vdwg.mxu0
        %12556 = vmatprep.subr.bf16.mxu0 %v10820
        %12557 = vmatpush1.bf16.msra.mxu0 %v10819
        %12558 = vmatprep.subr.bf16.mxu0 %v10842
        %12559 = vmatpush1.bf16.msra.mxu0 %v10841
        %12560 = vmatprep.subr.bf16.mxu0 %v10864
        %12561 = vmatpush1.bf16.msra.mxu0 %v10863
        %12562 = vmatprep.subr.bf16.mxu0 %v10886
        %12563 = vmatpush1.bf16.msra.mxu0 %v10885
        %12564 = vmatprep.subr.bf16.mxu0 %v10908
        %12565 = vmatpush1.bf16.msra.mxu0 %v10907
        %12566 = vmatprep.subr.bf16.mxu0 %v10930
        %12567 = vmatpush1.bf16.msra.mxu0 %v10929
        %12568 = vmatprep.subr.bf16.mxu0 %v10952
        %12569 = vmatpush1.bf16.msra.mxu0 %v10951
        %12570 = vmatprep.subr.bf16.mxu0 %v10974
        %12571 = vmatpush1.bf16.msra.mxu0 %v10973
        %12572 = vmatprep.subr.bf16.mxu0 %v10996
        %12573 = vmatpush1.bf16.msra.mxu0 %v10995
        %12574 = vmatprep.subr.bf16.mxu0 %v11018
        %12575 = vmatpush1.bf16.msra.mxu0 %v11017
        %12576 = vmatprep.subr.bf16.mxu0 %v11040
        %12577 = vmatpush1.bf16.msra.mxu0 %v11039
        %12578 = vmatprep.subr.bf16.mxu0 %v11062
        %12579 = vmatpush1.bf16.msra.mxu0 %v11061
        %12580 = vmatprep.subr.bf16.mxu0 %v11084
        %12581 = vmatpush1.bf16.msra.mxu0 %v11083
        %12582 = vmatprep.subr.bf16.mxu0 %v11106
        %12583 = vmatpush1.bf16.msra.mxu0 %v11105
        %12584 = vmatprep.subr.bf16.mxu0 %v11128
        %12585 = vmatpush1.bf16.msra.mxu0 %v11127
        %12586 = vmatprep.subr.bf16.mxu0 %v11150
        %12587 = vmatpush1.bf16.msra.mxu0 %v11149
        %12588 = vmatprep.mubr.bf16.mxu0 %v7518
        %12589 = vmatmul.mubr.bf16.gmra.mrb[0].mxu0 %v7517
        %v12590 = vpop.f32.mrb[0].mxu0
        %v12591 = vadd.f32 %v12550, %v12590
        %v12592 = vpop.f32.mrb[0].mxu0
        %v12593 = vadd.f32 %v12552, %v12592
        %v12594 = vpop.f32.mrb[0].mxu0
        %v12595 = vpop.f32.mrb[0].mxu0
        %12596 = vdwg.mxu0
        %12597 = vmatprep.subr.bf16.mxu0 %v10470
        %12598 = vmatpush1.bf16.msra.mxu0 %v10469
        %12599 = vmatprep.subr.bf16.mxu0 %v10492
        %12600 = vmatpush1.bf16.msra.mxu0 %v10491
        %12601 = vmatprep.subr.bf16.mxu0 %v10514
        %12602 = vmatpush1.bf16.msra.mxu0 %v10513
        %12603 = vmatprep.subr.bf16.mxu0 %v10536
        %12604 = vmatpush1.bf16.msra.mxu0 %v10535
        %12605 = vmatprep.subr.bf16.mxu0 %v10558
        %12606 = vmatpush1.bf16.msra.mxu0 %v10557
        %12607 = vmatprep.subr.bf16.mxu0 %v10580
        %12608 = vmatpush1.bf16.msra.mxu0 %v10579
        %12609 = vmatprep.subr.bf16.mxu0 %v10602
        %12610 = vmatpush1.bf16.msra.mxu0 %v10601
        %12611 = vmatprep.subr.bf16.mxu0 %v10624
        %12612 = vmatpush1.bf16.msra.mxu0 %v10623
        %12613 = vmatprep.subr.bf16.mxu0 %v10646
        %12614 = vmatpush1.bf16.msra.mxu0 %v10645
        %12615 = vmatprep.subr.bf16.mxu0 %v10668
        %12616 = vmatpush1.bf16.msra.mxu0 %v10667
        %12617 = vmatprep.subr.bf16.mxu0 %v10690
        %12618 = vmatpush1.bf16.msra.mxu0 %v10689
        %12619 = vmatprep.subr.bf16.mxu0 %v10712
        %12620 = vmatpush1.bf16.msra.mxu0 %v10711
        %12621 = vmatprep.subr.bf16.mxu0 %v10734
        %12622 = vmatpush1.bf16.msra.mxu0 %v10733
        %12623 = vmatprep.subr.bf16.mxu0 %v10756
        %12624 = vmatpush1.bf16.msra.mxu0 %v10755
        %12625 = vmatprep.subr.bf16.mxu0 %v10778
        %12626 = vmatpush1.bf16.msra.mxu0 %v10777
        %12627 = vmatprep.subr.bf16.mxu0 %v10800
        %12628 = vmatpush1.bf16.msra.mxu0 %v10799
        %12629 = vmatprep.mubr.bf16.mxu0 %v7516
        %12630 = vmatmul.mubr.bf16.gmra.mrb[0].mxu0 %v7515
        %v12631 = vpop.f32.mrb[0].mxu0
        %v12632 = vadd.f32 %v8304, %v12631
        %v12633 = vpop.f32.mrb[0].mxu0
        %v12634 = vadd.f32 %v8308, %v12633
        %v12635 = vpop.f32.mrb[0].mxu0
        %v12636 = vpop.f32.mrb[0].mxu0
        %12637 = vdwg.mxu0
        %12638 = vmatprep.subr.bf16.mxu0 %v10822
        %12639 = vmatpush1.bf16.msra.mxu0 %v10821
        %12640 = vmatprep.subr.bf16.mxu0 %v10844
        %12641 = vmatpush1.bf16.msra.mxu0 %v10843
        %12642 = vmatprep.subr.bf16.mxu0 %v10866
        %12643 = vmatpush1.bf16.msra.mxu0 %v10865
        %12644 = vmatprep.subr.bf16.mxu0 %v10888
        %12645 = vmatpush1.bf16.msra.mxu0 %v10887
        %12646 = vmatprep.subr.bf16.mxu0 %v10910
        %12647 = vmatpush1.bf16.msra.mxu0 %v10909
        %12648 = vmatprep.subr.bf16.mxu0 %v10932
        %12649 = vmatpush1.bf16.msra.mxu0 %v10931
        %12650 = vmatprep.subr.bf16.mxu0 %v10954
        %12651 = vmatpush1.bf16.msra.mxu0 %v10953
        %12652 = vmatprep.subr.bf16.mxu0 %v10976
        %12653 = vmatpush1.bf16.msra.mxu0 %v10975
        %12654 = vmatprep.subr.bf16.mxu0 %v10998
        %12655 = vmatpush1.bf16.msra.mxu0 %v10997
        %12656 = vmatprep.subr.bf16.mxu0 %v11020
        %12657 = vmatpush1.bf16.msra.mxu0 %v11019
        %12658 = vmatprep.subr.bf16.mxu0 %v11042
        %12659 = vmatpush1.bf16.msra.mxu0 %v11041
        %12660 = vmatprep.subr.bf16.mxu0 %v11064
        %12661 = vmatpush1.bf16.msra.mxu0 %v11063
        %12662 = vmatprep.subr.bf16.mxu0 %v11086
        %12663 = vmatpush1.bf16.msra.mxu0 %v11085
        %12664 = vmatprep.subr.bf16.mxu0 %v11108
        %12665 = vmatpush1.bf16.msra.mxu0 %v11107
        %12666 = vmatprep.subr.bf16.mxu0 %v11130
        %12667 = vmatpush1.bf16.msra.mxu0 %v11129
        %12668 = vmatprep.subr.bf16.mxu0 %v11152
        %12669 = vmatpush1.bf16.msra.mxu0 %v11151
        %12670 = vmatprep.mubr.bf16.mxu0 %v7518
        %12671 = vmatmul.mubr.bf16.gmra.mrb[0].mxu0 %v7517
        %v12672 = vpop.f32.mrb[0].mxu0
        %v12673 = vadd.f32 %v12632, %v12672
        %v12674 = vpop.f32.mrb[0].mxu0
        %v12675 = vadd.f32 %v12634, %v12674
        %v12676 = vpop.f32.mrb[0].mxu0
        %v12677 = vpop.f32.mrb[0].mxu0
        %12678 = vdwg.mxu0
        %12679 = vmatprep.subr.bf16.mxu0 %v10472
        %12680 = vmatpush1.bf16.msra.mxu0 %v10471
        %12681 = vmatprep.subr.bf16.mxu0 %v10494
        %12682 = vmatpush1.bf16.msra.mxu0 %v10493
        %12683 = vmatprep.subr.bf16.mxu0 %v10516
        %12684 = vmatpush1.bf16.msra.mxu0 %v10515
        %12685 = vmatprep.subr.bf16.mxu0 %v10538
        %12686 = vmatpush1.bf16.msra.mxu0 %v10537
        %12687 = vmatprep.subr.bf16.mxu0 %v10560
        %12688 = vmatpush1.bf16.msra.mxu0 %v10559
        %12689 = vmatprep.subr.bf16.mxu0 %v10582
        %12690 = vmatpush1.bf16.msra.mxu0 %v10581
        %12691 = vmatprep.subr.bf16.mxu0 %v10604
        %12692 = vmatpush1.bf16.msra.mxu0 %v10603
        %12693 = vmatprep.subr.bf16.mxu0 %v10626
        %12694 = vmatpush1.bf16.msra.mxu0 %v10625
        %12695 = vmatprep.subr.bf16.mxu0 %v10648
        %12696 = vmatpush1.bf16.msra.mxu0 %v10647
        %12697 = vmatprep.subr.bf16.mxu0 %v10670
        %12698 = vmatpush1.bf16.msra.mxu0 %v10669
        %12699 = vmatprep.subr.bf16.mxu0 %v10692
        %12700 = vmatpush1.bf16.msra.mxu0 %v10691
        %12701 = vmatprep.subr.bf16.mxu0 %v10714
        %12702 = vmatpush1.bf16.msra.mxu0 %v10713
        %12703 = vmatprep.subr.bf16.mxu0 %v10736
        %12704 = vmatpush1.bf16.msra.mxu0 %v10735
        %12705 = vmatprep.subr.bf16.mxu0 %v10758
        %12706 = vmatpush1.bf16.msra.mxu0 %v10757
        %12707 = vmatprep.subr.bf16.mxu0 %v10780
        %12708 = vmatpush1.bf16.msra.mxu0 %v10779
        %12709 = vmatprep.subr.bf16.mxu0 %v10802
        %12710 = vmatpush1.bf16.msra.mxu0 %v10801
        %12711 = vmatprep.mubr.bf16.mxu0 %v7516
        %12712 = vmatmul.mubr.bf16.gmra.mrb[0].mxu0 %v7515
        %v12713 = vpop.f32.mrb[0].mxu0
        %v12714 = vadd.f32 %v8312, %v12713
        %v12715 = vpop.f32.mrb[0].mxu0
        %v12716 = vadd.f32 %v8316, %v12715
        %v12717 = vpop.f32.mrb[0].mxu0
        %v12718 = vpop.f32.mrb[0].mxu0
        %12719 = vdwg.mxu0
        %12720 = vmatprep.subr.bf16.mxu0 %v10824
        %12721 = vmatpush1.bf16.msra.mxu0 %v10823
        %12722 = vmatprep.subr.bf16.mxu0 %v10846
        %12723 = vmatpush1.bf16.msra.mxu0 %v10845
        %12724 = vmatprep.subr.bf16.mxu0 %v10868
        %12725 = vmatpush1.bf16.msra.mxu0 %v10867
        %12726 = vmatprep.subr.bf16.mxu0 %v10890
        %12727 = vmatpush1.bf16.msra.mxu0 %v10889
        %12728 = vmatprep.subr.bf16.mxu0 %v10912
        %12729 = vmatpush1.bf16.msra.mxu0 %v10911
        %12730 = vmatprep.subr.bf16.mxu0 %v10934
        %12731 = vmatpush1.bf16.msra.mxu0 %v10933
        %12732 = vmatprep.subr.bf16.mxu0 %v10956
        %12733 = vmatpush1.bf16.msra.mxu0 %v10955
        %12734 = vmatprep.subr.bf16.mxu0 %v10978
        %12735 = vmatpush1.bf16.msra.mxu0 %v10977
        %12736 = vmatprep.subr.bf16.mxu0 %v11000
        %12737 = vmatpush1.bf16.msra.mxu0 %v10999
        %12738 = vmatprep.subr.bf16.mxu0 %v11022
        %12739 = vmatpush1.bf16.msra.mxu0 %v11021
        %12740 = vmatprep.subr.bf16.mxu0 %v11044
        %12741 = vmatpush1.bf16.msra.mxu0 %v11043
        %12742 = vmatprep.subr.bf16.mxu0 %v11066
        %12743 = vmatpush1.bf16.msra.mxu0 %v11065
        %12744 = vmatprep.subr.bf16.mxu0 %v11088
        %12745 = vmatpush1.bf16.msra.mxu0 %v11087
        %12746 = vmatprep.subr.bf16.mxu0 %v11110
        %12747 = vmatpush1.bf16.msra.mxu0 %v11109
        %12748 = vmatprep.subr.bf16.mxu0 %v11132
        %12749 = vmatpush1.bf16.msra.mxu0 %v11131
        %12750 = vmatprep.subr.bf16.mxu0 %v11154
        %12751 = vmatpush1.bf16.msra.mxu0 %v11153
        %12752 = vmatprep.mubr.bf16.mxu0 %v7518
        %12753 = vmatmul.mubr.bf16.gmra.mrb[0].mxu0 %v7517
        %v12754 = vpop.f32.mrb[0].mxu0
        %v12755 = vadd.f32 %v12714, %v12754
        %v12756 = vpop.f32.mrb[0].mxu0
        %v12757 = vadd.f32 %v12716, %v12756
        %v12758 = vpop.f32.mrb[0].mxu0
        %v12759 = vpop.f32.mrb[0].mxu0
        %12760 = vdwg.mxu0
        %12761 = vst [vmem:[%s805] sm:$0xff] %v11935
        %12762 = vst [vmem:[%s805 + $0x8] sm:$0xff] %v11937
        %12763 = vst [vmem:[%s805 + $0x10] sm:$0xff] %v12017
        %12764 = vst [vmem:[%s805 + $0x18] sm:$0xff] %v12019
        %12765 = vst [vmem:[%s805 + $0x20] sm:$0xff] %v12099
        %12766 = vst [vmem:[%s805 + $0x28] sm:$0xff] %v12101
        %12767 = vst [vmem:[%s805 + $0x30] sm:$0xff] %v12181
        %12768 = vst [vmem:[%s805 + $0x38] sm:$0xff] %v12183
        %12769 = vst [vmem:[%s805 + $0x40] sm:$0xff] %v12263
        %12770 = vst [vmem:[%s805 + $0x48] sm:$0xff] %v12265
        %12771 = vst [vmem:[%s805 + $0x50] sm:$0xff] %v12345
        %12772 = vst [vmem:[%s805 + $0x58] sm:$0xff] %v12347
        %12773 = vst [vmem:[%s805 + $0x60] sm:$0xff] %v12427
        %12774 = vst [vmem:[%s805 + $0x68] sm:$0xff] %v12429
        %12775 = vst [vmem:[%s805 + $0x70] sm:$0xff] %v12509
        %12776 = vst [vmem:[%s805 + $0x78] sm:$0xff] %v12511
        %12777 = vst [vmem:[%s805 + $0x80] sm:$0xff] %v12591
        %12778 = vst [vmem:[%s805 + $0x88] sm:$0xff] %v12593
        %12779 = vst [vmem:[%s805 + $0x90] sm:$0xff] %v12673
        %12780 = vst [vmem:[%s805 + $0x98] sm:$0xff] %v12675
        %12781 = vst [vmem:[%s805 + $0xa0] sm:$0xff] %v12755
        %12782 = vst [vmem:[%s805 + $0xa8] sm:$0xff] %v12757
        %s12783 = sand.u32 %s435, 1
        %s12784 = scalar_lea.sflag [#allocation4], %s12783
        %s12785 = sand.u32 %s435, 1
        %s12786 = smul.addr %s12785, 176
        %s12787 = scalar_lea.vmem [#allocation30], %s12786
        // Predicated region
        $region161: #{tpu_custom_call.1} parent=91 // pred_check
          %p12788 = pneg %p445
        $region162: #{tpu_custom_call.1} parent=91 // pred_check_branch
          %12790 = sbr.rel (%p12788) target = $region164
        $region163: #{tpu_custom_call.1} parent=91 // pred_region
          %s12792 = ssub.s32 2816, 2816
          %12793 = vsyncadd %s12784, %s12792
          %s12794 = smul.addr %s44, 22
          %s12795 = smul.addr %s12794, 128
          %s12796 = scalar_lea.hbm %s18, %s12795
          %s12798 = sshll.u32 %s12787, 4
          %s12799 = int_to_ptr.vmem [resolvable:$true] %s12798
          %12801 = dma.vmem_to_hbm [thread:$0]  %s12799, 2816, %s12796, %s12784
        $region164: #{tpu_custom_call.1} parent=91 // pred_fallthru
          _
      $region92: #{tpu_custom_call.1} parent=5 // pred_fallthru
        _
      %p12802 = scmp.le.s32.totalorder 2, %s39
      // Predicated region
      $region165: #{tpu_custom_call.1} parent=5 // pred_check
        %p12803 = pneg %p12802
      $region166: #{tpu_custom_call.1} parent=5 // pred_check_branch
        %12805 = sbr.rel (%p12803) target = $region168
      $region167: #{tpu_custom_call.1} parent=5 // pred_region
        %s12806 = ssub.s32 %s39, 2
        // Predicated region
        $region169: #{tpu_custom_call.1} parent=167 // pred_check
          %p12807 = pneg %p451
        $region170: #{tpu_custom_call.1} parent=167 // pred_check_branch
          %12809 = sbr.rel (%p12807) target = $region172
        $region171: #{tpu_custom_call.1} parent=167 // pred_region
          %s12810 = sand.u32 %s436, 1
          %s12811 = scalar_lea.sflag [#allocation4], %s12810
          %s12812 = sand.u32 %s436, 1
          %s12813 = smul.addr %s12812, 176
          %s12814 = scalar_lea.vmem [#allocation30], %s12813
          %12815 = dma.done %s12811, 2816
        $region172: #{tpu_custom_call.1} parent=167 // pred_fallthru
          _
      $region168: #{tpu_custom_call.1} parent=5 // pred_fallthru
        _
    $region6: #{tpu_custom_call.1} parent=1 // loop_footer
      %s43 = sadd.s32 1, %s39
    $region7: #{tpu_custom_call.1} parent=1 // loop_footer_branch
      %38 = sbr.rel target = $region3
    $region8: #{tpu_custom_call.1} parent=1 // loop_exit
      _
    %12816 = vsyncpa [#allocation3], 1
    %s12817 = scalar_lea.sflag [#allocation3], 1
    %12818 = vsyncpa %s12817, 1
    %12819 = vsyncpa [#allocation7], 1
    %12820 = vsyncpa [#allocation10], 1
    %12821 = vsyncpa [#allocation13], 1
    %12822 = vsyncpa [#allocation16], 1
    %12823 = vsyncpa [#allocation19], 1
    %12824 = vsyncpa [#allocation22], 1
    %12825 = vsyncpa [#allocation25], 1
    %12826 = vsyncpa [#allocation28], 1
    %12827 = vsyncpa [#allocation4], 1
    %s12828 = scalar_lea.sflag [#allocation4], 1
    %12829 = vsyncpa %s12828, 1
    %12830 = vsyncpa [#allocation5], 1
    %s12831 = scalar_lea.sflag [#allocation5], 1
    %12832 = vsyncpa %s12831, 1

</llo_original>
